<compile_context>
chip_gen: v7x
topology: tpu7x:2x2x1
jax: 0.10.0
libtpu: 0.0.40
codegen_flags: <defaults>
</compile_context>

<pallas_src>
import jax
import jax.numpy as jnp
from jax.experimental import pallas as pl
from jax.experimental.pallas import tpu as pltpu

HST_LEN = 20
FUT_LEN = 10
SELF_INPUT = 4
EGO_ENC = 64
CROSS_INPUT = 7
EGO_SUR = 32
OUT_SIZE = 2


# ----------------------------------------------------------------------------
# helpers
# ----------------------------------------------------------------------------
def _full_spec(shape):
    nd = len(shape)
    return pl.BlockSpec(shape, lambda i, _nd=nd: (0,) * _nd)


def _leaky(v):
    return jnp.where(v > 0, v, 0.1 * v)


# ----------------------------------------------------------------------------
# Kernel A: two stacked LSTM layers (Encoder / Cross_Encoder), fused gates
# ----------------------------------------------------------------------------
def _make_lstm2_kernel(emit_seq):
    def kernel(xw1_ref, whh1_ref, wih2_ref, whh2_ref, b2_ref, out_ref):
        T, B, _ = xw1_ref.shape
        H1 = whh1_ref.shape[0]
        H2 = whh2_ref.shape[0]

        whh1 = whh1_ref[...]        # (H1, 4*H1)  fused [i|f|g|o]
        wih2 = wih2_ref[...]        # (H1, 4*H2)
        whh2 = whh2_ref[...]        # (H2, 4*H2)
        b2 = b2_ref[...]            # (1, 4*H2)

        def gates_to_state(g, c, H):
            i = jax.nn.sigmoid(g[:, 0:H])
            f = jax.nn.sigmoid(g[:, H:2 * H])
            gg = jnp.tanh(g[:, 2 * H:3 * H])
            o = jax.nn.sigmoid(g[:, 3 * H:4 * H])
            c_new = f * c + i * gg
            h_new = o * jnp.tanh(c_new)
            return h_new, c_new

        h1 = jnp.zeros((B, H1), jnp.float32)
        c1 = jnp.zeros((B, H1), jnp.float32)
        h2 = jnp.zeros((B, H2), jnp.float32)
        c2 = jnp.zeros((B, H2), jnp.float32)

        for t in range(T):                       # T is static -> full unroll
            # layer 1: input projection already folded into xw1 (hoisted)
            g1 = xw1_ref[t] + jnp.dot(h1, whh1, preferred_element_type=jnp.float32)
            h1, c1 = gates_to_state(g1, c1, H1)
            # layer 2
            g2 = (jnp.dot(h1, wih2, preferred_element_type=jnp.float32)
                  + jnp.dot(h2, whh2, preferred_element_type=jnp.float32) + b2)
            h2, c2 = gates_to_state(g2, c2, H2)
            if emit_seq:
                out_ref[t] = _leaky(h2)          # LeakyReLU fused here
        if not emit_seq:
            out_ref[...] = _leaky(h2)
    return kernel


def lstm2(x_tbf, kparams, return_seq):
    """x_tbf: (T, B, F) time-major.  Returns leaky(seq) (T,B,H2) or leaky(last) (B,H2)."""
    T, B, _ = x_tbf.shape
    wih1, whh1, b1, wih2, whh2, b2 = kparams
    H2 = whh2.shape[0]

    # Hoisted layer-1 input projection: one big matmul off the serial chain.
    xw1 = jnp.einsum('tbf,fg->tbg', x_tbf, wih1,
                     preferred_element_type=jnp.float32) + b1       # (T, B, 4*H1)

    inputs = (xw1, whh1, wih2, whh2, b2)
    out_shape = (T, B, H2) if return_seq else (B, H2)
    return pl.pallas_call(
        _make_lstm2_kernel(return_seq),
        grid=(1,),
        in_specs=[_full_spec(a.shape) for a in inputs],
        out_specs=_full_spec(out_shape),
        out_shape=jax.ShapeDtypeStruct(out_shape, jnp.float32),
        compiler_params=pltpu.CompilerParams(dimension_semantics=("arbitrary",)),
    )(*inputs)


# ----------------------------------------------------------------------------
# Kernel B: surround convs + DJAU + final op1 linear
# ----------------------------------------------------------------------------
def _fusion_kernel(sa_pad_ref, sa_flat_ref, enc288_ref,
                   w1bd_ref, b1x1_ref, w3x3_ref, b3x3_ref,
                   w0_ref, b0_ref, ws_ref, bs_ref,
                   w1c_ref, b1c_ref, fc1_ref, fc2_ref,
                   wab_ref, wb_ref, wsur1_ref, wpool_ref, w3o_ref, bop_ref,
                   out_ref, djau_flat_ref):
    B, T, Lp = sa_pad_ref.shape
    L = Lp - 4                                     # 64
    C = EGO_SUR                                    # 32

    sa = sa_pad_ref[:, :, 2:2 + L]                 # (B, 20, 64) leaky'd self_aware
    enc = enc288_ref[...]                          # (B, 288): 9 neighbour encodings

    # ---- surround path ------------------------------------------------------
    # Conv2d(1x1) on all 9 cells at once via a block-diagonal (288,288) weight.
    c1_pre = (jnp.dot(enc, w1bd_ref[...], preferred_element_type=jnp.float32)
              + b1x1_ref[...])                     # (B, 288), block k = cell k
    # MaxPool2d(2,2) on the 3x3 map keeps cells NW,N,W,SELF (blocks 0,1,3,4).
    # max-then-LeakyReLU == LeakyReLU-then-max (both monotonic), matching PyTorch.
    pooled = _leaky(jnp.maximum(
        jnp.maximum(c1_pre[:, 0 * C:1 * C], c1_pre[:, 1 * C:2 * C]),
        jnp.maximum(c1_pre[:, 3 * C:4 * C], c1_pre[:, 4 * C:5 * C])))
    # Conv2d(3x3), valid padding -> single (B,288)@(288,32) matmul.
    c3 = _leaky(jnp.dot(enc, w3x3_ref[...], preferred_element_type=jnp.float32)
                + b3x3_ref[...])

    # ---- DJAU on (B, 20, 64) -------------------------------------------------
    # depthwise conv0 (k=5, pad=2): 5 taps sliced from the lane-padded input
    attn = jnp.zeros((B, T, L), jnp.float32) + b0_ref[...]
    for k in range(5):
        attn = attn + sa_pad_ref[:, :, k:k + L] * w0_ref[k]
    attn = attn * ws_ref[...] + bs_ref[...]        # conv_spatial (k=1 depthwise)
    # pointwise conv1 as a single batched matmul (no per-batch Python loop)
    w1c_b = jnp.broadcast_to(w1c_ref[...], (B, T, T))
    f_x = jnp.einsum('boc,bcl->bol', w1c_b, attn,
                     preferred_element_type=jnp.float32) + b1c_ref[...]
    se = jnp.mean(sa, axis=-1)                     # AdaptiveAvgPool1d(1) -> (B, 20)
    se = jnp.maximum(jnp.dot(se, fc1_ref[...], preferred_element_type=jnp.float32), 0.0)
    se = jax.nn.sigmoid(jnp.dot(se, fc2_ref[...], preferred_element_type=jnp.float32))
    djau = se[:, :, None] * f_x * sa               # (B, 20, 64)

    # ---- op1: Linear(2912 -> 20) as a handful of wide matmuls ----------------
    # relayout djau into a lane-flat (B, 1280) scratch, then K=1280 contractions
    for t in range(T):
        djau_flat_ref[:, t * L:(t + 1) * L] = djau[:, t, :]
    fut = (bop_ref[...]
           + jnp.dot(sa_flat_ref[...], wab_ref[...], preferred_element_type=jnp.float32)
           + jnp.dot(djau_flat_ref[...], wb_ref[...], preferred_element_type=jnp.float32)
           + jnp.dot(_leaky(c1_pre), wsur1_ref[...], preferred_element_type=jnp.float32)
           + jnp.dot(pooled, wpool_ref[...], preferred_element_type=jnp.float32)
           + jnp.dot(c3, w3o_ref[...], preferred_element_type=jnp.float32))
    out_ref[...] = fut


# ----------------------------------------------------------------------------
# Parameter construction (deterministic, canonical PyTorch shapes), then
# rearranged into kernel-friendly fused layouts (pure one-time glue).
# ----------------------------------------------------------------------------
def init_params(key):
    ks = iter(jax.random.split(key, 32))

    def nrm(shape, scale=0.1):
        return (scale * jax.random.normal(next(ks), shape)).astype(jnp.float32)

    def lstm_pair(n_features, embedding_dim):
        hid = 2 * embedding_dim
        return dict(
            w_ih1=nrm((4 * hid, n_features)), w_hh1=nrm((4 * hid, hid)),
            b_ih1=nrm((4 * hid,)), b_hh1=nrm((4 * hid,)),
            w_ih2=nrm((4 * embedding_dim, hid)),
            w_hh2=nrm((4 * embedding_dim, embedding_dim)),
            b_ih2=nrm((4 * embedding_dim,)), b_hh2=nrm((4 * embedding_dim,)),
        )

    enc = lstm_pair(SELF_INPUT, EGO_ENC)          # Encoder: 4 -> 128 -> 64
    cross = lstm_pair(CROSS_INPUT, EGO_SUR)       # Cross_Encoder: 7 -> 64 -> 32

    conv1x1_w, conv1x1_b = nrm((EGO_SUR, EGO_SUR, 1, 1)), nrm((EGO_SUR,))
    conv3x3_w, conv3x3_b = nrm((EGO_SUR, EGO_SUR, 3, 3)), nrm((EGO_SUR,))

    # DJAU(dim=20, kernel_size=3, dilation=3, reduction=3):
    #   conv0: k=5 pad=2 depthwise; conv_spatial: k=1 depthwise; conv1: 1x1;
    #   fc: 20 -> 3 -> 20 (no bias)   (reduction = max(20//3, 4) = 6)
    d = HST_LEN
    djau_conv0_w, djau_conv0_b = nrm((d, 1, 5)), nrm((d,))
    djau_convs_w, djau_convs_b = nrm((d, 1, 1)), nrm((d,))
    djau_conv1_w, djau_conv1_b = nrm((d, d, 1)), nrm((d,))
    djau_fc1_w = nrm((d // 6, d))
    djau_fc2_w = nrm((d, d // 6))

    n_sa = EGO_ENC * HST_LEN                      # 1280
    op1_in = EGO_SUR + EGO_SUR + EGO_SUR * 9 + 2 * n_sa   # 2912
    n_out = FUT_LEN * OUT_SIZE                    # 20
    op1_w, op1_b = nrm((n_out, op1_in)), nrm((n_out,))

    # ---- fused LSTM layouts: (F,4H)/(H,4H) with [i|f|g|o] column blocks ----
    def lstm_kernel_params(p):
        return (p['w_ih1'].T, p['w_hh1'].T, p['b_ih1'] + p['b_hh1'],
                p['w_ih2'].T, p['w_hh2'].T,
                (p['b_ih2'] + p['b_hh2']).reshape(1, -1))

    # ---- fusion-kernel layouts ----
    w1 = conv1x1_w[:, :, 0, 0].T                                # (in, out)
    w1bd = jnp.kron(jnp.eye(9, dtype=jnp.float32), w1)          # (288, 288) block-diag
    b1x1_9 = jnp.tile(conv1x1_b, 9).reshape(1, 9 * EGO_SUR)     # (1, 288)
    w3x3_flat = jnp.transpose(conv3x3_w, (2, 3, 1, 0)).reshape(9 * EGO_SUR, EGO_SUR)
    b3x3 = conv3x3_b.reshape(1, EGO_SUR)

    w0 = jnp.transpose(djau_conv0_w, (2, 0, 1))                 # (5, 20, 1)
    b0 = djau_conv0_b.reshape(d, 1)
    ws = djau_convs_w[:, :, 0]                                  # (20, 1)
    bs = djau_convs_b.reshape(d, 1)
    w1c = djau_conv1_w[:, :, 0]                                 # (20, 20) (out, in)
    b1c = djau_conv1_b.reshape(d, 1)
    fc1 = djau_fc1_w.T                                          # (20, 3)
    fc2 = djau_fc2_w.T                                          # (3, 20)

    wa = op1_w[:, 0:n_sa].T                                     # (1280, 20)
    wb = op1_w[:, n_sa:2 * n_sa].T                              # (1280, 20)
    wab = wa + wb                    # sa@(wa+wb) + djau@wb == sa@wa + (sa+djau)@wb
    wsur1 = op1_w[:, 2 * n_sa:2 * n_sa + 9 * EGO_SUR].T         # (288,20), rows c*9+k
    wsur1 = jnp.transpose(wsur1.reshape(EGO_SUR, 9, n_out), (1, 0, 2)).reshape(
        9 * EGO_SUR, n_out)                                     # rows k*32+c
    wpool = op1_w[:, 2 * n_sa + 9 * EGO_SUR:2 * n_sa + 10 * EGO_SUR].T   # (32, 20)
    w3o = op1_w[:, 2 * n_sa + 10 * EGO_SUR:].T                  # (32, 20)
    bop = op1_b.reshape(1, n_out)

    fusion = (w1bd, b1x1_9, w3x3_flat, b3x3,
              w0, b0, ws, bs, w1c, b1c, fc1, fc2,
              wab, wb, wsur1, wpool, w3o, bop)

    return dict(enc_kernel=lstm_kernel_params(enc),
                cross_kernel=lstm_kernel_params(cross),
                fusion_kernel=fusion)


# ----------------------------------------------------------------------------
# Full forward pass (thin glue between the two Pallas kernels)
# ----------------------------------------------------------------------------
def stiadjanet_forward(params, Self_in, N, NE, E, SE, S, SW_in, W, NW, SELF):
    B = Self_in.shape[0]

    # Encoder (ego): full layer-2 hidden sequence, LeakyReLU fused in kernel.
    seq = lstm2(jnp.transpose(Self_in, (1, 0, 2)), params['enc_kernel'],
                return_seq=True)                               # (20, B, 64)
    sa = jnp.transpose(seq, (1, 0, 2))                         # (B, 20, 64)
    sa_flat = sa.reshape(B, HST_LEN * EGO_ENC)                 # (B, 1280), t*64+l order
    sa_pad = jnp.pad(sa, ((0, 0), (0, 0), (2, 2)))             # (B, 20, 68) for conv0 taps

    # Cross_Encoder on all 9 neighbours in one call
    # (grid order NW,N,NE / W,SELF,E / SW,S,SE matches the NCHW surround map).
    cross = jnp.stack([NW, N, NE, W, SELF, E, SW_in, S, SE], axis=0)   # (9, B, 20, 7)
    cross = cross.reshape(9 * B, HST_LEN, CROSS_INPUT)
    last = lstm2(jnp.transpose(cross, (1, 0, 2)), params['cross_kernel'],
                 return_seq=False)                             # (9B, 32), leaky applied
    enc288 = jnp.transpose(last.reshape(9, B, EGO_SUR), (1, 0, 2)).reshape(
        B, 9 * EGO_SUR)                                        # (B, 288), k*32+c order

    inputs = (sa_pad, sa_flat, enc288) + params['fusion_kernel']
    fut = pl.pallas_call(
        _fusion_kernel,
        grid=(1,),
        in_specs=[_full_spec(a.shape) for a in inputs],
        out_specs=_full_spec((B, FUT_LEN * OUT_SIZE)),
        out_shape=jax.ShapeDtypeStruct((B, FUT_LEN * OUT_SIZE), jnp.float32),
        scratch_shapes=[pltpu.VMEM((B, HST_LEN * EGO_ENC), jnp.float32)],
        compiler_params=pltpu.CompilerParams(dimension_semantics=("arbitrary",)),
    )(*inputs)
    return fut.reshape(-1, FUT_LEN, OUT_SIZE)


if __name__ == "__main__":
    key = jax.random.PRNGKey(0)
    kp, kx = jax.random.split(key)
    params = init_params(kp)

    B = 2
    keys = jax.random.split(kx, 10)
    Self_in = jax.random.normal(keys[0], (B, HST_LEN, SELF_INPUT), dtype=jnp.float32)
    neigh = [jax.random.normal(keys[i + 1], (B, HST_LEN, CROSS_INPUT), dtype=jnp.float32)
             for i in range(9)]
    N, NE, E, SE, S, SWn, W, NW, SELF = neigh

    fut_pred = stiadjanet_forward(params, Self_in, N, NE, E, SE, S, SWn, W, NW, SELF)
    fut_pred = jax.block_until_ready(fut_pred)
    assert fut_pred.shape == (B, FUT_LEN, OUT_SIZE)
    assert bool(jnp.all(jnp.isfinite(fut_pred)))
    print("KERNEL_OK")
</pallas_src>

<mosaic_0001>
module attributes {stable_mosaic.version = 11 : i64} {
  func.func @kernel(%arg0: i32, %arg1: memref<20x2x512xf32, #tpu.memory_space<vmem>>, %arg2: memref<128x512xf32, #tpu.memory_space<vmem>>, %arg3: memref<128x256xf32, #tpu.memory_space<vmem>>, %arg4: memref<64x256xf32, #tpu.memory_space<vmem>>, %arg5: memref<1x256xf32, #tpu.memory_space<vmem>>, %arg6: memref<20x2x64xf32, #tpu.memory_space<vmem>>) attributes {dimension_semantics = [#tpu.dimension_semantics<arbitrary>], iteration_bounds = array<i64: 1>, scalar_prefetch = 0 : i64, scratch_operands = 0 : i64, tpu.core_type = #tpu.core_type<tc>, window_params = [{pipeline_mode = #tpu.pipeline_mode<synchronous>, transform_indices = @transform_0, window_bounds = array<i64: 20, 2, 512>}, {pipeline_mode = #tpu.pipeline_mode<synchronous>, transform_indices = @transform_1, window_bounds = array<i64: 128, 512>}, {pipeline_mode = #tpu.pipeline_mode<synchronous>, transform_indices = @transform_2, window_bounds = array<i64: 128, 256>}, {pipeline_mode = #tpu.pipeline_mode<synchronous>, transform_indices = @transform_3, window_bounds = array<i64: 64, 256>}, {pipeline_mode = #tpu.pipeline_mode<synchronous>, transform_indices = @transform_4, window_bounds = array<i64: 1, 256>}, {pipeline_mode = #tpu.pipeline_mode<synchronous>, transform_indices = @transform_5, window_bounds = array<i64: 20, 2, 64>}]} {
    %c0 = arith.constant 0 : index
    %c0_0 = arith.constant 0 : index
    %0 = vector.load %arg2[%c0, %c0_0] : memref<128x512xf32, #tpu.memory_space<vmem>>, vector<128x512xf32>
    %c0_1 = arith.constant 0 : index
    %c0_2 = arith.constant 0 : index
    %1 = vector.load %arg3[%c0_1, %c0_2] : memref<128x256xf32, #tpu.memory_space<vmem>>, vector<128x256xf32>
    %c0_3 = arith.constant 0 : index
    %c0_4 = arith.constant 0 : index
    %2 = vector.load %arg4[%c0_3, %c0_4] : memref<64x256xf32, #tpu.memory_space<vmem>>, vector<64x256xf32>
    %c0_5 = arith.constant 0 : index
    %c0_6 = arith.constant 0 : index
    %3 = vector.load %arg5[%c0_5, %c0_6] : memref<1x256xf32, #tpu.memory_space<vmem>>, vector<1x256xf32>
    %cst = arith.constant 0.000000e+00 : f32
    %4 = vector.broadcast %cst : f32 to vector<2x128xf32>
    %cst_7 = arith.constant 0.000000e+00 : f32
    %5 = vector.broadcast %cst_7 : f32 to vector<2x128xf32>
    %cst_8 = arith.constant 0.000000e+00 : f32
    %6 = vector.broadcast %cst_8 : f32 to vector<2x64xf32>
    %cst_9 = arith.constant 0.000000e+00 : f32
    %7 = vector.broadcast %cst_9 : f32 to vector<2x64xf32>
    %c0_10 = arith.constant 0 : index
    %c0_11 = arith.constant 0 : index
    %c0_12 = arith.constant 0 : index
    %8 = vector.load %arg1[%c0_10, %c0_11, %c0_12] : memref<20x2x512xf32, #tpu.memory_space<vmem>>, vector<1x2x512xf32>
    %9 = vector.shape_cast %8 : vector<1x2x512xf32> to vector<2x512xf32>
    %cst_13 = arith.constant dense<0.000000e+00> : vector<2x512xf32>
    %10 = tpu.matmul %4, %0, %cst_13 {dimension_numbers = #tpu.dot_dimension_numbers<[1], [0], [0], [1], [0, 0, 1, 1], [], []>} : vector<2x128xf32>, vector<128x512xf32>, vector<2x512xf32> -> vector<2x512xf32>
    %11 = arith.addf %9, %10 : vector<2x512xf32>
    %12 = vector.extract_strided_slice %11 {offsets = [0, 0], sizes = [2, 128], strides = [1, 1]} : vector<2x512xf32> to vector<2x128xf32>
    %13 = arith.negf %12 : vector<2x128xf32>
    %14 = math.exp %13 : vector<2x128xf32>
    %cst_14 = arith.constant 1.000000e+00 : f32
    %15 = vector.broadcast %cst_14 : f32 to vector<2x128xf32>
    %16 = arith.addf %15, %14 : vector<2x128xf32>
    %17 = arith.divf %15, %16 : vector<2x128xf32>
    %18 = vector.extract_strided_slice %11 {offsets = [0, 128], sizes = [2, 128], strides = [1, 1]} : vector<2x512xf32> to vector<2x128xf32>
    %19 = arith.negf %18 : vector<2x128xf32>
    %20 = math.exp %19 : vector<2x128xf32>
    %cst_15 = arith.constant 1.000000e+00 : f32
    %21 = vector.broadcast %cst_15 : f32 to vector<2x128xf32>
    %22 = arith.addf %21, %20 : vector<2x128xf32>
    %23 = arith.divf %21, %22 : vector<2x128xf32>
    %24 = vector.extract_strided_slice %11 {offsets = [0, 256], sizes = [2, 128], strides = [1, 1]} : vector<2x512xf32> to vector<2x128xf32>
    %25 = math.tanh %24 : vector<2x128xf32>
    %26 = vector.extract_strided_slice %11 {offsets = [0, 384], sizes = [2, 128], strides = [1, 1]} : vector<2x512xf32> to vector<2x128xf32>
    %27 = arith.negf %26 : vector<2x128xf32>
    %28 = math.exp %27 : vector<2x128xf32>
    %cst_16 = arith.constant 1.000000e+00 : f32
    %29 = vector.broadcast %cst_16 : f32 to vector<2x128xf32>
    %30 = arith.addf %29, %28 : vector<2x128xf32>
    %31 = arith.divf %29, %30 : vector<2x128xf32>
    %32 = arith.mulf %23, %5 : vector<2x128xf32>
    %33 = arith.mulf %17, %25 : vector<2x128xf32>
    %34 = arith.addf %32, %33 : vector<2x128xf32>
    %35 = math.tanh %34 : vector<2x128xf32>
    %36 = arith.mulf %31, %35 : vector<2x128xf32>
    %cst_17 = arith.constant dense<0.000000e+00> : vector<2x256xf32>
    %37 = tpu.matmul %36, %1, %cst_17 {dimension_numbers = #tpu.dot_dimension_numbers<[1], [0], [0], [1], [0, 0, 1, 1], [], []>} : vector<2x128xf32>, vector<128x256xf32>, vector<2x256xf32> -> vector<2x256xf32>
    %cst_18 = arith.constant dense<0.000000e+00> : vector<2x256xf32>
    %38 = tpu.matmul %6, %2, %cst_18 {dimension_numbers = #tpu.dot_dimension_numbers<[1], [0], [0], [1], [0, 0, 1, 1], [], []>} : vector<2x64xf32>, vector<64x256xf32>, vector<2x256xf32> -> vector<2x256xf32>
    %39 = arith.addf %37, %38 : vector<2x256xf32>
    %40 = vector.broadcast %3 : vector<1x256xf32> to vector<2x256xf32>
    %41 = arith.addf %39, %40 : vector<2x256xf32>
    %42 = vector.extract_strided_slice %41 {offsets = [0, 0], sizes = [2, 64], strides = [1, 1]} : vector<2x256xf32> to vector<2x64xf32>
    %43 = arith.negf %42 : vector<2x64xf32>
    %44 = math.exp %43 : vector<2x64xf32>
    %cst_19 = arith.constant 1.000000e+00 : f32
    %45 = vector.broadcast %cst_19 : f32 to vector<2x64xf32>
    %46 = arith.addf %45, %44 : vector<2x64xf32>
    %47 = arith.divf %45, %46 : vector<2x64xf32>
    %48 = vector.extract_strided_slice %41 {offsets = [0, 64], sizes = [2, 64], strides = [1, 1]} : vector<2x256xf32> to vector<2x64xf32>
    %49 = arith.negf %48 : vector<2x64xf32>
    %50 = math.exp %49 : vector<2x64xf32>
    %cst_20 = arith.constant 1.000000e+00 : f32
    %51 = vector.broadcast %cst_20 : f32 to vector<2x64xf32>
    %52 = arith.addf %51, %50 : vector<2x64xf32>
    %53 = arith.divf %51, %52 : vector<2x64xf32>
    %54 = vector.extract_strided_slice %41 {offsets = [0, 128], sizes = [2, 64], strides = [1, 1]} : vector<2x256xf32> to vector<2x64xf32>
    %55 = math.tanh %54 : vector<2x64xf32>
    %56 = vector.extract_strided_slice %41 {offsets = [0, 192], sizes = [2, 64], strides = [1, 1]} : vector<2x256xf32> to vector<2x64xf32>
    %57 = arith.negf %56 : vector<2x64xf32>
    %58 = math.exp %57 : vector<2x64xf32>
    %cst_21 = arith.constant 1.000000e+00 : f32
    %59 = vector.broadcast %cst_21 : f32 to vector<2x64xf32>
    %60 = arith.addf %59, %58 : vector<2x64xf32>
    %61 = arith.divf %59, %60 : vector<2x64xf32>
    %62 = arith.mulf %53, %7 : vector<2x64xf32>
    %63 = arith.mulf %47, %55 : vector<2x64xf32>
    %64 = arith.addf %62, %63 : vector<2x64xf32>
    %65 = math.tanh %64 : vector<2x64xf32>
    %66 = arith.mulf %61, %65 : vector<2x64xf32>
    %cst_22 = arith.constant 0.000000e+00 : f32
    %67 = vector.broadcast %cst_22 : f32 to vector<2x64xf32>
    %68 = arith.cmpf ogt, %66, %67 : vector<2x64xf32>
    %cst_23 = arith.constant 1.000000e-01 : f32
    %69 = vector.broadcast %cst_23 : f32 to vector<2x64xf32>
    %70 = arith.mulf %69, %66 : vector<2x64xf32>
    %71 = arith.select %68, %66, %70 : vector<2x64xi1>, vector<2x64xf32>
    %c0_24 = arith.constant 0 : index
    %c0_25 = arith.constant 0 : index
    %c0_26 = arith.constant 0 : index
    %72 = vector.load %arg6[%c0_24, %c0_25, %c0_26] : memref<20x2x64xf32, #tpu.memory_space<vmem>>, vector<1x2x64xf32>
    %73 = vector.shape_cast %72 : vector<1x2x64xf32> to vector<2x64xf32>
    %74 = vector.shape_cast %71 : vector<2x64xf32> to vector<1x2x64xf32>
    tpu.vector_store %arg6[%c0_24, %c0_25, %c0_26], %74 {strides = array<i32>} : memref<20x2x64xf32, #tpu.memory_space<vmem>>, vector<1x2x64xf32>,
    %c1 = arith.constant 1 : index
    %c0_27 = arith.constant 0 : index
    %c0_28 = arith.constant 0 : index
    %75 = vector.load %arg1[%c1, %c0_27, %c0_28] : memref<20x2x512xf32, #tpu.memory_space<vmem>>, vector<1x2x512xf32>
    %76 = vector.shape_cast %75 : vector<1x2x512xf32> to vector<2x512xf32>
    %cst_29 = arith.constant dense<0.000000e+00> : vector<2x512xf32>
    %77 = tpu.matmul %36, %0, %cst_29 {dimension_numbers = #tpu.dot_dimension_numbers<[1], [0], [0], [1], [0, 0, 1, 1], [], []>} : vector<2x128xf32>, vector<128x512xf32>, vector<2x512xf32> -> vector<2x512xf32>
    %78 = arith.addf %76, %77 : vector<2x512xf32>
    %79 = vector.extract_strided_slice %78 {offsets = [0, 0], sizes = [2, 128], strides = [1, 1]} : vector<2x512xf32> to vector<2x128xf32>
    %80 = arith.negf %79 : vector<2x128xf32>
    %81 = math.exp %80 : vector<2x128xf32>
    %cst_30 = arith.constant 1.000000e+00 : f32
    %82 = vector.broadcast %cst_30 : f32 to vector<2x128xf32>
    %83 = arith.addf %82, %81 : vector<2x128xf32>
    %84 = arith.divf %82, %83 : vector<2x128xf32>
    %85 = vector.extract_strided_slice %78 {offsets = [0, 128], sizes = [2, 128], strides = [1, 1]} : vector<2x512xf32> to vector<2x128xf32>
    %86 = arith.negf %85 : vector<2x128xf32>
    %87 = math.exp %86 : vector<2x128xf32>
    %cst_31 = arith.constant 1.000000e+00 : f32
    %88 = vector.broadcast %cst_31 : f32 to vector<2x128xf32>
    %89 = arith.addf %88, %87 : vector<2x128xf32>
    %90 = arith.divf %88, %89 : vector<2x128xf32>
    %91 = vector.extract_strided_slice %78 {offsets = [0, 256], sizes = [2, 128], strides = [1, 1]} : vector<2x512xf32> to vector<2x128xf32>
    %92 = math.tanh %91 : vector<2x128xf32>
    %93 = vector.extract_strided_slice %78 {offsets = [0, 384], sizes = [2, 128], strides = [1, 1]} : vector<2x512xf32> to vector<2x128xf32>
    %94 = arith.negf %93 : vector<2x128xf32>
    %95 = math.exp %94 : vector<2x128xf32>
    %cst_32 = arith.constant 1.000000e+00 : f32
    %96 = vector.broadcast %cst_32 : f32 to vector<2x128xf32>
    %97 = arith.addf %96, %95 : vector<2x128xf32>
    %98 = arith.divf %96, %97 : vector<2x128xf32>
    %99 = arith.mulf %90, %34 : vector<2x128xf32>
    %100 = arith.mulf %84, %92 : vector<2x128xf32>
    %101 = arith.addf %99, %100 : vector<2x128xf32>
    %102 = math.tanh %101 : vector<2x128xf32>
    %103 = arith.mulf %98, %102 : vector<2x128xf32>
    %cst_33 = arith.constant dense<0.000000e+00> : vector<2x256xf32>
    %104 = tpu.matmul %103, %1, %cst_33 {dimension_numbers = #tpu.dot_dimension_numbers<[1], [0], [0], [1], [0, 0, 1, 1], [], []>} : vector<2x128xf32>, vector<128x256xf32>, vector<2x256xf32> -> vector<2x256xf32>
    %cst_34 = arith.constant dense<0.000000e+00> : vector<2x256xf32>
    %105 = tpu.matmul %66, %2, %cst_34 {dimension_numbers = #tpu.dot_dimension_numbers<[1], [0], [0], [1], [0, 0, 1, 1], [], []>} : vector<2x64xf32>, vector<64x256xf32>, vector<2x256xf32> -> vector<2x256xf32>
    %106 = arith.addf %104, %105 : vector<2x256xf32>
    %107 = vector.broadcast %3 : vector<1x256xf32> to vector<2x256xf32>
    %108 = arith.addf %106, %107 : vector<2x256xf32>
    %109 = vector.extract_strided_slice %108 {offsets = [0, 0], sizes = [2, 64], strides = [1, 1]} : vector<2x256xf32> to vector<2x64xf32>
    %110 = arith.negf %109 : vector<2x64xf32>
    %111 = math.exp %110 : vector<2x64xf32>
    %cst_35 = arith.constant 1.000000e+00 : f32
    %112 = vector.broadcast %cst_35 : f32 to vector<2x64xf32>
    %113 = arith.addf %112, %111 : vector<2x64xf32>
    %114 = arith.divf %112, %113 : vector<2x64xf32>
    %115 = vector.extract_strided_slice %108 {offsets = [0, 64], sizes = [2, 64], strides = [1, 1]} : vector<2x256xf32> to vector<2x64xf32>
    %116 = arith.negf %115 : vector<2x64xf32>
    %117 = math.exp %116 : vector<2x64xf32>
    %cst_36 = arith.constant 1.000000e+00 : f32
    %118 = vector.broadcast %cst_36 : f32 to vector<2x64xf32>
    %119 = arith.addf %118, %117 : vector<2x64xf32>
    %120 = arith.divf %118, %119 : vector<2x64xf32>
    %121 = vector.extract_strided_slice %108 {offsets = [0, 128], sizes = [2, 64], strides = [1, 1]} : vector<2x256xf32> to vector<2x64xf32>
    %122 = math.tanh %121 : vector<2x64xf32>
    %123 = vector.extract_strided_slice %108 {offsets = [0, 192], sizes = [2, 64], strides = [1, 1]} : vector<2x256xf32> to vector<2x64xf32>
    %124 = arith.negf %123 : vector<2x64xf32>
    %125 = math.exp %124 : vector<2x64xf32>
    %cst_37 = arith.constant 1.000000e+00 : f32
    %126 = vector.broadcast %cst_37 : f32 to vector<2x64xf32>
    %127 = arith.addf %126, %125 : vector<2x64xf32>
    %128 = arith.divf %126, %127 : vector<2x64xf32>
    %129 = arith.mulf %120, %64 : vector<2x64xf32>
    %130 = arith.mulf %114, %122 : vector<2x64xf32>
    %131 = arith.addf %129, %130 : vector<2x64xf32>
    %132 = math.tanh %131 : vector<2x64xf32>
    %133 = arith.mulf %128, %132 : vector<2x64xf32>
    %cst_38 = arith.constant 0.000000e+00 : f32
    %134 = vector.broadcast %cst_38 : f32 to vector<2x64xf32>
    %135 = arith.cmpf ogt, %133, %134 : vector<2x64xf32>
    %cst_39 = arith.constant 1.000000e-01 : f32
    %136 = vector.broadcast %cst_39 : f32 to vector<2x64xf32>
    %137 = arith.mulf %136, %133 : vector<2x64xf32>
    %138 = arith.select %135, %133, %137 : vector<2x64xi1>, vector<2x64xf32>
    %c1_40 = arith.constant 1 : index
    %c0_41 = arith.constant 0 : index
    %c0_42 = arith.constant 0 : index
    %139 = vector.load %arg6[%c1_40, %c0_41, %c0_42] : memref<20x2x64xf32, #tpu.memory_space<vmem>>, vector<1x2x64xf32>
    %140 = vector.shape_cast %139 : vector<1x2x64xf32> to vector<2x64xf32>
    %141 = vector.shape_cast %138 : vector<2x64xf32> to vector<1x2x64xf32>
    tpu.vector_store %arg6[%c1_40, %c0_41, %c0_42], %141 {strides = array<i32>} : memref<20x2x64xf32, #tpu.memory_space<vmem>>, vector<1x2x64xf32>,
    %c2 = arith.constant 2 : index
    %c0_43 = arith.constant 0 : index
    %c0_44 = arith.constant 0 : index
    %142 = vector.load %arg1[%c2, %c0_43, %c0_44] : memref<20x2x512xf32, #tpu.memory_space<vmem>>, vector<1x2x512xf32>
    %143 = vector.shape_cast %142 : vector<1x2x512xf32> to vector<2x512xf32>
    %cst_45 = arith.constant dense<0.000000e+00> : vector<2x512xf32>
    %144 = tpu.matmul %103, %0, %cst_45 {dimension_numbers = #tpu.dot_dimension_numbers<[1], [0], [0], [1], [0, 0, 1, 1], [], []>} : vector<2x128xf32>, vector<128x512xf32>, vector<2x512xf32> -> vector<2x512xf32>
    %145 = arith.addf %143, %144 : vector<2x512xf32>
    %146 = vector.extract_strided_slice %145 {offsets = [0, 0], sizes = [2, 128], strides = [1, 1]} : vector<2x512xf32> to vector<2x128xf32>
    %147 = arith.negf %146 : vector<2x128xf32>
    %148 = math.exp %147 : vector<2x128xf32>
    %cst_46 = arith.constant 1.000000e+00 : f32
    %149 = vector.broadcast %cst_46 : f32 to vector<2x128xf32>
    %150 = arith.addf %149, %148 : vector<2x128xf32>
    %151 = arith.divf %149, %150 : vector<2x128xf32>
    %152 = vector.extract_strided_slice %145 {offsets = [0, 128], sizes = [2, 128], strides = [1, 1]} : vector<2x512xf32> to vector<2x128xf32>
    %153 = arith.negf %152 : vector<2x128xf32>
    %154 = math.exp %153 : vector<2x128xf32>
    %cst_47 = arith.constant 1.000000e+00 : f32
    %155 = vector.broadcast %cst_47 : f32 to vector<2x128xf32>
    %156 = arith.addf %155, %154 : vector<2x128xf32>
    %157 = arith.divf %155, %156 : vector<2x128xf32>
    %158 = vector.extract_strided_slice %145 {offsets = [0, 256], sizes = [2, 128], strides = [1, 1]} : vector<2x512xf32> to vector<2x128xf32>
    %159 = math.tanh %158 : vector<2x128xf32>
    %160 = vector.extract_strided_slice %145 {offsets = [0, 384], sizes = [2, 128], strides = [1, 1]} : vector<2x512xf32> to vector<2x128xf32>
    %161 = arith.negf %160 : vector<2x128xf32>
    %162 = math.exp %161 : vector<2x128xf32>
    %cst_48 = arith.constant 1.000000e+00 : f32
    %163 = vector.broadcast %cst_48 : f32 to vector<2x128xf32>
    %164 = arith.addf %163, %162 : vector<2x128xf32>
    %165 = arith.divf %163, %164 : vector<2x128xf32>
    %166 = arith.mulf %157, %101 : vector<2x128xf32>
    %167 = arith.mulf %151, %159 : vector<2x128xf32>
    %168 = arith.addf %166, %167 : vector<2x128xf32>
    %169 = math.tanh %168 : vector<2x128xf32>
    %170 = arith.mulf %165, %169 : vector<2x128xf32>
    %cst_49 = arith.constant dense<0.000000e+00> : vector<2x256xf32>
    %171 = tpu.matmul %170, %1, %cst_49 {dimension_numbers = #tpu.dot_dimension_numbers<[1], [0], [0], [1], [0, 0, 1, 1], [], []>} : vector<2x128xf32>, vector<128x256xf32>, vector<2x256xf32> -> vector<2x256xf32>
    %cst_50 = arith.constant dense<0.000000e+00> : vector<2x256xf32>
    %172 = tpu.matmul %133, %2, %cst_50 {dimension_numbers = #tpu.dot_dimension_numbers<[1], [0], [0], [1], [0, 0, 1, 1], [], []>} : vector<2x64xf32>, vector<64x256xf32>, vector<2x256xf32> -> vector<2x256xf32>
    %173 = arith.addf %171, %172 : vector<2x256xf32>
    %174 = vector.broadcast %3 : vector<1x256xf32> to vector<2x256xf32>
    %175 = arith.addf %173, %174 : vector<2x256xf32>
    %176 = vector.extract_strided_slice %175 {offsets = [0, 0], sizes = [2, 64], strides = [1, 1]} : vector<2x256xf32> to vector<2x64xf32>
    %177 = arith.negf %176 : vector<2x64xf32>
    %178 = math.exp %177 : vector<2x64xf32>
    %cst_51 = arith.constant 1.000000e+00 : f32
    %179 = vector.broadcast %cst_51 : f32 to vector<2x64xf32>
    %180 = arith.addf %179, %178 : vector<2x64xf32>
    %181 = arith.divf %179, %180 : vector<2x64xf32>
    %182 = vector.extract_strided_slice %175 {offsets = [0, 64], sizes = [2, 64], strides = [1, 1]} : vector<2x256xf32> to vector<2x64xf32>
    %183 = arith.negf %182 : vector<2x64xf32>
    %184 = math.exp %183 : vector<2x64xf32>
    %cst_52 = arith.constant 1.000000e+00 : f32
    %185 = vector.broadcast %cst_52 : f32 to vector<2x64xf32>
    %186 = arith.addf %185, %184 : vector<2x64xf32>
    %187 = arith.divf %185, %186 : vector<2x64xf32>
    %188 = vector.extract_strided_slice %175 {offsets = [0, 128], sizes = [2, 64], strides = [1, 1]} : vector<2x256xf32> to vector<2x64xf32>
    %189 = math.tanh %188 : vector<2x64xf32>
    %190 = vector.extract_strided_slice %175 {offsets = [0, 192], sizes = [2, 64], strides = [1, 1]} : vector<2x256xf32> to vector<2x64xf32>
    %191 = arith.negf %190 : vector<2x64xf32>
    %192 = math.exp %191 : vector<2x64xf32>
    %cst_53 = arith.constant 1.000000e+00 : f32
    %193 = vector.broadcast %cst_53 : f32 to vector<2x64xf32>
    %194 = arith.addf %193, %192 : vector<2x64xf32>
    %195 = arith.divf %193, %194 : vector<2x64xf32>
    %196 = arith.mulf %187, %131 : vector<2x64xf32>
    %197 = arith.mulf %181, %189 : vector<2x64xf32>
    %198 = arith.addf %196, %197 : vector<2x64xf32>
    %199 = math.tanh %198 : vector<2x64xf32>
    %200 = arith.mulf %195, %199 : vector<2x64xf32>
    %cst_54 = arith.constant 0.000000e+00 : f32
    %201 = vector.broadcast %cst_54 : f32 to vector<2x64xf32>
    %202 = arith.cmpf ogt, %200, %201 : vector<2x64xf32>
    %cst_55 = arith.constant 1.000000e-01 : f32
    %203 = vector.broadcast %cst_55 : f32 to vector<2x64xf32>
    %204 = arith.mulf %203, %200 : vector<2x64xf32>
    %205 = arith.select %202, %200, %204 : vector<2x64xi1>, vector<2x64xf32>
    %c2_56 = arith.constant 2 : index
    %c0_57 = arith.constant 0 : index
    %c0_58 = arith.constant 0 : index
    %206 = vector.load %arg6[%c2_56, %c0_57, %c0_58] : memref<20x2x64xf32, #tpu.memory_space<vmem>>, vector<1x2x64xf32>
    %207 = vector.shape_cast %206 : vector<1x2x64xf32> to vector<2x64xf32>
    %208 = vector.shape_cast %205 : vector<2x64xf32> to vector<1x2x64xf32>
    tpu.vector_store %arg6[%c2_56, %c0_57, %c0_58], %208 {strides = array<i32>} : memref<20x2x64xf32, #tpu.memory_space<vmem>>, vector<1x2x64xf32>,
    %c3 = arith.constant 3 : index
    %c0_59 = arith.constant 0 : index
    %c0_60 = arith.constant 0 : index
    %209 = vector.load %arg1[%c3, %c0_59, %c0_60] : memref<20x2x512xf32, #tpu.memory_space<vmem>>, vector<1x2x512xf32>
    %210 = vector.shape_cast %209 : vector<1x2x512xf32> to vector<2x512xf32>
    %cst_61 = arith.constant dense<0.000000e+00> : vector<2x512xf32>
    %211 = tpu.matmul %170, %0, %cst_61 {dimension_numbers = #tpu.dot_dimension_numbers<[1], [0], [0], [1], [0, 0, 1, 1], [], []>} : vector<2x128xf32>, vector<128x512xf32>, vector<2x512xf32> -> vector<2x512xf32>
    %212 = arith.addf %210, %211 : vector<2x512xf32>
    %213 = vector.extract_strided_slice %212 {offsets = [0, 0], sizes = [2, 128], strides = [1, 1]} : vector<2x512xf32> to vector<2x128xf32>
    %214 = arith.negf %213 : vector<2x128xf32>
    %215 = math.exp %214 : vector<2x128xf32>
    %cst_62 = arith.constant 1.000000e+00 : f32
    %216 = vector.broadcast %cst_62 : f32 to vector<2x128xf32>
    %217 = arith.addf %216, %215 : vector<2x128xf32>
    %218 = arith.divf %216, %217 : vector<2x128xf32>
    %219 = vector.extract_strided_slice %212 {offsets = [0, 128], sizes = [2, 128], strides = [1, 1]} : vector<2x512xf32> to vector<2x128xf32>
    %220 = arith.negf %219 : vector<2x128xf32>
    %221 = math.exp %220 : vector<2x128xf32>
    %cst_63 = arith.constant 1.000000e+00 : f32
    %222 = vector.broadcast %cst_63 : f32 to vector<2x128xf32>
    %223 = arith.addf %222, %221 : vector<2x128xf32>
    %224 = arith.divf %222, %223 : vector<2x128xf32>
    %225 = vector.extract_strided_slice %212 {offsets = [0, 256], sizes = [2, 128], strides = [1, 1]} : vector<2x512xf32> to vector<2x128xf32>
    %226 = math.tanh %225 : vector<2x128xf32>
    %227 = vector.extract_strided_slice %212 {offsets = [0, 384], sizes = [2, 128], strides = [1, 1]} : vector<2x512xf32> to vector<2x128xf32>
    %228 = arith.negf %227 : vector<2x128xf32>
    %229 = math.exp %228 : vector<2x128xf32>
    %cst_64 = arith.constant 1.000000e+00 : f32
    %230 = vector.broadcast %cst_64 : f32 to vector<2x128xf32>
    %231 = arith.addf %230, %229 : vector<2x128xf32>
    %232 = arith.divf %230, %231 : vector<2x128xf32>
    %233 = arith.mulf %224, %168 : vector<2x128xf32>
    %234 = arith.mulf %218, %226 : vector<2x128xf32>
    %235 = arith.addf %233, %234 : vector<2x128xf32>
    %236 = math.tanh %235 : vector<2x128xf32>
    %237 = arith.mulf %232, %236 : vector<2x128xf32>
    %cst_65 = arith.constant dense<0.000000e+00> : vector<2x256xf32>
    %238 = tpu.matmul %237, %1, %cst_65 {dimension_numbers = #tpu.dot_dimension_numbers<[1], [0], [0], [1], [0, 0, 1, 1], [], []>} : vector<2x128xf32>, vector<128x256xf32>, vector<2x256xf32> -> vector<2x256xf32>
    %cst_66 = arith.constant dense<0.000000e+00> : vector<2x256xf32>
    %239 = tpu.matmul %200, %2, %cst_66 {dimension_numbers = #tpu.dot_dimension_numbers<[1], [0], [0], [1], [0, 0, 1, 1], [], []>} : vector<2x64xf32>, vector<64x256xf32>, vector<2x256xf32> -> vector<2x256xf32>
    %240 = arith.addf %238, %239 : vector<2x256xf32>
    %241 = vector.broadcast %3 : vector<1x256xf32> to vector<2x256xf32>
    %242 = arith.addf %240, %241 : vector<2x256xf32>
    %243 = vector.extract_strided_slice %242 {offsets = [0, 0], sizes = [2, 64], strides = [1, 1]} : vector<2x256xf32> to vector<2x64xf32>
    %244 = arith.negf %243 : vector<2x64xf32>
    %245 = math.exp %244 : vector<2x64xf32>
    %cst_67 = arith.constant 1.000000e+00 : f32
    %246 = vector.broadcast %cst_67 : f32 to vector<2x64xf32>
    %247 = arith.addf %246, %245 : vector<2x64xf32>
    %248 = arith.divf %246, %247 : vector<2x64xf32>
    %249 = vector.extract_strided_slice %242 {offsets = [0, 64], sizes = [2, 64], strides = [1, 1]} : vector<2x256xf32> to vector<2x64xf32>
    %250 = arith.negf %249 : vector<2x64xf32>
    %251 = math.exp %250 : vector<2x64xf32>
    %cst_68 = arith.constant 1.000000e+00 : f32
    %252 = vector.broadcast %cst_68 : f32 to vector<2x64xf32>
    %253 = arith.addf %252, %251 : vector<2x64xf32>
    %254 = arith.divf %252, %253 : vector<2x64xf32>
    %255 = vector.extract_strided_slice %242 {offsets = [0, 128], sizes = [2, 64], strides = [1, 1]} : vector<2x256xf32> to vector<2x64xf32>
    %256 = math.tanh %255 : vector<2x64xf32>
    %257 = vector.extract_strided_slice %242 {offsets = [0, 192], sizes = [2, 64], strides = [1, 1]} : vector<2x256xf32> to vector<2x64xf32>
    %258 = arith.negf %257 : vector<2x64xf32>
    %259 = math.exp %258 : vector<2x64xf32>
    %cst_69 = arith.constant 1.000000e+00 : f32
    %260 = vector.broadcast %cst_69 : f32 to vector<2x64xf32>
    %261 = arith.addf %260, %259 : vector<2x64xf32>
    %262 = arith.divf %260, %261 : vector<2x64xf32>
    %263 = arith.mulf %254, %198 : vector<2x64xf32>
    %264 = arith.mulf %248, %256 : vector<2x64xf32>
    %265 = arith.addf %263, %264 : vector<2x64xf32>
    %266 = math.tanh %265 : vector<2x64xf32>
    %267 = arith.mulf %262, %266 : vector<2x64xf32>
    %cst_70 = arith.constant 0.000000e+00 : f32
    %268 = vector.broadcast %cst_70 : f32 to vector<2x64xf32>
    %269 = arith.cmpf ogt, %267, %268 : vector<2x64xf32>
    %cst_71 = arith.constant 1.000000e-01 : f32
    %270 = vector.broadcast %cst_71 : f32 to vector<2x64xf32>
    %271 = arith.mulf %270, %267 : vector<2x64xf32>
    %272 = arith.select %269, %267, %271 : vector<2x64xi1>, vector<2x64xf32>
    %c3_72 = arith.constant 3 : index
    %c0_73 = arith.constant 0 : index
    %c0_74 = arith.constant 0 : index
    %273 = vector.load %arg6[%c3_72, %c0_73, %c0_74] : memref<20x2x64xf32, #tpu.memory_space<vmem>>, vector<1x2x64xf32>
    %274 = vector.shape_cast %273 : vector<1x2x64xf32> to vector<2x64xf32>
    %275 = vector.shape_cast %272 : vector<2x64xf32> to vector<1x2x64xf32>
    tpu.vector_store %arg6[%c3_72, %c0_73, %c0_74], %275 {strides = array<i32>} : memref<20x2x64xf32, #tpu.memory_space<vmem>>, vector<1x2x64xf32>,
    %c4 = arith.constant 4 : index
    %c0_75 = arith.constant 0 : index
    %c0_76 = arith.constant 0 : index
    %276 = vector.load %arg1[%c4, %c0_75, %c0_76] : memref<20x2x512xf32, #tpu.memory_space<vmem>>, vector<1x2x512xf32>
    %277 = vector.shape_cast %276 : vector<1x2x512xf32> to vector<2x512xf32>
    %cst_77 = arith.constant dense<0.000000e+00> : vector<2x512xf32>
    %278 = tpu.matmul %237, %0, %cst_77 {dimension_numbers = #tpu.dot_dimension_numbers<[1], [0], [0], [1], [0, 0, 1, 1], [], []>} : vector<2x128xf32>, vector<128x512xf32>, vector<2x512xf32> -> vector<2x512xf32>
    %279 = arith.addf %277, %278 : vector<2x512xf32>
    %280 = vector.extract_strided_slice %279 {offsets = [0, 0], sizes = [2, 128], strides = [1, 1]} : vector<2x512xf32> to vector<2x128xf32>
    %281 = arith.negf %280 : vector<2x128xf32>
    %282 = math.exp %281 : vector<2x128xf32>
    %cst_78 = arith.constant 1.000000e+00 : f32
    %283 = vector.broadcast %cst_78 : f32 to vector<2x128xf32>
    %284 = arith.addf %283, %282 : vector<2x128xf32>
    %285 = arith.divf %283, %284 : vector<2x128xf32>
    %286 = vector.extract_strided_slice %279 {offsets = [0, 128], sizes = [2, 128], strides = [1, 1]} : vector<2x512xf32> to vector<2x128xf32>
    %287 = arith.negf %286 : vector<2x128xf32>
    %288 = math.exp %287 : vector<2x128xf32>
    %cst_79 = arith.constant 1.000000e+00 : f32
    %289 = vector.broadcast %cst_79 : f32 to vector<2x128xf32>
    %290 = arith.addf %289, %288 : vector<2x128xf32>
    %291 = arith.divf %289, %290 : vector<2x128xf32>
    %292 = vector.extract_strided_slice %279 {offsets = [0, 256], sizes = [2, 128], strides = [1, 1]} : vector<2x512xf32> to vector<2x128xf32>
    %293 = math.tanh %292 : vector<2x128xf32>
    %294 = vector.extract_strided_slice %279 {offsets = [0, 384], sizes = [2, 128], strides = [1, 1]} : vector<2x512xf32> to vector<2x128xf32>
    %295 = arith.negf %294 : vector<2x128xf32>
    %296 = math.exp %295 : vector<2x128xf32>
    %cst_80 = arith.constant 1.000000e+00 : f32
    %297 = vector.broadcast %cst_80 : f32 to vector<2x128xf32>
    %298 = arith.addf %297, %296 : vector<2x128xf32>
    %299 = arith.divf %297, %298 : vector<2x128xf32>
    %300 = arith.mulf %291, %235 : vector<2x128xf32>
    %301 = arith.mulf %285, %293 : vector<2x128xf32>
    %302 = arith.addf %300, %301 : vector<2x128xf32>
    %303 = math.tanh %302 : vector<2x128xf32>
    %304 = arith.mulf %299, %303 : vector<2x128xf32>
    %cst_81 = arith.constant dense<0.000000e+00> : vector<2x256xf32>
    %305 = tpu.matmul %304, %1, %cst_81 {dimension_numbers = #tpu.dot_dimension_numbers<[1], [0], [0], [1], [0, 0, 1, 1], [], []>} : vector<2x128xf32>, vector<128x256xf32>, vector<2x256xf32> -> vector<2x256xf32>
    %cst_82 = arith.constant dense<0.000000e+00> : vector<2x256xf32>
    %306 = tpu.matmul %267, %2, %cst_82 {dimension_numbers = #tpu.dot_dimension_numbers<[1], [0], [0], [1], [0, 0, 1, 1], [], []>} : vector<2x64xf32>, vector<64x256xf32>, vector<2x256xf32> -> vector<2x256xf32>
    %307 = arith.addf %305, %306 : vector<2x256xf32>
    %308 = vector.broadcast %3 : vector<1x256xf32> to vector<2x256xf32>
    %309 = arith.addf %307, %308 : vector<2x256xf32>
    %310 = vector.extract_strided_slice %309 {offsets = [0, 0], sizes = [2, 64], strides = [1, 1]} : vector<2x256xf32> to vector<2x64xf32>
    %311 = arith.negf %310 : vector<2x64xf32>
    %312 = math.exp %311 : vector<2x64xf32>
    %cst_83 = arith.constant 1.000000e+00 : f32
    %313 = vector.broadcast %cst_83 : f32 to vector<2x64xf32>
    %314 = arith.addf %313, %312 : vector<2x64xf32>
    %315 = arith.divf %313, %314 : vector<2x64xf32>
    %316 = vector.extract_strided_slice %309 {offsets = [0, 64], sizes = [2, 64], strides = [1, 1]} : vector<2x256xf32> to vector<2x64xf32>
    %317 = arith.negf %316 : vector<2x64xf32>
    %318 = math.exp %317 : vector<2x64xf32>
    %cst_84 = arith.constant 1.000000e+00 : f32
    %319 = vector.broadcast %cst_84 : f32 to vector<2x64xf32>
    %320 = arith.addf %319, %318 : vector<2x64xf32>
    %321 = arith.divf %319, %320 : vector<2x64xf32>
    %322 = vector.extract_strided_slice %309 {offsets = [0, 128], sizes = [2, 64], strides = [1, 1]} : vector<2x256xf32> to vector<2x64xf32>
    %323 = math.tanh %322 : vector<2x64xf32>
    %324 = vector.extract_strided_slice %309 {offsets = [0, 192], sizes = [2, 64], strides = [1, 1]} : vector<2x256xf32> to vector<2x64xf32>
    %325 = arith.negf %324 : vector<2x64xf32>
    %326 = math.exp %325 : vector<2x64xf32>
    %cst_85 = arith.constant 1.000000e+00 : f32
    %327 = vector.broadcast %cst_85 : f32 to vector<2x64xf32>
    %328 = arith.addf %327, %326 : vector<2x64xf32>
    %329 = arith.divf %327, %328 : vector<2x64xf32>
    %330 = arith.mulf %321, %265 : vector<2x64xf32>
    %331 = arith.mulf %315, %323 : vector<2x64xf32>
    %332 = arith.addf %330, %331 : vector<2x64xf32>
    %333 = math.tanh %332 : vector<2x64xf32>
    %334 = arith.mulf %329, %333 : vector<2x64xf32>
    %cst_86 = arith.constant 0.000000e+00 : f32
    %335 = vector.broadcast %cst_86 : f32 to vector<2x64xf32>
    %336 = arith.cmpf ogt, %334, %335 : vector<2x64xf32>
    %cst_87 = arith.constant 1.000000e-01 : f32
    %337 = vector.broadcast %cst_87 : f32 to vector<2x64xf32>
    %338 = arith.mulf %337, %334 : vector<2x64xf32>
    %339 = arith.select %336, %334, %338 : vector<2x64xi1>, vector<2x64xf32>
    %c4_88 = arith.constant 4 : index
    %c0_89 = arith.constant 0 : index
    %c0_90 = arith.constant 0 : index
    %340 = vector.load %arg6[%c4_88, %c0_89, %c0_90] : memref<20x2x64xf32, #tpu.memory_space<vmem>>, vector<1x2x64xf32>
    %341 = vector.shape_cast %340 : vector<1x2x64xf32> to vector<2x64xf32>
    %342 = vector.shape_cast %339 : vector<2x64xf32> to vector<1x2x64xf32>
    tpu.vector_store %arg6[%c4_88, %c0_89, %c0_90], %342 {strides = array<i32>} : memref<20x2x64xf32, #tpu.memory_space<vmem>>, vector<1x2x64xf32>,
    %c5 = arith.constant 5 : index
    %c0_91 = arith.constant 0 : index
    %c0_92 = arith.constant 0 : index
    %343 = vector.load %arg1[%c5, %c0_91, %c0_92] : memref<20x2x512xf32, #tpu.memory_space<vmem>>, vector<1x2x512xf32>
    %344 = vector.shape_cast %343 : vector<1x2x512xf32> to vector<2x512xf32>
    %cst_93 = arith.constant dense<0.000000e+00> : vector<2x512xf32>
    %345 = tpu.matmul %304, %0, %cst_93 {dimension_numbers = #tpu.dot_dimension_numbers<[1], [0], [0], [1], [0, 0, 1, 1], [], []>} : vector<2x128xf32>, vector<128x512xf32>, vector<2x512xf32> -> vector<2x512xf32>
    %346 = arith.addf %344, %345 : vector<2x512xf32>
    %347 = vector.extract_strided_slice %346 {offsets = [0, 0], sizes = [2, 128], strides = [1, 1]} : vector<2x512xf32> to vector<2x128xf32>
    %348 = arith.negf %347 : vector<2x128xf32>
    %349 = math.exp %348 : vector<2x128xf32>
    %cst_94 = arith.constant 1.000000e+00 : f32
    %350 = vector.broadcast %cst_94 : f32 to vector<2x128xf32>
    %351 = arith.addf %350, %349 : vector<2x128xf32>
    %352 = arith.divf %350, %351 : vector<2x128xf32>
    %353 = vector.extract_strided_slice %346 {offsets = [0, 128], sizes = [2, 128], strides = [1, 1]} : vector<2x512xf32> to vector<2x128xf32>
    %354 = arith.negf %353 : vector<2x128xf32>
    %355 = math.exp %354 : vector<2x128xf32>
    %cst_95 = arith.constant 1.000000e+00 : f32
    %356 = vector.broadcast %cst_95 : f32 to vector<2x128xf32>
    %357 = arith.addf %356, %355 : vector<2x128xf32>
    %358 = arith.divf %356, %357 : vector<2x128xf32>
    %359 = vector.extract_strided_slice %346 {offsets = [0, 256], sizes = [2, 128], strides = [1, 1]} : vector<2x512xf32> to vector<2x128xf32>
    %360 = math.tanh %359 : vector<2x128xf32>
    %361 = vector.extract_strided_slice %346 {offsets = [0, 384], sizes = [2, 128], strides = [1, 1]} : vector<2x512xf32> to vector<2x128xf32>
    %362 = arith.negf %361 : vector<2x128xf32>
    %363 = math.exp %362 : vector<2x128xf32>
    %cst_96 = arith.constant 1.000000e+00 : f32
    %364 = vector.broadcast %cst_96 : f32 to vector<2x128xf32>
    %365 = arith.addf %364, %363 : vector<2x128xf32>
    %366 = arith.divf %364, %365 : vector<2x128xf32>
    %367 = arith.mulf %358, %302 : vector<2x128xf32>
    %368 = arith.mulf %352, %360 : vector<2x128xf32>
    %369 = arith.addf %367, %368 : vector<2x128xf32>
    %370 = math.tanh %369 : vector<2x128xf32>
    %371 = arith.mulf %366, %370 : vector<2x128xf32>
    %cst_97 = arith.constant dense<0.000000e+00> : vector<2x256xf32>
    %372 = tpu.matmul %371, %1, %cst_97 {dimension_numbers = #tpu.dot_dimension_numbers<[1], [0], [0], [1], [0, 0, 1, 1], [], []>} : vector<2x128xf32>, vector<128x256xf32>, vector<2x256xf32> -> vector<2x256xf32>
    %cst_98 = arith.constant dense<0.000000e+00> : vector<2x256xf32>
    %373 = tpu.matmul %334, %2, %cst_98 {dimension_numbers = #tpu.dot_dimension_numbers<[1], [0], [0], [1], [0, 0, 1, 1], [], []>} : vector<2x64xf32>, vector<64x256xf32>, vector<2x256xf32> -> vector<2x256xf32>
    %374 = arith.addf %372, %373 : vector<2x256xf32>
    %375 = vector.broadcast %3 : vector<1x256xf32> to vector<2x256xf32>
    %376 = arith.addf %374, %375 : vector<2x256xf32>
    %377 = vector.extract_strided_slice %376 {offsets = [0, 0], sizes = [2, 64], strides = [1, 1]} : vector<2x256xf32> to vector<2x64xf32>
    %378 = arith.negf %377 : vector<2x64xf32>
    %379 = math.exp %378 : vector<2x64xf32>
    %cst_99 = arith.constant 1.000000e+00 : f32
    %380 = vector.broadcast %cst_99 : f32 to vector<2x64xf32>
    %381 = arith.addf %380, %379 : vector<2x64xf32>
    %382 = arith.divf %380, %381 : vector<2x64xf32>
    %383 = vector.extract_strided_slice %376 {offsets = [0, 64], sizes = [2, 64], strides = [1, 1]} : vector<2x256xf32> to vector<2x64xf32>
    %384 = arith.negf %383 : vector<2x64xf32>
    %385 = math.exp %384 : vector<2x64xf32>
    %cst_100 = arith.constant 1.000000e+00 : f32
    %386 = vector.broadcast %cst_100 : f32 to vector<2x64xf32>
    %387 = arith.addf %386, %385 : vector<2x64xf32>
    %388 = arith.divf %386, %387 : vector<2x64xf32>
    %389 = vector.extract_strided_slice %376 {offsets = [0, 128], sizes = [2, 64], strides = [1, 1]} : vector<2x256xf32> to vector<2x64xf32>
    %390 = math.tanh %389 : vector<2x64xf32>
    %391 = vector.extract_strided_slice %376 {offsets = [0, 192], sizes = [2, 64], strides = [1, 1]} : vector<2x256xf32> to vector<2x64xf32>
    %392 = arith.negf %391 : vector<2x64xf32>
    %393 = math.exp %392 : vector<2x64xf32>
    %cst_101 = arith.constant 1.000000e+00 : f32
    %394 = vector.broadcast %cst_101 : f32 to vector<2x64xf32>
    %395 = arith.addf %394, %393 : vector<2x64xf32>
    %396 = arith.divf %394, %395 : vector<2x64xf32>
    %397 = arith.mulf %388, %332 : vector<2x64xf32>
    %398 = arith.mulf %382, %390 : vector<2x64xf32>
    %399 = arith.addf %397, %398 : vector<2x64xf32>
    %400 = math.tanh %399 : vector<2x64xf32>
    %401 = arith.mulf %396, %400 : vector<2x64xf32>
    %cst_102 = arith.constant 0.000000e+00 : f32
    %402 = vector.broadcast %cst_102 : f32 to vector<2x64xf32>
    %403 = arith.cmpf ogt, %401, %402 : vector<2x64xf32>
    %cst_103 = arith.constant 1.000000e-01 : f32
    %404 = vector.broadcast %cst_103 : f32 to vector<2x64xf32>
    %405 = arith.mulf %404, %401 : vector<2x64xf32>
    %406 = arith.select %403, %401, %405 : vector<2x64xi1>, vector<2x64xf32>
    %c5_104 = arith.constant 5 : index
    %c0_105 = arith.constant 0 : index
    %c0_106 = arith.constant 0 : index
    %407 = vector.load %arg6[%c5_104, %c0_105, %c0_106] : memref<20x2x64xf32, #tpu.memory_space<vmem>>, vector<1x2x64xf32>
    %408 = vector.shape_cast %407 : vector<1x2x64xf32> to vector<2x64xf32>
    %409 = vector.shape_cast %406 : vector<2x64xf32> to vector<1x2x64xf32>
    tpu.vector_store %arg6[%c5_104, %c0_105, %c0_106], %409 {strides = array<i32>} : memref<20x2x64xf32, #tpu.memory_space<vmem>>, vector<1x2x64xf32>,
    %c6 = arith.constant 6 : index
    %c0_107 = arith.constant 0 : index
    %c0_108 = arith.constant 0 : index
    %410 = vector.load %arg1[%c6, %c0_107, %c0_108] : memref<20x2x512xf32, #tpu.memory_space<vmem>>, vector<1x2x512xf32>
    %411 = vector.shape_cast %410 : vector<1x2x512xf32> to vector<2x512xf32>
    %cst_109 = arith.constant dense<0.000000e+00> : vector<2x512xf32>
    %412 = tpu.matmul %371, %0, %cst_109 {dimension_numbers = #tpu.dot_dimension_numbers<[1], [0], [0], [1], [0, 0, 1, 1], [], []>} : vector<2x128xf32>, vector<128x512xf32>, vector<2x512xf32> -> vector<2x512xf32>
    %413 = arith.addf %411, %412 : vector<2x512xf32>
    %414 = vector.extract_strided_slice %413 {offsets = [0, 0], sizes = [2, 128], strides = [1, 1]} : vector<2x512xf32> to vector<2x128xf32>
    %415 = arith.negf %414 : vector<2x128xf32>
    %416 = math.exp %415 : vector<2x128xf32>
    %cst_110 = arith.constant 1.000000e+00 : f32
    %417 = vector.broadcast %cst_110 : f32 to vector<2x128xf32>
    %418 = arith.addf %417, %416 : vector<2x128xf32>
    %419 = arith.divf %417, %418 : vector<2x128xf32>
    %420 = vector.extract_strided_slice %413 {offsets = [0, 128], sizes = [2, 128], strides = [1, 1]} : vector<2x512xf32> to vector<2x128xf32>
    %421 = arith.negf %420 : vector<2x128xf32>
    %422 = math.exp %421 : vector<2x128xf32>
    %cst_111 = arith.constant 1.000000e+00 : f32
    %423 = vector.broadcast %cst_111 : f32 to vector<2x128xf32>
    %424 = arith.addf %423, %422 : vector<2x128xf32>
    %425 = arith.divf %423, %424 : vector<2x128xf32>
    %426 = vector.extract_strided_slice %413 {offsets = [0, 256], sizes = [2, 128], strides = [1, 1]} : vector<2x512xf32> to vector<2x128xf32>
    %427 = math.tanh %426 : vector<2x128xf32>
    %428 = vector.extract_strided_slice %413 {offsets = [0, 384], sizes = [2, 128], strides = [1, 1]} : vector<2x512xf32> to vector<2x128xf32>
    %429 = arith.negf %428 : vector<2x128xf32>
    %430 = math.exp %429 : vector<2x128xf32>
    %cst_112 = arith.constant 1.000000e+00 : f32
    %431 = vector.broadcast %cst_112 : f32 to vector<2x128xf32>
    %432 = arith.addf %431, %430 : vector<2x128xf32>
    %433 = arith.divf %431, %432 : vector<2x128xf32>
    %434 = arith.mulf %425, %369 : vector<2x128xf32>
    %435 = arith.mulf %419, %427 : vector<2x128xf32>
    %436 = arith.addf %434, %435 : vector<2x128xf32>
    %437 = math.tanh %436 : vector<2x128xf32>
    %438 = arith.mulf %433, %437 : vector<2x128xf32>
    %cst_113 = arith.constant dense<0.000000e+00> : vector<2x256xf32>
    %439 = tpu.matmul %438, %1, %cst_113 {dimension_numbers = #tpu.dot_dimension_numbers<[1], [0], [0], [1], [0, 0, 1, 1], [], []>} : vector<2x128xf32>, vector<128x256xf32>, vector<2x256xf32> -> vector<2x256xf32>
    %cst_114 = arith.constant dense<0.000000e+00> : vector<2x256xf32>
    %440 = tpu.matmul %401, %2, %cst_114 {dimension_numbers = #tpu.dot_dimension_numbers<[1], [0], [0], [1], [0, 0, 1, 1], [], []>} : vector<2x64xf32>, vector<64x256xf32>, vector<2x256xf32> -> vector<2x256xf32>
    %441 = arith.addf %439, %440 : vector<2x256xf32>
    %442 = vector.broadcast %3 : vector<1x256xf32> to vector<2x256xf32>
    %443 = arith.addf %441, %442 : vector<2x256xf32>
    %444 = vector.extract_strided_slice %443 {offsets = [0, 0], sizes = [2, 64], strides = [1, 1]} : vector<2x256xf32> to vector<2x64xf32>
    %445 = arith.negf %444 : vector<2x64xf32>
    %446 = math.exp %445 : vector<2x64xf32>
    %cst_115 = arith.constant 1.000000e+00 : f32
    %447 = vector.broadcast %cst_115 : f32 to vector<2x64xf32>
    %448 = arith.addf %447, %446 : vector<2x64xf32>
    %449 = arith.divf %447, %448 : vector<2x64xf32>
    %450 = vector.extract_strided_slice %443 {offsets = [0, 64], sizes = [2, 64], strides = [1, 1]} : vector<2x256xf32> to vector<2x64xf32>
    %451 = arith.negf %450 : vector<2x64xf32>
    %452 = math.exp %451 : vector<2x64xf32>
    %cst_116 = arith.constant 1.000000e+00 : f32
    %453 = vector.broadcast %cst_116 : f32 to vector<2x64xf32>
    %454 = arith.addf %453, %452 : vector<2x64xf32>
    %455 = arith.divf %453, %454 : vector<2x64xf32>
    %456 = vector.extract_strided_slice %443 {offsets = [0, 128], sizes = [2, 64], strides = [1, 1]} : vector<2x256xf32> to vector<2x64xf32>
    %457 = math.tanh %456 : vector<2x64xf32>
    %458 = vector.extract_strided_slice %443 {offsets = [0, 192], sizes = [2, 64], strides = [1, 1]} : vector<2x256xf32> to vector<2x64xf32>
    %459 = arith.negf %458 : vector<2x64xf32>
    %460 = math.exp %459 : vector<2x64xf32>
    %cst_117 = arith.constant 1.000000e+00 : f32
    %461 = vector.broadcast %cst_117 : f32 to vector<2x64xf32>
    %462 = arith.addf %461, %460 : vector<2x64xf32>
    %463 = arith.divf %461, %462 : vector<2x64xf32>
    %464 = arith.mulf %455, %399 : vector<2x64xf32>
    %465 = arith.mulf %449, %457 : vector<2x64xf32>
    %466 = arith.addf %464, %465 : vector<2x64xf32>
    %467 = math.tanh %466 : vector<2x64xf32>
    %468 = arith.mulf %463, %467 : vector<2x64xf32>
    %cst_118 = arith.constant 0.000000e+00 : f32
    %469 = vector.broadcast %cst_118 : f32 to vector<2x64xf32>
    %470 = arith.cmpf ogt, %468, %469 : vector<2x64xf32>
    %cst_119 = arith.constant 1.000000e-01 : f32
    %471 = vector.broadcast %cst_119 : f32 to vector<2x64xf32>
    %472 = arith.mulf %471, %468 : vector<2x64xf32>
    %473 = arith.select %470, %468, %472 : vector<2x64xi1>, vector<2x64xf32>
    %c6_120 = arith.constant 6 : index
    %c0_121 = arith.constant 0 : index
    %c0_122 = arith.constant 0 : index
    %474 = vector.load %arg6[%c6_120, %c0_121, %c0_122] : memref<20x2x64xf32, #tpu.memory_space<vmem>>, vector<1x2x64xf32>
    %475 = vector.shape_cast %474 : vector<1x2x64xf32> to vector<2x64xf32>
    %476 = vector.shape_cast %473 : vector<2x64xf32> to vector<1x2x64xf32>
    tpu.vector_store %arg6[%c6_120, %c0_121, %c0_122], %476 {strides = array<i32>} : memref<20x2x64xf32, #tpu.memory_space<vmem>>, vector<1x2x64xf32>,
    %c7 = arith.constant 7 : index
    %c0_123 = arith.constant 0 : index
    %c0_124 = arith.constant 0 : index
    %477 = vector.load %arg1[%c7, %c0_123, %c0_124] : memref<20x2x512xf32, #tpu.memory_space<vmem>>, vector<1x2x512xf32>
    %478 = vector.shape_cast %477 : vector<1x2x512xf32> to vector<2x512xf32>
    %cst_125 = arith.constant dense<0.000000e+00> : vector<2x512xf32>
    %479 = tpu.matmul %438, %0, %cst_125 {dimension_numbers = #tpu.dot_dimension_numbers<[1], [0], [0], [1], [0, 0, 1, 1], [], []>} : vector<2x128xf32>, vector<128x512xf32>, vector<2x512xf32> -> vector<2x512xf32>
    %480 = arith.addf %478, %479 : vector<2x512xf32>
    %481 = vector.extract_strided_slice %480 {offsets = [0, 0], sizes = [2, 128], strides = [1, 1]} : vector<2x512xf32> to vector<2x128xf32>
    %482 = arith.negf %481 : vector<2x128xf32>
    %483 = math.exp %482 : vector<2x128xf32>
    %cst_126 = arith.constant 1.000000e+00 : f32
    %484 = vector.broadcast %cst_126 : f32 to vector<2x128xf32>
    %485 = arith.addf %484, %483 : vector<2x128xf32>
    %486 = arith.divf %484, %485 : vector<2x128xf32>
    %487 = vector.extract_strided_slice %480 {offsets = [0, 128], sizes = [2, 128], strides = [1, 1]} : vector<2x512xf32> to vector<2x128xf32>
    %488 = arith.negf %487 : vector<2x128xf32>
    %489 = math.exp %488 : vector<2x128xf32>
    %cst_127 = arith.constant 1.000000e+00 : f32
    %490 = vector.broadcast %cst_127 : f32 to vector<2x128xf32>
    %491 = arith.addf %490, %489 : vector<2x128xf32>
    %492 = arith.divf %490, %491 : vector<2x128xf32>
    %493 = vector.extract_strided_slice %480 {offsets = [0, 256], sizes = [2, 128], strides = [1, 1]} : vector<2x512xf32> to vector<2x128xf32>
    %494 = math.tanh %493 : vector<2x128xf32>
    %495 = vector.extract_strided_slice %480 {offsets = [0, 384], sizes = [2, 128], strides = [1, 1]} : vector<2x512xf32> to vector<2x128xf32>
    %496 = arith.negf %495 : vector<2x128xf32>
    %497 = math.exp %496 : vector<2x128xf32>
    %cst_128 = arith.constant 1.000000e+00 : f32
    %498 = vector.broadcast %cst_128 : f32 to vector<2x128xf32>
    %499 = arith.addf %498, %497 : vector<2x128xf32>
    %500 = arith.divf %498, %499 : vector<2x128xf32>
    %501 = arith.mulf %492, %436 : vector<2x128xf32>
    %502 = arith.mulf %486, %494 : vector<2x128xf32>
    %503 = arith.addf %501, %502 : vector<2x128xf32>
    %504 = math.tanh %503 : vector<2x128xf32>
    %505 = arith.mulf %500, %504 : vector<2x128xf32>
    %cst_129 = arith.constant dense<0.000000e+00> : vector<2x256xf32>
    %506 = tpu.matmul %505, %1, %cst_129 {dimension_numbers = #tpu.dot_dimension_numbers<[1], [0], [0], [1], [0, 0, 1, 1], [], []>} : vector<2x128xf32>, vector<128x256xf32>, vector<2x256xf32> -> vector<2x256xf32>
    %cst_130 = arith.constant dense<0.000000e+00> : vector<2x256xf32>
    %507 = tpu.matmul %468, %2, %cst_130 {dimension_numbers = #tpu.dot_dimension_numbers<[1], [0], [0], [1], [0, 0, 1, 1], [], []>} : vector<2x64xf32>, vector<64x256xf32>, vector<2x256xf32> -> vector<2x256xf32>
    %508 = arith.addf %506, %507 : vector<2x256xf32>
    %509 = vector.broadcast %3 : vector<1x256xf32> to vector<2x256xf32>
    %510 = arith.addf %508, %509 : vector<2x256xf32>
    %511 = vector.extract_strided_slice %510 {offsets = [0, 0], sizes = [2, 64], strides = [1, 1]} : vector<2x256xf32> to vector<2x64xf32>
    %512 = arith.negf %511 : vector<2x64xf32>
    %513 = math.exp %512 : vector<2x64xf32>
    %cst_131 = arith.constant 1.000000e+00 : f32
    %514 = vector.broadcast %cst_131 : f32 to vector<2x64xf32>
    %515 = arith.addf %514, %513 : vector<2x64xf32>
    %516 = arith.divf %514, %515 : vector<2x64xf32>
    %517 = vector.extract_strided_slice %510 {offsets = [0, 64], sizes = [2, 64], strides = [1, 1]} : vector<2x256xf32> to vector<2x64xf32>
    %518 = arith.negf %517 : vector<2x64xf32>
    %519 = math.exp %518 : vector<2x64xf32>
    %cst_132 = arith.constant 1.000000e+00 : f32
    %520 = vector.broadcast %cst_132 : f32 to vector<2x64xf32>
    %521 = arith.addf %520, %519 : vector<2x64xf32>
    %522 = arith.divf %520, %521 : vector<2x64xf32>
    %523 = vector.extract_strided_slice %510 {offsets = [0, 128], sizes = [2, 64], strides = [1, 1]} : vector<2x256xf32> to vector<2x64xf32>
    %524 = math.tanh %523 : vector<2x64xf32>
    %525 = vector.extract_strided_slice %510 {offsets = [0, 192], sizes = [2, 64], strides = [1, 1]} : vector<2x256xf32> to vector<2x64xf32>
    %526 = arith.negf %525 : vector<2x64xf32>
    %527 = math.exp %526 : vector<2x64xf32>
    %cst_133 = arith.constant 1.000000e+00 : f32
    %528 = vector.broadcast %cst_133 : f32 to vector<2x64xf32>
    %529 = arith.addf %528, %527 : vector<2x64xf32>
    %530 = arith.divf %528, %529 : vector<2x64xf32>
    %531 = arith.mulf %522, %466 : vector<2x64xf32>
    %532 = arith.mulf %516, %524 : vector<2x64xf32>
    %533 = arith.addf %531, %532 : vector<2x64xf32>
    %534 = math.tanh %533 : vector<2x64xf32>
    %535 = arith.mulf %530, %534 : vector<2x64xf32>
    %cst_134 = arith.constant 0.000000e+00 : f32
    %536 = vector.broadcast %cst_134 : f32 to vector<2x64xf32>
    %537 = arith.cmpf ogt, %535, %536 : vector<2x64xf32>
    %cst_135 = arith.constant 1.000000e-01 : f32
    %538 = vector.broadcast %cst_135 : f32 to vector<2x64xf32>
    %539 = arith.mulf %538, %535 : vector<2x64xf32>
    %540 = arith.select %537, %535, %539 : vector<2x64xi1>, vector<2x64xf32>
    %c7_136 = arith.constant 7 : index
    %c0_137 = arith.constant 0 : index
    %c0_138 = arith.constant 0 : index
    %541 = vector.load %arg6[%c7_136, %c0_137, %c0_138] : memref<20x2x64xf32, #tpu.memory_space<vmem>>, vector<1x2x64xf32>
    %542 = vector.shape_cast %541 : vector<1x2x64xf32> to vector<2x64xf32>
    %543 = vector.shape_cast %540 : vector<2x64xf32> to vector<1x2x64xf32>
    tpu.vector_store %arg6[%c7_136, %c0_137, %c0_138], %543 {strides = array<i32>} : memref<20x2x64xf32, #tpu.memory_space<vmem>>, vector<1x2x64xf32>,
    %c8 = arith.constant 8 : index
    %c0_139 = arith.constant 0 : index
    %c0_140 = arith.constant 0 : index
    %544 = vector.load %arg1[%c8, %c0_139, %c0_140] : memref<20x2x512xf32, #tpu.memory_space<vmem>>, vector<1x2x512xf32>
    %545 = vector.shape_cast %544 : vector<1x2x512xf32> to vector<2x512xf32>
    %cst_141 = arith.constant dense<0.000000e+00> : vector<2x512xf32>
    %546 = tpu.matmul %505, %0, %cst_141 {dimension_numbers = #tpu.dot_dimension_numbers<[1], [0], [0], [1], [0, 0, 1, 1], [], []>} : vector<2x128xf32>, vector<128x512xf32>, vector<2x512xf32> -> vector<2x512xf32>
    %547 = arith.addf %545, %546 : vector<2x512xf32>
    %548 = vector.extract_strided_slice %547 {offsets = [0, 0], sizes = [2, 128], strides = [1, 1]} : vector<2x512xf32> to vector<2x128xf32>
    %549 = arith.negf %548 : vector<2x128xf32>
    %550 = math.exp %549 : vector<2x128xf32>
    %cst_142 = arith.constant 1.000000e+00 : f32
    %551 = vector.broadcast %cst_142 : f32 to vector<2x128xf32>
    %552 = arith.addf %551, %550 : vector<2x128xf32>
    %553 = arith.divf %551, %552 : vector<2x128xf32>
    %554 = vector.extract_strided_slice %547 {offsets = [0, 128], sizes = [2, 128], strides = [1, 1]} : vector<2x512xf32> to vector<2x128xf32>
    %555 = arith.negf %554 : vector<2x128xf32>
    %556 = math.exp %555 : vector<2x128xf32>
    %cst_143 = arith.constant 1.000000e+00 : f32
    %557 = vector.broadcast %cst_143 : f32 to vector<2x128xf32>
    %558 = arith.addf %557, %556 : vector<2x128xf32>
    %559 = arith.divf %557, %558 : vector<2x128xf32>
    %560 = vector.extract_strided_slice %547 {offsets = [0, 256], sizes = [2, 128], strides = [1, 1]} : vector<2x512xf32> to vector<2x128xf32>
    %561 = math.tanh %560 : vector<2x128xf32>
    %562 = vector.extract_strided_slice %547 {offsets = [0, 384], sizes = [2, 128], strides = [1, 1]} : vector<2x512xf32> to vector<2x128xf32>
    %563 = arith.negf %562 : vector<2x128xf32>
    %564 = math.exp %563 : vector<2x128xf32>
    %cst_144 = arith.constant 1.000000e+00 : f32
    %565 = vector.broadcast %cst_144 : f32 to vector<2x128xf32>
    %566 = arith.addf %565, %564 : vector<2x128xf32>
    %567 = arith.divf %565, %566 : vector<2x128xf32>
    %568 = arith.mulf %559, %503 : vector<2x128xf32>
    %569 = arith.mulf %553, %561 : vector<2x128xf32>
    %570 = arith.addf %568, %569 : vector<2x128xf32>
    %571 = math.tanh %570 : vector<2x128xf32>
    %572 = arith.mulf %567, %571 : vector<2x128xf32>
    %cst_145 = arith.constant dense<0.000000e+00> : vector<2x256xf32>
    %573 = tpu.matmul %572, %1, %cst_145 {dimension_numbers = #tpu.dot_dimension_numbers<[1], [0], [0], [1], [0, 0, 1, 1], [], []>} : vector<2x128xf32>, vector<128x256xf32>, vector<2x256xf32> -> vector<2x256xf32>
    %cst_146 = arith.constant dense<0.000000e+00> : vector<2x256xf32>
    %574 = tpu.matmul %535, %2, %cst_146 {dimension_numbers = #tpu.dot_dimension_numbers<[1], [0], [0], [1], [0, 0, 1, 1], [], []>} : vector<2x64xf32>, vector<64x256xf32>, vector<2x256xf32> -> vector<2x256xf32>
    %575 = arith.addf %573, %574 : vector<2x256xf32>
    %576 = vector.broadcast %3 : vector<1x256xf32> to vector<2x256xf32>
    %577 = arith.addf %575, %576 : vector<2x256xf32>
    %578 = vector.extract_strided_slice %577 {offsets = [0, 0], sizes = [2, 64], strides = [1, 1]} : vector<2x256xf32> to vector<2x64xf32>
    %579 = arith.negf %578 : vector<2x64xf32>
    %580 = math.exp %579 : vector<2x64xf32>
    %cst_147 = arith.constant 1.000000e+00 : f32
    %581 = vector.broadcast %cst_147 : f32 to vector<2x64xf32>
    %582 = arith.addf %581, %580 : vector<2x64xf32>
    %583 = arith.divf %581, %582 : vector<2x64xf32>
    %584 = vector.extract_strided_slice %577 {offsets = [0, 64], sizes = [2, 64], strides = [1, 1]} : vector<2x256xf32> to vector<2x64xf32>
    %585 = arith.negf %584 : vector<2x64xf32>
    %586 = math.exp %585 : vector<2x64xf32>
    %cst_148 = arith.constant 1.000000e+00 : f32
    %587 = vector.broadcast %cst_148 : f32 to vector<2x64xf32>
    %588 = arith.addf %587, %586 : vector<2x64xf32>
    %589 = arith.divf %587, %588 : vector<2x64xf32>
    %590 = vector.extract_strided_slice %577 {offsets = [0, 128], sizes = [2, 64], strides = [1, 1]} : vector<2x256xf32> to vector<2x64xf32>
    %591 = math.tanh %590 : vector<2x64xf32>
    %592 = vector.extract_strided_slice %577 {offsets = [0, 192], sizes = [2, 64], strides = [1, 1]} : vector<2x256xf32> to vector<2x64xf32>
    %593 = arith.negf %592 : vector<2x64xf32>
    %594 = math.exp %593 : vector<2x64xf32>
    %cst_149 = arith.constant 1.000000e+00 : f32
    %595 = vector.broadcast %cst_149 : f32 to vector<2x64xf32>
    %596 = arith.addf %595, %594 : vector<2x64xf32>
    %597 = arith.divf %595, %596 : vector<2x64xf32>
    %598 = arith.mulf %589, %533 : vector<2x64xf32>
    %599 = arith.mulf %583, %591 : vector<2x64xf32>
    %600 = arith.addf %598, %599 : vector<2x64xf32>
    %601 = math.tanh %600 : vector<2x64xf32>
    %602 = arith.mulf %597, %601 : vector<2x64xf32>
    %cst_150 = arith.constant 0.000000e+00 : f32
    %603 = vector.broadcast %cst_150 : f32 to vector<2x64xf32>
    %604 = arith.cmpf ogt, %602, %603 : vector<2x64xf32>
    %cst_151 = arith.constant 1.000000e-01 : f32
    %605 = vector.broadcast %cst_151 : f32 to vector<2x64xf32>
    %606 = arith.mulf %605, %602 : vector<2x64xf32>
    %607 = arith.select %604, %602, %606 : vector<2x64xi1>, vector<2x64xf32>
    %c8_152 = arith.constant 8 : index
    %c0_153 = arith.constant 0 : index
    %c0_154 = arith.constant 0 : index
    %608 = vector.load %arg6[%c8_152, %c0_153, %c0_154] : memref<20x2x64xf32, #tpu.memory_space<vmem>>, vector<1x2x64xf32>
    %609 = vector.shape_cast %608 : vector<1x2x64xf32> to vector<2x64xf32>
    %610 = vector.shape_cast %607 : vector<2x64xf32> to vector<1x2x64xf32>
    tpu.vector_store %arg6[%c8_152, %c0_153, %c0_154], %610 {strides = array<i32>} : memref<20x2x64xf32, #tpu.memory_space<vmem>>, vector<1x2x64xf32>,
    %c9 = arith.constant 9 : index
    %c0_155 = arith.constant 0 : index
    %c0_156 = arith.constant 0 : index
    %611 = vector.load %arg1[%c9, %c0_155, %c0_156] : memref<20x2x512xf32, #tpu.memory_space<vmem>>, vector<1x2x512xf32>
    %612 = vector.shape_cast %611 : vector<1x2x512xf32> to vector<2x512xf32>
    %cst_157 = arith.constant dense<0.000000e+00> : vector<2x512xf32>
    %613 = tpu.matmul %572, %0, %cst_157 {dimension_numbers = #tpu.dot_dimension_numbers<[1], [0], [0], [1], [0, 0, 1, 1], [], []>} : vector<2x128xf32>, vector<128x512xf32>, vector<2x512xf32> -> vector<2x512xf32>
    %614 = arith.addf %612, %613 : vector<2x512xf32>
    %615 = vector.extract_strided_slice %614 {offsets = [0, 0], sizes = [2, 128], strides = [1, 1]} : vector<2x512xf32> to vector<2x128xf32>
    %616 = arith.negf %615 : vector<2x128xf32>
    %617 = math.exp %616 : vector<2x128xf32>
    %cst_158 = arith.constant 1.000000e+00 : f32
    %618 = vector.broadcast %cst_158 : f32 to vector<2x128xf32>
    %619 = arith.addf %618, %617 : vector<2x128xf32>
    %620 = arith.divf %618, %619 : vector<2x128xf32>
    %621 = vector.extract_strided_slice %614 {offsets = [0, 128], sizes = [2, 128], strides = [1, 1]} : vector<2x512xf32> to vector<2x128xf32>
    %622 = arith.negf %621 : vector<2x128xf32>
    %623 = math.exp %622 : vector<2x128xf32>
    %cst_159 = arith.constant 1.000000e+00 : f32
    %624 = vector.broadcast %cst_159 : f32 to vector<2x128xf32>
    %625 = arith.addf %624, %623 : vector<2x128xf32>
    %626 = arith.divf %624, %625 : vector<2x128xf32>
    %627 = vector.extract_strided_slice %614 {offsets = [0, 256], sizes = [2, 128], strides = [1, 1]} : vector<2x512xf32> to vector<2x128xf32>
    %628 = math.tanh %627 : vector<2x128xf32>
    %629 = vector.extract_strided_slice %614 {offsets = [0, 384], sizes = [2, 128], strides = [1, 1]} : vector<2x512xf32> to vector<2x128xf32>
    %630 = arith.negf %629 : vector<2x128xf32>
    %631 = math.exp %630 : vector<2x128xf32>
    %cst_160 = arith.constant 1.000000e+00 : f32
    %632 = vector.broadcast %cst_160 : f32 to vector<2x128xf32>
    %633 = arith.addf %632, %631 : vector<2x128xf32>
    %634 = arith.divf %632, %633 : vector<2x128xf32>
    %635 = arith.mulf %626, %570 : vector<2x128xf32>
    %636 = arith.mulf %620, %628 : vector<2x128xf32>
    %637 = arith.addf %635, %636 : vector<2x128xf32>
    %638 = math.tanh %637 : vector<2x128xf32>
    %639 = arith.mulf %634, %638 : vector<2x128xf32>
    %cst_161 = arith.constant dense<0.000000e+00> : vector<2x256xf32>
    %640 = tpu.matmul %639, %1, %cst_161 {dimension_numbers = #tpu.dot_dimension_numbers<[1], [0], [0], [1], [0, 0, 1, 1], [], []>} : vector<2x128xf32>, vector<128x256xf32>, vector<2x256xf32> -> vector<2x256xf32>
    %cst_162 = arith.constant dense<0.000000e+00> : vector<2x256xf32>
    %641 = tpu.matmul %602, %2, %cst_162 {dimension_numbers = #tpu.dot_dimension_numbers<[1], [0], [0], [1], [0, 0, 1, 1], [], []>} : vector<2x64xf32>, vector<64x256xf32>, vector<2x256xf32> -> vector<2x256xf32>
    %642 = arith.addf %640, %641 : vector<2x256xf32>
    %643 = vector.broadcast %3 : vector<1x256xf32> to vector<2x256xf32>
    %644 = arith.addf %642, %643 : vector<2x256xf32>
    %645 = vector.extract_strided_slice %644 {offsets = [0, 0], sizes = [2, 64], strides = [1, 1]} : vector<2x256xf32> to vector<2x64xf32>
    %646 = arith.negf %645 : vector<2x64xf32>
    %647 = math.exp %646 : vector<2x64xf32>
    %cst_163 = arith.constant 1.000000e+00 : f32
    %648 = vector.broadcast %cst_163 : f32 to vector<2x64xf32>
    %649 = arith.addf %648, %647 : vector<2x64xf32>
    %650 = arith.divf %648, %649 : vector<2x64xf32>
    %651 = vector.extract_strided_slice %644 {offsets = [0, 64], sizes = [2, 64], strides = [1, 1]} : vector<2x256xf32> to vector<2x64xf32>
    %652 = arith.negf %651 : vector<2x64xf32>
    %653 = math.exp %652 : vector<2x64xf32>
    %cst_164 = arith.constant 1.000000e+00 : f32
    %654 = vector.broadcast %cst_164 : f32 to vector<2x64xf32>
    %655 = arith.addf %654, %653 : vector<2x64xf32>
    %656 = arith.divf %654, %655 : vector<2x64xf32>
    %657 = vector.extract_strided_slice %644 {offsets = [0, 128], sizes = [2, 64], strides = [1, 1]} : vector<2x256xf32> to vector<2x64xf32>
    %658 = math.tanh %657 : vector<2x64xf32>
    %659 = vector.extract_strided_slice %644 {offsets = [0, 192], sizes = [2, 64], strides = [1, 1]} : vector<2x256xf32> to vector<2x64xf32>
    %660 = arith.negf %659 : vector<2x64xf32>
    %661 = math.exp %660 : vector<2x64xf32>
    %cst_165 = arith.constant 1.000000e+00 : f32
    %662 = vector.broadcast %cst_165 : f32 to vector<2x64xf32>
    %663 = arith.addf %662, %661 : vector<2x64xf32>
    %664 = arith.divf %662, %663 : vector<2x64xf32>
    %665 = arith.mulf %656, %600 : vector<2x64xf32>
    %666 = arith.mulf %650, %658 : vector<2x64xf32>
    %667 = arith.addf %665, %666 : vector<2x64xf32>
    %668 = math.tanh %667 : vector<2x64xf32>
    %669 = arith.mulf %664, %668 : vector<2x64xf32>
    %cst_166 = arith.constant 0.000000e+00 : f32
    %670 = vector.broadcast %cst_166 : f32 to vector<2x64xf32>
    %671 = arith.cmpf ogt, %669, %670 : vector<2x64xf32>
    %cst_167 = arith.constant 1.000000e-01 : f32
    %672 = vector.broadcast %cst_167 : f32 to vector<2x64xf32>
    %673 = arith.mulf %672, %669 : vector<2x64xf32>
    %674 = arith.select %671, %669, %673 : vector<2x64xi1>, vector<2x64xf32>
    %c9_168 = arith.constant 9 : index
    %c0_169 = arith.constant 0 : index
    %c0_170 = arith.constant 0 : index
    %675 = vector.load %arg6[%c9_168, %c0_169, %c0_170] : memref<20x2x64xf32, #tpu.memory_space<vmem>>, vector<1x2x64xf32>
    %676 = vector.shape_cast %675 : vector<1x2x64xf32> to vector<2x64xf32>
    %677 = vector.shape_cast %674 : vector<2x64xf32> to vector<1x2x64xf32>
    tpu.vector_store %arg6[%c9_168, %c0_169, %c0_170], %677 {strides = array<i32>} : memref<20x2x64xf32, #tpu.memory_space<vmem>>, vector<1x2x64xf32>,
    %c10 = arith.constant 10 : index
    %c0_171 = arith.constant 0 : index
    %c0_172 = arith.constant 0 : index
    %678 = vector.load %arg1[%c10, %c0_171, %c0_172] : memref<20x2x512xf32, #tpu.memory_space<vmem>>, vector<1x2x512xf32>
    %679 = vector.shape_cast %678 : vector<1x2x512xf32> to vector<2x512xf32>
    %cst_173 = arith.constant dense<0.000000e+00> : vector<2x512xf32>
    %680 = tpu.matmul %639, %0, %cst_173 {dimension_numbers = #tpu.dot_dimension_numbers<[1], [0], [0], [1], [0, 0, 1, 1], [], []>} : vector<2x128xf32>, vector<128x512xf32>, vector<2x512xf32> -> vector<2x512xf32>
    %681 = arith.addf %679, %680 : vector<2x512xf32>
    %682 = vector.extract_strided_slice %681 {offsets = [0, 0], sizes = [2, 128], strides = [1, 1]} : vector<2x512xf32> to vector<2x128xf32>
    %683 = arith.negf %682 : vector<2x128xf32>
    %684 = math.exp %683 : vector<2x128xf32>
    %cst_174 = arith.constant 1.000000e+00 : f32
    %685 = vector.broadcast %cst_174 : f32 to vector<2x128xf32>
    %686 = arith.addf %685, %684 : vector<2x128xf32>
    %687 = arith.divf %685, %686 : vector<2x128xf32>
    %688 = vector.extract_strided_slice %681 {offsets = [0, 128], sizes = [2, 128], strides = [1, 1]} : vector<2x512xf32> to vector<2x128xf32>
    %689 = arith.negf %688 : vector<2x128xf32>
    %690 = math.exp %689 : vector<2x128xf32>
    %cst_175 = arith.constant 1.000000e+00 : f32
    %691 = vector.broadcast %cst_175 : f32 to vector<2x128xf32>
    %692 = arith.addf %691, %690 : vector<2x128xf32>
    %693 = arith.divf %691, %692 : vector<2x128xf32>
    %694 = vector.extract_strided_slice %681 {offsets = [0, 256], sizes = [2, 128], strides = [1, 1]} : vector<2x512xf32> to vector<2x128xf32>
    %695 = math.tanh %694 : vector<2x128xf32>
    %696 = vector.extract_strided_slice %681 {offsets = [0, 384], sizes = [2, 128], strides = [1, 1]} : vector<2x512xf32> to vector<2x128xf32>
    %697 = arith.negf %696 : vector<2x128xf32>
    %698 = math.exp %697 : vector<2x128xf32>
    %cst_176 = arith.constant 1.000000e+00 : f32
    %699 = vector.broadcast %cst_176 : f32 to vector<2x128xf32>
    %700 = arith.addf %699, %698 : vector<2x128xf32>
    %701 = arith.divf %699, %700 : vector<2x128xf32>
    %702 = arith.mulf %693, %637 : vector<2x128xf32>
    %703 = arith.mulf %687, %695 : vector<2x128xf32>
    %704 = arith.addf %702, %703 : vector<2x128xf32>
    %705 = math.tanh %704 : vector<2x128xf32>
    %706 = arith.mulf %701, %705 : vector<2x128xf32>
    %cst_177 = arith.constant dense<0.000000e+00> : vector<2x256xf32>
    %707 = tpu.matmul %706, %1, %cst_177 {dimension_numbers = #tpu.dot_dimension_numbers<[1], [0], [0], [1], [0, 0, 1, 1], [], []>} : vector<2x128xf32>, vector<128x256xf32>, vector<2x256xf32> -> vector<2x256xf32>
    %cst_178 = arith.constant dense<0.000000e+00> : vector<2x256xf32>
    %708 = tpu.matmul %669, %2, %cst_178 {dimension_numbers = #tpu.dot_dimension_numbers<[1], [0], [0], [1], [0, 0, 1, 1], [], []>} : vector<2x64xf32>, vector<64x256xf32>, vector<2x256xf32> -> vector<2x256xf32>
    %709 = arith.addf %707, %708 : vector<2x256xf32>
    %710 = vector.broadcast %3 : vector<1x256xf32> to vector<2x256xf32>
    %711 = arith.addf %709, %710 : vector<2x256xf32>
    %712 = vector.extract_strided_slice %711 {offsets = [0, 0], sizes = [2, 64], strides = [1, 1]} : vector<2x256xf32> to vector<2x64xf32>
    %713 = arith.negf %712 : vector<2x64xf32>
    %714 = math.exp %713 : vector<2x64xf32>
    %cst_179 = arith.constant 1.000000e+00 : f32
    %715 = vector.broadcast %cst_179 : f32 to vector<2x64xf32>
    %716 = arith.addf %715, %714 : vector<2x64xf32>
    %717 = arith.divf %715, %716 : vector<2x64xf32>
    %718 = vector.extract_strided_slice %711 {offsets = [0, 64], sizes = [2, 64], strides = [1, 1]} : vector<2x256xf32> to vector<2x64xf32>
    %719 = arith.negf %718 : vector<2x64xf32>
    %720 = math.exp %719 : vector<2x64xf32>
    %cst_180 = arith.constant 1.000000e+00 : f32
    %721 = vector.broadcast %cst_180 : f32 to vector<2x64xf32>
    %722 = arith.addf %721, %720 : vector<2x64xf32>
    %723 = arith.divf %721, %722 : vector<2x64xf32>
    %724 = vector.extract_strided_slice %711 {offsets = [0, 128], sizes = [2, 64], strides = [1, 1]} : vector<2x256xf32> to vector<2x64xf32>
    %725 = math.tanh %724 : vector<2x64xf32>
    %726 = vector.extract_strided_slice %711 {offsets = [0, 192], sizes = [2, 64], strides = [1, 1]} : vector<2x256xf32> to vector<2x64xf32>
    %727 = arith.negf %726 : vector<2x64xf32>
    %728 = math.exp %727 : vector<2x64xf32>
    %cst_181 = arith.constant 1.000000e+00 : f32
    %729 = vector.broadcast %cst_181 : f32 to vector<2x64xf32>
    %730 = arith.addf %729, %728 : vector<2x64xf32>
    %731 = arith.divf %729, %730 : vector<2x64xf32>
    %732 = arith.mulf %723, %667 : vector<2x64xf32>
    %733 = arith.mulf %717, %725 : vector<2x64xf32>
    %734 = arith.addf %732, %733 : vector<2x64xf32>
    %735 = math.tanh %734 : vector<2x64xf32>
    %736 = arith.mulf %731, %735 : vector<2x64xf32>
    %cst_182 = arith.constant 0.000000e+00 : f32
    %737 = vector.broadcast %cst_182 : f32 to vector<2x64xf32>
    %738 = arith.cmpf ogt, %736, %737 : vector<2x64xf32>
    %cst_183 = arith.constant 1.000000e-01 : f32
    %739 = vector.broadcast %cst_183 : f32 to vector<2x64xf32>
    %740 = arith.mulf %739, %736 : vector<2x64xf32>
    %741 = arith.select %738, %736, %740 : vector<2x64xi1>, vector<2x64xf32>
    %c10_184 = arith.constant 10 : index
    %c0_185 = arith.constant 0 : index
    %c0_186 = arith.constant 0 : index
    %742 = vector.load %arg6[%c10_184, %c0_185, %c0_186] : memref<20x2x64xf32, #tpu.memory_space<vmem>>, vector<1x2x64xf32>
    %743 = vector.shape_cast %742 : vector<1x2x64xf32> to vector<2x64xf32>
    %744 = vector.shape_cast %741 : vector<2x64xf32> to vector<1x2x64xf32>
    tpu.vector_store %arg6[%c10_184, %c0_185, %c0_186], %744 {strides = array<i32>} : memref<20x2x64xf32, #tpu.memory_space<vmem>>, vector<1x2x64xf32>,
    %c11 = arith.constant 11 : index
    %c0_187 = arith.constant 0 : index
    %c0_188 = arith.constant 0 : index
    %745 = vector.load %arg1[%c11, %c0_187, %c0_188] : memref<20x2x512xf32, #tpu.memory_space<vmem>>, vector<1x2x512xf32>
    %746 = vector.shape_cast %745 : vector<1x2x512xf32> to vector<2x512xf32>
    %cst_189 = arith.constant dense<0.000000e+00> : vector<2x512xf32>
    %747 = tpu.matmul %706, %0, %cst_189 {dimension_numbers = #tpu.dot_dimension_numbers<[1], [0], [0], [1], [0, 0, 1, 1], [], []>} : vector<2x128xf32>, vector<128x512xf32>, vector<2x512xf32> -> vector<2x512xf32>
    %748 = arith.addf %746, %747 : vector<2x512xf32>
    %749 = vector.extract_strided_slice %748 {offsets = [0, 0], sizes = [2, 128], strides = [1, 1]} : vector<2x512xf32> to vector<2x128xf32>
    %750 = arith.negf %749 : vector<2x128xf32>
    %751 = math.exp %750 : vector<2x128xf32>
    %cst_190 = arith.constant 1.000000e+00 : f32
    %752 = vector.broadcast %cst_190 : f32 to vector<2x128xf32>
    %753 = arith.addf %752, %751 : vector<2x128xf32>
    %754 = arith.divf %752, %753 : vector<2x128xf32>
    %755 = vector.extract_strided_slice %748 {offsets = [0, 128], sizes = [2, 128], strides = [1, 1]} : vector<2x512xf32> to vector<2x128xf32>
    %756 = arith.negf %755 : vector<2x128xf32>
    %757 = math.exp %756 : vector<2x128xf32>
    %cst_191 = arith.constant 1.000000e+00 : f32
    %758 = vector.broadcast %cst_191 : f32 to vector<2x128xf32>
    %759 = arith.addf %758, %757 : vector<2x128xf32>
    %760 = arith.divf %758, %759 : vector<2x128xf32>
    %761 = vector.extract_strided_slice %748 {offsets = [0, 256], sizes = [2, 128], strides = [1, 1]} : vector<2x512xf32> to vector<2x128xf32>
    %762 = math.tanh %761 : vector<2x128xf32>
    %763 = vector.extract_strided_slice %748 {offsets = [0, 384], sizes = [2, 128], strides = [1, 1]} : vector<2x512xf32> to vector<2x128xf32>
    %764 = arith.negf %763 : vector<2x128xf32>
    %765 = math.exp %764 : vector<2x128xf32>
    %cst_192 = arith.constant 1.000000e+00 : f32
    %766 = vector.broadcast %cst_192 : f32 to vector<2x128xf32>
    %767 = arith.addf %766, %765 : vector<2x128xf32>
    %768 = arith.divf %766, %767 : vector<2x128xf32>
    %769 = arith.mulf %760, %704 : vector<2x128xf32>
    %770 = arith.mulf %754, %762 : vector<2x128xf32>
    %771 = arith.addf %769, %770 : vector<2x128xf32>
    %772 = math.tanh %771 : vector<2x128xf32>
    %773 = arith.mulf %768, %772 : vector<2x128xf32>
    %cst_193 = arith.constant dense<0.000000e+00> : vector<2x256xf32>
    %774 = tpu.matmul %773, %1, %cst_193 {dimension_numbers = #tpu.dot_dimension_numbers<[1], [0], [0], [1], [0, 0, 1, 1], [], []>} : vector<2x128xf32>, vector<128x256xf32>, vector<2x256xf32> -> vector<2x256xf32>
    %cst_194 = arith.constant dense<0.000000e+00> : vector<2x256xf32>
    %775 = tpu.matmul %736, %2, %cst_194 {dimension_numbers = #tpu.dot_dimension_numbers<[1], [0], [0], [1], [0, 0, 1, 1], [], []>} : vector<2x64xf32>, vector<64x256xf32>, vector<2x256xf32> -> vector<2x256xf32>
    %776 = arith.addf %774, %775 : vector<2x256xf32>
    %777 = vector.broadcast %3 : vector<1x256xf32> to vector<2x256xf32>
    %778 = arith.addf %776, %777 : vector<2x256xf32>
    %779 = vector.extract_strided_slice %778 {offsets = [0, 0], sizes = [2, 64], strides = [1, 1]} : vector<2x256xf32> to vector<2x64xf32>
    %780 = arith.negf %779 : vector<2x64xf32>
    %781 = math.exp %780 : vector<2x64xf32>
    %cst_195 = arith.constant 1.000000e+00 : f32
    %782 = vector.broadcast %cst_195 : f32 to vector<2x64xf32>
    %783 = arith.addf %782, %781 : vector<2x64xf32>
    %784 = arith.divf %782, %783 : vector<2x64xf32>
    %785 = vector.extract_strided_slice %778 {offsets = [0, 64], sizes = [2, 64], strides = [1, 1]} : vector<2x256xf32> to vector<2x64xf32>
    %786 = arith.negf %785 : vector<2x64xf32>
    %787 = math.exp %786 : vector<2x64xf32>
    %cst_196 = arith.constant 1.000000e+00 : f32
    %788 = vector.broadcast %cst_196 : f32 to vector<2x64xf32>
    %789 = arith.addf %788, %787 : vector<2x64xf32>
    %790 = arith.divf %788, %789 : vector<2x64xf32>
    %791 = vector.extract_strided_slice %778 {offsets = [0, 128], sizes = [2, 64], strides = [1, 1]} : vector<2x256xf32> to vector<2x64xf32>
    %792 = math.tanh %791 : vector<2x64xf32>
    %793 = vector.extract_strided_slice %778 {offsets = [0, 192], sizes = [2, 64], strides = [1, 1]} : vector<2x256xf32> to vector<2x64xf32>
    %794 = arith.negf %793 : vector<2x64xf32>
    %795 = math.exp %794 : vector<2x64xf32>
    %cst_197 = arith.constant 1.000000e+00 : f32
    %796 = vector.broadcast %cst_197 : f32 to vector<2x64xf32>
    %797 = arith.addf %796, %795 : vector<2x64xf32>
    %798 = arith.divf %796, %797 : vector<2x64xf32>
    %799 = arith.mulf %790, %734 : vector<2x64xf32>
    %800 = arith.mulf %784, %792 : vector<2x64xf32>
    %801 = arith.addf %799, %800 : vector<2x64xf32>
    %802 = math.tanh %801 : vector<2x64xf32>
    %803 = arith.mulf %798, %802 : vector<2x64xf32>
    %cst_198 = arith.constant 0.000000e+00 : f32
    %804 = vector.broadcast %cst_198 : f32 to vector<2x64xf32>
    %805 = arith.cmpf ogt, %803, %804 : vector<2x64xf32>
    %cst_199 = arith.constant 1.000000e-01 : f32
    %806 = vector.broadcast %cst_199 : f32 to vector<2x64xf32>
    %807 = arith.mulf %806, %803 : vector<2x64xf32>
    %808 = arith.select %805, %803, %807 : vector<2x64xi1>, vector<2x64xf32>
    %c11_200 = arith.constant 11 : index
    %c0_201 = arith.constant 0 : index
    %c0_202 = arith.constant 0 : index
    %809 = vector.load %arg6[%c11_200, %c0_201, %c0_202] : memref<20x2x64xf32, #tpu.memory_space<vmem>>, vector<1x2x64xf32>
    %810 = vector.shape_cast %809 : vector<1x2x64xf32> to vector<2x64xf32>
    %811 = vector.shape_cast %808 : vector<2x64xf32> to vector<1x2x64xf32>
    tpu.vector_store %arg6[%c11_200, %c0_201, %c0_202], %811 {strides = array<i32>} : memref<20x2x64xf32, #tpu.memory_space<vmem>>, vector<1x2x64xf32>,
    %c12 = arith.constant 12 : index
    %c0_203 = arith.constant 0 : index
    %c0_204 = arith.constant 0 : index
    %812 = vector.load %arg1[%c12, %c0_203, %c0_204] : memref<20x2x512xf32, #tpu.memory_space<vmem>>, vector<1x2x512xf32>
    %813 = vector.shape_cast %812 : vector<1x2x512xf32> to vector<2x512xf32>
    %cst_205 = arith.constant dense<0.000000e+00> : vector<2x512xf32>
    %814 = tpu.matmul %773, %0, %cst_205 {dimension_numbers = #tpu.dot_dimension_numbers<[1], [0], [0], [1], [0, 0, 1, 1], [], []>} : vector<2x128xf32>, vector<128x512xf32>, vector<2x512xf32> -> vector<2x512xf32>
    %815 = arith.addf %813, %814 : vector<2x512xf32>
    %816 = vector.extract_strided_slice %815 {offsets = [0, 0], sizes = [2, 128], strides = [1, 1]} : vector<2x512xf32> to vector<2x128xf32>
    %817 = arith.negf %816 : vector<2x128xf32>
    %818 = math.exp %817 : vector<2x128xf32>
    %cst_206 = arith.constant 1.000000e+00 : f32
    %819 = vector.broadcast %cst_206 : f32 to vector<2x128xf32>
    %820 = arith.addf %819, %818 : vector<2x128xf32>
    %821 = arith.divf %819, %820 : vector<2x128xf32>
    %822 = vector.extract_strided_slice %815 {offsets = [0, 128], sizes = [2, 128], strides = [1, 1]} : vector<2x512xf32> to vector<2x128xf32>
    %823 = arith.negf %822 : vector<2x128xf32>
    %824 = math.exp %823 : vector<2x128xf32>
    %cst_207 = arith.constant 1.000000e+00 : f32
    %825 = vector.broadcast %cst_207 : f32 to vector<2x128xf32>
    %826 = arith.addf %825, %824 : vector<2x128xf32>
    %827 = arith.divf %825, %826 : vector<2x128xf32>
    %828 = vector.extract_strided_slice %815 {offsets = [0, 256], sizes = [2, 128], strides = [1, 1]} : vector<2x512xf32> to vector<2x128xf32>
    %829 = math.tanh %828 : vector<2x128xf32>
    %830 = vector.extract_strided_slice %815 {offsets = [0, 384], sizes = [2, 128], strides = [1, 1]} : vector<2x512xf32> to vector<2x128xf32>
    %831 = arith.negf %830 : vector<2x128xf32>
    %832 = math.exp %831 : vector<2x128xf32>
    %cst_208 = arith.constant 1.000000e+00 : f32
    %833 = vector.broadcast %cst_208 : f32 to vector<2x128xf32>
    %834 = arith.addf %833, %832 : vector<2x128xf32>
    %835 = arith.divf %833, %834 : vector<2x128xf32>
    %836 = arith.mulf %827, %771 : vector<2x128xf32>
    %837 = arith.mulf %821, %829 : vector<2x128xf32>
    %838 = arith.addf %836, %837 : vector<2x128xf32>
    %839 = math.tanh %838 : vector<2x128xf32>
    %840 = arith.mulf %835, %839 : vector<2x128xf32>
    %cst_209 = arith.constant dense<0.000000e+00> : vector<2x256xf32>
    %841 = tpu.matmul %840, %1, %cst_209 {dimension_numbers = #tpu.dot_dimension_numbers<[1], [0], [0], [1], [0, 0, 1, 1], [], []>} : vector<2x128xf32>, vector<128x256xf32>, vector<2x256xf32> -> vector<2x256xf32>
    %cst_210 = arith.constant dense<0.000000e+00> : vector<2x256xf32>
    %842 = tpu.matmul %803, %2, %cst_210 {dimension_numbers = #tpu.dot_dimension_numbers<[1], [0], [0], [1], [0, 0, 1, 1], [], []>} : vector<2x64xf32>, vector<64x256xf32>, vector<2x256xf32> -> vector<2x256xf32>
    %843 = arith.addf %841, %842 : vector<2x256xf32>
    %844 = vector.broadcast %3 : vector<1x256xf32> to vector<2x256xf32>
    %845 = arith.addf %843, %844 : vector<2x256xf32>
    %846 = vector.extract_strided_slice %845 {offsets = [0, 0], sizes = [2, 64], strides = [1, 1]} : vector<2x256xf32> to vector<2x64xf32>
    %847 = arith.negf %846 : vector<2x64xf32>
    %848 = math.exp %847 : vector<2x64xf32>
    %cst_211 = arith.constant 1.000000e+00 : f32
    %849 = vector.broadcast %cst_211 : f32 to vector<2x64xf32>
    %850 = arith.addf %849, %848 : vector<2x64xf32>
    %851 = arith.divf %849, %850 : vector<2x64xf32>
    %852 = vector.extract_strided_slice %845 {offsets = [0, 64], sizes = [2, 64], strides = [1, 1]} : vector<2x256xf32> to vector<2x64xf32>
    %853 = arith.negf %852 : vector<2x64xf32>
    %854 = math.exp %853 : vector<2x64xf32>
    %cst_212 = arith.constant 1.000000e+00 : f32
    %855 = vector.broadcast %cst_212 : f32 to vector<2x64xf32>
    %856 = arith.addf %855, %854 : vector<2x64xf32>
    %857 = arith.divf %855, %856 : vector<2x64xf32>
    %858 = vector.extract_strided_slice %845 {offsets = [0, 128], sizes = [2, 64], strides = [1, 1]} : vector<2x256xf32> to vector<2x64xf32>
    %859 = math.tanh %858 : vector<2x64xf32>
    %860 = vector.extract_strided_slice %845 {offsets = [0, 192], sizes = [2, 64], strides = [1, 1]} : vector<2x256xf32> to vector<2x64xf32>
    %861 = arith.negf %860 : vector<2x64xf32>
    %862 = math.exp %861 : vector<2x64xf32>
    %cst_213 = arith.constant 1.000000e+00 : f32
    %863 = vector.broadcast %cst_213 : f32 to vector<2x64xf32>
    %864 = arith.addf %863, %862 : vector<2x64xf32>
    %865 = arith.divf %863, %864 : vector<2x64xf32>
    %866 = arith.mulf %857, %801 : vector<2x64xf32>
    %867 = arith.mulf %851, %859 : vector<2x64xf32>
    %868 = arith.addf %866, %867 : vector<2x64xf32>
    %869 = math.tanh %868 : vector<2x64xf32>
    %870 = arith.mulf %865, %869 : vector<2x64xf32>
    %cst_214 = arith.constant 0.000000e+00 : f32
    %871 = vector.broadcast %cst_214 : f32 to vector<2x64xf32>
    %872 = arith.cmpf ogt, %870, %871 : vector<2x64xf32>
    %cst_215 = arith.constant 1.000000e-01 : f32
    %873 = vector.broadcast %cst_215 : f32 to vector<2x64xf32>
    %874 = arith.mulf %873, %870 : vector<2x64xf32>
    %875 = arith.select %872, %870, %874 : vector<2x64xi1>, vector<2x64xf32>
    %c12_216 = arith.constant 12 : index
    %c0_217 = arith.constant 0 : index
    %c0_218 = arith.constant 0 : index
    %876 = vector.load %arg6[%c12_216, %c0_217, %c0_218] : memref<20x2x64xf32, #tpu.memory_space<vmem>>, vector<1x2x64xf32>
    %877 = vector.shape_cast %876 : vector<1x2x64xf32> to vector<2x64xf32>
    %878 = vector.shape_cast %875 : vector<2x64xf32> to vector<1x2x64xf32>
    tpu.vector_store %arg6[%c12_216, %c0_217, %c0_218], %878 {strides = array<i32>} : memref<20x2x64xf32, #tpu.memory_space<vmem>>, vector<1x2x64xf32>,
    %c13 = arith.constant 13 : index
    %c0_219 = arith.constant 0 : index
    %c0_220 = arith.constant 0 : index
    %879 = vector.load %arg1[%c13, %c0_219, %c0_220] : memref<20x2x512xf32, #tpu.memory_space<vmem>>, vector<1x2x512xf32>
    %880 = vector.shape_cast %879 : vector<1x2x512xf32> to vector<2x512xf32>
    %cst_221 = arith.constant dense<0.000000e+00> : vector<2x512xf32>
    %881 = tpu.matmul %840, %0, %cst_221 {dimension_numbers = #tpu.dot_dimension_numbers<[1], [0], [0], [1], [0, 0, 1, 1], [], []>} : vector<2x128xf32>, vector<128x512xf32>, vector<2x512xf32> -> vector<2x512xf32>
    %882 = arith.addf %880, %881 : vector<2x512xf32>
    %883 = vector.extract_strided_slice %882 {offsets = [0, 0], sizes = [2, 128], strides = [1, 1]} : vector<2x512xf32> to vector<2x128xf32>
    %884 = arith.negf %883 : vector<2x128xf32>
    %885 = math.exp %884 : vector<2x128xf32>
    %cst_222 = arith.constant 1.000000e+00 : f32
    %886 = vector.broadcast %cst_222 : f32 to vector<2x128xf32>
    %887 = arith.addf %886, %885 : vector<2x128xf32>
    %888 = arith.divf %886, %887 : vector<2x128xf32>
    %889 = vector.extract_strided_slice %882 {offsets = [0, 128], sizes = [2, 128], strides = [1, 1]} : vector<2x512xf32> to vector<2x128xf32>
    %890 = arith.negf %889 : vector<2x128xf32>
    %891 = math.exp %890 : vector<2x128xf32>
    %cst_223 = arith.constant 1.000000e+00 : f32
    %892 = vector.broadcast %cst_223 : f32 to vector<2x128xf32>
    %893 = arith.addf %892, %891 : vector<2x128xf32>
    %894 = arith.divf %892, %893 : vector<2x128xf32>
    %895 = vector.extract_strided_slice %882 {offsets = [0, 256], sizes = [2, 128], strides = [1, 1]} : vector<2x512xf32> to vector<2x128xf32>
    %896 = math.tanh %895 : vector<2x128xf32>
    %897 = vector.extract_strided_slice %882 {offsets = [0, 384], sizes = [2, 128], strides = [1, 1]} : vector<2x512xf32> to vector<2x128xf32>
    %898 = arith.negf %897 : vector<2x128xf32>
    %899 = math.exp %898 : vector<2x128xf32>
    %cst_224 = arith.constant 1.000000e+00 : f32
    %900 = vector.broadcast %cst_224 : f32 to vector<2x128xf32>
    %901 = arith.addf %900, %899 : vector<2x128xf32>
    %902 = arith.divf %900, %901 : vector<2x128xf32>
    %903 = arith.mulf %894, %838 : vector<2x128xf32>
    %904 = arith.mulf %888, %896 : vector<2x128xf32>
    %905 = arith.addf %903, %904 : vector<2x128xf32>
    %906 = math.tanh %905 : vector<2x128xf32>
    %907 = arith.mulf %902, %906 : vector<2x128xf32>
    %cst_225 = arith.constant dense<0.000000e+00> : vector<2x256xf32>
    %908 = tpu.matmul %907, %1, %cst_225 {dimension_numbers = #tpu.dot_dimension_numbers<[1], [0], [0], [1], [0, 0, 1, 1], [], []>} : vector<2x128xf32>, vector<128x256xf32>, vector<2x256xf32> -> vector<2x256xf32>
    %cst_226 = arith.constant dense<0.000000e+00> : vector<2x256xf32>
    %909 = tpu.matmul %870, %2, %cst_226 {dimension_numbers = #tpu.dot_dimension_numbers<[1], [0], [0], [1], [0, 0, 1, 1], [], []>} : vector<2x64xf32>, vector<64x256xf32>, vector<2x256xf32> -> vector<2x256xf32>
    %910 = arith.addf %908, %909 : vector<2x256xf32>
    %911 = vector.broadcast %3 : vector<1x256xf32> to vector<2x256xf32>
    %912 = arith.addf %910, %911 : vector<2x256xf32>
    %913 = vector.extract_strided_slice %912 {offsets = [0, 0], sizes = [2, 64], strides = [1, 1]} : vector<2x256xf32> to vector<2x64xf32>
    %914 = arith.negf %913 : vector<2x64xf32>
    %915 = math.exp %914 : vector<2x64xf32>
    %cst_227 = arith.constant 1.000000e+00 : f32
    %916 = vector.broadcast %cst_227 : f32 to vector<2x64xf32>
    %917 = arith.addf %916, %915 : vector<2x64xf32>
    %918 = arith.divf %916, %917 : vector<2x64xf32>
    %919 = vector.extract_strided_slice %912 {offsets = [0, 64], sizes = [2, 64], strides = [1, 1]} : vector<2x256xf32> to vector<2x64xf32>
    %920 = arith.negf %919 : vector<2x64xf32>
    %921 = math.exp %920 : vector<2x64xf32>
    %cst_228 = arith.constant 1.000000e+00 : f32
    %922 = vector.broadcast %cst_228 : f32 to vector<2x64xf32>
    %923 = arith.addf %922, %921 : vector<2x64xf32>
    %924 = arith.divf %922, %923 : vector<2x64xf32>
    %925 = vector.extract_strided_slice %912 {offsets = [0, 128], sizes = [2, 64], strides = [1, 1]} : vector<2x256xf32> to vector<2x64xf32>
    %926 = math.tanh %925 : vector<2x64xf32>
    %927 = vector.extract_strided_slice %912 {offsets = [0, 192], sizes = [2, 64], strides = [1, 1]} : vector<2x256xf32> to vector<2x64xf32>
    %928 = arith.negf %927 : vector<2x64xf32>
    %929 = math.exp %928 : vector<2x64xf32>
    %cst_229 = arith.constant 1.000000e+00 : f32
    %930 = vector.broadcast %cst_229 : f32 to vector<2x64xf32>
    %931 = arith.addf %930, %929 : vector<2x64xf32>
    %932 = arith.divf %930, %931 : vector<2x64xf32>
    %933 = arith.mulf %924, %868 : vector<2x64xf32>
    %934 = arith.mulf %918, %926 : vector<2x64xf32>
    %935 = arith.addf %933, %934 : vector<2x64xf32>
    %936 = math.tanh %935 : vector<2x64xf32>
    %937 = arith.mulf %932, %936 : vector<2x64xf32>
    %cst_230 = arith.constant 0.000000e+00 : f32
    %938 = vector.broadcast %cst_230 : f32 to vector<2x64xf32>
    %939 = arith.cmpf ogt, %937, %938 : vector<2x64xf32>
    %cst_231 = arith.constant 1.000000e-01 : f32
    %940 = vector.broadcast %cst_231 : f32 to vector<2x64xf32>
    %941 = arith.mulf %940, %937 : vector<2x64xf32>
    %942 = arith.select %939, %937, %941 : vector<2x64xi1>, vector<2x64xf32>
    %c13_232 = arith.constant 13 : index
    %c0_233 = arith.constant 0 : index
    %c0_234 = arith.constant 0 : index
    %943 = vector.load %arg6[%c13_232, %c0_233, %c0_234] : memref<20x2x64xf32, #tpu.memory_space<vmem>>, vector<1x2x64xf32>
    %944 = vector.shape_cast %943 : vector<1x2x64xf32> to vector<2x64xf32>
    %945 = vector.shape_cast %942 : vector<2x64xf32> to vector<1x2x64xf32>
    tpu.vector_store %arg6[%c13_232, %c0_233, %c0_234], %945 {strides = array<i32>} : memref<20x2x64xf32, #tpu.memory_space<vmem>>, vector<1x2x64xf32>,
    %c14 = arith.constant 14 : index
    %c0_235 = arith.constant 0 : index
    %c0_236 = arith.constant 0 : index
    %946 = vector.load %arg1[%c14, %c0_235, %c0_236] : memref<20x2x512xf32, #tpu.memory_space<vmem>>, vector<1x2x512xf32>
    %947 = vector.shape_cast %946 : vector<1x2x512xf32> to vector<2x512xf32>
    %cst_237 = arith.constant dense<0.000000e+00> : vector<2x512xf32>
    %948 = tpu.matmul %907, %0, %cst_237 {dimension_numbers = #tpu.dot_dimension_numbers<[1], [0], [0], [1], [0, 0, 1, 1], [], []>} : vector<2x128xf32>, vector<128x512xf32>, vector<2x512xf32> -> vector<2x512xf32>
    %949 = arith.addf %947, %948 : vector<2x512xf32>
    %950 = vector.extract_strided_slice %949 {offsets = [0, 0], sizes = [2, 128], strides = [1, 1]} : vector<2x512xf32> to vector<2x128xf32>
    %951 = arith.negf %950 : vector<2x128xf32>
    %952 = math.exp %951 : vector<2x128xf32>
    %cst_238 = arith.constant 1.000000e+00 : f32
    %953 = vector.broadcast %cst_238 : f32 to vector<2x128xf32>
    %954 = arith.addf %953, %952 : vector<2x128xf32>
    %955 = arith.divf %953, %954 : vector<2x128xf32>
    %956 = vector.extract_strided_slice %949 {offsets = [0, 128], sizes = [2, 128], strides = [1, 1]} : vector<2x512xf32> to vector<2x128xf32>
    %957 = arith.negf %956 : vector<2x128xf32>
    %958 = math.exp %957 : vector<2x128xf32>
    %cst_239 = arith.constant 1.000000e+00 : f32
    %959 = vector.broadcast %cst_239 : f32 to vector<2x128xf32>
    %960 = arith.addf %959, %958 : vector<2x128xf32>
    %961 = arith.divf %959, %960 : vector<2x128xf32>
    %962 = vector.extract_strided_slice %949 {offsets = [0, 256], sizes = [2, 128], strides = [1, 1]} : vector<2x512xf32> to vector<2x128xf32>
    %963 = math.tanh %962 : vector<2x128xf32>
    %964 = vector.extract_strided_slice %949 {offsets = [0, 384], sizes = [2, 128], strides = [1, 1]} : vector<2x512xf32> to vector<2x128xf32>
    %965 = arith.negf %964 : vector<2x128xf32>
    %966 = math.exp %965 : vector<2x128xf32>
    %cst_240 = arith.constant 1.000000e+00 : f32
    %967 = vector.broadcast %cst_240 : f32 to vector<2x128xf32>
    %968 = arith.addf %967, %966 : vector<2x128xf32>
    %969 = arith.divf %967, %968 : vector<2x128xf32>
    %970 = arith.mulf %961, %905 : vector<2x128xf32>
    %971 = arith.mulf %955, %963 : vector<2x128xf32>
    %972 = arith.addf %970, %971 : vector<2x128xf32>
    %973 = math.tanh %972 : vector<2x128xf32>
    %974 = arith.mulf %969, %973 : vector<2x128xf32>
    %cst_241 = arith.constant dense<0.000000e+00> : vector<2x256xf32>
    %975 = tpu.matmul %974, %1, %cst_241 {dimension_numbers = #tpu.dot_dimension_numbers<[1], [0], [0], [1], [0, 0, 1, 1], [], []>} : vector<2x128xf32>, vector<128x256xf32>, vector<2x256xf32> -> vector<2x256xf32>
    %cst_242 = arith.constant dense<0.000000e+00> : vector<2x256xf32>
    %976 = tpu.matmul %937, %2, %cst_242 {dimension_numbers = #tpu.dot_dimension_numbers<[1], [0], [0], [1], [0, 0, 1, 1], [], []>} : vector<2x64xf32>, vector<64x256xf32>, vector<2x256xf32> -> vector<2x256xf32>
    %977 = arith.addf %975, %976 : vector<2x256xf32>
    %978 = vector.broadcast %3 : vector<1x256xf32> to vector<2x256xf32>
    %979 = arith.addf %977, %978 : vector<2x256xf32>
    %980 = vector.extract_strided_slice %979 {offsets = [0, 0], sizes = [2, 64], strides = [1, 1]} : vector<2x256xf32> to vector<2x64xf32>
    %981 = arith.negf %980 : vector<2x64xf32>
    %982 = math.exp %981 : vector<2x64xf32>
    %cst_243 = arith.constant 1.000000e+00 : f32
    %983 = vector.broadcast %cst_243 : f32 to vector<2x64xf32>
    %984 = arith.addf %983, %982 : vector<2x64xf32>
    %985 = arith.divf %983, %984 : vector<2x64xf32>
    %986 = vector.extract_strided_slice %979 {offsets = [0, 64], sizes = [2, 64], strides = [1, 1]} : vector<2x256xf32> to vector<2x64xf32>
    %987 = arith.negf %986 : vector<2x64xf32>
    %988 = math.exp %987 : vector<2x64xf32>
    %cst_244 = arith.constant 1.000000e+00 : f32
    %989 = vector.broadcast %cst_244 : f32 to vector<2x64xf32>
    %990 = arith.addf %989, %988 : vector<2x64xf32>
    %991 = arith.divf %989, %990 : vector<2x64xf32>
    %992 = vector.extract_strided_slice %979 {offsets = [0, 128], sizes = [2, 64], strides = [1, 1]} : vector<2x256xf32> to vector<2x64xf32>
    %993 = math.tanh %992 : vector<2x64xf32>
    %994 = vector.extract_strided_slice %979 {offsets = [0, 192], sizes = [2, 64], strides = [1, 1]} : vector<2x256xf32> to vector<2x64xf32>
    %995 = arith.negf %994 : vector<2x64xf32>
    %996 = math.exp %995 : vector<2x64xf32>
    %cst_245 = arith.constant 1.000000e+00 : f32
    %997 = vector.broadcast %cst_245 : f32 to vector<2x64xf32>
    %998 = arith.addf %997, %996 : vector<2x64xf32>
    %999 = arith.divf %997, %998 : vector<2x64xf32>
    %1000 = arith.mulf %991, %935 : vector<2x64xf32>
    %1001 = arith.mulf %985, %993 : vector<2x64xf32>
    %1002 = arith.addf %1000, %1001 : vector<2x64xf32>
    %1003 = math.tanh %1002 : vector<2x64xf32>
    %1004 = arith.mulf %999, %1003 : vector<2x64xf32>
    %cst_246 = arith.constant 0.000000e+00 : f32
    %1005 = vector.broadcast %cst_246 : f32 to vector<2x64xf32>
    %1006 = arith.cmpf ogt, %1004, %1005 : vector<2x64xf32>
    %cst_247 = arith.constant 1.000000e-01 : f32
    %1007 = vector.broadcast %cst_247 : f32 to vector<2x64xf32>
    %1008 = arith.mulf %1007, %1004 : vector<2x64xf32>
    %1009 = arith.select %1006, %1004, %1008 : vector<2x64xi1>, vector<2x64xf32>
    %c14_248 = arith.constant 14 : index
    %c0_249 = arith.constant 0 : index
    %c0_250 = arith.constant 0 : index
    %1010 = vector.load %arg6[%c14_248, %c0_249, %c0_250] : memref<20x2x64xf32, #tpu.memory_space<vmem>>, vector<1x2x64xf32>
    %1011 = vector.shape_cast %1010 : vector<1x2x64xf32> to vector<2x64xf32>
    %1012 = vector.shape_cast %1009 : vector<2x64xf32> to vector<1x2x64xf32>
    tpu.vector_store %arg6[%c14_248, %c0_249, %c0_250], %1012 {strides = array<i32>} : memref<20x2x64xf32, #tpu.memory_space<vmem>>, vector<1x2x64xf32>,
    %c15 = arith.constant 15 : index
    %c0_251 = arith.constant 0 : index
    %c0_252 = arith.constant 0 : index
    %1013 = vector.load %arg1[%c15, %c0_251, %c0_252] : memref<20x2x512xf32, #tpu.memory_space<vmem>>, vector<1x2x512xf32>
    %1014 = vector.shape_cast %1013 : vector<1x2x512xf32> to vector<2x512xf32>
    %cst_253 = arith.constant dense<0.000000e+00> : vector<2x512xf32>
    %1015 = tpu.matmul %974, %0, %cst_253 {dimension_numbers = #tpu.dot_dimension_numbers<[1], [0], [0], [1], [0, 0, 1, 1], [], []>} : vector<2x128xf32>, vector<128x512xf32>, vector<2x512xf32> -> vector<2x512xf32>
    %1016 = arith.addf %1014, %1015 : vector<2x512xf32>
    %1017 = vector.extract_strided_slice %1016 {offsets = [0, 0], sizes = [2, 128], strides = [1, 1]} : vector<2x512xf32> to vector<2x128xf32>
    %1018 = arith.negf %1017 : vector<2x128xf32>
    %1019 = math.exp %1018 : vector<2x128xf32>
    %cst_254 = arith.constant 1.000000e+00 : f32
    %1020 = vector.broadcast %cst_254 : f32 to vector<2x128xf32>
    %1021 = arith.addf %1020, %1019 : vector<2x128xf32>
    %1022 = arith.divf %1020, %1021 : vector<2x128xf32>
    %1023 = vector.extract_strided_slice %1016 {offsets = [0, 128], sizes = [2, 128], strides = [1, 1]} : vector<2x512xf32> to vector<2x128xf32>
    %1024 = arith.negf %1023 : vector<2x128xf32>
    %1025 = math.exp %1024 : vector<2x128xf32>
    %cst_255 = arith.constant 1.000000e+00 : f32
    %1026 = vector.broadcast %cst_255 : f32 to vector<2x128xf32>
    %1027 = arith.addf %1026, %1025 : vector<2x128xf32>
    %1028 = arith.divf %1026, %1027 : vector<2x128xf32>
    %1029 = vector.extract_strided_slice %1016 {offsets = [0, 256], sizes = [2, 128], strides = [1, 1]} : vector<2x512xf32> to vector<2x128xf32>
    %1030 = math.tanh %1029 : vector<2x128xf32>
    %1031 = vector.extract_strided_slice %1016 {offsets = [0, 384], sizes = [2, 128], strides = [1, 1]} : vector<2x512xf32> to vector<2x128xf32>
    %1032 = arith.negf %1031 : vector<2x128xf32>
    %1033 = math.exp %1032 : vector<2x128xf32>
    %cst_256 = arith.constant 1.000000e+00 : f32
    %1034 = vector.broadcast %cst_256 : f32 to vector<2x128xf32>
    %1035 = arith.addf %1034, %1033 : vector<2x128xf32>
    %1036 = arith.divf %1034, %1035 : vector<2x128xf32>
    %1037 = arith.mulf %1028, %972 : vector<2x128xf32>
    %1038 = arith.mulf %1022, %1030 : vector<2x128xf32>
    %1039 = arith.addf %1037, %1038 : vector<2x128xf32>
    %1040 = math.tanh %1039 : vector<2x128xf32>
    %1041 = arith.mulf %1036, %1040 : vector<2x128xf32>
    %cst_257 = arith.constant dense<0.000000e+00> : vector<2x256xf32>
    %1042 = tpu.matmul %1041, %1, %cst_257 {dimension_numbers = #tpu.dot_dimension_numbers<[1], [0], [0], [1], [0, 0, 1, 1], [], []>} : vector<2x128xf32>, vector<128x256xf32>, vector<2x256xf32> -> vector<2x256xf32>
    %cst_258 = arith.constant dense<0.000000e+00> : vector<2x256xf32>
    %1043 = tpu.matmul %1004, %2, %cst_258 {dimension_numbers = #tpu.dot_dimension_numbers<[1], [0], [0], [1], [0, 0, 1, 1], [], []>} : vector<2x64xf32>, vector<64x256xf32>, vector<2x256xf32> -> vector<2x256xf32>
    %1044 = arith.addf %1042, %1043 : vector<2x256xf32>
    %1045 = vector.broadcast %3 : vector<1x256xf32> to vector<2x256xf32>
    %1046 = arith.addf %1044, %1045 : vector<2x256xf32>
    %1047 = vector.extract_strided_slice %1046 {offsets = [0, 0], sizes = [2, 64], strides = [1, 1]} : vector<2x256xf32> to vector<2x64xf32>
    %1048 = arith.negf %1047 : vector<2x64xf32>
    %1049 = math.exp %1048 : vector<2x64xf32>
    %cst_259 = arith.constant 1.000000e+00 : f32
    %1050 = vector.broadcast %cst_259 : f32 to vector<2x64xf32>
    %1051 = arith.addf %1050, %1049 : vector<2x64xf32>
    %1052 = arith.divf %1050, %1051 : vector<2x64xf32>
    %1053 = vector.extract_strided_slice %1046 {offsets = [0, 64], sizes = [2, 64], strides = [1, 1]} : vector<2x256xf32> to vector<2x64xf32>
    %1054 = arith.negf %1053 : vector<2x64xf32>
    %1055 = math.exp %1054 : vector<2x64xf32>
    %cst_260 = arith.constant 1.000000e+00 : f32
    %1056 = vector.broadcast %cst_260 : f32 to vector<2x64xf32>
    %1057 = arith.addf %1056, %1055 : vector<2x64xf32>
    %1058 = arith.divf %1056, %1057 : vector<2x64xf32>
    %1059 = vector.extract_strided_slice %1046 {offsets = [0, 128], sizes = [2, 64], strides = [1, 1]} : vector<2x256xf32> to vector<2x64xf32>
    %1060 = math.tanh %1059 : vector<2x64xf32>
    %1061 = vector.extract_strided_slice %1046 {offsets = [0, 192], sizes = [2, 64], strides = [1, 1]} : vector<2x256xf32> to vector<2x64xf32>
    %1062 = arith.negf %1061 : vector<2x64xf32>
    %1063 = math.exp %1062 : vector<2x64xf32>
    %cst_261 = arith.constant 1.000000e+00 : f32
    %1064 = vector.broadcast %cst_261 : f32 to vector<2x64xf32>
    %1065 = arith.addf %1064, %1063 : vector<2x64xf32>
    %1066 = arith.divf %1064, %1065 : vector<2x64xf32>
    %1067 = arith.mulf %1058, %1002 : vector<2x64xf32>
    %1068 = arith.mulf %1052, %1060 : vector<2x64xf32>
    %1069 = arith.addf %1067, %1068 : vector<2x64xf32>
    %1070 = math.tanh %1069 : vector<2x64xf32>
    %1071 = arith.mulf %1066, %1070 : vector<2x64xf32>
    %cst_262 = arith.constant 0.000000e+00 : f32
    %1072 = vector.broadcast %cst_262 : f32 to vector<2x64xf32>
    %1073 = arith.cmpf ogt, %1071, %1072 : vector<2x64xf32>
    %cst_263 = arith.constant 1.000000e-01 : f32
    %1074 = vector.broadcast %cst_263 : f32 to vector<2x64xf32>
    %1075 = arith.mulf %1074, %1071 : vector<2x64xf32>
    %1076 = arith.select %1073, %1071, %1075 : vector<2x64xi1>, vector<2x64xf32>
    %c15_264 = arith.constant 15 : index
    %c0_265 = arith.constant 0 : index
    %c0_266 = arith.constant 0 : index
    %1077 = vector.load %arg6[%c15_264, %c0_265, %c0_266] : memref<20x2x64xf32, #tpu.memory_space<vmem>>, vector<1x2x64xf32>
    %1078 = vector.shape_cast %1077 : vector<1x2x64xf32> to vector<2x64xf32>
    %1079 = vector.shape_cast %1076 : vector<2x64xf32> to vector<1x2x64xf32>
    tpu.vector_store %arg6[%c15_264, %c0_265, %c0_266], %1079 {strides = array<i32>} : memref<20x2x64xf32, #tpu.memory_space<vmem>>, vector<1x2x64xf32>,
    %c16 = arith.constant 16 : index
    %c0_267 = arith.constant 0 : index
    %c0_268 = arith.constant 0 : index
    %1080 = vector.load %arg1[%c16, %c0_267, %c0_268] : memref<20x2x512xf32, #tpu.memory_space<vmem>>, vector<1x2x512xf32>
    %1081 = vector.shape_cast %1080 : vector<1x2x512xf32> to vector<2x512xf32>
    %cst_269 = arith.constant dense<0.000000e+00> : vector<2x512xf32>
    %1082 = tpu.matmul %1041, %0, %cst_269 {dimension_numbers = #tpu.dot_dimension_numbers<[1], [0], [0], [1], [0, 0, 1, 1], [], []>} : vector<2x128xf32>, vector<128x512xf32>, vector<2x512xf32> -> vector<2x512xf32>
    %1083 = arith.addf %1081, %1082 : vector<2x512xf32>
    %1084 = vector.extract_strided_slice %1083 {offsets = [0, 0], sizes = [2, 128], strides = [1, 1]} : vector<2x512xf32> to vector<2x128xf32>
    %1085 = arith.negf %1084 : vector<2x128xf32>
    %1086 = math.exp %1085 : vector<2x128xf32>
    %cst_270 = arith.constant 1.000000e+00 : f32
    %1087 = vector.broadcast %cst_270 : f32 to vector<2x128xf32>
    %1088 = arith.addf %1087, %1086 : vector<2x128xf32>
    %1089 = arith.divf %1087, %1088 : vector<2x128xf32>
    %1090 = vector.extract_strided_slice %1083 {offsets = [0, 128], sizes = [2, 128], strides = [1, 1]} : vector<2x512xf32> to vector<2x128xf32>
    %1091 = arith.negf %1090 : vector<2x128xf32>
    %1092 = math.exp %1091 : vector<2x128xf32>
    %cst_271 = arith.constant 1.000000e+00 : f32
    %1093 = vector.broadcast %cst_271 : f32 to vector<2x128xf32>
    %1094 = arith.addf %1093, %1092 : vector<2x128xf32>
    %1095 = arith.divf %1093, %1094 : vector<2x128xf32>
    %1096 = vector.extract_strided_slice %1083 {offsets = [0, 256], sizes = [2, 128], strides = [1, 1]} : vector<2x512xf32> to vector<2x128xf32>
    %1097 = math.tanh %1096 : vector<2x128xf32>
    %1098 = vector.extract_strided_slice %1083 {offsets = [0, 384], sizes = [2, 128], strides = [1, 1]} : vector<2x512xf32> to vector<2x128xf32>
    %1099 = arith.negf %1098 : vector<2x128xf32>
    %1100 = math.exp %1099 : vector<2x128xf32>
    %cst_272 = arith.constant 1.000000e+00 : f32
    %1101 = vector.broadcast %cst_272 : f32 to vector<2x128xf32>
    %1102 = arith.addf %1101, %1100 : vector<2x128xf32>
    %1103 = arith.divf %1101, %1102 : vector<2x128xf32>
    %1104 = arith.mulf %1095, %1039 : vector<2x128xf32>
    %1105 = arith.mulf %1089, %1097 : vector<2x128xf32>
    %1106 = arith.addf %1104, %1105 : vector<2x128xf32>
    %1107 = math.tanh %1106 : vector<2x128xf32>
    %1108 = arith.mulf %1103, %1107 : vector<2x128xf32>
    %cst_273 = arith.constant dense<0.000000e+00> : vector<2x256xf32>
    %1109 = tpu.matmul %1108, %1, %cst_273 {dimension_numbers = #tpu.dot_dimension_numbers<[1], [0], [0], [1], [0, 0, 1, 1], [], []>} : vector<2x128xf32>, vector<128x256xf32>, vector<2x256xf32> -> vector<2x256xf32>
    %cst_274 = arith.constant dense<0.000000e+00> : vector<2x256xf32>
    %1110 = tpu.matmul %1071, %2, %cst_274 {dimension_numbers = #tpu.dot_dimension_numbers<[1], [0], [0], [1], [0, 0, 1, 1], [], []>} : vector<2x64xf32>, vector<64x256xf32>, vector<2x256xf32> -> vector<2x256xf32>
    %1111 = arith.addf %1109, %1110 : vector<2x256xf32>
    %1112 = vector.broadcast %3 : vector<1x256xf32> to vector<2x256xf32>
    %1113 = arith.addf %1111, %1112 : vector<2x256xf32>
    %1114 = vector.extract_strided_slice %1113 {offsets = [0, 0], sizes = [2, 64], strides = [1, 1]} : vector<2x256xf32> to vector<2x64xf32>
    %1115 = arith.negf %1114 : vector<2x64xf32>
    %1116 = math.exp %1115 : vector<2x64xf32>
    %cst_275 = arith.constant 1.000000e+00 : f32
    %1117 = vector.broadcast %cst_275 : f32 to vector<2x64xf32>
    %1118 = arith.addf %1117, %1116 : vector<2x64xf32>
    %1119 = arith.divf %1117, %1118 : vector<2x64xf32>
    %1120 = vector.extract_strided_slice %1113 {offsets = [0, 64], sizes = [2, 64], strides = [1, 1]} : vector<2x256xf32> to vector<2x64xf32>
    %1121 = arith.negf %1120 : vector<2x64xf32>
    %1122 = math.exp %1121 : vector<2x64xf32>
    %cst_276 = arith.constant 1.000000e+00 : f32
    %1123 = vector.broadcast %cst_276 : f32 to vector<2x64xf32>
    %1124 = arith.addf %1123, %1122 : vector<2x64xf32>
    %1125 = arith.divf %1123, %1124 : vector<2x64xf32>
    %1126 = vector.extract_strided_slice %1113 {offsets = [0, 128], sizes = [2, 64], strides = [1, 1]} : vector<2x256xf32> to vector<2x64xf32>
    %1127 = math.tanh %1126 : vector<2x64xf32>
    %1128 = vector.extract_strided_slice %1113 {offsets = [0, 192], sizes = [2, 64], strides = [1, 1]} : vector<2x256xf32> to vector<2x64xf32>
    %1129 = arith.negf %1128 : vector<2x64xf32>
    %1130 = math.exp %1129 : vector<2x64xf32>
    %cst_277 = arith.constant 1.000000e+00 : f32
    %1131 = vector.broadcast %cst_277 : f32 to vector<2x64xf32>
    %1132 = arith.addf %1131, %1130 : vector<2x64xf32>
    %1133 = arith.divf %1131, %1132 : vector<2x64xf32>
    %1134 = arith.mulf %1125, %1069 : vector<2x64xf32>
    %1135 = arith.mulf %1119, %1127 : vector<2x64xf32>
    %1136 = arith.addf %1134, %1135 : vector<2x64xf32>
    %1137 = math.tanh %1136 : vector<2x64xf32>
    %1138 = arith.mulf %1133, %1137 : vector<2x64xf32>
    %cst_278 = arith.constant 0.000000e+00 : f32
    %1139 = vector.broadcast %cst_278 : f32 to vector<2x64xf32>
    %1140 = arith.cmpf ogt, %1138, %1139 : vector<2x64xf32>
    %cst_279 = arith.constant 1.000000e-01 : f32
    %1141 = vector.broadcast %cst_279 : f32 to vector<2x64xf32>
    %1142 = arith.mulf %1141, %1138 : vector<2x64xf32>
    %1143 = arith.select %1140, %1138, %1142 : vector<2x64xi1>, vector<2x64xf32>
    %c16_280 = arith.constant 16 : index
    %c0_281 = arith.constant 0 : index
    %c0_282 = arith.constant 0 : index
    %1144 = vector.load %arg6[%c16_280, %c0_281, %c0_282] : memref<20x2x64xf32, #tpu.memory_space<vmem>>, vector<1x2x64xf32>
    %1145 = vector.shape_cast %1144 : vector<1x2x64xf32> to vector<2x64xf32>
    %1146 = vector.shape_cast %1143 : vector<2x64xf32> to vector<1x2x64xf32>
    tpu.vector_store %arg6[%c16_280, %c0_281, %c0_282], %1146 {strides = array<i32>} : memref<20x2x64xf32, #tpu.memory_space<vmem>>, vector<1x2x64xf32>,
    %c17 = arith.constant 17 : index
    %c0_283 = arith.constant 0 : index
    %c0_284 = arith.constant 0 : index
    %1147 = vector.load %arg1[%c17, %c0_283, %c0_284] : memref<20x2x512xf32, #tpu.memory_space<vmem>>, vector<1x2x512xf32>
    %1148 = vector.shape_cast %1147 : vector<1x2x512xf32> to vector<2x512xf32>
    %cst_285 = arith.constant dense<0.000000e+00> : vector<2x512xf32>
    %1149 = tpu.matmul %1108, %0, %cst_285 {dimension_numbers = #tpu.dot_dimension_numbers<[1], [0], [0], [1], [0, 0, 1, 1], [], []>} : vector<2x128xf32>, vector<128x512xf32>, vector<2x512xf32> -> vector<2x512xf32>
    %1150 = arith.addf %1148, %1149 : vector<2x512xf32>
    %1151 = vector.extract_strided_slice %1150 {offsets = [0, 0], sizes = [2, 128], strides = [1, 1]} : vector<2x512xf32> to vector<2x128xf32>
    %1152 = arith.negf %1151 : vector<2x128xf32>
    %1153 = math.exp %1152 : vector<2x128xf32>
    %cst_286 = arith.constant 1.000000e+00 : f32
    %1154 = vector.broadcast %cst_286 : f32 to vector<2x128xf32>
    %1155 = arith.addf %1154, %1153 : vector<2x128xf32>
    %1156 = arith.divf %1154, %1155 : vector<2x128xf32>
    %1157 = vector.extract_strided_slice %1150 {offsets = [0, 128], sizes = [2, 128], strides = [1, 1]} : vector<2x512xf32> to vector<2x128xf32>
    %1158 = arith.negf %1157 : vector<2x128xf32>
    %1159 = math.exp %1158 : vector<2x128xf32>
    %cst_287 = arith.constant 1.000000e+00 : f32
    %1160 = vector.broadcast %cst_287 : f32 to vector<2x128xf32>
    %1161 = arith.addf %1160, %1159 : vector<2x128xf32>
    %1162 = arith.divf %1160, %1161 : vector<2x128xf32>
    %1163 = vector.extract_strided_slice %1150 {offsets = [0, 256], sizes = [2, 128], strides = [1, 1]} : vector<2x512xf32> to vector<2x128xf32>
    %1164 = math.tanh %1163 : vector<2x128xf32>
    %1165 = vector.extract_strided_slice %1150 {offsets = [0, 384], sizes = [2, 128], strides = [1, 1]} : vector<2x512xf32> to vector<2x128xf32>
    %1166 = arith.negf %1165 : vector<2x128xf32>
    %1167 = math.exp %1166 : vector<2x128xf32>
    %cst_288 = arith.constant 1.000000e+00 : f32
    %1168 = vector.broadcast %cst_288 : f32 to vector<2x128xf32>
    %1169 = arith.addf %1168, %1167 : vector<2x128xf32>
    %1170 = arith.divf %1168, %1169 : vector<2x128xf32>
    %1171 = arith.mulf %1162, %1106 : vector<2x128xf32>
    %1172 = arith.mulf %1156, %1164 : vector<2x128xf32>
    %1173 = arith.addf %1171, %1172 : vector<2x128xf32>
    %1174 = math.tanh %1173 : vector<2x128xf32>
    %1175 = arith.mulf %1170, %1174 : vector<2x128xf32>
    %cst_289 = arith.constant dense<0.000000e+00> : vector<2x256xf32>
    %1176 = tpu.matmul %1175, %1, %cst_289 {dimension_numbers = #tpu.dot_dimension_numbers<[1], [0], [0], [1], [0, 0, 1, 1], [], []>} : vector<2x128xf32>, vector<128x256xf32>, vector<2x256xf32> -> vector<2x256xf32>
    %cst_290 = arith.constant dense<0.000000e+00> : vector<2x256xf32>
    %1177 = tpu.matmul %1138, %2, %cst_290 {dimension_numbers = #tpu.dot_dimension_numbers<[1], [0], [0], [1], [0, 0, 1, 1], [], []>} : vector<2x64xf32>, vector<64x256xf32>, vector<2x256xf32> -> vector<2x256xf32>
    %1178 = arith.addf %1176, %1177 : vector<2x256xf32>
    %1179 = vector.broadcast %3 : vector<1x256xf32> to vector<2x256xf32>
    %1180 = arith.addf %1178, %1179 : vector<2x256xf32>
    %1181 = vector.extract_strided_slice %1180 {offsets = [0, 0], sizes = [2, 64], strides = [1, 1]} : vector<2x256xf32> to vector<2x64xf32>
    %1182 = arith.negf %1181 : vector<2x64xf32>
    %1183 = math.exp %1182 : vector<2x64xf32>
    %cst_291 = arith.constant 1.000000e+00 : f32
    %1184 = vector.broadcast %cst_291 : f32 to vector<2x64xf32>
    %1185 = arith.addf %1184, %1183 : vector<2x64xf32>
    %1186 = arith.divf %1184, %1185 : vector<2x64xf32>
    %1187 = vector.extract_strided_slice %1180 {offsets = [0, 64], sizes = [2, 64], strides = [1, 1]} : vector<2x256xf32> to vector<2x64xf32>
    %1188 = arith.negf %1187 : vector<2x64xf32>
    %1189 = math.exp %1188 : vector<2x64xf32>
    %cst_292 = arith.constant 1.000000e+00 : f32
    %1190 = vector.broadcast %cst_292 : f32 to vector<2x64xf32>
    %1191 = arith.addf %1190, %1189 : vector<2x64xf32>
    %1192 = arith.divf %1190, %1191 : vector<2x64xf32>
    %1193 = vector.extract_strided_slice %1180 {offsets = [0, 128], sizes = [2, 64], strides = [1, 1]} : vector<2x256xf32> to vector<2x64xf32>
    %1194 = math.tanh %1193 : vector<2x64xf32>
    %1195 = vector.extract_strided_slice %1180 {offsets = [0, 192], sizes = [2, 64], strides = [1, 1]} : vector<2x256xf32> to vector<2x64xf32>
    %1196 = arith.negf %1195 : vector<2x64xf32>
    %1197 = math.exp %1196 : vector<2x64xf32>
    %cst_293 = arith.constant 1.000000e+00 : f32
    %1198 = vector.broadcast %cst_293 : f32 to vector<2x64xf32>
    %1199 = arith.addf %1198, %1197 : vector<2x64xf32>
    %1200 = arith.divf %1198, %1199 : vector<2x64xf32>
    %1201 = arith.mulf %1192, %1136 : vector<2x64xf32>
    %1202 = arith.mulf %1186, %1194 : vector<2x64xf32>
    %1203 = arith.addf %1201, %1202 : vector<2x64xf32>
    %1204 = math.tanh %1203 : vector<2x64xf32>
    %1205 = arith.mulf %1200, %1204 : vector<2x64xf32>
    %cst_294 = arith.constant 0.000000e+00 : f32
    %1206 = vector.broadcast %cst_294 : f32 to vector<2x64xf32>
    %1207 = arith.cmpf ogt, %1205, %1206 : vector<2x64xf32>
    %cst_295 = arith.constant 1.000000e-01 : f32
    %1208 = vector.broadcast %cst_295 : f32 to vector<2x64xf32>
    %1209 = arith.mulf %1208, %1205 : vector<2x64xf32>
    %1210 = arith.select %1207, %1205, %1209 : vector<2x64xi1>, vector<2x64xf32>
    %c17_296 = arith.constant 17 : index
    %c0_297 = arith.constant 0 : index
    %c0_298 = arith.constant 0 : index
    %1211 = vector.load %arg6[%c17_296, %c0_297, %c0_298] : memref<20x2x64xf32, #tpu.memory_space<vmem>>, vector<1x2x64xf32>
    %1212 = vector.shape_cast %1211 : vector<1x2x64xf32> to vector<2x64xf32>
    %1213 = vector.shape_cast %1210 : vector<2x64xf32> to vector<1x2x64xf32>
    tpu.vector_store %arg6[%c17_296, %c0_297, %c0_298], %1213 {strides = array<i32>} : memref<20x2x64xf32, #tpu.memory_space<vmem>>, vector<1x2x64xf32>,
    %c18 = arith.constant 18 : index
    %c0_299 = arith.constant 0 : index
    %c0_300 = arith.constant 0 : index
    %1214 = vector.load %arg1[%c18, %c0_299, %c0_300] : memref<20x2x512xf32, #tpu.memory_space<vmem>>, vector<1x2x512xf32>
    %1215 = vector.shape_cast %1214 : vector<1x2x512xf32> to vector<2x512xf32>
    %cst_301 = arith.constant dense<0.000000e+00> : vector<2x512xf32>
    %1216 = tpu.matmul %1175, %0, %cst_301 {dimension_numbers = #tpu.dot_dimension_numbers<[1], [0], [0], [1], [0, 0, 1, 1], [], []>} : vector<2x128xf32>, vector<128x512xf32>, vector<2x512xf32> -> vector<2x512xf32>
    %1217 = arith.addf %1215, %1216 : vector<2x512xf32>
    %1218 = vector.extract_strided_slice %1217 {offsets = [0, 0], sizes = [2, 128], strides = [1, 1]} : vector<2x512xf32> to vector<2x128xf32>
    %1219 = arith.negf %1218 : vector<2x128xf32>
    %1220 = math.exp %1219 : vector<2x128xf32>
    %cst_302 = arith.constant 1.000000e+00 : f32
    %1221 = vector.broadcast %cst_302 : f32 to vector<2x128xf32>
    %1222 = arith.addf %1221, %1220 : vector<2x128xf32>
    %1223 = arith.divf %1221, %1222 : vector<2x128xf32>
    %1224 = vector.extract_strided_slice %1217 {offsets = [0, 128], sizes = [2, 128], strides = [1, 1]} : vector<2x512xf32> to vector<2x128xf32>
    %1225 = arith.negf %1224 : vector<2x128xf32>
    %1226 = math.exp %1225 : vector<2x128xf32>
    %cst_303 = arith.constant 1.000000e+00 : f32
    %1227 = vector.broadcast %cst_303 : f32 to vector<2x128xf32>
    %1228 = arith.addf %1227, %1226 : vector<2x128xf32>
    %1229 = arith.divf %1227, %1228 : vector<2x128xf32>
    %1230 = vector.extract_strided_slice %1217 {offsets = [0, 256], sizes = [2, 128], strides = [1, 1]} : vector<2x512xf32> to vector<2x128xf32>
    %1231 = math.tanh %1230 : vector<2x128xf32>
    %1232 = vector.extract_strided_slice %1217 {offsets = [0, 384], sizes = [2, 128], strides = [1, 1]} : vector<2x512xf32> to vector<2x128xf32>
    %1233 = arith.negf %1232 : vector<2x128xf32>
    %1234 = math.exp %1233 : vector<2x128xf32>
    %cst_304 = arith.constant 1.000000e+00 : f32
    %1235 = vector.broadcast %cst_304 : f32 to vector<2x128xf32>
    %1236 = arith.addf %1235, %1234 : vector<2x128xf32>
    %1237 = arith.divf %1235, %1236 : vector<2x128xf32>
    %1238 = arith.mulf %1229, %1173 : vector<2x128xf32>
    %1239 = arith.mulf %1223, %1231 : vector<2x128xf32>
    %1240 = arith.addf %1238, %1239 : vector<2x128xf32>
    %1241 = math.tanh %1240 : vector<2x128xf32>
    %1242 = arith.mulf %1237, %1241 : vector<2x128xf32>
    %cst_305 = arith.constant dense<0.000000e+00> : vector<2x256xf32>
    %1243 = tpu.matmul %1242, %1, %cst_305 {dimension_numbers = #tpu.dot_dimension_numbers<[1], [0], [0], [1], [0, 0, 1, 1], [], []>} : vector<2x128xf32>, vector<128x256xf32>, vector<2x256xf32> -> vector<2x256xf32>
    %cst_306 = arith.constant dense<0.000000e+00> : vector<2x256xf32>
    %1244 = tpu.matmul %1205, %2, %cst_306 {dimension_numbers = #tpu.dot_dimension_numbers<[1], [0], [0], [1], [0, 0, 1, 1], [], []>} : vector<2x64xf32>, vector<64x256xf32>, vector<2x256xf32> -> vector<2x256xf32>
    %1245 = arith.addf %1243, %1244 : vector<2x256xf32>
    %1246 = vector.broadcast %3 : vector<1x256xf32> to vector<2x256xf32>
    %1247 = arith.addf %1245, %1246 : vector<2x256xf32>
    %1248 = vector.extract_strided_slice %1247 {offsets = [0, 0], sizes = [2, 64], strides = [1, 1]} : vector<2x256xf32> to vector<2x64xf32>
    %1249 = arith.negf %1248 : vector<2x64xf32>
    %1250 = math.exp %1249 : vector<2x64xf32>
    %cst_307 = arith.constant 1.000000e+00 : f32
    %1251 = vector.broadcast %cst_307 : f32 to vector<2x64xf32>
    %1252 = arith.addf %1251, %1250 : vector<2x64xf32>
    %1253 = arith.divf %1251, %1252 : vector<2x64xf32>
    %1254 = vector.extract_strided_slice %1247 {offsets = [0, 64], sizes = [2, 64], strides = [1, 1]} : vector<2x256xf32> to vector<2x64xf32>
    %1255 = arith.negf %1254 : vector<2x64xf32>
    %1256 = math.exp %1255 : vector<2x64xf32>
    %cst_308 = arith.constant 1.000000e+00 : f32
    %1257 = vector.broadcast %cst_308 : f32 to vector<2x64xf32>
    %1258 = arith.addf %1257, %1256 : vector<2x64xf32>
    %1259 = arith.divf %1257, %1258 : vector<2x64xf32>
    %1260 = vector.extract_strided_slice %1247 {offsets = [0, 128], sizes = [2, 64], strides = [1, 1]} : vector<2x256xf32> to vector<2x64xf32>
    %1261 = math.tanh %1260 : vector<2x64xf32>
    %1262 = vector.extract_strided_slice %1247 {offsets = [0, 192], sizes = [2, 64], strides = [1, 1]} : vector<2x256xf32> to vector<2x64xf32>
    %1263 = arith.negf %1262 : vector<2x64xf32>
    %1264 = math.exp %1263 : vector<2x64xf32>
    %cst_309 = arith.constant 1.000000e+00 : f32
    %1265 = vector.broadcast %cst_309 : f32 to vector<2x64xf32>
    %1266 = arith.addf %1265, %1264 : vector<2x64xf32>
    %1267 = arith.divf %1265, %1266 : vector<2x64xf32>
    %1268 = arith.mulf %1259, %1203 : vector<2x64xf32>
    %1269 = arith.mulf %1253, %1261 : vector<2x64xf32>
    %1270 = arith.addf %1268, %1269 : vector<2x64xf32>
    %1271 = math.tanh %1270 : vector<2x64xf32>
    %1272 = arith.mulf %1267, %1271 : vector<2x64xf32>
    %cst_310 = arith.constant 0.000000e+00 : f32
    %1273 = vector.broadcast %cst_310 : f32 to vector<2x64xf32>
    %1274 = arith.cmpf ogt, %1272, %1273 : vector<2x64xf32>
    %cst_311 = arith.constant 1.000000e-01 : f32
    %1275 = vector.broadcast %cst_311 : f32 to vector<2x64xf32>
    %1276 = arith.mulf %1275, %1272 : vector<2x64xf32>
    %1277 = arith.select %1274, %1272, %1276 : vector<2x64xi1>, vector<2x64xf32>
    %c18_312 = arith.constant 18 : index
    %c0_313 = arith.constant 0 : index
    %c0_314 = arith.constant 0 : index
    %1278 = vector.load %arg6[%c18_312, %c0_313, %c0_314] : memref<20x2x64xf32, #tpu.memory_space<vmem>>, vector<1x2x64xf32>
    %1279 = vector.shape_cast %1278 : vector<1x2x64xf32> to vector<2x64xf32>
    %1280 = vector.shape_cast %1277 : vector<2x64xf32> to vector<1x2x64xf32>
    tpu.vector_store %arg6[%c18_312, %c0_313, %c0_314], %1280 {strides = array<i32>} : memref<20x2x64xf32, #tpu.memory_space<vmem>>, vector<1x2x64xf32>,
    %c19 = arith.constant 19 : index
    %c0_315 = arith.constant 0 : index
    %c0_316 = arith.constant 0 : index
    %1281 = vector.load %arg1[%c19, %c0_315, %c0_316] : memref<20x2x512xf32, #tpu.memory_space<vmem>>, vector<1x2x512xf32>
    %1282 = vector.shape_cast %1281 : vector<1x2x512xf32> to vector<2x512xf32>
    %cst_317 = arith.constant dense<0.000000e+00> : vector<2x512xf32>
    %1283 = tpu.matmul %1242, %0, %cst_317 {dimension_numbers = #tpu.dot_dimension_numbers<[1], [0], [0], [1], [0, 0, 1, 1], [], []>} : vector<2x128xf32>, vector<128x512xf32>, vector<2x512xf32> -> vector<2x512xf32>
    %1284 = arith.addf %1282, %1283 : vector<2x512xf32>
    %1285 = vector.extract_strided_slice %1284 {offsets = [0, 0], sizes = [2, 128], strides = [1, 1]} : vector<2x512xf32> to vector<2x128xf32>
    %1286 = arith.negf %1285 : vector<2x128xf32>
    %1287 = math.exp %1286 : vector<2x128xf32>
    %cst_318 = arith.constant 1.000000e+00 : f32
    %1288 = vector.broadcast %cst_318 : f32 to vector<2x128xf32>
    %1289 = arith.addf %1288, %1287 : vector<2x128xf32>
    %1290 = arith.divf %1288, %1289 : vector<2x128xf32>
    %1291 = vector.extract_strided_slice %1284 {offsets = [0, 128], sizes = [2, 128], strides = [1, 1]} : vector<2x512xf32> to vector<2x128xf32>
    %1292 = arith.negf %1291 : vector<2x128xf32>
    %1293 = math.exp %1292 : vector<2x128xf32>
    %cst_319 = arith.constant 1.000000e+00 : f32
    %1294 = vector.broadcast %cst_319 : f32 to vector<2x128xf32>
    %1295 = arith.addf %1294, %1293 : vector<2x128xf32>
    %1296 = arith.divf %1294, %1295 : vector<2x128xf32>
    %1297 = vector.extract_strided_slice %1284 {offsets = [0, 256], sizes = [2, 128], strides = [1, 1]} : vector<2x512xf32> to vector<2x128xf32>
    %1298 = math.tanh %1297 : vector<2x128xf32>
    %1299 = vector.extract_strided_slice %1284 {offsets = [0, 384], sizes = [2, 128], strides = [1, 1]} : vector<2x512xf32> to vector<2x128xf32>
    %1300 = arith.negf %1299 : vector<2x128xf32>
    %1301 = math.exp %1300 : vector<2x128xf32>
    %cst_320 = arith.constant 1.000000e+00 : f32
    %1302 = vector.broadcast %cst_320 : f32 to vector<2x128xf32>
    %1303 = arith.addf %1302, %1301 : vector<2x128xf32>
    %1304 = arith.divf %1302, %1303 : vector<2x128xf32>
    %1305 = arith.mulf %1296, %1240 : vector<2x128xf32>
    %1306 = arith.mulf %1290, %1298 : vector<2x128xf32>
    %1307 = arith.addf %1305, %1306 : vector<2x128xf32>
    %1308 = math.tanh %1307 : vector<2x128xf32>
    %1309 = arith.mulf %1304, %1308 : vector<2x128xf32>
    %cst_321 = arith.constant dense<0.000000e+00> : vector<2x256xf32>
    %1310 = tpu.matmul %1309, %1, %cst_321 {dimension_numbers = #tpu.dot_dimension_numbers<[1], [0], [0], [1], [0, 0, 1, 1], [], []>} : vector<2x128xf32>, vector<128x256xf32>, vector<2x256xf32> -> vector<2x256xf32>
    %cst_322 = arith.constant dense<0.000000e+00> : vector<2x256xf32>
    %1311 = tpu.matmul %1272, %2, %cst_322 {dimension_numbers = #tpu.dot_dimension_numbers<[1], [0], [0], [1], [0, 0, 1, 1], [], []>} : vector<2x64xf32>, vector<64x256xf32>, vector<2x256xf32> -> vector<2x256xf32>
    %1312 = arith.addf %1310, %1311 : vector<2x256xf32>
    %1313 = vector.broadcast %3 : vector<1x256xf32> to vector<2x256xf32>
    %1314 = arith.addf %1312, %1313 : vector<2x256xf32>
    %1315 = vector.extract_strided_slice %1314 {offsets = [0, 0], sizes = [2, 64], strides = [1, 1]} : vector<2x256xf32> to vector<2x64xf32>
    %1316 = arith.negf %1315 : vector<2x64xf32>
    %1317 = math.exp %1316 : vector<2x64xf32>
    %cst_323 = arith.constant 1.000000e+00 : f32
    %1318 = vector.broadcast %cst_323 : f32 to vector<2x64xf32>
    %1319 = arith.addf %1318, %1317 : vector<2x64xf32>
    %1320 = arith.divf %1318, %1319 : vector<2x64xf32>
    %1321 = vector.extract_strided_slice %1314 {offsets = [0, 64], sizes = [2, 64], strides = [1, 1]} : vector<2x256xf32> to vector<2x64xf32>
    %1322 = arith.negf %1321 : vector<2x64xf32>
    %1323 = math.exp %1322 : vector<2x64xf32>
    %cst_324 = arith.constant 1.000000e+00 : f32
    %1324 = vector.broadcast %cst_324 : f32 to vector<2x64xf32>
    %1325 = arith.addf %1324, %1323 : vector<2x64xf32>
    %1326 = arith.divf %1324, %1325 : vector<2x64xf32>
    %1327 = vector.extract_strided_slice %1314 {offsets = [0, 128], sizes = [2, 64], strides = [1, 1]} : vector<2x256xf32> to vector<2x64xf32>
    %1328 = math.tanh %1327 : vector<2x64xf32>
    %1329 = vector.extract_strided_slice %1314 {offsets = [0, 192], sizes = [2, 64], strides = [1, 1]} : vector<2x256xf32> to vector<2x64xf32>
    %1330 = arith.negf %1329 : vector<2x64xf32>
    %1331 = math.exp %1330 : vector<2x64xf32>
    %cst_325 = arith.constant 1.000000e+00 : f32
    %1332 = vector.broadcast %cst_325 : f32 to vector<2x64xf32>
    %1333 = arith.addf %1332, %1331 : vector<2x64xf32>
    %1334 = arith.divf %1332, %1333 : vector<2x64xf32>
    %1335 = arith.mulf %1326, %1270 : vector<2x64xf32>
    %1336 = arith.mulf %1320, %1328 : vector<2x64xf32>
    %1337 = arith.addf %1335, %1336 : vector<2x64xf32>
    %1338 = math.tanh %1337 : vector<2x64xf32>
    %1339 = arith.mulf %1334, %1338 : vector<2x64xf32>
    %cst_326 = arith.constant 0.000000e+00 : f32
    %1340 = vector.broadcast %cst_326 : f32 to vector<2x64xf32>
    %1341 = arith.cmpf ogt, %1339, %1340 : vector<2x64xf32>
    %cst_327 = arith.constant 1.000000e-01 : f32
    %1342 = vector.broadcast %cst_327 : f32 to vector<2x64xf32>
    %1343 = arith.mulf %1342, %1339 : vector<2x64xf32>
    %1344 = arith.select %1341, %1339, %1343 : vector<2x64xi1>, vector<2x64xf32>
    %c19_328 = arith.constant 19 : index
    %c0_329 = arith.constant 0 : index
    %c0_330 = arith.constant 0 : index
    %1345 = vector.load %arg6[%c19_328, %c0_329, %c0_330] : memref<20x2x64xf32, #tpu.memory_space<vmem>>, vector<1x2x64xf32>
    %1346 = vector.shape_cast %1345 : vector<1x2x64xf32> to vector<2x64xf32>
    %1347 = vector.shape_cast %1344 : vector<2x64xf32> to vector<1x2x64xf32>
    tpu.vector_store %arg6[%c19_328, %c0_329, %c0_330], %1347 {strides = array<i32>} : memref<20x2x64xf32, #tpu.memory_space<vmem>>, vector<1x2x64xf32>,
    return
  }
  func.func @transform_0(%arg0: i32) -> (i32, i32, i32) {
    %c0_i32 = arith.constant 0 : i32
    %c0_i32_0 = arith.constant 0 : i32
    %c0_i32_1 = arith.constant 0 : i32
    %c0_i32_2 = arith.constant 0 : i32
    return %c0_i32, %c0_i32_0, %c0_i32_1 : i32, i32, i32
  }
  func.func @transform_1(%arg0: i32) -> (i32, i32) {
    %c0_i32 = arith.constant 0 : i32
    %c0_i32_0 = arith.constant 0 : i32
    %c0_i32_1 = arith.constant 0 : i32
    return %c0_i32, %c0_i32_0 : i32, i32
  }
  func.func @transform_2(%arg0: i32) -> (i32, i32) {
    %c0_i32 = arith.constant 0 : i32
    %c0_i32_0 = arith.constant 0 : i32
    %c0_i32_1 = arith.constant 0 : i32
    return %c0_i32, %c0_i32_0 : i32, i32
  }
  func.func @transform_3(%arg0: i32) -> (i32, i32) {
    %c0_i32 = arith.constant 0 : i32
    %c0_i32_0 = arith.constant 0 : i32
    %c0_i32_1 = arith.constant 0 : i32
    return %c0_i32, %c0_i32_0 : i32, i32
  }
  func.func @transform_4(%arg0: i32) -> (i32, i32) {
    %c0_i32 = arith.constant 0 : i32
    %c0_i32_0 = arith.constant 0 : i32
    %c0_i32_1 = arith.constant 0 : i32
    return %c0_i32, %c0_i32_0 : i32, i32
  }
  func.func @transform_5(%arg0: i32) -> (i32, i32, i32) {
    %c0_i32 = arith.constant 0 : i32
    %c0_i32_0 = arith.constant 0 : i32
    %c0_i32_1 = arith.constant 0 : i32
    %c0_i32_2 = arith.constant 0 : i32
    return %c0_i32, %c0_i32_0, %c0_i32_1 : i32, i32, i32
  }
}

</mosaic_0001>

<llo_original>
// kernel: tpu_custom_call.1
$region0: #{tpu_custom_call.1}
  #allocation0 [shape = 'u32[]', space=smem, size = 0x4, offset = 0x4, fixed_abs, tag = 'smem constant byte address 0x4 - core index']
  #allocation1 [shape = 'u32[144,128]{1,0:T(1,128)}', space=vmem, size = 0x12000, scoped, tag = 'internal scratch']
  %s0 = inlined_call_operand.hbm [shape: f32[20,2,512], index: 0, kind: input, shape index: {}]
  %s1 = inlined_call_operand.hbm [shape: f32[128,512], index: 1, kind: input, shape index: {}]
  %s2 = inlined_call_operand.hbm [shape: f32[128,256], index: 2, kind: input, shape index: {}]
  %s3 = inlined_call_operand.hbm [shape: f32[64,256], index: 3, kind: input, shape index: {}]
  %s4 = inlined_call_operand.vmem [shape: f32[1,256], index: 4, kind: input, shape index: {}]
  %s5 = inlined_call_operand.hbm [shape: f32[20,2,64], index: 5, kind: output, shape index: {}]
  %s6 = sld [smem:[#allocation0]]
  $region46: #{tpu_custom_call.1} parent=0
    _
  %s8 = ssub.s32 1, %s6
  %s9 = scalar_select 0, %s8, %s6
  $region1: #{tpu_custom_call.1} parent=0
    #allocation2 [shape = 'u8[81920]{0}', space=vmem, size = 0x14000, scoped, tag = 'input window, operand 0, single buffered']
    #allocation3 [shape = 's32[1]{0}', space=sflag, size = 0x4, scoped, tag = 'scoped memory for tpu_custom_call.1']
    #allocation4 [shape = 's32[1]{0}', space=sflag, size = 0x4, scoped, tag = 'scoped memory for tpu_custom_call.1']
    #allocation5 [shape = 'u8[262144]{0}', space=vmem, size = 0x40000, scoped, tag = 'input window, operand 1, single buffered']
    #allocation6 [shape = 's32[1]{0}', space=sflag, size = 0x4, scoped, tag = 'scoped memory for tpu_custom_call.1']
    #allocation7 [shape = 'u8[131072]{0}', space=vmem, size = 0x20000, scoped, tag = 'input window, operand 2, single buffered']
    #allocation8 [shape = 'u8[65536]{0}', space=vmem, size = 0x10000, scoped, tag = 'input window, operand 3, single buffered']
    #allocation9 [shape = 's32[1]{0}', space=sflag, size = 0x4, scoped, tag = 'scoped memory for tpu_custom_call.1']
    #allocation10 [shape = 'u8[20480]{0}', space=vmem, size = 0x5000, scoped, tag = 'output window, operand 0, single buffered']
    %10 = vsyncpa [#allocation3], 0
    %11 = vsyncpa [#allocation6], 0
    %12 = vsyncpa [#allocation9], 0
    %13 = vsyncpa [#allocation4], 0
    // Predicated region
    $region2: #{tpu_custom_call.1} parent=1 // pred_check
      _
    $region3: #{tpu_custom_call.1} parent=1 // pred_check_branch
      %15 = sbr.rel (0) target = $region5
    $region4: #{tpu_custom_call.1} parent=1 // pred_region
      %s17 = ssub.s32 2560, 2560
      %18 = vsyncadd [#allocation3], %s17
      %s19 = sshll.u32 [#allocation2], 4
      %s20 = int_to_ptr.vmem [resolvable:$true] %s19
      %25 = dma.hbm_to_vmem [thread:$0]  %s0, 2560, %s20, [#allocation3], 128, 128, 8
    $region5: #{tpu_custom_call.1} parent=1 // pred_fallthru
      _
    // Predicated region
    $region6: #{tpu_custom_call.1} parent=1 // pred_check
      _
    $region7: #{tpu_custom_call.1} parent=1 // pred_check_branch
      %27 = sbr.rel (0) target = $region9
    $region8: #{tpu_custom_call.1} parent=1 // pred_region
      %s29 = ssub.s32 8192, 8192
      %30 = vsyncadd [#allocation6], %s29
      %s31 = sshll.u32 [#allocation5], 4
      %s32 = int_to_ptr.vmem [resolvable:$true] %s31
      %37 = dma.hbm_to_vmem [thread:$0]  %s1, 8192, %s32, [#allocation6], 512, 512, 32
    $region9: #{tpu_custom_call.1} parent=1 // pred_fallthru
      _
    // Predicated region
    $region10: #{tpu_custom_call.1} parent=1 // pred_check
      _
    $region11: #{tpu_custom_call.1} parent=1 // pred_check_branch
      %39 = sbr.rel (0) target = $region13
    $region12: #{tpu_custom_call.1} parent=1 // pred_region
      %s41 = ssub.s32 4096, 4096
      %42 = vsyncadd [#allocation6], %s41
      %s43 = sshll.u32 [#allocation7], 4
      %s44 = int_to_ptr.vmem [resolvable:$true] %s43
      %49 = dma.hbm_to_vmem [thread:$0]  %s2, 4096, %s44, [#allocation6], 256, 256, 16
    $region13: #{tpu_custom_call.1} parent=1 // pred_fallthru
      _
    // Predicated region
    $region14: #{tpu_custom_call.1} parent=1 // pred_check
      _
    $region15: #{tpu_custom_call.1} parent=1 // pred_check_branch
      %51 = sbr.rel (0) target = $region17
    $region16: #{tpu_custom_call.1} parent=1 // pred_region
      %s53 = ssub.s32 2048, 2048
      %54 = vsyncadd [#allocation9], %s53
      %s55 = sshll.u32 [#allocation8], 4
      %s56 = int_to_ptr.vmem [resolvable:$true] %s55
      %61 = dma.hbm_to_vmem [thread:$0]  %s3, 2048, %s56, [#allocation9], 256, 256, 16
    $region17: #{tpu_custom_call.1} parent=1 // pred_fallthru
      _
    // Predicated region
    $region18: #{tpu_custom_call.1} parent=1 // pred_check
      _
    $region19: #{tpu_custom_call.1} parent=1 // pred_check_branch
      %63 = sbr.rel (0) target = $region21
    $region20: #{tpu_custom_call.1} parent=1 // pred_region
      _
    $region21: #{tpu_custom_call.1} parent=1 // pred_fallthru
      _
    // Predicated region
    $region22: #{tpu_custom_call.1} parent=1 // pred_check
      _
    $region23: #{tpu_custom_call.1} parent=1 // pred_check_branch
      %65 = sbr.rel (0) target = $region25
    $region24: #{tpu_custom_call.1} parent=1 // pred_region
      %66 = dma.done [#allocation3], 2560
    $region25: #{tpu_custom_call.1} parent=1 // pred_fallthru
      _
    // Predicated region
    $region26: #{tpu_custom_call.1} parent=1 // pred_check
      _
    $region27: #{tpu_custom_call.1} parent=1 // pred_check_branch
      %68 = sbr.rel (0) target = $region29
    $region28: #{tpu_custom_call.1} parent=1 // pred_region
      %69 = dma.done [#allocation6], 8192
    $region29: #{tpu_custom_call.1} parent=1 // pred_fallthru
      _
    // Predicated region
    $region30: #{tpu_custom_call.1} parent=1 // pred_check
      _
    $region31: #{tpu_custom_call.1} parent=1 // pred_check_branch
      %71 = sbr.rel (0) target = $region33
    $region32: #{tpu_custom_call.1} parent=1 // pred_region
      %72 = dma.done [#allocation6], 4096
    $region33: #{tpu_custom_call.1} parent=1 // pred_fallthru
      _
    // Predicated region
    $region34: #{tpu_custom_call.1} parent=1 // pred_check
      _
    $region35: #{tpu_custom_call.1} parent=1 // pred_check_branch
      %74 = sbr.rel (0) target = $region37
    $region36: #{tpu_custom_call.1} parent=1 // pred_region
      %75 = dma.done [#allocation9], 2048
    $region37: #{tpu_custom_call.1} parent=1 // pred_fallthru
      _
    %v76 = vld [vmem:[#allocation5] sm:$0xff]
    %v77 = vld [vmem:[#allocation5 + $0x8] sm:$0xff]
    %v78 = vld [vmem:[#allocation5 + $0x10] sm:$0xff]
    %v79 = vld [vmem:[#allocation5 + $0x18] sm:$0xff]
    %v80 = vld [vmem:[#allocation5 + $0x20] sm:$0xff]
    %v81 = vld [vmem:[#allocation5 + $0x28] sm:$0xff]
    %v82 = vld [vmem:[#allocation5 + $0x30] sm:$0xff]
    %v83 = vld [vmem:[#allocation5 + $0x38] sm:$0xff]
    %v84 = vld [vmem:[#allocation5 + $0x40] sm:$0xff]
    %v85 = vld [vmem:[#allocation5 + $0x48] sm:$0xff]
    %v86 = vld [vmem:[#allocation5 + $0x50] sm:$0xff]
    %v87 = vld [vmem:[#allocation5 + $0x58] sm:$0xff]
    %v88 = vld [vmem:[#allocation5 + $0x60] sm:$0xff]
    %v89 = vld [vmem:[#allocation5 + $0x68] sm:$0xff]
    %v90 = vld [vmem:[#allocation5 + $0x70] sm:$0xff]
    %v91 = vld [vmem:[#allocation5 + $0x78] sm:$0xff]
    %v92 = vld [vmem:[#allocation5 + $0x80] sm:$0xff]
    %v93 = vld [vmem:[#allocation5 + $0x88] sm:$0xff]
    %v94 = vld [vmem:[#allocation5 + $0x90] sm:$0xff]
    %v95 = vld [vmem:[#allocation5 + $0x98] sm:$0xff]
    %v96 = vld [vmem:[#allocation5 + $0xa0] sm:$0xff]
    %v97 = vld [vmem:[#allocation5 + $0xa8] sm:$0xff]
    %v98 = vld [vmem:[#allocation5 + $0xb0] sm:$0xff]
    %v99 = vld [vmem:[#allocation5 + $0xb8] sm:$0xff]
    %v100 = vld [vmem:[#allocation5 + $0xc0] sm:$0xff]
    %v101 = vld [vmem:[#allocation5 + $0xc8] sm:$0xff]
    %v102 = vld [vmem:[#allocation5 + $0xd0] sm:$0xff]
    %v103 = vld [vmem:[#allocation5 + $0xd8] sm:$0xff]
    %v104 = vld [vmem:[#allocation5 + $0xe0] sm:$0xff]
    %v105 = vld [vmem:[#allocation5 + $0xe8] sm:$0xff]
    %v106 = vld [vmem:[#allocation5 + $0xf0] sm:$0xff]
    %v107 = vld [vmem:[#allocation5 + $0xf8] sm:$0xff]
    %v108 = vld [vmem:[#allocation5 + $0x100] sm:$0xff]
    %v109 = vld [vmem:[#allocation5 + $0x108] sm:$0xff]
    %v110 = vld [vmem:[#allocation5 + $0x110] sm:$0xff]
    %v111 = vld [vmem:[#allocation5 + $0x118] sm:$0xff]
    %v112 = vld [vmem:[#allocation5 + $0x120] sm:$0xff]
    %v113 = vld [vmem:[#allocation5 + $0x128] sm:$0xff]
    %v114 = vld [vmem:[#allocation5 + $0x130] sm:$0xff]
    %v115 = vld [vmem:[#allocation5 + $0x138] sm:$0xff]
    %v116 = vld [vmem:[#allocation5 + $0x140] sm:$0xff]
    %v117 = vld [vmem:[#allocation5 + $0x148] sm:$0xff]
    %v118 = vld [vmem:[#allocation5 + $0x150] sm:$0xff]
    %v119 = vld [vmem:[#allocation5 + $0x158] sm:$0xff]
    %v120 = vld [vmem:[#allocation5 + $0x160] sm:$0xff]
    %v121 = vld [vmem:[#allocation5 + $0x168] sm:$0xff]
    %v122 = vld [vmem:[#allocation5 + $0x170] sm:$0xff]
    %v123 = vld [vmem:[#allocation5 + $0x178] sm:$0xff]
    %v124 = vld [vmem:[#allocation5 + $0x180] sm:$0xff]
    %v125 = vld [vmem:[#allocation5 + $0x188] sm:$0xff]
    %v126 = vld [vmem:[#allocation5 + $0x190] sm:$0xff]
    %v127 = vld [vmem:[#allocation5 + $0x198] sm:$0xff]
    %v128 = vld [vmem:[#allocation5 + $0x1a0] sm:$0xff]
    %v129 = vld [vmem:[#allocation5 + $0x1a8] sm:$0xff]
    %v130 = vld [vmem:[#allocation5 + $0x1b0] sm:$0xff]
    %v131 = vld [vmem:[#allocation5 + $0x1b8] sm:$0xff]
    %v132 = vld [vmem:[#allocation5 + $0x1c0] sm:$0xff]
    %v133 = vld [vmem:[#allocation5 + $0x1c8] sm:$0xff]
    %v134 = vld [vmem:[#allocation5 + $0x1d0] sm:$0xff]
    %v135 = vld [vmem:[#allocation5 + $0x1d8] sm:$0xff]
    %v136 = vld [vmem:[#allocation5 + $0x1e0] sm:$0xff]
    %v137 = vld [vmem:[#allocation5 + $0x1e8] sm:$0xff]
    %v138 = vld [vmem:[#allocation5 + $0x1f0] sm:$0xff]
    %v139 = vld [vmem:[#allocation5 + $0x1f8] sm:$0xff]
    %v140 = vld [vmem:[#allocation7] sm:$0xff]
    %v141 = vld [vmem:[#allocation7 + $0x8] sm:$0xff]
    %v142 = vld [vmem:[#allocation7 + $0x10] sm:$0xff]
    %v143 = vld [vmem:[#allocation7 + $0x18] sm:$0xff]
    %v144 = vld [vmem:[#allocation7 + $0x20] sm:$0xff]
    %v145 = vld [vmem:[#allocation7 + $0x28] sm:$0xff]
    %v146 = vld [vmem:[#allocation7 + $0x30] sm:$0xff]
    %v147 = vld [vmem:[#allocation7 + $0x38] sm:$0xff]
    %v148 = vld [vmem:[#allocation7 + $0x40] sm:$0xff]
    %v149 = vld [vmem:[#allocation7 + $0x48] sm:$0xff]
    %v150 = vld [vmem:[#allocation7 + $0x50] sm:$0xff]
    %v151 = vld [vmem:[#allocation7 + $0x58] sm:$0xff]
    %v152 = vld [vmem:[#allocation7 + $0x60] sm:$0xff]
    %v153 = vld [vmem:[#allocation7 + $0x68] sm:$0xff]
    %v154 = vld [vmem:[#allocation7 + $0x70] sm:$0xff]
    %v155 = vld [vmem:[#allocation7 + $0x78] sm:$0xff]
    %v156 = vld [vmem:[#allocation7 + $0x80] sm:$0xff]
    %v157 = vld [vmem:[#allocation7 + $0x88] sm:$0xff]
    %v158 = vld [vmem:[#allocation7 + $0x90] sm:$0xff]
    %v159 = vld [vmem:[#allocation7 + $0x98] sm:$0xff]
    %v160 = vld [vmem:[#allocation7 + $0xa0] sm:$0xff]
    %v161 = vld [vmem:[#allocation7 + $0xa8] sm:$0xff]
    %v162 = vld [vmem:[#allocation7 + $0xb0] sm:$0xff]
    %v163 = vld [vmem:[#allocation7 + $0xb8] sm:$0xff]
    %v164 = vld [vmem:[#allocation7 + $0xc0] sm:$0xff]
    %v165 = vld [vmem:[#allocation7 + $0xc8] sm:$0xff]
    %v166 = vld [vmem:[#allocation7 + $0xd0] sm:$0xff]
    %v167 = vld [vmem:[#allocation7 + $0xd8] sm:$0xff]
    %v168 = vld [vmem:[#allocation7 + $0xe0] sm:$0xff]
    %v169 = vld [vmem:[#allocation7 + $0xe8] sm:$0xff]
    %v170 = vld [vmem:[#allocation7 + $0xf0] sm:$0xff]
    %v171 = vld [vmem:[#allocation7 + $0xf8] sm:$0xff]
    %v172 = vld [vmem:[#allocation8] sm:$0xff]
    %v173 = vld [vmem:[#allocation8 + $0x8] sm:$0xff]
    %v174 = vld [vmem:[#allocation8 + $0x10] sm:$0xff]
    %v175 = vld [vmem:[#allocation8 + $0x18] sm:$0xff]
    %v176 = vld [vmem:[#allocation8 + $0x20] sm:$0xff]
    %v177 = vld [vmem:[#allocation8 + $0x28] sm:$0xff]
    %v178 = vld [vmem:[#allocation8 + $0x30] sm:$0xff]
    %v179 = vld [vmem:[#allocation8 + $0x38] sm:$0xff]
    %v180 = vld [vmem:[#allocation8 + $0x40] sm:$0xff]
    %v181 = vld [vmem:[#allocation8 + $0x48] sm:$0xff]
    %v182 = vld [vmem:[#allocation8 + $0x50] sm:$0xff]
    %v183 = vld [vmem:[#allocation8 + $0x58] sm:$0xff]
    %v184 = vld [vmem:[#allocation8 + $0x60] sm:$0xff]
    %v185 = vld [vmem:[#allocation8 + $0x68] sm:$0xff]
    %v186 = vld [vmem:[#allocation8 + $0x70] sm:$0xff]
    %v187 = vld [vmem:[#allocation8 + $0x78] sm:$0xff]
    %v188 = vld [vmem:[%s4] sm:$0x3]
    %v189 = vld [vmem:[#allocation2] sm:$0xff]
    %190 = vmatprep.subr.mxu0 %v77
    %191 = vmatpush1.msra.mxu0 %v76
    %192 = vmatprep.subr.mxu0 %v81
    %193 = vmatpush1.msra.mxu0 %v80
    %194 = vmatprep.subr.mxu0 %v85
    %195 = vmatpush1.msra.mxu0 %v84
    %196 = vmatprep.subr.mxu0 %v89
    %197 = vmatpush1.msra.mxu0 %v88
    %198 = vmatprep.subr.mxu0 %v93
    %199 = vmatpush1.msra.mxu0 %v92
    %200 = vmatprep.subr.mxu0 %v97
    %201 = vmatpush1.msra.mxu0 %v96
    %202 = vmatprep.subr.mxu0 %v101
    %203 = vmatpush1.msra.mxu0 %v100
    %204 = vmatprep.subr.mxu0 %v105
    %205 = vmatpush1.msra.mxu0 %v104
    %206 = vmatprep.subr.mxu0 %v109
    %207 = vmatpush1.msra.mxu0 %v108
    %208 = vmatprep.subr.mxu0 %v113
    %209 = vmatpush1.msra.mxu0 %v112
    %210 = vmatprep.subr.mxu0 %v117
    %211 = vmatpush1.msra.mxu0 %v116
    %212 = vmatprep.subr.mxu0 %v121
    %213 = vmatpush1.msra.mxu0 %v120
    %214 = vmatprep.subr.mxu0 %v125
    %215 = vmatpush1.msra.mxu0 %v124
    %216 = vmatprep.subr.mxu0 %v129
    %217 = vmatpush1.msra.mxu0 %v128
    %218 = vmatprep.subr.mxu0 %v133
    %219 = vmatpush1.msra.mxu0 %v132
    %220 = vmatprep.subr.mxu0 %v137
    %221 = vmatpush1.msra.mxu0 %v136
    %222 = vmatprep.subr.mxu0 0.0
    %223 = vmatpush1.msra.mxu0 0.0
    %224 = vmatprep.subr.mxu0 0.0
    %225 = vmatpush1.msra.mxu0 0.0
    %226 = vmatprep.subr.mxu0 0.0
    %227 = vmatpush1.msra.mxu0 0.0
    %228 = vmatprep.subr.mxu0 0.0
    %229 = vmatpush1.msra.mxu0 0.0
    %230 = vmatprep.subr.mxu0 0.0
    %231 = vmatpush1.msra.mxu0 0.0
    %232 = vmatprep.subr.mxu0 0.0
    %233 = vmatpush1.msra.mxu0 0.0
    %234 = vmatprep.subr.mxu0 0.0
    %235 = vmatpush1.msra.mxu0 0.0
    %236 = vmatprep.subr.mxu0 0.0
    %237 = vmatpush1.msra.mxu0 0.0
    %238 = vmatprep.subr.mxu0 0.0
    %239 = vmatpush1.msra.mxu0 0.0
    %240 = vmatprep.subr.mxu0 0.0
    %241 = vmatpush1.msra.mxu0 0.0
    %242 = vmatprep.subr.mxu0 0.0
    %243 = vmatpush1.msra.mxu0 0.0
    %244 = vmatprep.subr.mxu0 0.0
    %245 = vmatpush1.msra.mxu0 0.0
    %246 = vmatprep.subr.mxu0 0.0
    %247 = vmatpush1.msra.mxu0 0.0
    %248 = vmatprep.subr.mxu0 0.0
    %249 = vmatpush1.msra.mxu0 0.0
    %250 = vmatprep.subr.mxu0 0.0
    %251 = vmatpush1.msra.mxu0 0.0
    %252 = vmatprep.subr.mxu0 0.0
    %253 = vmatpush1.msra.mxu0 0.0
    %254 = vmatprep.mubr.f32.mxu0 0.0
    %255 = vmatmul.mubr.f32.gmra.mrb[0].mxu0 0.0
    %v256 = vpop.f32.mrb[0].mxu0
    %v257 = vadd.f32 0.0, %v256
    %v258 = vpop.f32.mrb[0].mxu0
    %v259 = vadd.f32 0.0, %v258
    %260 = vdwg.mxu0
    %261 = vmatprep.subr.mxu0 %v79
    %262 = vmatpush1.msra.mxu0 %v78
    %263 = vmatprep.subr.mxu0 %v83
    %264 = vmatpush1.msra.mxu0 %v82
    %265 = vmatprep.subr.mxu0 %v87
    %266 = vmatpush1.msra.mxu0 %v86
    %267 = vmatprep.subr.mxu0 %v91
    %268 = vmatpush1.msra.mxu0 %v90
    %269 = vmatprep.subr.mxu0 %v95
    %270 = vmatpush1.msra.mxu0 %v94
    %271 = vmatprep.subr.mxu0 %v99
    %272 = vmatpush1.msra.mxu0 %v98
    %273 = vmatprep.subr.mxu0 %v103
    %274 = vmatpush1.msra.mxu0 %v102
    %275 = vmatprep.subr.mxu0 %v107
    %276 = vmatpush1.msra.mxu0 %v106
    %277 = vmatprep.subr.mxu0 %v111
    %278 = vmatpush1.msra.mxu0 %v110
    %279 = vmatprep.subr.mxu0 %v115
    %280 = vmatpush1.msra.mxu0 %v114
    %281 = vmatprep.subr.mxu0 %v119
    %282 = vmatpush1.msra.mxu0 %v118
    %283 = vmatprep.subr.mxu0 %v123
    %284 = vmatpush1.msra.mxu0 %v122
    %285 = vmatprep.subr.mxu0 %v127
    %286 = vmatpush1.msra.mxu0 %v126
    %287 = vmatprep.subr.mxu0 %v131
    %288 = vmatpush1.msra.mxu0 %v130
    %289 = vmatprep.subr.mxu0 %v135
    %290 = vmatpush1.msra.mxu0 %v134
    %291 = vmatprep.subr.mxu0 %v139
    %292 = vmatpush1.msra.mxu0 %v138
    %293 = vmatprep.subr.mxu0 0.0
    %294 = vmatpush1.msra.mxu0 0.0
    %295 = vmatprep.subr.mxu0 0.0
    %296 = vmatpush1.msra.mxu0 0.0
    %297 = vmatprep.subr.mxu0 0.0
    %298 = vmatpush1.msra.mxu0 0.0
    %299 = vmatprep.subr.mxu0 0.0
    %300 = vmatpush1.msra.mxu0 0.0
    %301 = vmatprep.subr.mxu0 0.0
    %302 = vmatpush1.msra.mxu0 0.0
    %303 = vmatprep.subr.mxu0 0.0
    %304 = vmatpush1.msra.mxu0 0.0
    %305 = vmatprep.subr.mxu0 0.0
    %306 = vmatpush1.msra.mxu0 0.0
    %307 = vmatprep.subr.mxu0 0.0
    %308 = vmatpush1.msra.mxu0 0.0
    %309 = vmatprep.subr.mxu0 0.0
    %310 = vmatpush1.msra.mxu0 0.0
    %311 = vmatprep.subr.mxu0 0.0
    %312 = vmatpush1.msra.mxu0 0.0
    %313 = vmatprep.subr.mxu0 0.0
    %314 = vmatpush1.msra.mxu0 0.0
    %315 = vmatprep.subr.mxu0 0.0
    %316 = vmatpush1.msra.mxu0 0.0
    %317 = vmatprep.subr.mxu0 0.0
    %318 = vmatpush1.msra.mxu0 0.0
    %319 = vmatprep.subr.mxu0 0.0
    %320 = vmatpush1.msra.mxu0 0.0
    %321 = vmatprep.subr.mxu0 0.0
    %322 = vmatpush1.msra.mxu0 0.0
    %323 = vmatprep.subr.mxu0 0.0
    %324 = vmatpush1.msra.mxu0 0.0
    %325 = vmatprep.mubr.f32.mxu0 0.0
    %326 = vmatmul.mubr.f32.gmra.mrb[0].mxu0 0.0
    %v327 = vpop.f32.mrb[0].mxu0
    %v328 = vadd.f32 0.0, %v327
    %v329 = vpop.f32.mrb[0].mxu0
    %v330 = vadd.f32 0.0, %v329
    %331 = vdwg.mxu0
    %v336 = vcombine.low %v257, %v259
    %v337 = vcombine.low %v328, %v330
    %v339 = vunpack.c.l.s4 1983009808
    %v340 = vunpack.c.0.s8 %v339
    %v341 = vlaneseq
    %v342 = vshrl.u32 %v341, 7
    %v343 = vsub.s32 %v340, %v342
    %v344 = vrot.slane %v336, %v343
    %v346 = vunpack.c.l.s4 1983009808
    %v347 = vunpack.c.0.s8 %v346
    %v348 = vlaneseq
    %v349 = vshrl.u32 %v348, 7
    %v350 = vsub.s32 %v347, %v349
    %v351 = vrot.slane %v337, %v350
    %v352 = vcombine.low %v344, %v351
    %v354 = vadd.f32 %v189, %v352
    %v355 = vxor.u32 %v354, 2147483648
    %v356 = vmul.f32 %v355, 1.442695
    %v357 = vpow.pop %v356
    %v358 = vadd.f32 %v357, 1.0
    %v359 = vrcp.pop %v358
    %v360 = vmul.f32 1.0, %v359
    %v362 = vrot.slane %v354, 2
    %v364 = vxor.u32 %v362, 2147483648
    %v365 = vmul.f32 %v364, 1.442695
    %v366 = vpow.pop %v365
    %v367 = vadd.f32 %v366, 1.0
    %v368 = vrcp.pop %v367
    %v369 = vmul.f32 1.0, %v368
    %v370 = vrot.slane %v354, 4
    %v372 = vtanh.pop %v370
    %v373 = vrot.slane %v354, 6
    %v375 = vxor.u32 %v373, 2147483648
    %v376 = vmul.f32 %v375, 1.442695
    %v377 = vpow.pop %v376
    %v378 = vadd.f32 %v377, 1.0
    %v379 = vrcp.pop %v378
    %v380 = vmul.f32 1.0, %v379
    %v381 = vmul.f32 %v369, 0.0
    %v382 = vmul.f32 %v360, %v372
    %v383 = vadd.f32 %v381, %v382
    %v384 = vtanh.pop %v383
    %v385 = vmul.f32 %v380, %v384
    %vm386 = vcmask 523264
    %v388 = vsel %vm386, 0.0, 0
    %390 = vmatprep.subr.mxu0 %v173
    %391 = vmatpush1.msra.mxu0 %v172
    %392 = vmatprep.subr.mxu0 %v175
    %393 = vmatpush1.msra.mxu0 %v174
    %394 = vmatprep.subr.mxu0 %v177
    %395 = vmatpush1.msra.mxu0 %v176
    %396 = vmatprep.subr.mxu0 %v179
    %397 = vmatpush1.msra.mxu0 %v178
    %398 = vmatprep.subr.mxu0 %v181
    %399 = vmatpush1.msra.mxu0 %v180
    %400 = vmatprep.subr.mxu0 %v183
    %401 = vmatpush1.msra.mxu0 %v182
    %402 = vmatprep.subr.mxu0 %v185
    %403 = vmatpush1.msra.mxu0 %v184
    %404 = vmatprep.subr.mxu0 %v187
    %405 = vmatpush1.msra.mxu0 %v186
    %406 = vmatprep.subr.mxu0 0.0
    %407 = vmatpush1.msra.mxu0 0.0
    %408 = vmatprep.subr.mxu0 0.0
    %409 = vmatpush1.msra.mxu0 0.0
    %410 = vmatprep.subr.mxu0 0.0
    %411 = vmatpush1.msra.mxu0 0.0
    %412 = vmatprep.subr.mxu0 0.0
    %413 = vmatpush1.msra.mxu0 0.0
    %414 = vmatprep.subr.mxu0 0.0
    %415 = vmatpush1.msra.mxu0 0.0
    %416 = vmatprep.subr.mxu0 0.0
    %417 = vmatpush1.msra.mxu0 0.0
    %418 = vmatprep.subr.mxu0 0.0
    %419 = vmatpush1.msra.mxu0 0.0
    %420 = vmatprep.subr.mxu0 0.0
    %421 = vmatpush1.msra.mxu0 0.0
    %422 = vmatprep.subr.mxu0 0.0
    %423 = vmatpush1.msra.mxu0 0.0
    %424 = vmatprep.subr.mxu0 0.0
    %425 = vmatpush1.msra.mxu0 0.0
    %426 = vmatprep.subr.mxu0 0.0
    %427 = vmatpush1.msra.mxu0 0.0
    %428 = vmatprep.subr.mxu0 0.0
    %429 = vmatpush1.msra.mxu0 0.0
    %430 = vmatprep.subr.mxu0 0.0
    %431 = vmatpush1.msra.mxu0 0.0
    %432 = vmatprep.subr.mxu0 0.0
    %433 = vmatpush1.msra.mxu0 0.0
    %434 = vmatprep.subr.mxu0 0.0
    %435 = vmatpush1.msra.mxu0 0.0
    %436 = vmatprep.subr.mxu0 0.0
    %437 = vmatpush1.msra.mxu0 0.0
    %438 = vmatprep.subr.mxu0 0.0
    %439 = vmatpush1.msra.mxu0 0.0
    %440 = vmatprep.subr.mxu0 0.0
    %441 = vmatpush1.msra.mxu0 0.0
    %442 = vmatprep.subr.mxu0 0.0
    %443 = vmatpush1.msra.mxu0 0.0
    %444 = vmatprep.subr.mxu0 0.0
    %445 = vmatpush1.msra.mxu0 0.0
    %446 = vmatprep.subr.mxu0 0.0
    %447 = vmatpush1.msra.mxu0 0.0
    %448 = vmatprep.subr.mxu0 0.0
    %449 = vmatpush1.msra.mxu0 0.0
    %450 = vmatprep.subr.mxu0 0.0
    %451 = vmatpush1.msra.mxu0 0.0
    %452 = vmatprep.subr.mxu0 0.0
    %453 = vmatpush1.msra.mxu0 0.0
    %454 = vmatprep.mubr.f32.mxu0 0.0
    %455 = vmatmul.mubr.f32.gmra.mrb[0].mxu0 %v388
    %v456 = vpop.f32.mrb[0].mxu0
    %v457 = vadd.f32 0.0, %v456
    %v458 = vpop.f32.mrb[0].mxu0
    %v459 = vadd.f32 0.0, %v458
    %460 = vdwg.mxu0
    %461 = vmatprep.subr.mxu0 %v141
    %462 = vmatpush1.msra.mxu0 %v140
    %463 = vmatprep.subr.mxu0 %v143
    %464 = vmatpush1.msra.mxu0 %v142
    %465 = vmatprep.subr.mxu0 %v145
    %466 = vmatpush1.msra.mxu0 %v144
    %467 = vmatprep.subr.mxu0 %v147
    %468 = vmatpush1.msra.mxu0 %v146
    %469 = vmatprep.subr.mxu0 %v149
    %470 = vmatpush1.msra.mxu0 %v148
    %471 = vmatprep.subr.mxu0 %v151
    %472 = vmatpush1.msra.mxu0 %v150
    %473 = vmatprep.subr.mxu0 %v153
    %474 = vmatpush1.msra.mxu0 %v152
    %475 = vmatprep.subr.mxu0 %v155
    %476 = vmatpush1.msra.mxu0 %v154
    %477 = vmatprep.subr.mxu0 %v157
    %478 = vmatpush1.msra.mxu0 %v156
    %479 = vmatprep.subr.mxu0 %v159
    %480 = vmatpush1.msra.mxu0 %v158
    %481 = vmatprep.subr.mxu0 %v161
    %482 = vmatpush1.msra.mxu0 %v160
    %483 = vmatprep.subr.mxu0 %v163
    %484 = vmatpush1.msra.mxu0 %v162
    %485 = vmatprep.subr.mxu0 %v165
    %486 = vmatpush1.msra.mxu0 %v164
    %487 = vmatprep.subr.mxu0 %v167
    %488 = vmatpush1.msra.mxu0 %v166
    %489 = vmatprep.subr.mxu0 %v169
    %490 = vmatpush1.msra.mxu0 %v168
    %491 = vmatprep.subr.mxu0 %v171
    %492 = vmatpush1.msra.mxu0 %v170
    %493 = vmatprep.subr.mxu0 0.0
    %494 = vmatpush1.msra.mxu0 0.0
    %495 = vmatprep.subr.mxu0 0.0
    %496 = vmatpush1.msra.mxu0 0.0
    %497 = vmatprep.subr.mxu0 0.0
    %498 = vmatpush1.msra.mxu0 0.0
    %499 = vmatprep.subr.mxu0 0.0
    %500 = vmatpush1.msra.mxu0 0.0
    %501 = vmatprep.subr.mxu0 0.0
    %502 = vmatpush1.msra.mxu0 0.0
    %503 = vmatprep.subr.mxu0 0.0
    %504 = vmatpush1.msra.mxu0 0.0
    %505 = vmatprep.subr.mxu0 0.0
    %506 = vmatpush1.msra.mxu0 0.0
    %507 = vmatprep.subr.mxu0 0.0
    %508 = vmatpush1.msra.mxu0 0.0
    %509 = vmatprep.subr.mxu0 0.0
    %510 = vmatpush1.msra.mxu0 0.0
    %511 = vmatprep.subr.mxu0 0.0
    %512 = vmatpush1.msra.mxu0 0.0
    %513 = vmatprep.subr.mxu0 0.0
    %514 = vmatpush1.msra.mxu0 0.0
    %515 = vmatprep.subr.mxu0 0.0
    %516 = vmatpush1.msra.mxu0 0.0
    %517 = vmatprep.subr.mxu0 0.0
    %518 = vmatpush1.msra.mxu0 0.0
    %519 = vmatprep.subr.mxu0 0.0
    %520 = vmatpush1.msra.mxu0 0.0
    %521 = vmatprep.subr.mxu0 0.0
    %522 = vmatpush1.msra.mxu0 0.0
    %523 = vmatprep.subr.mxu0 0.0
    %524 = vmatpush1.msra.mxu0 0.0
    %525 = vmatprep.mubr.f32.mxu0 0.0
    %526 = vmatmul.mubr.f32.gmra.mrb[0].mxu0 %v385
    %v527 = vpop.f32.mrb[0].mxu0
    %v528 = vadd.f32 %v457, %v527
    %v529 = vpop.f32.mrb[0].mxu0
    %v530 = vadd.f32 %v459, %v529
    %531 = vdwg.mxu0
    %v533 = vlaneseq
    %v534 = vshrl.u32 %v533, 7
    %v535 = vsub.s32 0, %v534
    %v536 = vrot.slane %v188, %v535
    %v537 = vlaneseq
    %v538 = vshrl.u32 %v537, 7
    %v539 = vsub.s32 1, %v538
    %v540 = vrot.slane %v188, %v539
    %v543 = vadd.f32 %v528, %v536
    %v544 = vadd.f32 %v530, %v540
    %v545 = vxor.u32 %v543, 2147483648
    %v546 = vmul.f32 %v545, 1.442695
    %v547 = vpow.pop %v546
    %v548 = vadd.f32 %v547, 1.0
    %v549 = vrcp.pop %v548
    %v550 = vmul.f32 1.0, %v549
    %v551 = vtanh.pop %v544
    %v552 = vxor.u32 %v544, 2147483648
    %v553 = vmul.f32 %v552, 1.442695
    %v554 = vpow.pop %v553
    %v555 = vadd.f32 %v554, 1.0
    %v556 = vrcp.pop %v555
    %v557 = vmul.f32 1.0, %v556
    %v558 = vmul.f32 %v550, 0.0
    %v559 = vmul.f32 %v550, %v551
    %561 = vrot.lane.b32.xlu0 %v559, 64
    %v562 = vpop.permute.xlu0 %561
    %v564 = vadd.f32 %v558, %v562
    %v565 = vtanh.pop %v564
    %v566 = vmul.f32 %v557, %v565
    %vm567 = vcmp.gt.f32.partialorder %v566, 0.0
    %v568 = vmul.f32 %v566, 0.1
    %v569 = vsel %vm567, %v566, %v568
    %571 = vrot.lane.b32.xlu0 %v569, 64
    %v572 = vpop.permute.xlu0 %571
    %vm574 = vcmask 517120
    %575 = vst.msk [vmem:[#allocation10] sm:$0x3] %vm574, %v572
    %s576 = scalar_lea.vmem [#allocation2], 8
    %v577 = vld [vmem:[%s576] sm:$0xff]
    %578 = vmatprep.subr.mxu0 %v77
    %579 = vmatpush1.msra.mxu0 %v76
    %580 = vmatprep.subr.mxu0 %v81
    %581 = vmatpush1.msra.mxu0 %v80
    %582 = vmatprep.subr.mxu0 %v85
    %583 = vmatpush1.msra.mxu0 %v84
    %584 = vmatprep.subr.mxu0 %v89
    %585 = vmatpush1.msra.mxu0 %v88
    %586 = vmatprep.subr.mxu0 %v93
    %587 = vmatpush1.msra.mxu0 %v92
    %588 = vmatprep.subr.mxu0 %v97
    %589 = vmatpush1.msra.mxu0 %v96
    %590 = vmatprep.subr.mxu0 %v101
    %591 = vmatpush1.msra.mxu0 %v100
    %592 = vmatprep.subr.mxu0 %v105
    %593 = vmatpush1.msra.mxu0 %v104
    %594 = vmatprep.subr.mxu0 %v109
    %595 = vmatpush1.msra.mxu0 %v108
    %596 = vmatprep.subr.mxu0 %v113
    %597 = vmatpush1.msra.mxu0 %v112
    %598 = vmatprep.subr.mxu0 %v117
    %599 = vmatpush1.msra.mxu0 %v116
    %600 = vmatprep.subr.mxu0 %v121
    %601 = vmatpush1.msra.mxu0 %v120
    %602 = vmatprep.subr.mxu0 %v125
    %603 = vmatpush1.msra.mxu0 %v124
    %604 = vmatprep.subr.mxu0 %v129
    %605 = vmatpush1.msra.mxu0 %v128
    %606 = vmatprep.subr.mxu0 %v133
    %607 = vmatpush1.msra.mxu0 %v132
    %608 = vmatprep.subr.mxu0 %v137
    %609 = vmatpush1.msra.mxu0 %v136
    %610 = vmatprep.subr.mxu0 0.0
    %611 = vmatpush1.msra.mxu0 0.0
    %612 = vmatprep.subr.mxu0 0.0
    %613 = vmatpush1.msra.mxu0 0.0
    %614 = vmatprep.subr.mxu0 0.0
    %615 = vmatpush1.msra.mxu0 0.0
    %616 = vmatprep.subr.mxu0 0.0
    %617 = vmatpush1.msra.mxu0 0.0
    %618 = vmatprep.subr.mxu0 0.0
    %619 = vmatpush1.msra.mxu0 0.0
    %620 = vmatprep.subr.mxu0 0.0
    %621 = vmatpush1.msra.mxu0 0.0
    %622 = vmatprep.subr.mxu0 0.0
    %623 = vmatpush1.msra.mxu0 0.0
    %624 = vmatprep.subr.mxu0 0.0
    %625 = vmatpush1.msra.mxu0 0.0
    %626 = vmatprep.subr.mxu0 0.0
    %627 = vmatpush1.msra.mxu0 0.0
    %628 = vmatprep.subr.mxu0 0.0
    %629 = vmatpush1.msra.mxu0 0.0
    %630 = vmatprep.subr.mxu0 0.0
    %631 = vmatpush1.msra.mxu0 0.0
    %632 = vmatprep.subr.mxu0 0.0
    %633 = vmatpush1.msra.mxu0 0.0
    %634 = vmatprep.subr.mxu0 0.0
    %635 = vmatpush1.msra.mxu0 0.0
    %636 = vmatprep.subr.mxu0 0.0
    %637 = vmatpush1.msra.mxu0 0.0
    %638 = vmatprep.subr.mxu0 0.0
    %639 = vmatpush1.msra.mxu0 0.0
    %640 = vmatprep.subr.mxu0 0.0
    %641 = vmatpush1.msra.mxu0 0.0
    %642 = vmatprep.mubr.f32.mxu0 0.0
    %643 = vmatmul.mubr.f32.gmra.mrb[0].mxu0 %v385
    %v644 = vpop.f32.mrb[0].mxu0
    %v645 = vadd.f32 0.0, %v644
    %v646 = vpop.f32.mrb[0].mxu0
    %v647 = vadd.f32 0.0, %v646
    %648 = vdwg.mxu0
    %649 = vmatprep.subr.mxu0 %v79
    %650 = vmatpush1.msra.mxu0 %v78
    %651 = vmatprep.subr.mxu0 %v83
    %652 = vmatpush1.msra.mxu0 %v82
    %653 = vmatprep.subr.mxu0 %v87
    %654 = vmatpush1.msra.mxu0 %v86
    %655 = vmatprep.subr.mxu0 %v91
    %656 = vmatpush1.msra.mxu0 %v90
    %657 = vmatprep.subr.mxu0 %v95
    %658 = vmatpush1.msra.mxu0 %v94
    %659 = vmatprep.subr.mxu0 %v99
    %660 = vmatpush1.msra.mxu0 %v98
    %661 = vmatprep.subr.mxu0 %v103
    %662 = vmatpush1.msra.mxu0 %v102
    %663 = vmatprep.subr.mxu0 %v107
    %664 = vmatpush1.msra.mxu0 %v106
    %665 = vmatprep.subr.mxu0 %v111
    %666 = vmatpush1.msra.mxu0 %v110
    %667 = vmatprep.subr.mxu0 %v115
    %668 = vmatpush1.msra.mxu0 %v114
    %669 = vmatprep.subr.mxu0 %v119
    %670 = vmatpush1.msra.mxu0 %v118
    %671 = vmatprep.subr.mxu0 %v123
    %672 = vmatpush1.msra.mxu0 %v122
    %673 = vmatprep.subr.mxu0 %v127
    %674 = vmatpush1.msra.mxu0 %v126
    %675 = vmatprep.subr.mxu0 %v131
    %676 = vmatpush1.msra.mxu0 %v130
    %677 = vmatprep.subr.mxu0 %v135
    %678 = vmatpush1.msra.mxu0 %v134
    %679 = vmatprep.subr.mxu0 %v139
    %680 = vmatpush1.msra.mxu0 %v138
    %681 = vmatprep.subr.mxu0 0.0
    %682 = vmatpush1.msra.mxu0 0.0
    %683 = vmatprep.subr.mxu0 0.0
    %684 = vmatpush1.msra.mxu0 0.0
    %685 = vmatprep.subr.mxu0 0.0
    %686 = vmatpush1.msra.mxu0 0.0
    %687 = vmatprep.subr.mxu0 0.0
    %688 = vmatpush1.msra.mxu0 0.0
    %689 = vmatprep.subr.mxu0 0.0
    %690 = vmatpush1.msra.mxu0 0.0
    %691 = vmatprep.subr.mxu0 0.0
    %692 = vmatpush1.msra.mxu0 0.0
    %693 = vmatprep.subr.mxu0 0.0
    %694 = vmatpush1.msra.mxu0 0.0
    %695 = vmatprep.subr.mxu0 0.0
    %696 = vmatpush1.msra.mxu0 0.0
    %697 = vmatprep.subr.mxu0 0.0
    %698 = vmatpush1.msra.mxu0 0.0
    %699 = vmatprep.subr.mxu0 0.0
    %700 = vmatpush1.msra.mxu0 0.0
    %701 = vmatprep.subr.mxu0 0.0
    %702 = vmatpush1.msra.mxu0 0.0
    %703 = vmatprep.subr.mxu0 0.0
    %704 = vmatpush1.msra.mxu0 0.0
    %705 = vmatprep.subr.mxu0 0.0
    %706 = vmatpush1.msra.mxu0 0.0
    %707 = vmatprep.subr.mxu0 0.0
    %708 = vmatpush1.msra.mxu0 0.0
    %709 = vmatprep.subr.mxu0 0.0
    %710 = vmatpush1.msra.mxu0 0.0
    %711 = vmatprep.subr.mxu0 0.0
    %712 = vmatpush1.msra.mxu0 0.0
    %713 = vmatprep.mubr.f32.mxu0 0.0
    %714 = vmatmul.mubr.f32.gmra.mrb[0].mxu0 %v385
    %v715 = vpop.f32.mrb[0].mxu0
    %v716 = vadd.f32 0.0, %v715
    %v717 = vpop.f32.mrb[0].mxu0
    %v718 = vadd.f32 0.0, %v717
    %719 = vdwg.mxu0
    %v724 = vcombine.low %v645, %v647
    %v725 = vcombine.low %v716, %v718
    %v727 = vunpack.c.l.s4 1983009808
    %v728 = vunpack.c.0.s8 %v727
    %v729 = vlaneseq
    %v730 = vshrl.u32 %v729, 7
    %v731 = vsub.s32 %v728, %v730
    %v732 = vrot.slane %v724, %v731
    %v734 = vunpack.c.l.s4 1983009808
    %v735 = vunpack.c.0.s8 %v734
    %v736 = vlaneseq
    %v737 = vshrl.u32 %v736, 7
    %v738 = vsub.s32 %v735, %v737
    %v739 = vrot.slane %v725, %v738
    %v740 = vcombine.low %v732, %v739
    %v742 = vadd.f32 %v577, %v740
    %v743 = vxor.u32 %v742, 2147483648
    %v744 = vmul.f32 %v743, 1.442695
    %v745 = vpow.pop %v744
    %v746 = vadd.f32 %v745, 1.0
    %v747 = vrcp.pop %v746
    %v748 = vmul.f32 1.0, %v747
    %v750 = vrot.slane %v742, 2
    %v752 = vxor.u32 %v750, 2147483648
    %v753 = vmul.f32 %v752, 1.442695
    %v754 = vpow.pop %v753
    %v755 = vadd.f32 %v754, 1.0
    %v756 = vrcp.pop %v755
    %v757 = vmul.f32 1.0, %v756
    %v758 = vrot.slane %v742, 4
    %v760 = vtanh.pop %v758
    %v761 = vrot.slane %v742, 6
    %v763 = vxor.u32 %v761, 2147483648
    %v764 = vmul.f32 %v763, 1.442695
    %v765 = vpow.pop %v764
    %v766 = vadd.f32 %v765, 1.0
    %v767 = vrcp.pop %v766
    %v768 = vmul.f32 1.0, %v767
    %v769 = vmul.f32 %v757, %v383
    %v770 = vmul.f32 %v748, %v760
    %v771 = vadd.f32 %v769, %v770
    %v772 = vtanh.pop %v771
    %v773 = vmul.f32 %v768, %v772
    %775 = vrot.lane.b32.xlu0 %v566, 64
    %v776 = vpop.permute.xlu0 %775
    %v777 = vsel %vm386, %v776, 0
    %779 = vmatprep.subr.mxu0 %v173
    %780 = vmatpush1.msra.mxu0 %v172
    %781 = vmatprep.subr.mxu0 %v175
    %782 = vmatpush1.msra.mxu0 %v174
    %783 = vmatprep.subr.mxu0 %v177
    %784 = vmatpush1.msra.mxu0 %v176
    %785 = vmatprep.subr.mxu0 %v179
    %786 = vmatpush1.msra.mxu0 %v178
    %787 = vmatprep.subr.mxu0 %v181
    %788 = vmatpush1.msra.mxu0 %v180
    %789 = vmatprep.subr.mxu0 %v183
    %790 = vmatpush1.msra.mxu0 %v182
    %791 = vmatprep.subr.mxu0 %v185
    %792 = vmatpush1.msra.mxu0 %v184
    %793 = vmatprep.subr.mxu0 %v187
    %794 = vmatpush1.msra.mxu0 %v186
    %795 = vmatprep.subr.mxu0 0.0
    %796 = vmatpush1.msra.mxu0 0.0
    %797 = vmatprep.subr.mxu0 0.0
    %798 = vmatpush1.msra.mxu0 0.0
    %799 = vmatprep.subr.mxu0 0.0
    %800 = vmatpush1.msra.mxu0 0.0
    %801 = vmatprep.subr.mxu0 0.0
    %802 = vmatpush1.msra.mxu0 0.0
    %803 = vmatprep.subr.mxu0 0.0
    %804 = vmatpush1.msra.mxu0 0.0
    %805 = vmatprep.subr.mxu0 0.0
    %806 = vmatpush1.msra.mxu0 0.0
    %807 = vmatprep.subr.mxu0 0.0
    %808 = vmatpush1.msra.mxu0 0.0
    %809 = vmatprep.subr.mxu0 0.0
    %810 = vmatpush1.msra.mxu0 0.0
    %811 = vmatprep.subr.mxu0 0.0
    %812 = vmatpush1.msra.mxu0 0.0
    %813 = vmatprep.subr.mxu0 0.0
    %814 = vmatpush1.msra.mxu0 0.0
    %815 = vmatprep.subr.mxu0 0.0
    %816 = vmatpush1.msra.mxu0 0.0
    %817 = vmatprep.subr.mxu0 0.0
    %818 = vmatpush1.msra.mxu0 0.0
    %819 = vmatprep.subr.mxu0 0.0
    %820 = vmatpush1.msra.mxu0 0.0
    %821 = vmatprep.subr.mxu0 0.0
    %822 = vmatpush1.msra.mxu0 0.0
    %823 = vmatprep.subr.mxu0 0.0
    %824 = vmatpush1.msra.mxu0 0.0
    %825 = vmatprep.subr.mxu0 0.0
    %826 = vmatpush1.msra.mxu0 0.0
    %827 = vmatprep.subr.mxu0 0.0
    %828 = vmatpush1.msra.mxu0 0.0
    %829 = vmatprep.subr.mxu0 0.0
    %830 = vmatpush1.msra.mxu0 0.0
    %831 = vmatprep.subr.mxu0 0.0
    %832 = vmatpush1.msra.mxu0 0.0
    %833 = vmatprep.subr.mxu0 0.0
    %834 = vmatpush1.msra.mxu0 0.0
    %835 = vmatprep.subr.mxu0 0.0
    %836 = vmatpush1.msra.mxu0 0.0
    %837 = vmatprep.subr.mxu0 0.0
    %838 = vmatpush1.msra.mxu0 0.0
    %839 = vmatprep.subr.mxu0 0.0
    %840 = vmatpush1.msra.mxu0 0.0
    %841 = vmatprep.subr.mxu0 0.0
    %842 = vmatpush1.msra.mxu0 0.0
    %843 = vmatprep.mubr.f32.mxu0 0.0
    %844 = vmatmul.mubr.f32.gmra.mrb[0].mxu0 %v777
    %v845 = vpop.f32.mrb[0].mxu0
    %v846 = vadd.f32 0.0, %v845
    %v847 = vpop.f32.mrb[0].mxu0
    %v848 = vadd.f32 0.0, %v847
    %849 = vdwg.mxu0
    %850 = vmatprep.subr.mxu0 %v141
    %851 = vmatpush1.msra.mxu0 %v140
    %852 = vmatprep.subr.mxu0 %v143
    %853 = vmatpush1.msra.mxu0 %v142
    %854 = vmatprep.subr.mxu0 %v145
    %855 = vmatpush1.msra.mxu0 %v144
    %856 = vmatprep.subr.mxu0 %v147
    %857 = vmatpush1.msra.mxu0 %v146
    %858 = vmatprep.subr.mxu0 %v149
    %859 = vmatpush1.msra.mxu0 %v148
    %860 = vmatprep.subr.mxu0 %v151
    %861 = vmatpush1.msra.mxu0 %v150
    %862 = vmatprep.subr.mxu0 %v153
    %863 = vmatpush1.msra.mxu0 %v152
    %864 = vmatprep.subr.mxu0 %v155
    %865 = vmatpush1.msra.mxu0 %v154
    %866 = vmatprep.subr.mxu0 %v157
    %867 = vmatpush1.msra.mxu0 %v156
    %868 = vmatprep.subr.mxu0 %v159
    %869 = vmatpush1.msra.mxu0 %v158
    %870 = vmatprep.subr.mxu0 %v161
    %871 = vmatpush1.msra.mxu0 %v160
    %872 = vmatprep.subr.mxu0 %v163
    %873 = vmatpush1.msra.mxu0 %v162
    %874 = vmatprep.subr.mxu0 %v165
    %875 = vmatpush1.msra.mxu0 %v164
    %876 = vmatprep.subr.mxu0 %v167
    %877 = vmatpush1.msra.mxu0 %v166
    %878 = vmatprep.subr.mxu0 %v169
    %879 = vmatpush1.msra.mxu0 %v168
    %880 = vmatprep.subr.mxu0 %v171
    %881 = vmatpush1.msra.mxu0 %v170
    %882 = vmatprep.subr.mxu0 0.0
    %883 = vmatpush1.msra.mxu0 0.0
    %884 = vmatprep.subr.mxu0 0.0
    %885 = vmatpush1.msra.mxu0 0.0
    %886 = vmatprep.subr.mxu0 0.0
    %887 = vmatpush1.msra.mxu0 0.0
    %888 = vmatprep.subr.mxu0 0.0
    %889 = vmatpush1.msra.mxu0 0.0
    %890 = vmatprep.subr.mxu0 0.0
    %891 = vmatpush1.msra.mxu0 0.0
    %892 = vmatprep.subr.mxu0 0.0
    %893 = vmatpush1.msra.mxu0 0.0
    %894 = vmatprep.subr.mxu0 0.0
    %895 = vmatpush1.msra.mxu0 0.0
    %896 = vmatprep.subr.mxu0 0.0
    %897 = vmatpush1.msra.mxu0 0.0
    %898 = vmatprep.subr.mxu0 0.0
    %899 = vmatpush1.msra.mxu0 0.0
    %900 = vmatprep.subr.mxu0 0.0
    %901 = vmatpush1.msra.mxu0 0.0
    %902 = vmatprep.subr.mxu0 0.0
    %903 = vmatpush1.msra.mxu0 0.0
    %904 = vmatprep.subr.mxu0 0.0
    %905 = vmatpush1.msra.mxu0 0.0
    %906 = vmatprep.subr.mxu0 0.0
    %907 = vmatpush1.msra.mxu0 0.0
    %908 = vmatprep.subr.mxu0 0.0
    %909 = vmatpush1.msra.mxu0 0.0
    %910 = vmatprep.subr.mxu0 0.0
    %911 = vmatpush1.msra.mxu0 0.0
    %912 = vmatprep.subr.mxu0 0.0
    %913 = vmatpush1.msra.mxu0 0.0
    %914 = vmatprep.mubr.f32.mxu0 0.0
    %915 = vmatmul.mubr.f32.gmra.mrb[0].mxu0 %v773
    %v916 = vpop.f32.mrb[0].mxu0
    %v917 = vadd.f32 %v846, %v916
    %v918 = vpop.f32.mrb[0].mxu0
    %v919 = vadd.f32 %v848, %v918
    %920 = vdwg.mxu0
    %v921 = vadd.f32 %v917, %v536
    %v922 = vadd.f32 %v919, %v540
    %v923 = vxor.u32 %v921, 2147483648
    %v924 = vmul.f32 %v923, 1.442695
    %v925 = vpow.pop %v924
    %v926 = vadd.f32 %v925, 1.0
    %v927 = vrcp.pop %v926
    %v928 = vmul.f32 1.0, %v927
    %v929 = vtanh.pop %v922
    %v930 = vxor.u32 %v922, 2147483648
    %v931 = vmul.f32 %v930, 1.442695
    %v932 = vpow.pop %v931
    %v933 = vadd.f32 %v932, 1.0
    %v934 = vrcp.pop %v933
    %v935 = vmul.f32 1.0, %v934
    %v936 = vmul.f32 %v928, %v564
    %v937 = vmul.f32 %v928, %v929
    %939 = vrot.lane.b32.xlu0 %v937, 64
    %v940 = vpop.permute.xlu0 %939
    %v942 = vadd.f32 %v936, %v940
    %v943 = vtanh.pop %v942
    %v944 = vmul.f32 %v935, %v943
    %vm945 = vcmp.gt.f32.partialorder %v944, 0.0
    %v946 = vmul.f32 %v944, 0.1
    %v947 = vsel %vm945, %v944, %v946
    %949 = vrot.lane.b32.xlu0 %v947, 64
    %v950 = vpop.permute.xlu0 %949
    %s952 = scalar_lea.vmem [#allocation10], 2
    %953 = vst.msk [vmem:[%s952] sm:$0x3] %vm574, %v950
    %s954 = scalar_lea.vmem [#allocation2], 16
    %v955 = vld [vmem:[%s954] sm:$0xff]
    %956 = vmatprep.subr.mxu0 %v77
    %957 = vmatpush1.msra.mxu0 %v76
    %958 = vmatprep.subr.mxu0 %v81
    %959 = vmatpush1.msra.mxu0 %v80
    %960 = vmatprep.subr.mxu0 %v85
    %961 = vmatpush1.msra.mxu0 %v84
    %962 = vmatprep.subr.mxu0 %v89
    %963 = vmatpush1.msra.mxu0 %v88
    %964 = vmatprep.subr.mxu0 %v93
    %965 = vmatpush1.msra.mxu0 %v92
    %966 = vmatprep.subr.mxu0 %v97
    %967 = vmatpush1.msra.mxu0 %v96
    %968 = vmatprep.subr.mxu0 %v101
    %969 = vmatpush1.msra.mxu0 %v100
    %970 = vmatprep.subr.mxu0 %v105
    %971 = vmatpush1.msra.mxu0 %v104
    %972 = vmatprep.subr.mxu0 %v109
    %973 = vmatpush1.msra.mxu0 %v108
    %974 = vmatprep.subr.mxu0 %v113
    %975 = vmatpush1.msra.mxu0 %v112
    %976 = vmatprep.subr.mxu0 %v117
    %977 = vmatpush1.msra.mxu0 %v116
    %978 = vmatprep.subr.mxu0 %v121
    %979 = vmatpush1.msra.mxu0 %v120
    %980 = vmatprep.subr.mxu0 %v125
    %981 = vmatpush1.msra.mxu0 %v124
    %982 = vmatprep.subr.mxu0 %v129
    %983 = vmatpush1.msra.mxu0 %v128
    %984 = vmatprep.subr.mxu0 %v133
    %985 = vmatpush1.msra.mxu0 %v132
    %986 = vmatprep.subr.mxu0 %v137
    %987 = vmatpush1.msra.mxu0 %v136
    %988 = vmatprep.subr.mxu0 0.0
    %989 = vmatpush1.msra.mxu0 0.0
    %990 = vmatprep.subr.mxu0 0.0
    %991 = vmatpush1.msra.mxu0 0.0
    %992 = vmatprep.subr.mxu0 0.0
    %993 = vmatpush1.msra.mxu0 0.0
    %994 = vmatprep.subr.mxu0 0.0
    %995 = vmatpush1.msra.mxu0 0.0
    %996 = vmatprep.subr.mxu0 0.0
    %997 = vmatpush1.msra.mxu0 0.0
    %998 = vmatprep.subr.mxu0 0.0
    %999 = vmatpush1.msra.mxu0 0.0
    %1000 = vmatprep.subr.mxu0 0.0
    %1001 = vmatpush1.msra.mxu0 0.0
    %1002 = vmatprep.subr.mxu0 0.0
    %1003 = vmatpush1.msra.mxu0 0.0
    %1004 = vmatprep.subr.mxu0 0.0
    %1005 = vmatpush1.msra.mxu0 0.0
    %1006 = vmatprep.subr.mxu0 0.0
    %1007 = vmatpush1.msra.mxu0 0.0
    %1008 = vmatprep.subr.mxu0 0.0
    %1009 = vmatpush1.msra.mxu0 0.0
    %1010 = vmatprep.subr.mxu0 0.0
    %1011 = vmatpush1.msra.mxu0 0.0
    %1012 = vmatprep.subr.mxu0 0.0
    %1013 = vmatpush1.msra.mxu0 0.0
    %1014 = vmatprep.subr.mxu0 0.0
    %1015 = vmatpush1.msra.mxu0 0.0
    %1016 = vmatprep.subr.mxu0 0.0
    %1017 = vmatpush1.msra.mxu0 0.0
    %1018 = vmatprep.subr.mxu0 0.0
    %1019 = vmatpush1.msra.mxu0 0.0
    %1020 = vmatprep.mubr.f32.mxu0 0.0
    %1021 = vmatmul.mubr.f32.gmra.mrb[0].mxu0 %v773
    %v1022 = vpop.f32.mrb[0].mxu0
    %v1023 = vadd.f32 0.0, %v1022
    %v1024 = vpop.f32.mrb[0].mxu0
    %v1025 = vadd.f32 0.0, %v1024
    %1026 = vdwg.mxu0
    %1027 = vmatprep.subr.mxu0 %v79
    %1028 = vmatpush1.msra.mxu0 %v78
    %1029 = vmatprep.subr.mxu0 %v83
    %1030 = vmatpush1.msra.mxu0 %v82
    %1031 = vmatprep.subr.mxu0 %v87
    %1032 = vmatpush1.msra.mxu0 %v86
    %1033 = vmatprep.subr.mxu0 %v91
    %1034 = vmatpush1.msra.mxu0 %v90
    %1035 = vmatprep.subr.mxu0 %v95
    %1036 = vmatpush1.msra.mxu0 %v94
    %1037 = vmatprep.subr.mxu0 %v99
    %1038 = vmatpush1.msra.mxu0 %v98
    %1039 = vmatprep.subr.mxu0 %v103
    %1040 = vmatpush1.msra.mxu0 %v102
    %1041 = vmatprep.subr.mxu0 %v107
    %1042 = vmatpush1.msra.mxu0 %v106
    %1043 = vmatprep.subr.mxu0 %v111
    %1044 = vmatpush1.msra.mxu0 %v110
    %1045 = vmatprep.subr.mxu0 %v115
    %1046 = vmatpush1.msra.mxu0 %v114
    %1047 = vmatprep.subr.mxu0 %v119
    %1048 = vmatpush1.msra.mxu0 %v118
    %1049 = vmatprep.subr.mxu0 %v123
    %1050 = vmatpush1.msra.mxu0 %v122
    %1051 = vmatprep.subr.mxu0 %v127
    %1052 = vmatpush1.msra.mxu0 %v126
    %1053 = vmatprep.subr.mxu0 %v131
    %1054 = vmatpush1.msra.mxu0 %v130
    %1055 = vmatprep.subr.mxu0 %v135
    %1056 = vmatpush1.msra.mxu0 %v134
    %1057 = vmatprep.subr.mxu0 %v139
    %1058 = vmatpush1.msra.mxu0 %v138
    %1059 = vmatprep.subr.mxu0 0.0
    %1060 = vmatpush1.msra.mxu0 0.0
    %1061 = vmatprep.subr.mxu0 0.0
    %1062 = vmatpush1.msra.mxu0 0.0
    %1063 = vmatprep.subr.mxu0 0.0
    %1064 = vmatpush1.msra.mxu0 0.0
    %1065 = vmatprep.subr.mxu0 0.0
    %1066 = vmatpush1.msra.mxu0 0.0
    %1067 = vmatprep.subr.mxu0 0.0
    %1068 = vmatpush1.msra.mxu0 0.0
    %1069 = vmatprep.subr.mxu0 0.0
    %1070 = vmatpush1.msra.mxu0 0.0
    %1071 = vmatprep.subr.mxu0 0.0
    %1072 = vmatpush1.msra.mxu0 0.0
    %1073 = vmatprep.subr.mxu0 0.0
    %1074 = vmatpush1.msra.mxu0 0.0
    %1075 = vmatprep.subr.mxu0 0.0
    %1076 = vmatpush1.msra.mxu0 0.0
    %1077 = vmatprep.subr.mxu0 0.0
    %1078 = vmatpush1.msra.mxu0 0.0
    %1079 = vmatprep.subr.mxu0 0.0
    %1080 = vmatpush1.msra.mxu0 0.0
    %1081 = vmatprep.subr.mxu0 0.0
    %1082 = vmatpush1.msra.mxu0 0.0
    %1083 = vmatprep.subr.mxu0 0.0
    %1084 = vmatpush1.msra.mxu0 0.0
    %1085 = vmatprep.subr.mxu0 0.0
    %1086 = vmatpush1.msra.mxu0 0.0
    %1087 = vmatprep.subr.mxu0 0.0
    %1088 = vmatpush1.msra.mxu0 0.0
    %1089 = vmatprep.subr.mxu0 0.0
    %1090 = vmatpush1.msra.mxu0 0.0
    %1091 = vmatprep.mubr.f32.mxu0 0.0
    %1092 = vmatmul.mubr.f32.gmra.mrb[0].mxu0 %v773
    %v1093 = vpop.f32.mrb[0].mxu0
    %v1094 = vadd.f32 0.0, %v1093
    %v1095 = vpop.f32.mrb[0].mxu0
    %v1096 = vadd.f32 0.0, %v1095
    %1097 = vdwg.mxu0
    %v1102 = vcombine.low %v1023, %v1025
    %v1103 = vcombine.low %v1094, %v1096
    %v1105 = vunpack.c.l.s4 1983009808
    %v1106 = vunpack.c.0.s8 %v1105
    %v1107 = vlaneseq
    %v1108 = vshrl.u32 %v1107, 7
    %v1109 = vsub.s32 %v1106, %v1108
    %v1110 = vrot.slane %v1102, %v1109
    %v1112 = vunpack.c.l.s4 1983009808
    %v1113 = vunpack.c.0.s8 %v1112
    %v1114 = vlaneseq
    %v1115 = vshrl.u32 %v1114, 7
    %v1116 = vsub.s32 %v1113, %v1115
    %v1117 = vrot.slane %v1103, %v1116
    %v1118 = vcombine.low %v1110, %v1117
    %v1120 = vadd.f32 %v955, %v1118
    %v1121 = vxor.u32 %v1120, 2147483648
    %v1122 = vmul.f32 %v1121, 1.442695
    %v1123 = vpow.pop %v1122
    %v1124 = vadd.f32 %v1123, 1.0
    %v1125 = vrcp.pop %v1124
    %v1126 = vmul.f32 1.0, %v1125
    %v1128 = vrot.slane %v1120, 2
    %v1130 = vxor.u32 %v1128, 2147483648
    %v1131 = vmul.f32 %v1130, 1.442695
    %v1132 = vpow.pop %v1131
    %v1133 = vadd.f32 %v1132, 1.0
    %v1134 = vrcp.pop %v1133
    %v1135 = vmul.f32 1.0, %v1134
    %v1136 = vrot.slane %v1120, 4
    %v1138 = vtanh.pop %v1136
    %v1139 = vrot.slane %v1120, 6
    %v1141 = vxor.u32 %v1139, 2147483648
    %v1142 = vmul.f32 %v1141, 1.442695
    %v1143 = vpow.pop %v1142
    %v1144 = vadd.f32 %v1143, 1.0
    %v1145 = vrcp.pop %v1144
    %v1146 = vmul.f32 1.0, %v1145
    %v1147 = vmul.f32 %v1135, %v771
    %v1148 = vmul.f32 %v1126, %v1138
    %v1149 = vadd.f32 %v1147, %v1148
    %v1150 = vtanh.pop %v1149
    %v1151 = vmul.f32 %v1146, %v1150
    %1153 = vrot.lane.b32.xlu0 %v944, 64
    %v1154 = vpop.permute.xlu0 %1153
    %v1155 = vsel %vm386, %v1154, 0
    %1157 = vmatprep.subr.mxu0 %v173
    %1158 = vmatpush1.msra.mxu0 %v172
    %1159 = vmatprep.subr.mxu0 %v175
    %1160 = vmatpush1.msra.mxu0 %v174
    %1161 = vmatprep.subr.mxu0 %v177
    %1162 = vmatpush1.msra.mxu0 %v176
    %1163 = vmatprep.subr.mxu0 %v179
    %1164 = vmatpush1.msra.mxu0 %v178
    %1165 = vmatprep.subr.mxu0 %v181
    %1166 = vmatpush1.msra.mxu0 %v180
    %1167 = vmatprep.subr.mxu0 %v183
    %1168 = vmatpush1.msra.mxu0 %v182
    %1169 = vmatprep.subr.mxu0 %v185
    %1170 = vmatpush1.msra.mxu0 %v184
    %1171 = vmatprep.subr.mxu0 %v187
    %1172 = vmatpush1.msra.mxu0 %v186
    %1173 = vmatprep.subr.mxu0 0.0
    %1174 = vmatpush1.msra.mxu0 0.0
    %1175 = vmatprep.subr.mxu0 0.0
    %1176 = vmatpush1.msra.mxu0 0.0
    %1177 = vmatprep.subr.mxu0 0.0
    %1178 = vmatpush1.msra.mxu0 0.0
    %1179 = vmatprep.subr.mxu0 0.0
    %1180 = vmatpush1.msra.mxu0 0.0
    %1181 = vmatprep.subr.mxu0 0.0
    %1182 = vmatpush1.msra.mxu0 0.0
    %1183 = vmatprep.subr.mxu0 0.0
    %1184 = vmatpush1.msra.mxu0 0.0
    %1185 = vmatprep.subr.mxu0 0.0
    %1186 = vmatpush1.msra.mxu0 0.0
    %1187 = vmatprep.subr.mxu0 0.0
    %1188 = vmatpush1.msra.mxu0 0.0
    %1189 = vmatprep.subr.mxu0 0.0
    %1190 = vmatpush1.msra.mxu0 0.0
    %1191 = vmatprep.subr.mxu0 0.0
    %1192 = vmatpush1.msra.mxu0 0.0
    %1193 = vmatprep.subr.mxu0 0.0
    %1194 = vmatpush1.msra.mxu0 0.0
    %1195 = vmatprep.subr.mxu0 0.0
    %1196 = vmatpush1.msra.mxu0 0.0
    %1197 = vmatprep.subr.mxu0 0.0
    %1198 = vmatpush1.msra.mxu0 0.0
    %1199 = vmatprep.subr.mxu0 0.0
    %1200 = vmatpush1.msra.mxu0 0.0
    %1201 = vmatprep.subr.mxu0 0.0
    %1202 = vmatpush1.msra.mxu0 0.0
    %1203 = vmatprep.subr.mxu0 0.0
    %1204 = vmatpush1.msra.mxu0 0.0
    %1205 = vmatprep.subr.mxu0 0.0
    %1206 = vmatpush1.msra.mxu0 0.0
    %1207 = vmatprep.subr.mxu0 0.0
    %1208 = vmatpush1.msra.mxu0 0.0
    %1209 = vmatprep.subr.mxu0 0.0
    %1210 = vmatpush1.msra.mxu0 0.0
    %1211 = vmatprep.subr.mxu0 0.0
    %1212 = vmatpush1.msra.mxu0 0.0
    %1213 = vmatprep.subr.mxu0 0.0
    %1214 = vmatpush1.msra.mxu0 0.0
    %1215 = vmatprep.subr.mxu0 0.0
    %1216 = vmatpush1.msra.mxu0 0.0
    %1217 = vmatprep.subr.mxu0 0.0
    %1218 = vmatpush1.msra.mxu0 0.0
    %1219 = vmatprep.subr.mxu0 0.0
    %1220 = vmatpush1.msra.mxu0 0.0
    %1221 = vmatprep.mubr.f32.mxu0 0.0
    %1222 = vmatmul.mubr.f32.gmra.mrb[0].mxu0 %v1155
    %v1223 = vpop.f32.mrb[0].mxu0
    %v1224 = vadd.f32 0.0, %v1223
    %v1225 = vpop.f32.mrb[0].mxu0
    %v1226 = vadd.f32 0.0, %v1225
    %1227 = vdwg.mxu0
    %1228 = vmatprep.subr.mxu0 %v141
    %1229 = vmatpush1.msra.mxu0 %v140
    %1230 = vmatprep.subr.mxu0 %v143
    %1231 = vmatpush1.msra.mxu0 %v142
    %1232 = vmatprep.subr.mxu0 %v145
    %1233 = vmatpush1.msra.mxu0 %v144
    %1234 = vmatprep.subr.mxu0 %v147
    %1235 = vmatpush1.msra.mxu0 %v146
    %1236 = vmatprep.subr.mxu0 %v149
    %1237 = vmatpush1.msra.mxu0 %v148
    %1238 = vmatprep.subr.mxu0 %v151
    %1239 = vmatpush1.msra.mxu0 %v150
    %1240 = vmatprep.subr.mxu0 %v153
    %1241 = vmatpush1.msra.mxu0 %v152
    %1242 = vmatprep.subr.mxu0 %v155
    %1243 = vmatpush1.msra.mxu0 %v154
    %1244 = vmatprep.subr.mxu0 %v157
    %1245 = vmatpush1.msra.mxu0 %v156
    %1246 = vmatprep.subr.mxu0 %v159
    %1247 = vmatpush1.msra.mxu0 %v158
    %1248 = vmatprep.subr.mxu0 %v161
    %1249 = vmatpush1.msra.mxu0 %v160
    %1250 = vmatprep.subr.mxu0 %v163
    %1251 = vmatpush1.msra.mxu0 %v162
    %1252 = vmatprep.subr.mxu0 %v165
    %1253 = vmatpush1.msra.mxu0 %v164
    %1254 = vmatprep.subr.mxu0 %v167
    %1255 = vmatpush1.msra.mxu0 %v166
    %1256 = vmatprep.subr.mxu0 %v169
    %1257 = vmatpush1.msra.mxu0 %v168
    %1258 = vmatprep.subr.mxu0 %v171
    %1259 = vmatpush1.msra.mxu0 %v170
    %1260 = vmatprep.subr.mxu0 0.0
    %1261 = vmatpush1.msra.mxu0 0.0
    %1262 = vmatprep.subr.mxu0 0.0
    %1263 = vmatpush1.msra.mxu0 0.0
    %1264 = vmatprep.subr.mxu0 0.0
    %1265 = vmatpush1.msra.mxu0 0.0
    %1266 = vmatprep.subr.mxu0 0.0
    %1267 = vmatpush1.msra.mxu0 0.0
    %1268 = vmatprep.subr.mxu0 0.0
    %1269 = vmatpush1.msra.mxu0 0.0
    %1270 = vmatprep.subr.mxu0 0.0
    %1271 = vmatpush1.msra.mxu0 0.0
    %1272 = vmatprep.subr.mxu0 0.0
    %1273 = vmatpush1.msra.mxu0 0.0
    %1274 = vmatprep.subr.mxu0 0.0
    %1275 = vmatpush1.msra.mxu0 0.0
    %1276 = vmatprep.subr.mxu0 0.0
    %1277 = vmatpush1.msra.mxu0 0.0
    %1278 = vmatprep.subr.mxu0 0.0
    %1279 = vmatpush1.msra.mxu0 0.0
    %1280 = vmatprep.subr.mxu0 0.0
    %1281 = vmatpush1.msra.mxu0 0.0
    %1282 = vmatprep.subr.mxu0 0.0
    %1283 = vmatpush1.msra.mxu0 0.0
    %1284 = vmatprep.subr.mxu0 0.0
    %1285 = vmatpush1.msra.mxu0 0.0
    %1286 = vmatprep.subr.mxu0 0.0
    %1287 = vmatpush1.msra.mxu0 0.0
    %1288 = vmatprep.subr.mxu0 0.0
    %1289 = vmatpush1.msra.mxu0 0.0
    %1290 = vmatprep.subr.mxu0 0.0
    %1291 = vmatpush1.msra.mxu0 0.0
    %1292 = vmatprep.mubr.f32.mxu0 0.0
    %1293 = vmatmul.mubr.f32.gmra.mrb[0].mxu0 %v1151
    %v1294 = vpop.f32.mrb[0].mxu0
    %v1295 = vadd.f32 %v1224, %v1294
    %v1296 = vpop.f32.mrb[0].mxu0
    %v1297 = vadd.f32 %v1226, %v1296
    %1298 = vdwg.mxu0
    %v1299 = vadd.f32 %v1295, %v536
    %v1300 = vadd.f32 %v1297, %v540
    %v1301 = vxor.u32 %v1299, 2147483648
    %v1302 = vmul.f32 %v1301, 1.442695
    %v1303 = vpow.pop %v1302
    %v1304 = vadd.f32 %v1303, 1.0
    %v1305 = vrcp.pop %v1304
    %v1306 = vmul.f32 1.0, %v1305
    %v1307 = vtanh.pop %v1300
    %v1308 = vxor.u32 %v1300, 2147483648
    %v1309 = vmul.f32 %v1308, 1.442695
    %v1310 = vpow.pop %v1309
    %v1311 = vadd.f32 %v1310, 1.0
    %v1312 = vrcp.pop %v1311
    %v1313 = vmul.f32 1.0, %v1312
    %v1314 = vmul.f32 %v1306, %v942
    %v1315 = vmul.f32 %v1306, %v1307
    %1317 = vrot.lane.b32.xlu0 %v1315, 64
    %v1318 = vpop.permute.xlu0 %1317
    %v1320 = vadd.f32 %v1314, %v1318
    %v1321 = vtanh.pop %v1320
    %v1322 = vmul.f32 %v1313, %v1321
    %vm1323 = vcmp.gt.f32.partialorder %v1322, 0.0
    %v1324 = vmul.f32 %v1322, 0.1
    %v1325 = vsel %vm1323, %v1322, %v1324
    %1327 = vrot.lane.b32.xlu0 %v1325, 64
    %v1328 = vpop.permute.xlu0 %1327
    %s1330 = scalar_lea.vmem [#allocation10], 4
    %1331 = vst.msk [vmem:[%s1330] sm:$0x3] %vm574, %v1328
    %s1332 = scalar_lea.vmem [#allocation2], 24
    %v1333 = vld [vmem:[%s1332] sm:$0xff]
    %1334 = vmatprep.subr.mxu0 %v77
    %1335 = vmatpush1.msra.mxu0 %v76
    %1336 = vmatprep.subr.mxu0 %v81
    %1337 = vmatpush1.msra.mxu0 %v80
    %1338 = vmatprep.subr.mxu0 %v85
    %1339 = vmatpush1.msra.mxu0 %v84
    %1340 = vmatprep.subr.mxu0 %v89
    %1341 = vmatpush1.msra.mxu0 %v88
    %1342 = vmatprep.subr.mxu0 %v93
    %1343 = vmatpush1.msra.mxu0 %v92
    %1344 = vmatprep.subr.mxu0 %v97
    %1345 = vmatpush1.msra.mxu0 %v96
    %1346 = vmatprep.subr.mxu0 %v101
    %1347 = vmatpush1.msra.mxu0 %v100
    %1348 = vmatprep.subr.mxu0 %v105
    %1349 = vmatpush1.msra.mxu0 %v104
    %1350 = vmatprep.subr.mxu0 %v109
    %1351 = vmatpush1.msra.mxu0 %v108
    %1352 = vmatprep.subr.mxu0 %v113
    %1353 = vmatpush1.msra.mxu0 %v112
    %1354 = vmatprep.subr.mxu0 %v117
    %1355 = vmatpush1.msra.mxu0 %v116
    %1356 = vmatprep.subr.mxu0 %v121
    %1357 = vmatpush1.msra.mxu0 %v120
    %1358 = vmatprep.subr.mxu0 %v125
    %1359 = vmatpush1.msra.mxu0 %v124
    %1360 = vmatprep.subr.mxu0 %v129
    %1361 = vmatpush1.msra.mxu0 %v128
    %1362 = vmatprep.subr.mxu0 %v133
    %1363 = vmatpush1.msra.mxu0 %v132
    %1364 = vmatprep.subr.mxu0 %v137
    %1365 = vmatpush1.msra.mxu0 %v136
    %1366 = vmatprep.subr.mxu0 0.0
    %1367 = vmatpush1.msra.mxu0 0.0
    %1368 = vmatprep.subr.mxu0 0.0
    %1369 = vmatpush1.msra.mxu0 0.0
    %1370 = vmatprep.subr.mxu0 0.0
    %1371 = vmatpush1.msra.mxu0 0.0
    %1372 = vmatprep.subr.mxu0 0.0
    %1373 = vmatpush1.msra.mxu0 0.0
    %1374 = vmatprep.subr.mxu0 0.0
    %1375 = vmatpush1.msra.mxu0 0.0
    %1376 = vmatprep.subr.mxu0 0.0
    %1377 = vmatpush1.msra.mxu0 0.0
    %1378 = vmatprep.subr.mxu0 0.0
    %1379 = vmatpush1.msra.mxu0 0.0
    %1380 = vmatprep.subr.mxu0 0.0
    %1381 = vmatpush1.msra.mxu0 0.0
    %1382 = vmatprep.subr.mxu0 0.0
    %1383 = vmatpush1.msra.mxu0 0.0
    %1384 = vmatprep.subr.mxu0 0.0
    %1385 = vmatpush1.msra.mxu0 0.0
    %1386 = vmatprep.subr.mxu0 0.0
    %1387 = vmatpush1.msra.mxu0 0.0
    %1388 = vmatprep.subr.mxu0 0.0
    %1389 = vmatpush1.msra.mxu0 0.0
    %1390 = vmatprep.subr.mxu0 0.0
    %1391 = vmatpush1.msra.mxu0 0.0
    %1392 = vmatprep.subr.mxu0 0.0
    %1393 = vmatpush1.msra.mxu0 0.0
    %1394 = vmatprep.subr.mxu0 0.0
    %1395 = vmatpush1.msra.mxu0 0.0
    %1396 = vmatprep.subr.mxu0 0.0
    %1397 = vmatpush1.msra.mxu0 0.0
    %1398 = vmatprep.mubr.f32.mxu0 0.0
    %1399 = vmatmul.mubr.f32.gmra.mrb[0].mxu0 %v1151
    %v1400 = vpop.f32.mrb[0].mxu0
    %v1401 = vadd.f32 0.0, %v1400
    %v1402 = vpop.f32.mrb[0].mxu0
    %v1403 = vadd.f32 0.0, %v1402
    %1404 = vdwg.mxu0
    %1405 = vmatprep.subr.mxu0 %v79
    %1406 = vmatpush1.msra.mxu0 %v78
    %1407 = vmatprep.subr.mxu0 %v83
    %1408 = vmatpush1.msra.mxu0 %v82
    %1409 = vmatprep.subr.mxu0 %v87
    %1410 = vmatpush1.msra.mxu0 %v86
    %1411 = vmatprep.subr.mxu0 %v91
    %1412 = vmatpush1.msra.mxu0 %v90
    %1413 = vmatprep.subr.mxu0 %v95
    %1414 = vmatpush1.msra.mxu0 %v94
    %1415 = vmatprep.subr.mxu0 %v99
    %1416 = vmatpush1.msra.mxu0 %v98
    %1417 = vmatprep.subr.mxu0 %v103
    %1418 = vmatpush1.msra.mxu0 %v102
    %1419 = vmatprep.subr.mxu0 %v107
    %1420 = vmatpush1.msra.mxu0 %v106
    %1421 = vmatprep.subr.mxu0 %v111
    %1422 = vmatpush1.msra.mxu0 %v110
    %1423 = vmatprep.subr.mxu0 %v115
    %1424 = vmatpush1.msra.mxu0 %v114
    %1425 = vmatprep.subr.mxu0 %v119
    %1426 = vmatpush1.msra.mxu0 %v118
    %1427 = vmatprep.subr.mxu0 %v123
    %1428 = vmatpush1.msra.mxu0 %v122
    %1429 = vmatprep.subr.mxu0 %v127
    %1430 = vmatpush1.msra.mxu0 %v126
    %1431 = vmatprep.subr.mxu0 %v131
    %1432 = vmatpush1.msra.mxu0 %v130
    %1433 = vmatprep.subr.mxu0 %v135
    %1434 = vmatpush1.msra.mxu0 %v134
    %1435 = vmatprep.subr.mxu0 %v139
    %1436 = vmatpush1.msra.mxu0 %v138
    %1437 = vmatprep.subr.mxu0 0.0
    %1438 = vmatpush1.msra.mxu0 0.0
    %1439 = vmatprep.subr.mxu0 0.0
    %1440 = vmatpush1.msra.mxu0 0.0
    %1441 = vmatprep.subr.mxu0 0.0
    %1442 = vmatpush1.msra.mxu0 0.0
    %1443 = vmatprep.subr.mxu0 0.0
    %1444 = vmatpush1.msra.mxu0 0.0
    %1445 = vmatprep.subr.mxu0 0.0
    %1446 = vmatpush1.msra.mxu0 0.0
    %1447 = vmatprep.subr.mxu0 0.0
    %1448 = vmatpush1.msra.mxu0 0.0
    %1449 = vmatprep.subr.mxu0 0.0
    %1450 = vmatpush1.msra.mxu0 0.0
    %1451 = vmatprep.subr.mxu0 0.0
    %1452 = vmatpush1.msra.mxu0 0.0
    %1453 = vmatprep.subr.mxu0 0.0
    %1454 = vmatpush1.msra.mxu0 0.0
    %1455 = vmatprep.subr.mxu0 0.0
    %1456 = vmatpush1.msra.mxu0 0.0
    %1457 = vmatprep.subr.mxu0 0.0
    %1458 = vmatpush1.msra.mxu0 0.0
    %1459 = vmatprep.subr.mxu0 0.0
    %1460 = vmatpush1.msra.mxu0 0.0
    %1461 = vmatprep.subr.mxu0 0.0
    %1462 = vmatpush1.msra.mxu0 0.0
    %1463 = vmatprep.subr.mxu0 0.0
    %1464 = vmatpush1.msra.mxu0 0.0
    %1465 = vmatprep.subr.mxu0 0.0
    %1466 = vmatpush1.msra.mxu0 0.0
    %1467 = vmatprep.subr.mxu0 0.0
    %1468 = vmatpush1.msra.mxu0 0.0
    %1469 = vmatprep.mubr.f32.mxu0 0.0
    %1470 = vmatmul.mubr.f32.gmra.mrb[0].mxu0 %v1151
    %v1471 = vpop.f32.mrb[0].mxu0
    %v1472 = vadd.f32 0.0, %v1471
    %v1473 = vpop.f32.mrb[0].mxu0
    %v1474 = vadd.f32 0.0, %v1473
    %1475 = vdwg.mxu0
    %v1480 = vcombine.low %v1401, %v1403
    %v1481 = vcombine.low %v1472, %v1474
    %v1483 = vunpack.c.l.s4 1983009808
    %v1484 = vunpack.c.0.s8 %v1483
    %v1485 = vlaneseq
    %v1486 = vshrl.u32 %v1485, 7
    %v1487 = vsub.s32 %v1484, %v1486
    %v1488 = vrot.slane %v1480, %v1487
    %v1490 = vunpack.c.l.s4 1983009808
    %v1491 = vunpack.c.0.s8 %v1490
    %v1492 = vlaneseq
    %v1493 = vshrl.u32 %v1492, 7
    %v1494 = vsub.s32 %v1491, %v1493
    %v1495 = vrot.slane %v1481, %v1494
    %v1496 = vcombine.low %v1488, %v1495
    %v1498 = vadd.f32 %v1333, %v1496
    %v1499 = vxor.u32 %v1498, 2147483648
    %v1500 = vmul.f32 %v1499, 1.442695
    %v1501 = vpow.pop %v1500
    %v1502 = vadd.f32 %v1501, 1.0
    %v1503 = vrcp.pop %v1502
    %v1504 = vmul.f32 1.0, %v1503
    %v1506 = vrot.slane %v1498, 2
    %v1508 = vxor.u32 %v1506, 2147483648
    %v1509 = vmul.f32 %v1508, 1.442695
    %v1510 = vpow.pop %v1509
    %v1511 = vadd.f32 %v1510, 1.0
    %v1512 = vrcp.pop %v1511
    %v1513 = vmul.f32 1.0, %v1512
    %v1514 = vrot.slane %v1498, 4
    %v1516 = vtanh.pop %v1514
    %v1517 = vrot.slane %v1498, 6
    %v1519 = vxor.u32 %v1517, 2147483648
    %v1520 = vmul.f32 %v1519, 1.442695
    %v1521 = vpow.pop %v1520
    %v1522 = vadd.f32 %v1521, 1.0
    %v1523 = vrcp.pop %v1522
    %v1524 = vmul.f32 1.0, %v1523
    %v1525 = vmul.f32 %v1513, %v1149
    %v1526 = vmul.f32 %v1504, %v1516
    %v1527 = vadd.f32 %v1525, %v1526
    %v1528 = vtanh.pop %v1527
    %v1529 = vmul.f32 %v1524, %v1528
    %1531 = vrot.lane.b32.xlu0 %v1322, 64
    %v1532 = vpop.permute.xlu0 %1531
    %v1533 = vsel %vm386, %v1532, 0
    %1535 = vmatprep.subr.mxu0 %v173
    %1536 = vmatpush1.msra.mxu0 %v172
    %1537 = vmatprep.subr.mxu0 %v175
    %1538 = vmatpush1.msra.mxu0 %v174
    %1539 = vmatprep.subr.mxu0 %v177
    %1540 = vmatpush1.msra.mxu0 %v176
    %1541 = vmatprep.subr.mxu0 %v179
    %1542 = vmatpush1.msra.mxu0 %v178
    %1543 = vmatprep.subr.mxu0 %v181
    %1544 = vmatpush1.msra.mxu0 %v180
    %1545 = vmatprep.subr.mxu0 %v183
    %1546 = vmatpush1.msra.mxu0 %v182
    %1547 = vmatprep.subr.mxu0 %v185
    %1548 = vmatpush1.msra.mxu0 %v184
    %1549 = vmatprep.subr.mxu0 %v187
    %1550 = vmatpush1.msra.mxu0 %v186
    %1551 = vmatprep.subr.mxu0 0.0
    %1552 = vmatpush1.msra.mxu0 0.0
    %1553 = vmatprep.subr.mxu0 0.0
    %1554 = vmatpush1.msra.mxu0 0.0
    %1555 = vmatprep.subr.mxu0 0.0
    %1556 = vmatpush1.msra.mxu0 0.0
    %1557 = vmatprep.subr.mxu0 0.0
    %1558 = vmatpush1.msra.mxu0 0.0
    %1559 = vmatprep.subr.mxu0 0.0
    %1560 = vmatpush1.msra.mxu0 0.0
    %1561 = vmatprep.subr.mxu0 0.0
    %1562 = vmatpush1.msra.mxu0 0.0
    %1563 = vmatprep.subr.mxu0 0.0
    %1564 = vmatpush1.msra.mxu0 0.0
    %1565 = vmatprep.subr.mxu0 0.0
    %1566 = vmatpush1.msra.mxu0 0.0
    %1567 = vmatprep.subr.mxu0 0.0
    %1568 = vmatpush1.msra.mxu0 0.0
    %1569 = vmatprep.subr.mxu0 0.0
    %1570 = vmatpush1.msra.mxu0 0.0
    %1571 = vmatprep.subr.mxu0 0.0
    %1572 = vmatpush1.msra.mxu0 0.0
    %1573 = vmatprep.subr.mxu0 0.0
    %1574 = vmatpush1.msra.mxu0 0.0
    %1575 = vmatprep.subr.mxu0 0.0
    %1576 = vmatpush1.msra.mxu0 0.0
    %1577 = vmatprep.subr.mxu0 0.0
    %1578 = vmatpush1.msra.mxu0 0.0
    %1579 = vmatprep.subr.mxu0 0.0
    %1580 = vmatpush1.msra.mxu0 0.0
    %1581 = vmatprep.subr.mxu0 0.0
    %1582 = vmatpush1.msra.mxu0 0.0
    %1583 = vmatprep.subr.mxu0 0.0
    %1584 = vmatpush1.msra.mxu0 0.0
    %1585 = vmatprep.subr.mxu0 0.0
    %1586 = vmatpush1.msra.mxu0 0.0
    %1587 = vmatprep.subr.mxu0 0.0
    %1588 = vmatpush1.msra.mxu0 0.0
    %1589 = vmatprep.subr.mxu0 0.0
    %1590 = vmatpush1.msra.mxu0 0.0
    %1591 = vmatprep.subr.mxu0 0.0
    %1592 = vmatpush1.msra.mxu0 0.0
    %1593 = vmatprep.subr.mxu0 0.0
    %1594 = vmatpush1.msra.mxu0 0.0
    %1595 = vmatprep.subr.mxu0 0.0
    %1596 = vmatpush1.msra.mxu0 0.0
    %1597 = vmatprep.subr.mxu0 0.0
    %1598 = vmatpush1.msra.mxu0 0.0
    %1599 = vmatprep.mubr.f32.mxu0 0.0
    %1600 = vmatmul.mubr.f32.gmra.mrb[0].mxu0 %v1533
    %v1601 = vpop.f32.mrb[0].mxu0
    %v1602 = vadd.f32 0.0, %v1601
    %v1603 = vpop.f32.mrb[0].mxu0
    %v1604 = vadd.f32 0.0, %v1603
    %1605 = vdwg.mxu0
    %1606 = vmatprep.subr.mxu0 %v141
    %1607 = vmatpush1.msra.mxu0 %v140
    %1608 = vmatprep.subr.mxu0 %v143
    %1609 = vmatpush1.msra.mxu0 %v142
    %1610 = vmatprep.subr.mxu0 %v145
    %1611 = vmatpush1.msra.mxu0 %v144
    %1612 = vmatprep.subr.mxu0 %v147
    %1613 = vmatpush1.msra.mxu0 %v146
    %1614 = vmatprep.subr.mxu0 %v149
    %1615 = vmatpush1.msra.mxu0 %v148
    %1616 = vmatprep.subr.mxu0 %v151
    %1617 = vmatpush1.msra.mxu0 %v150
    %1618 = vmatprep.subr.mxu0 %v153
    %1619 = vmatpush1.msra.mxu0 %v152
    %1620 = vmatprep.subr.mxu0 %v155
    %1621 = vmatpush1.msra.mxu0 %v154
    %1622 = vmatprep.subr.mxu0 %v157
    %1623 = vmatpush1.msra.mxu0 %v156
    %1624 = vmatprep.subr.mxu0 %v159
    %1625 = vmatpush1.msra.mxu0 %v158
    %1626 = vmatprep.subr.mxu0 %v161
    %1627 = vmatpush1.msra.mxu0 %v160
    %1628 = vmatprep.subr.mxu0 %v163
    %1629 = vmatpush1.msra.mxu0 %v162
    %1630 = vmatprep.subr.mxu0 %v165
    %1631 = vmatpush1.msra.mxu0 %v164
    %1632 = vmatprep.subr.mxu0 %v167
    %1633 = vmatpush1.msra.mxu0 %v166
    %1634 = vmatprep.subr.mxu0 %v169
    %1635 = vmatpush1.msra.mxu0 %v168
    %1636 = vmatprep.subr.mxu0 %v171
    %1637 = vmatpush1.msra.mxu0 %v170
    %1638 = vmatprep.subr.mxu0 0.0
    %1639 = vmatpush1.msra.mxu0 0.0
    %1640 = vmatprep.subr.mxu0 0.0
    %1641 = vmatpush1.msra.mxu0 0.0
    %1642 = vmatprep.subr.mxu0 0.0
    %1643 = vmatpush1.msra.mxu0 0.0
    %1644 = vmatprep.subr.mxu0 0.0
    %1645 = vmatpush1.msra.mxu0 0.0
    %1646 = vmatprep.subr.mxu0 0.0
    %1647 = vmatpush1.msra.mxu0 0.0
    %1648 = vmatprep.subr.mxu0 0.0
    %1649 = vmatpush1.msra.mxu0 0.0
    %1650 = vmatprep.subr.mxu0 0.0
    %1651 = vmatpush1.msra.mxu0 0.0
    %1652 = vmatprep.subr.mxu0 0.0
    %1653 = vmatpush1.msra.mxu0 0.0
    %1654 = vmatprep.subr.mxu0 0.0
    %1655 = vmatpush1.msra.mxu0 0.0
    %1656 = vmatprep.subr.mxu0 0.0
    %1657 = vmatpush1.msra.mxu0 0.0
    %1658 = vmatprep.subr.mxu0 0.0
    %1659 = vmatpush1.msra.mxu0 0.0
    %1660 = vmatprep.subr.mxu0 0.0
    %1661 = vmatpush1.msra.mxu0 0.0
    %1662 = vmatprep.subr.mxu0 0.0
    %1663 = vmatpush1.msra.mxu0 0.0
    %1664 = vmatprep.subr.mxu0 0.0
    %1665 = vmatpush1.msra.mxu0 0.0
    %1666 = vmatprep.subr.mxu0 0.0
    %1667 = vmatpush1.msra.mxu0 0.0
    %1668 = vmatprep.subr.mxu0 0.0
    %1669 = vmatpush1.msra.mxu0 0.0
    %1670 = vmatprep.mubr.f32.mxu0 0.0
    %1671 = vmatmul.mubr.f32.gmra.mrb[0].mxu0 %v1529
    %v1672 = vpop.f32.mrb[0].mxu0
    %v1673 = vadd.f32 %v1602, %v1672
    %v1674 = vpop.f32.mrb[0].mxu0
    %v1675 = vadd.f32 %v1604, %v1674
    %1676 = vdwg.mxu0
    %v1677 = vadd.f32 %v1673, %v536
    %v1678 = vadd.f32 %v1675, %v540
    %v1679 = vxor.u32 %v1677, 2147483648
    %v1680 = vmul.f32 %v1679, 1.442695
    %v1681 = vpow.pop %v1680
    %v1682 = vadd.f32 %v1681, 1.0
    %v1683 = vrcp.pop %v1682
    %v1684 = vmul.f32 1.0, %v1683
    %v1685 = vtanh.pop %v1678
    %v1686 = vxor.u32 %v1678, 2147483648
    %v1687 = vmul.f32 %v1686, 1.442695
    %v1688 = vpow.pop %v1687
    %v1689 = vadd.f32 %v1688, 1.0
    %v1690 = vrcp.pop %v1689
    %v1691 = vmul.f32 1.0, %v1690
    %v1692 = vmul.f32 %v1684, %v1320
    %v1693 = vmul.f32 %v1684, %v1685
    %1695 = vrot.lane.b32.xlu0 %v1693, 64
    %v1696 = vpop.permute.xlu0 %1695
    %v1698 = vadd.f32 %v1692, %v1696
    %v1699 = vtanh.pop %v1698
    %v1700 = vmul.f32 %v1691, %v1699
    %vm1701 = vcmp.gt.f32.partialorder %v1700, 0.0
    %v1702 = vmul.f32 %v1700, 0.1
    %v1703 = vsel %vm1701, %v1700, %v1702
    %1705 = vrot.lane.b32.xlu0 %v1703, 64
    %v1706 = vpop.permute.xlu0 %1705
    %s1708 = scalar_lea.vmem [#allocation10], 6
    %1709 = vst.msk [vmem:[%s1708] sm:$0x3] %vm574, %v1706
    %s1710 = scalar_lea.vmem [#allocation2], 32
    %v1711 = vld [vmem:[%s1710] sm:$0xff]
    %1712 = vmatprep.subr.mxu0 %v77
    %1713 = vmatpush1.msra.mxu0 %v76
    %1714 = vmatprep.subr.mxu0 %v81
    %1715 = vmatpush1.msra.mxu0 %v80
    %1716 = vmatprep.subr.mxu0 %v85
    %1717 = vmatpush1.msra.mxu0 %v84
    %1718 = vmatprep.subr.mxu0 %v89
    %1719 = vmatpush1.msra.mxu0 %v88
    %1720 = vmatprep.subr.mxu0 %v93
    %1721 = vmatpush1.msra.mxu0 %v92
    %1722 = vmatprep.subr.mxu0 %v97
    %1723 = vmatpush1.msra.mxu0 %v96
    %1724 = vmatprep.subr.mxu0 %v101
    %1725 = vmatpush1.msra.mxu0 %v100
    %1726 = vmatprep.subr.mxu0 %v105
    %1727 = vmatpush1.msra.mxu0 %v104
    %1728 = vmatprep.subr.mxu0 %v109
    %1729 = vmatpush1.msra.mxu0 %v108
    %1730 = vmatprep.subr.mxu0 %v113
    %1731 = vmatpush1.msra.mxu0 %v112
    %1732 = vmatprep.subr.mxu0 %v117
    %1733 = vmatpush1.msra.mxu0 %v116
    %1734 = vmatprep.subr.mxu0 %v121
    %1735 = vmatpush1.msra.mxu0 %v120
    %1736 = vmatprep.subr.mxu0 %v125
    %1737 = vmatpush1.msra.mxu0 %v124
    %1738 = vmatprep.subr.mxu0 %v129
    %1739 = vmatpush1.msra.mxu0 %v128
    %1740 = vmatprep.subr.mxu0 %v133
    %1741 = vmatpush1.msra.mxu0 %v132
    %1742 = vmatprep.subr.mxu0 %v137
    %1743 = vmatpush1.msra.mxu0 %v136
    %1744 = vmatprep.subr.mxu0 0.0
    %1745 = vmatpush1.msra.mxu0 0.0
    %1746 = vmatprep.subr.mxu0 0.0
    %1747 = vmatpush1.msra.mxu0 0.0
    %1748 = vmatprep.subr.mxu0 0.0
    %1749 = vmatpush1.msra.mxu0 0.0
    %1750 = vmatprep.subr.mxu0 0.0
    %1751 = vmatpush1.msra.mxu0 0.0
    %1752 = vmatprep.subr.mxu0 0.0
    %1753 = vmatpush1.msra.mxu0 0.0
    %1754 = vmatprep.subr.mxu0 0.0
    %1755 = vmatpush1.msra.mxu0 0.0
    %1756 = vmatprep.subr.mxu0 0.0
    %1757 = vmatpush1.msra.mxu0 0.0
    %1758 = vmatprep.subr.mxu0 0.0
    %1759 = vmatpush1.msra.mxu0 0.0
    %1760 = vmatprep.subr.mxu0 0.0
    %1761 = vmatpush1.msra.mxu0 0.0
    %1762 = vmatprep.subr.mxu0 0.0
    %1763 = vmatpush1.msra.mxu0 0.0
    %1764 = vmatprep.subr.mxu0 0.0
    %1765 = vmatpush1.msra.mxu0 0.0
    %1766 = vmatprep.subr.mxu0 0.0
    %1767 = vmatpush1.msra.mxu0 0.0
    %1768 = vmatprep.subr.mxu0 0.0
    %1769 = vmatpush1.msra.mxu0 0.0
    %1770 = vmatprep.subr.mxu0 0.0
    %1771 = vmatpush1.msra.mxu0 0.0
    %1772 = vmatprep.subr.mxu0 0.0
    %1773 = vmatpush1.msra.mxu0 0.0
    %1774 = vmatprep.subr.mxu0 0.0
    %1775 = vmatpush1.msra.mxu0 0.0
    %1776 = vmatprep.mubr.f32.mxu0 0.0
    %1777 = vmatmul.mubr.f32.gmra.mrb[0].mxu0 %v1529
    %v1778 = vpop.f32.mrb[0].mxu0
    %v1779 = vadd.f32 0.0, %v1778
    %v1780 = vpop.f32.mrb[0].mxu0
    %v1781 = vadd.f32 0.0, %v1780
    %1782 = vdwg.mxu0
    %1783 = vmatprep.subr.mxu0 %v79
    %1784 = vmatpush1.msra.mxu0 %v78
    %1785 = vmatprep.subr.mxu0 %v83
    %1786 = vmatpush1.msra.mxu0 %v82
    %1787 = vmatprep.subr.mxu0 %v87
    %1788 = vmatpush1.msra.mxu0 %v86
    %1789 = vmatprep.subr.mxu0 %v91
    %1790 = vmatpush1.msra.mxu0 %v90
    %1791 = vmatprep.subr.mxu0 %v95
    %1792 = vmatpush1.msra.mxu0 %v94
    %1793 = vmatprep.subr.mxu0 %v99
    %1794 = vmatpush1.msra.mxu0 %v98
    %1795 = vmatprep.subr.mxu0 %v103
    %1796 = vmatpush1.msra.mxu0 %v102
    %1797 = vmatprep.subr.mxu0 %v107
    %1798 = vmatpush1.msra.mxu0 %v106
    %1799 = vmatprep.subr.mxu0 %v111
    %1800 = vmatpush1.msra.mxu0 %v110
    %1801 = vmatprep.subr.mxu0 %v115
    %1802 = vmatpush1.msra.mxu0 %v114
    %1803 = vmatprep.subr.mxu0 %v119
    %1804 = vmatpush1.msra.mxu0 %v118
    %1805 = vmatprep.subr.mxu0 %v123
    %1806 = vmatpush1.msra.mxu0 %v122
    %1807 = vmatprep.subr.mxu0 %v127
    %1808 = vmatpush1.msra.mxu0 %v126
    %1809 = vmatprep.subr.mxu0 %v131
    %1810 = vmatpush1.msra.mxu0 %v130
    %1811 = vmatprep.subr.mxu0 %v135
    %1812 = vmatpush1.msra.mxu0 %v134
    %1813 = vmatprep.subr.mxu0 %v139
    %1814 = vmatpush1.msra.mxu0 %v138
    %1815 = vmatprep.subr.mxu0 0.0
    %1816 = vmatpush1.msra.mxu0 0.0
    %1817 = vmatprep.subr.mxu0 0.0
    %1818 = vmatpush1.msra.mxu0 0.0
    %1819 = vmatprep.subr.mxu0 0.0
    %1820 = vmatpush1.msra.mxu0 0.0
    %1821 = vmatprep.subr.mxu0 0.0
    %1822 = vmatpush1.msra.mxu0 0.0
    %1823 = vmatprep.subr.mxu0 0.0
    %1824 = vmatpush1.msra.mxu0 0.0
    %1825 = vmatprep.subr.mxu0 0.0
    %1826 = vmatpush1.msra.mxu0 0.0
    %1827 = vmatprep.subr.mxu0 0.0
    %1828 = vmatpush1.msra.mxu0 0.0
    %1829 = vmatprep.subr.mxu0 0.0
    %1830 = vmatpush1.msra.mxu0 0.0
    %1831 = vmatprep.subr.mxu0 0.0
    %1832 = vmatpush1.msra.mxu0 0.0
    %1833 = vmatprep.subr.mxu0 0.0
    %1834 = vmatpush1.msra.mxu0 0.0
    %1835 = vmatprep.subr.mxu0 0.0
    %1836 = vmatpush1.msra.mxu0 0.0
    %1837 = vmatprep.subr.mxu0 0.0
    %1838 = vmatpush1.msra.mxu0 0.0
    %1839 = vmatprep.subr.mxu0 0.0
    %1840 = vmatpush1.msra.mxu0 0.0
    %1841 = vmatprep.subr.mxu0 0.0
    %1842 = vmatpush1.msra.mxu0 0.0
    %1843 = vmatprep.subr.mxu0 0.0
    %1844 = vmatpush1.msra.mxu0 0.0
    %1845 = vmatprep.subr.mxu0 0.0
    %1846 = vmatpush1.msra.mxu0 0.0
    %1847 = vmatprep.mubr.f32.mxu0 0.0
    %1848 = vmatmul.mubr.f32.gmra.mrb[0].mxu0 %v1529
    %v1849 = vpop.f32.mrb[0].mxu0
    %v1850 = vadd.f32 0.0, %v1849
    %v1851 = vpop.f32.mrb[0].mxu0
    %v1852 = vadd.f32 0.0, %v1851
    %1853 = vdwg.mxu0
    %v1858 = vcombine.low %v1779, %v1781
    %v1859 = vcombine.low %v1850, %v1852
    %v1861 = vunpack.c.l.s4 1983009808
    %v1862 = vunpack.c.0.s8 %v1861
    %v1863 = vlaneseq
    %v1864 = vshrl.u32 %v1863, 7
    %v1865 = vsub.s32 %v1862, %v1864
    %v1866 = vrot.slane %v1858, %v1865
    %v1868 = vunpack.c.l.s4 1983009808
    %v1869 = vunpack.c.0.s8 %v1868
    %v1870 = vlaneseq
    %v1871 = vshrl.u32 %v1870, 7
    %v1872 = vsub.s32 %v1869, %v1871
    %v1873 = vrot.slane %v1859, %v1872
    %v1874 = vcombine.low %v1866, %v1873
    %v1876 = vadd.f32 %v1711, %v1874
    %v1877 = vxor.u32 %v1876, 2147483648
    %v1878 = vmul.f32 %v1877, 1.442695
    %v1879 = vpow.pop %v1878
    %v1880 = vadd.f32 %v1879, 1.0
    %v1881 = vrcp.pop %v1880
    %v1882 = vmul.f32 1.0, %v1881
    %v1884 = vrot.slane %v1876, 2
    %v1886 = vxor.u32 %v1884, 2147483648
    %v1887 = vmul.f32 %v1886, 1.442695
    %v1888 = vpow.pop %v1887
    %v1889 = vadd.f32 %v1888, 1.0
    %v1890 = vrcp.pop %v1889
    %v1891 = vmul.f32 1.0, %v1890
    %v1892 = vrot.slane %v1876, 4
    %v1894 = vtanh.pop %v1892
    %v1895 = vrot.slane %v1876, 6
    %v1897 = vxor.u32 %v1895, 2147483648
    %v1898 = vmul.f32 %v1897, 1.442695
    %v1899 = vpow.pop %v1898
    %v1900 = vadd.f32 %v1899, 1.0
    %v1901 = vrcp.pop %v1900
    %v1902 = vmul.f32 1.0, %v1901
    %v1903 = vmul.f32 %v1891, %v1527
    %v1904 = vmul.f32 %v1882, %v1894
    %v1905 = vadd.f32 %v1903, %v1904
    %v1906 = vtanh.pop %v1905
    %v1907 = vmul.f32 %v1902, %v1906
    %1909 = vrot.lane.b32.xlu0 %v1700, 64
    %v1910 = vpop.permute.xlu0 %1909
    %v1911 = vsel %vm386, %v1910, 0
    %1913 = vmatprep.subr.mxu0 %v173
    %1914 = vmatpush1.msra.mxu0 %v172
    %1915 = vmatprep.subr.mxu0 %v175
    %1916 = vmatpush1.msra.mxu0 %v174
    %1917 = vmatprep.subr.mxu0 %v177
    %1918 = vmatpush1.msra.mxu0 %v176
    %1919 = vmatprep.subr.mxu0 %v179
    %1920 = vmatpush1.msra.mxu0 %v178
    %1921 = vmatprep.subr.mxu0 %v181
    %1922 = vmatpush1.msra.mxu0 %v180
    %1923 = vmatprep.subr.mxu0 %v183
    %1924 = vmatpush1.msra.mxu0 %v182
    %1925 = vmatprep.subr.mxu0 %v185
    %1926 = vmatpush1.msra.mxu0 %v184
    %1927 = vmatprep.subr.mxu0 %v187
    %1928 = vmatpush1.msra.mxu0 %v186
    %1929 = vmatprep.subr.mxu0 0.0
    %1930 = vmatpush1.msra.mxu0 0.0
    %1931 = vmatprep.subr.mxu0 0.0
    %1932 = vmatpush1.msra.mxu0 0.0
    %1933 = vmatprep.subr.mxu0 0.0
    %1934 = vmatpush1.msra.mxu0 0.0
    %1935 = vmatprep.subr.mxu0 0.0
    %1936 = vmatpush1.msra.mxu0 0.0
    %1937 = vmatprep.subr.mxu0 0.0
    %1938 = vmatpush1.msra.mxu0 0.0
    %1939 = vmatprep.subr.mxu0 0.0
    %1940 = vmatpush1.msra.mxu0 0.0
    %1941 = vmatprep.subr.mxu0 0.0
    %1942 = vmatpush1.msra.mxu0 0.0
    %1943 = vmatprep.subr.mxu0 0.0
    %1944 = vmatpush1.msra.mxu0 0.0
    %1945 = vmatprep.subr.mxu0 0.0
    %1946 = vmatpush1.msra.mxu0 0.0
    %1947 = vmatprep.subr.mxu0 0.0
    %1948 = vmatpush1.msra.mxu0 0.0
    %1949 = vmatprep.subr.mxu0 0.0
    %1950 = vmatpush1.msra.mxu0 0.0
    %1951 = vmatprep.subr.mxu0 0.0
    %1952 = vmatpush1.msra.mxu0 0.0
    %1953 = vmatprep.subr.mxu0 0.0
    %1954 = vmatpush1.msra.mxu0 0.0
    %1955 = vmatprep.subr.mxu0 0.0
    %1956 = vmatpush1.msra.mxu0 0.0
    %1957 = vmatprep.subr.mxu0 0.0
    %1958 = vmatpush1.msra.mxu0 0.0
    %1959 = vmatprep.subr.mxu0 0.0
    %1960 = vmatpush1.msra.mxu0 0.0
    %1961 = vmatprep.subr.mxu0 0.0
    %1962 = vmatpush1.msra.mxu0 0.0
    %1963 = vmatprep.subr.mxu0 0.0
    %1964 = vmatpush1.msra.mxu0 0.0
    %1965 = vmatprep.subr.mxu0 0.0
    %1966 = vmatpush1.msra.mxu0 0.0
    %1967 = vmatprep.subr.mxu0 0.0
    %1968 = vmatpush1.msra.mxu0 0.0
    %1969 = vmatprep.subr.mxu0 0.0
    %1970 = vmatpush1.msra.mxu0 0.0
    %1971 = vmatprep.subr.mxu0 0.0
    %1972 = vmatpush1.msra.mxu0 0.0
    %1973 = vmatprep.subr.mxu0 0.0
    %1974 = vmatpush1.msra.mxu0 0.0
    %1975 = vmatprep.subr.mxu0 0.0
    %1976 = vmatpush1.msra.mxu0 0.0
    %1977 = vmatprep.mubr.f32.mxu0 0.0
    %1978 = vmatmul.mubr.f32.gmra.mrb[0].mxu0 %v1911
    %v1979 = vpop.f32.mrb[0].mxu0
    %v1980 = vadd.f32 0.0, %v1979
    %v1981 = vpop.f32.mrb[0].mxu0
    %v1982 = vadd.f32 0.0, %v1981
    %1983 = vdwg.mxu0
    %1984 = vmatprep.subr.mxu0 %v141
    %1985 = vmatpush1.msra.mxu0 %v140
    %1986 = vmatprep.subr.mxu0 %v143
    %1987 = vmatpush1.msra.mxu0 %v142
    %1988 = vmatprep.subr.mxu0 %v145
    %1989 = vmatpush1.msra.mxu0 %v144
    %1990 = vmatprep.subr.mxu0 %v147
    %1991 = vmatpush1.msra.mxu0 %v146
    %1992 = vmatprep.subr.mxu0 %v149
    %1993 = vmatpush1.msra.mxu0 %v148
    %1994 = vmatprep.subr.mxu0 %v151
    %1995 = vmatpush1.msra.mxu0 %v150
    %1996 = vmatprep.subr.mxu0 %v153
    %1997 = vmatpush1.msra.mxu0 %v152
    %1998 = vmatprep.subr.mxu0 %v155
    %1999 = vmatpush1.msra.mxu0 %v154
    %2000 = vmatprep.subr.mxu0 %v157
    %2001 = vmatpush1.msra.mxu0 %v156
    %2002 = vmatprep.subr.mxu0 %v159
    %2003 = vmatpush1.msra.mxu0 %v158
    %2004 = vmatprep.subr.mxu0 %v161
    %2005 = vmatpush1.msra.mxu0 %v160
    %2006 = vmatprep.subr.mxu0 %v163
    %2007 = vmatpush1.msra.mxu0 %v162
    %2008 = vmatprep.subr.mxu0 %v165
    %2009 = vmatpush1.msra.mxu0 %v164
    %2010 = vmatprep.subr.mxu0 %v167
    %2011 = vmatpush1.msra.mxu0 %v166
    %2012 = vmatprep.subr.mxu0 %v169
    %2013 = vmatpush1.msra.mxu0 %v168
    %2014 = vmatprep.subr.mxu0 %v171
    %2015 = vmatpush1.msra.mxu0 %v170
    %2016 = vmatprep.subr.mxu0 0.0
    %2017 = vmatpush1.msra.mxu0 0.0
    %2018 = vmatprep.subr.mxu0 0.0
    %2019 = vmatpush1.msra.mxu0 0.0
    %2020 = vmatprep.subr.mxu0 0.0
    %2021 = vmatpush1.msra.mxu0 0.0
    %2022 = vmatprep.subr.mxu0 0.0
    %2023 = vmatpush1.msra.mxu0 0.0
    %2024 = vmatprep.subr.mxu0 0.0
    %2025 = vmatpush1.msra.mxu0 0.0
    %2026 = vmatprep.subr.mxu0 0.0
    %2027 = vmatpush1.msra.mxu0 0.0
    %2028 = vmatprep.subr.mxu0 0.0
    %2029 = vmatpush1.msra.mxu0 0.0
    %2030 = vmatprep.subr.mxu0 0.0
    %2031 = vmatpush1.msra.mxu0 0.0
    %2032 = vmatprep.subr.mxu0 0.0
    %2033 = vmatpush1.msra.mxu0 0.0
    %2034 = vmatprep.subr.mxu0 0.0
    %2035 = vmatpush1.msra.mxu0 0.0
    %2036 = vmatprep.subr.mxu0 0.0
    %2037 = vmatpush1.msra.mxu0 0.0
    %2038 = vmatprep.subr.mxu0 0.0
    %2039 = vmatpush1.msra.mxu0 0.0
    %2040 = vmatprep.subr.mxu0 0.0
    %2041 = vmatpush1.msra.mxu0 0.0
    %2042 = vmatprep.subr.mxu0 0.0
    %2043 = vmatpush1.msra.mxu0 0.0
    %2044 = vmatprep.subr.mxu0 0.0
    %2045 = vmatpush1.msra.mxu0 0.0
    %2046 = vmatprep.subr.mxu0 0.0
    %2047 = vmatpush1.msra.mxu0 0.0
    %2048 = vmatprep.mubr.f32.mxu0 0.0
    %2049 = vmatmul.mubr.f32.gmra.mrb[0].mxu0 %v1907
    %v2050 = vpop.f32.mrb[0].mxu0
    %v2051 = vadd.f32 %v1980, %v2050
    %v2052 = vpop.f32.mrb[0].mxu0
    %v2053 = vadd.f32 %v1982, %v2052
    %2054 = vdwg.mxu0
    %v2055 = vadd.f32 %v2051, %v536
    %v2056 = vadd.f32 %v2053, %v540
    %v2057 = vxor.u32 %v2055, 2147483648
    %v2058 = vmul.f32 %v2057, 1.442695
    %v2059 = vpow.pop %v2058
    %v2060 = vadd.f32 %v2059, 1.0
    %v2061 = vrcp.pop %v2060
    %v2062 = vmul.f32 1.0, %v2061
    %v2063 = vtanh.pop %v2056
    %v2064 = vxor.u32 %v2056, 2147483648
    %v2065 = vmul.f32 %v2064, 1.442695
    %v2066 = vpow.pop %v2065
    %v2067 = vadd.f32 %v2066, 1.0
    %v2068 = vrcp.pop %v2067
    %v2069 = vmul.f32 1.0, %v2068
    %v2070 = vmul.f32 %v2062, %v1698
    %v2071 = vmul.f32 %v2062, %v2063
    %2073 = vrot.lane.b32.xlu0 %v2071, 64
    %v2074 = vpop.permute.xlu0 %2073
    %v2076 = vadd.f32 %v2070, %v2074
    %v2077 = vtanh.pop %v2076
    %v2078 = vmul.f32 %v2069, %v2077
    %vm2079 = vcmp.gt.f32.partialorder %v2078, 0.0
    %v2080 = vmul.f32 %v2078, 0.1
    %v2081 = vsel %vm2079, %v2078, %v2080
    %2083 = vrot.lane.b32.xlu0 %v2081, 64
    %v2084 = vpop.permute.xlu0 %2083
    %s2086 = scalar_lea.vmem [#allocation10], 8
    %2087 = vst.msk [vmem:[%s2086] sm:$0x3] %vm574, %v2084
    %s2088 = scalar_lea.vmem [#allocation2], 40
    %v2089 = vld [vmem:[%s2088] sm:$0xff]
    %2090 = vmatprep.subr.mxu0 %v77
    %2091 = vmatpush1.msra.mxu0 %v76
    %2092 = vmatprep.subr.mxu0 %v81
    %2093 = vmatpush1.msra.mxu0 %v80
    %2094 = vmatprep.subr.mxu0 %v85
    %2095 = vmatpush1.msra.mxu0 %v84
    %2096 = vmatprep.subr.mxu0 %v89
    %2097 = vmatpush1.msra.mxu0 %v88
    %2098 = vmatprep.subr.mxu0 %v93
    %2099 = vmatpush1.msra.mxu0 %v92
    %2100 = vmatprep.subr.mxu0 %v97
    %2101 = vmatpush1.msra.mxu0 %v96
    %2102 = vmatprep.subr.mxu0 %v101
    %2103 = vmatpush1.msra.mxu0 %v100
    %2104 = vmatprep.subr.mxu0 %v105
    %2105 = vmatpush1.msra.mxu0 %v104
    %2106 = vmatprep.subr.mxu0 %v109
    %2107 = vmatpush1.msra.mxu0 %v108
    %2108 = vmatprep.subr.mxu0 %v113
    %2109 = vmatpush1.msra.mxu0 %v112
    %2110 = vmatprep.subr.mxu0 %v117
    %2111 = vmatpush1.msra.mxu0 %v116
    %2112 = vmatprep.subr.mxu0 %v121
    %2113 = vmatpush1.msra.mxu0 %v120
    %2114 = vmatprep.subr.mxu0 %v125
    %2115 = vmatpush1.msra.mxu0 %v124
    %2116 = vmatprep.subr.mxu0 %v129
    %2117 = vmatpush1.msra.mxu0 %v128
    %2118 = vmatprep.subr.mxu0 %v133
    %2119 = vmatpush1.msra.mxu0 %v132
    %2120 = vmatprep.subr.mxu0 %v137
    %2121 = vmatpush1.msra.mxu0 %v136
    %2122 = vmatprep.subr.mxu0 0.0
    %2123 = vmatpush1.msra.mxu0 0.0
    %2124 = vmatprep.subr.mxu0 0.0
    %2125 = vmatpush1.msra.mxu0 0.0
    %2126 = vmatprep.subr.mxu0 0.0
    %2127 = vmatpush1.msra.mxu0 0.0
    %2128 = vmatprep.subr.mxu0 0.0
    %2129 = vmatpush1.msra.mxu0 0.0
    %2130 = vmatprep.subr.mxu0 0.0
    %2131 = vmatpush1.msra.mxu0 0.0
    %2132 = vmatprep.subr.mxu0 0.0
    %2133 = vmatpush1.msra.mxu0 0.0
    %2134 = vmatprep.subr.mxu0 0.0
    %2135 = vmatpush1.msra.mxu0 0.0
    %2136 = vmatprep.subr.mxu0 0.0
    %2137 = vmatpush1.msra.mxu0 0.0
    %2138 = vmatprep.subr.mxu0 0.0
    %2139 = vmatpush1.msra.mxu0 0.0
    %2140 = vmatprep.subr.mxu0 0.0
    %2141 = vmatpush1.msra.mxu0 0.0
    %2142 = vmatprep.subr.mxu0 0.0
    %2143 = vmatpush1.msra.mxu0 0.0
    %2144 = vmatprep.subr.mxu0 0.0
    %2145 = vmatpush1.msra.mxu0 0.0
    %2146 = vmatprep.subr.mxu0 0.0
    %2147 = vmatpush1.msra.mxu0 0.0
    %2148 = vmatprep.subr.mxu0 0.0
    %2149 = vmatpush1.msra.mxu0 0.0
    %2150 = vmatprep.subr.mxu0 0.0
    %2151 = vmatpush1.msra.mxu0 0.0
    %2152 = vmatprep.subr.mxu0 0.0
    %2153 = vmatpush1.msra.mxu0 0.0
    %2154 = vmatprep.mubr.f32.mxu0 0.0
    %2155 = vmatmul.mubr.f32.gmra.mrb[0].mxu0 %v1907
    %v2156 = vpop.f32.mrb[0].mxu0
    %v2157 = vadd.f32 0.0, %v2156
    %v2158 = vpop.f32.mrb[0].mxu0
    %v2159 = vadd.f32 0.0, %v2158
    %2160 = vdwg.mxu0
    %2161 = vmatprep.subr.mxu0 %v79
    %2162 = vmatpush1.msra.mxu0 %v78
    %2163 = vmatprep.subr.mxu0 %v83
    %2164 = vmatpush1.msra.mxu0 %v82
    %2165 = vmatprep.subr.mxu0 %v87
    %2166 = vmatpush1.msra.mxu0 %v86
    %2167 = vmatprep.subr.mxu0 %v91
    %2168 = vmatpush1.msra.mxu0 %v90
    %2169 = vmatprep.subr.mxu0 %v95
    %2170 = vmatpush1.msra.mxu0 %v94
    %2171 = vmatprep.subr.mxu0 %v99
    %2172 = vmatpush1.msra.mxu0 %v98
    %2173 = vmatprep.subr.mxu0 %v103
    %2174 = vmatpush1.msra.mxu0 %v102
    %2175 = vmatprep.subr.mxu0 %v107
    %2176 = vmatpush1.msra.mxu0 %v106
    %2177 = vmatprep.subr.mxu0 %v111
    %2178 = vmatpush1.msra.mxu0 %v110
    %2179 = vmatprep.subr.mxu0 %v115
    %2180 = vmatpush1.msra.mxu0 %v114
    %2181 = vmatprep.subr.mxu0 %v119
    %2182 = vmatpush1.msra.mxu0 %v118
    %2183 = vmatprep.subr.mxu0 %v123
    %2184 = vmatpush1.msra.mxu0 %v122
    %2185 = vmatprep.subr.mxu0 %v127
    %2186 = vmatpush1.msra.mxu0 %v126
    %2187 = vmatprep.subr.mxu0 %v131
    %2188 = vmatpush1.msra.mxu0 %v130
    %2189 = vmatprep.subr.mxu0 %v135
    %2190 = vmatpush1.msra.mxu0 %v134
    %2191 = vmatprep.subr.mxu0 %v139
    %2192 = vmatpush1.msra.mxu0 %v138
    %2193 = vmatprep.subr.mxu0 0.0
    %2194 = vmatpush1.msra.mxu0 0.0
    %2195 = vmatprep.subr.mxu0 0.0
    %2196 = vmatpush1.msra.mxu0 0.0
    %2197 = vmatprep.subr.mxu0 0.0
    %2198 = vmatpush1.msra.mxu0 0.0
    %2199 = vmatprep.subr.mxu0 0.0
    %2200 = vmatpush1.msra.mxu0 0.0
    %2201 = vmatprep.subr.mxu0 0.0
    %2202 = vmatpush1.msra.mxu0 0.0
    %2203 = vmatprep.subr.mxu0 0.0
    %2204 = vmatpush1.msra.mxu0 0.0
    %2205 = vmatprep.subr.mxu0 0.0
    %2206 = vmatpush1.msra.mxu0 0.0
    %2207 = vmatprep.subr.mxu0 0.0
    %2208 = vmatpush1.msra.mxu0 0.0
    %2209 = vmatprep.subr.mxu0 0.0
    %2210 = vmatpush1.msra.mxu0 0.0
    %2211 = vmatprep.subr.mxu0 0.0
    %2212 = vmatpush1.msra.mxu0 0.0
    %2213 = vmatprep.subr.mxu0 0.0
    %2214 = vmatpush1.msra.mxu0 0.0
    %2215 = vmatprep.subr.mxu0 0.0
    %2216 = vmatpush1.msra.mxu0 0.0
    %2217 = vmatprep.subr.mxu0 0.0
    %2218 = vmatpush1.msra.mxu0 0.0
    %2219 = vmatprep.subr.mxu0 0.0
    %2220 = vmatpush1.msra.mxu0 0.0
    %2221 = vmatprep.subr.mxu0 0.0
    %2222 = vmatpush1.msra.mxu0 0.0
    %2223 = vmatprep.subr.mxu0 0.0
    %2224 = vmatpush1.msra.mxu0 0.0
    %2225 = vmatprep.mubr.f32.mxu0 0.0
    %2226 = vmatmul.mubr.f32.gmra.mrb[0].mxu0 %v1907
    %v2227 = vpop.f32.mrb[0].mxu0
    %v2228 = vadd.f32 0.0, %v2227
    %v2229 = vpop.f32.mrb[0].mxu0
    %v2230 = vadd.f32 0.0, %v2229
    %2231 = vdwg.mxu0
    %v2236 = vcombine.low %v2157, %v2159
    %v2237 = vcombine.low %v2228, %v2230
    %v2239 = vunpack.c.l.s4 1983009808
    %v2240 = vunpack.c.0.s8 %v2239
    %v2241 = vlaneseq
    %v2242 = vshrl.u32 %v2241, 7
    %v2243 = vsub.s32 %v2240, %v2242
    %v2244 = vrot.slane %v2236, %v2243
    %v2246 = vunpack.c.l.s4 1983009808
    %v2247 = vunpack.c.0.s8 %v2246
    %v2248 = vlaneseq
    %v2249 = vshrl.u32 %v2248, 7
    %v2250 = vsub.s32 %v2247, %v2249
    %v2251 = vrot.slane %v2237, %v2250
    %v2252 = vcombine.low %v2244, %v2251
    %v2254 = vadd.f32 %v2089, %v2252
    %v2255 = vxor.u32 %v2254, 2147483648
    %v2256 = vmul.f32 %v2255, 1.442695
    %v2257 = vpow.pop %v2256
    %v2258 = vadd.f32 %v2257, 1.0
    %v2259 = vrcp.pop %v2258
    %v2260 = vmul.f32 1.0, %v2259
    %v2262 = vrot.slane %v2254, 2
    %v2264 = vxor.u32 %v2262, 2147483648
    %v2265 = vmul.f32 %v2264, 1.442695
    %v2266 = vpow.pop %v2265
    %v2267 = vadd.f32 %v2266, 1.0
    %v2268 = vrcp.pop %v2267
    %v2269 = vmul.f32 1.0, %v2268
    %v2270 = vrot.slane %v2254, 4
    %v2272 = vtanh.pop %v2270
    %v2273 = vrot.slane %v2254, 6
    %v2275 = vxor.u32 %v2273, 2147483648
    %v2276 = vmul.f32 %v2275, 1.442695
    %v2277 = vpow.pop %v2276
    %v2278 = vadd.f32 %v2277, 1.0
    %v2279 = vrcp.pop %v2278
    %v2280 = vmul.f32 1.0, %v2279
    %v2281 = vmul.f32 %v2269, %v1905
    %v2282 = vmul.f32 %v2260, %v2272
    %v2283 = vadd.f32 %v2281, %v2282
    %v2284 = vtanh.pop %v2283
    %v2285 = vmul.f32 %v2280, %v2284
    %2287 = vrot.lane.b32.xlu0 %v2078, 64
    %v2288 = vpop.permute.xlu0 %2287
    %v2289 = vsel %vm386, %v2288, 0
    %2291 = vmatprep.subr.mxu0 %v173
    %2292 = vmatpush1.msra.mxu0 %v172
    %2293 = vmatprep.subr.mxu0 %v175
    %2294 = vmatpush1.msra.mxu0 %v174
    %2295 = vmatprep.subr.mxu0 %v177
    %2296 = vmatpush1.msra.mxu0 %v176
    %2297 = vmatprep.subr.mxu0 %v179
    %2298 = vmatpush1.msra.mxu0 %v178
    %2299 = vmatprep.subr.mxu0 %v181
    %2300 = vmatpush1.msra.mxu0 %v180
    %2301 = vmatprep.subr.mxu0 %v183
    %2302 = vmatpush1.msra.mxu0 %v182
    %2303 = vmatprep.subr.mxu0 %v185
    %2304 = vmatpush1.msra.mxu0 %v184
    %2305 = vmatprep.subr.mxu0 %v187
    %2306 = vmatpush1.msra.mxu0 %v186
    %2307 = vmatprep.subr.mxu0 0.0
    %2308 = vmatpush1.msra.mxu0 0.0
    %2309 = vmatprep.subr.mxu0 0.0
    %2310 = vmatpush1.msra.mxu0 0.0
    %2311 = vmatprep.subr.mxu0 0.0
    %2312 = vmatpush1.msra.mxu0 0.0
    %2313 = vmatprep.subr.mxu0 0.0
    %2314 = vmatpush1.msra.mxu0 0.0
    %2315 = vmatprep.subr.mxu0 0.0
    %2316 = vmatpush1.msra.mxu0 0.0
    %2317 = vmatprep.subr.mxu0 0.0
    %2318 = vmatpush1.msra.mxu0 0.0
    %2319 = vmatprep.subr.mxu0 0.0
    %2320 = vmatpush1.msra.mxu0 0.0
    %2321 = vmatprep.subr.mxu0 0.0
    %2322 = vmatpush1.msra.mxu0 0.0
    %2323 = vmatprep.subr.mxu0 0.0
    %2324 = vmatpush1.msra.mxu0 0.0
    %2325 = vmatprep.subr.mxu0 0.0
    %2326 = vmatpush1.msra.mxu0 0.0
    %2327 = vmatprep.subr.mxu0 0.0
    %2328 = vmatpush1.msra.mxu0 0.0
    %2329 = vmatprep.subr.mxu0 0.0
    %2330 = vmatpush1.msra.mxu0 0.0
    %2331 = vmatprep.subr.mxu0 0.0
    %2332 = vmatpush1.msra.mxu0 0.0
    %2333 = vmatprep.subr.mxu0 0.0
    %2334 = vmatpush1.msra.mxu0 0.0
    %2335 = vmatprep.subr.mxu0 0.0
    %2336 = vmatpush1.msra.mxu0 0.0
    %2337 = vmatprep.subr.mxu0 0.0
    %2338 = vmatpush1.msra.mxu0 0.0
    %2339 = vmatprep.subr.mxu0 0.0
    %2340 = vmatpush1.msra.mxu0 0.0
    %2341 = vmatprep.subr.mxu0 0.0
    %2342 = vmatpush1.msra.mxu0 0.0
    %2343 = vmatprep.subr.mxu0 0.0
    %2344 = vmatpush1.msra.mxu0 0.0
    %2345 = vmatprep.subr.mxu0 0.0
    %2346 = vmatpush1.msra.mxu0 0.0
    %2347 = vmatprep.subr.mxu0 0.0
    %2348 = vmatpush1.msra.mxu0 0.0
    %2349 = vmatprep.subr.mxu0 0.0
    %2350 = vmatpush1.msra.mxu0 0.0
    %2351 = vmatprep.subr.mxu0 0.0
    %2352 = vmatpush1.msra.mxu0 0.0
    %2353 = vmatprep.subr.mxu0 0.0
    %2354 = vmatpush1.msra.mxu0 0.0
    %2355 = vmatprep.mubr.f32.mxu0 0.0
    %2356 = vmatmul.mubr.f32.gmra.mrb[0].mxu0 %v2289
    %v2357 = vpop.f32.mrb[0].mxu0
    %v2358 = vadd.f32 0.0, %v2357
    %v2359 = vpop.f32.mrb[0].mxu0
    %v2360 = vadd.f32 0.0, %v2359
    %2361 = vdwg.mxu0
    %2362 = vmatprep.subr.mxu0 %v141
    %2363 = vmatpush1.msra.mxu0 %v140
    %2364 = vmatprep.subr.mxu0 %v143
    %2365 = vmatpush1.msra.mxu0 %v142
    %2366 = vmatprep.subr.mxu0 %v145
    %2367 = vmatpush1.msra.mxu0 %v144
    %2368 = vmatprep.subr.mxu0 %v147
    %2369 = vmatpush1.msra.mxu0 %v146
    %2370 = vmatprep.subr.mxu0 %v149
    %2371 = vmatpush1.msra.mxu0 %v148
    %2372 = vmatprep.subr.mxu0 %v151
    %2373 = vmatpush1.msra.mxu0 %v150
    %2374 = vmatprep.subr.mxu0 %v153
    %2375 = vmatpush1.msra.mxu0 %v152
    %2376 = vmatprep.subr.mxu0 %v155
    %2377 = vmatpush1.msra.mxu0 %v154
    %2378 = vmatprep.subr.mxu0 %v157
    %2379 = vmatpush1.msra.mxu0 %v156
    %2380 = vmatprep.subr.mxu0 %v159
    %2381 = vmatpush1.msra.mxu0 %v158
    %2382 = vmatprep.subr.mxu0 %v161
    %2383 = vmatpush1.msra.mxu0 %v160
    %2384 = vmatprep.subr.mxu0 %v163
    %2385 = vmatpush1.msra.mxu0 %v162
    %2386 = vmatprep.subr.mxu0 %v165
    %2387 = vmatpush1.msra.mxu0 %v164
    %2388 = vmatprep.subr.mxu0 %v167
    %2389 = vmatpush1.msra.mxu0 %v166
    %2390 = vmatprep.subr.mxu0 %v169
    %2391 = vmatpush1.msra.mxu0 %v168
    %2392 = vmatprep.subr.mxu0 %v171
    %2393 = vmatpush1.msra.mxu0 %v170
    %2394 = vmatprep.subr.mxu0 0.0
    %2395 = vmatpush1.msra.mxu0 0.0
    %2396 = vmatprep.subr.mxu0 0.0
    %2397 = vmatpush1.msra.mxu0 0.0
    %2398 = vmatprep.subr.mxu0 0.0
    %2399 = vmatpush1.msra.mxu0 0.0
    %2400 = vmatprep.subr.mxu0 0.0
    %2401 = vmatpush1.msra.mxu0 0.0
    %2402 = vmatprep.subr.mxu0 0.0
    %2403 = vmatpush1.msra.mxu0 0.0
    %2404 = vmatprep.subr.mxu0 0.0
    %2405 = vmatpush1.msra.mxu0 0.0
    %2406 = vmatprep.subr.mxu0 0.0
    %2407 = vmatpush1.msra.mxu0 0.0
    %2408 = vmatprep.subr.mxu0 0.0
    %2409 = vmatpush1.msra.mxu0 0.0
    %2410 = vmatprep.subr.mxu0 0.0
    %2411 = vmatpush1.msra.mxu0 0.0
    %2412 = vmatprep.subr.mxu0 0.0
    %2413 = vmatpush1.msra.mxu0 0.0
    %2414 = vmatprep.subr.mxu0 0.0
    %2415 = vmatpush1.msra.mxu0 0.0
    %2416 = vmatprep.subr.mxu0 0.0
    %2417 = vmatpush1.msra.mxu0 0.0
    %2418 = vmatprep.subr.mxu0 0.0
    %2419 = vmatpush1.msra.mxu0 0.0
    %2420 = vmatprep.subr.mxu0 0.0
    %2421 = vmatpush1.msra.mxu0 0.0
    %2422 = vmatprep.subr.mxu0 0.0
    %2423 = vmatpush1.msra.mxu0 0.0
    %2424 = vmatprep.subr.mxu0 0.0
    %2425 = vmatpush1.msra.mxu0 0.0
    %2426 = vmatprep.mubr.f32.mxu0 0.0
    %2427 = vmatmul.mubr.f32.gmra.mrb[0].mxu0 %v2285
    %v2428 = vpop.f32.mrb[0].mxu0
    %v2429 = vadd.f32 %v2358, %v2428
    %v2430 = vpop.f32.mrb[0].mxu0
    %v2431 = vadd.f32 %v2360, %v2430
    %2432 = vdwg.mxu0
    %v2433 = vadd.f32 %v2429, %v536
    %v2434 = vadd.f32 %v2431, %v540
    %v2435 = vxor.u32 %v2433, 2147483648
    %v2436 = vmul.f32 %v2435, 1.442695
    %v2437 = vpow.pop %v2436
    %v2438 = vadd.f32 %v2437, 1.0
    %v2439 = vrcp.pop %v2438
    %v2440 = vmul.f32 1.0, %v2439
    %v2441 = vtanh.pop %v2434
    %v2442 = vxor.u32 %v2434, 2147483648
    %v2443 = vmul.f32 %v2442, 1.442695
    %v2444 = vpow.pop %v2443
    %v2445 = vadd.f32 %v2444, 1.0
    %v2446 = vrcp.pop %v2445
    %v2447 = vmul.f32 1.0, %v2446
    %v2448 = vmul.f32 %v2440, %v2076
    %v2449 = vmul.f32 %v2440, %v2441
    %2451 = vrot.lane.b32.xlu0 %v2449, 64
    %v2452 = vpop.permute.xlu0 %2451
    %v2454 = vadd.f32 %v2448, %v2452
    %v2455 = vtanh.pop %v2454
    %v2456 = vmul.f32 %v2447, %v2455
    %vm2457 = vcmp.gt.f32.partialorder %v2456, 0.0
    %v2458 = vmul.f32 %v2456, 0.1
    %v2459 = vsel %vm2457, %v2456, %v2458
    %2461 = vrot.lane.b32.xlu0 %v2459, 64
    %v2462 = vpop.permute.xlu0 %2461
    %s2464 = scalar_lea.vmem [#allocation10], 10
    %2465 = vst.msk [vmem:[%s2464] sm:$0x3] %vm574, %v2462
    %s2466 = scalar_lea.vmem [#allocation2], 48
    %v2467 = vld [vmem:[%s2466] sm:$0xff]
    %2468 = vmatprep.subr.mxu0 %v77
    %2469 = vmatpush1.msra.mxu0 %v76
    %2470 = vmatprep.subr.mxu0 %v81
    %2471 = vmatpush1.msra.mxu0 %v80
    %2472 = vmatprep.subr.mxu0 %v85
    %2473 = vmatpush1.msra.mxu0 %v84
    %2474 = vmatprep.subr.mxu0 %v89
    %2475 = vmatpush1.msra.mxu0 %v88
    %2476 = vmatprep.subr.mxu0 %v93
    %2477 = vmatpush1.msra.mxu0 %v92
    %2478 = vmatprep.subr.mxu0 %v97
    %2479 = vmatpush1.msra.mxu0 %v96
    %2480 = vmatprep.subr.mxu0 %v101
    %2481 = vmatpush1.msra.mxu0 %v100
    %2482 = vmatprep.subr.mxu0 %v105
    %2483 = vmatpush1.msra.mxu0 %v104
    %2484 = vmatprep.subr.mxu0 %v109
    %2485 = vmatpush1.msra.mxu0 %v108
    %2486 = vmatprep.subr.mxu0 %v113
    %2487 = vmatpush1.msra.mxu0 %v112
    %2488 = vmatprep.subr.mxu0 %v117
    %2489 = vmatpush1.msra.mxu0 %v116
    %2490 = vmatprep.subr.mxu0 %v121
    %2491 = vmatpush1.msra.mxu0 %v120
    %2492 = vmatprep.subr.mxu0 %v125
    %2493 = vmatpush1.msra.mxu0 %v124
    %2494 = vmatprep.subr.mxu0 %v129
    %2495 = vmatpush1.msra.mxu0 %v128
    %2496 = vmatprep.subr.mxu0 %v133
    %2497 = vmatpush1.msra.mxu0 %v132
    %2498 = vmatprep.subr.mxu0 %v137
    %2499 = vmatpush1.msra.mxu0 %v136
    %2500 = vmatprep.subr.mxu0 0.0
    %2501 = vmatpush1.msra.mxu0 0.0
    %2502 = vmatprep.subr.mxu0 0.0
    %2503 = vmatpush1.msra.mxu0 0.0
    %2504 = vmatprep.subr.mxu0 0.0
    %2505 = vmatpush1.msra.mxu0 0.0
    %2506 = vmatprep.subr.mxu0 0.0
    %2507 = vmatpush1.msra.mxu0 0.0
    %2508 = vmatprep.subr.mxu0 0.0
    %2509 = vmatpush1.msra.mxu0 0.0
    %2510 = vmatprep.subr.mxu0 0.0
    %2511 = vmatpush1.msra.mxu0 0.0
    %2512 = vmatprep.subr.mxu0 0.0
    %2513 = vmatpush1.msra.mxu0 0.0
    %2514 = vmatprep.subr.mxu0 0.0
    %2515 = vmatpush1.msra.mxu0 0.0
    %2516 = vmatprep.subr.mxu0 0.0
    %2517 = vmatpush1.msra.mxu0 0.0
    %2518 = vmatprep.subr.mxu0 0.0
    %2519 = vmatpush1.msra.mxu0 0.0
    %2520 = vmatprep.subr.mxu0 0.0
    %2521 = vmatpush1.msra.mxu0 0.0
    %2522 = vmatprep.subr.mxu0 0.0
    %2523 = vmatpush1.msra.mxu0 0.0
    %2524 = vmatprep.subr.mxu0 0.0
    %2525 = vmatpush1.msra.mxu0 0.0
    %2526 = vmatprep.subr.mxu0 0.0
    %2527 = vmatpush1.msra.mxu0 0.0
    %2528 = vmatprep.subr.mxu0 0.0
    %2529 = vmatpush1.msra.mxu0 0.0
    %2530 = vmatprep.subr.mxu0 0.0
    %2531 = vmatpush1.msra.mxu0 0.0
    %2532 = vmatprep.mubr.f32.mxu0 0.0
    %2533 = vmatmul.mubr.f32.gmra.mrb[0].mxu0 %v2285
    %v2534 = vpop.f32.mrb[0].mxu0
    %v2535 = vadd.f32 0.0, %v2534
    %v2536 = vpop.f32.mrb[0].mxu0
    %v2537 = vadd.f32 0.0, %v2536
    %2538 = vdwg.mxu0
    %2539 = vmatprep.subr.mxu0 %v79
    %2540 = vmatpush1.msra.mxu0 %v78
    %2541 = vmatprep.subr.mxu0 %v83
    %2542 = vmatpush1.msra.mxu0 %v82
    %2543 = vmatprep.subr.mxu0 %v87
    %2544 = vmatpush1.msra.mxu0 %v86
    %2545 = vmatprep.subr.mxu0 %v91
    %2546 = vmatpush1.msra.mxu0 %v90
    %2547 = vmatprep.subr.mxu0 %v95
    %2548 = vmatpush1.msra.mxu0 %v94
    %2549 = vmatprep.subr.mxu0 %v99
    %2550 = vmatpush1.msra.mxu0 %v98
    %2551 = vmatprep.subr.mxu0 %v103
    %2552 = vmatpush1.msra.mxu0 %v102
    %2553 = vmatprep.subr.mxu0 %v107
    %2554 = vmatpush1.msra.mxu0 %v106
    %2555 = vmatprep.subr.mxu0 %v111
    %2556 = vmatpush1.msra.mxu0 %v110
    %2557 = vmatprep.subr.mxu0 %v115
    %2558 = vmatpush1.msra.mxu0 %v114
    %2559 = vmatprep.subr.mxu0 %v119
    %2560 = vmatpush1.msra.mxu0 %v118
    %2561 = vmatprep.subr.mxu0 %v123
    %2562 = vmatpush1.msra.mxu0 %v122
    %2563 = vmatprep.subr.mxu0 %v127
    %2564 = vmatpush1.msra.mxu0 %v126
    %2565 = vmatprep.subr.mxu0 %v131
    %2566 = vmatpush1.msra.mxu0 %v130
    %2567 = vmatprep.subr.mxu0 %v135
    %2568 = vmatpush1.msra.mxu0 %v134
    %2569 = vmatprep.subr.mxu0 %v139
    %2570 = vmatpush1.msra.mxu0 %v138
    %2571 = vmatprep.subr.mxu0 0.0
    %2572 = vmatpush1.msra.mxu0 0.0
    %2573 = vmatprep.subr.mxu0 0.0
    %2574 = vmatpush1.msra.mxu0 0.0
    %2575 = vmatprep.subr.mxu0 0.0
    %2576 = vmatpush1.msra.mxu0 0.0
    %2577 = vmatprep.subr.mxu0 0.0
    %2578 = vmatpush1.msra.mxu0 0.0
    %2579 = vmatprep.subr.mxu0 0.0
    %2580 = vmatpush1.msra.mxu0 0.0
    %2581 = vmatprep.subr.mxu0 0.0
    %2582 = vmatpush1.msra.mxu0 0.0
    %2583 = vmatprep.subr.mxu0 0.0
    %2584 = vmatpush1.msra.mxu0 0.0
    %2585 = vmatprep.subr.mxu0 0.0
    %2586 = vmatpush1.msra.mxu0 0.0
    %2587 = vmatprep.subr.mxu0 0.0
    %2588 = vmatpush1.msra.mxu0 0.0
    %2589 = vmatprep.subr.mxu0 0.0
    %2590 = vmatpush1.msra.mxu0 0.0
    %2591 = vmatprep.subr.mxu0 0.0
    %2592 = vmatpush1.msra.mxu0 0.0
    %2593 = vmatprep.subr.mxu0 0.0
    %2594 = vmatpush1.msra.mxu0 0.0
    %2595 = vmatprep.subr.mxu0 0.0
    %2596 = vmatpush1.msra.mxu0 0.0
    %2597 = vmatprep.subr.mxu0 0.0
    %2598 = vmatpush1.msra.mxu0 0.0
    %2599 = vmatprep.subr.mxu0 0.0
    %2600 = vmatpush1.msra.mxu0 0.0
    %2601 = vmatprep.subr.mxu0 0.0
    %2602 = vmatpush1.msra.mxu0 0.0
    %2603 = vmatprep.mubr.f32.mxu0 0.0
    %2604 = vmatmul.mubr.f32.gmra.mrb[0].mxu0 %v2285
    %v2605 = vpop.f32.mrb[0].mxu0
    %v2606 = vadd.f32 0.0, %v2605
    %v2607 = vpop.f32.mrb[0].mxu0
    %v2608 = vadd.f32 0.0, %v2607
    %2609 = vdwg.mxu0
    %v2614 = vcombine.low %v2535, %v2537
    %v2615 = vcombine.low %v2606, %v2608
    %v2617 = vunpack.c.l.s4 1983009808
    %v2618 = vunpack.c.0.s8 %v2617
    %v2619 = vlaneseq
    %v2620 = vshrl.u32 %v2619, 7
    %v2621 = vsub.s32 %v2618, %v2620
    %v2622 = vrot.slane %v2614, %v2621
    %v2624 = vunpack.c.l.s4 1983009808
    %v2625 = vunpack.c.0.s8 %v2624
    %v2626 = vlaneseq
    %v2627 = vshrl.u32 %v2626, 7
    %v2628 = vsub.s32 %v2625, %v2627
    %v2629 = vrot.slane %v2615, %v2628
    %v2630 = vcombine.low %v2622, %v2629
    %v2632 = vadd.f32 %v2467, %v2630
    %v2633 = vxor.u32 %v2632, 2147483648
    %v2634 = vmul.f32 %v2633, 1.442695
    %v2635 = vpow.pop %v2634
    %v2636 = vadd.f32 %v2635, 1.0
    %v2637 = vrcp.pop %v2636
    %v2638 = vmul.f32 1.0, %v2637
    %v2640 = vrot.slane %v2632, 2
    %v2642 = vxor.u32 %v2640, 2147483648
    %v2643 = vmul.f32 %v2642, 1.442695
    %v2644 = vpow.pop %v2643
    %v2645 = vadd.f32 %v2644, 1.0
    %v2646 = vrcp.pop %v2645
    %v2647 = vmul.f32 1.0, %v2646
    %v2648 = vrot.slane %v2632, 4
    %v2650 = vtanh.pop %v2648
    %v2651 = vrot.slane %v2632, 6
    %v2653 = vxor.u32 %v2651, 2147483648
    %v2654 = vmul.f32 %v2653, 1.442695
    %v2655 = vpow.pop %v2654
    %v2656 = vadd.f32 %v2655, 1.0
    %v2657 = vrcp.pop %v2656
    %v2658 = vmul.f32 1.0, %v2657
    %v2659 = vmul.f32 %v2647, %v2283
    %v2660 = vmul.f32 %v2638, %v2650
    %v2661 = vadd.f32 %v2659, %v2660
    %v2662 = vtanh.pop %v2661
    %v2663 = vmul.f32 %v2658, %v2662
    %2665 = vrot.lane.b32.xlu0 %v2456, 64
    %v2666 = vpop.permute.xlu0 %2665
    %v2667 = vsel %vm386, %v2666, 0
    %2669 = vmatprep.subr.mxu0 %v173
    %2670 = vmatpush1.msra.mxu0 %v172
    %2671 = vmatprep.subr.mxu0 %v175
    %2672 = vmatpush1.msra.mxu0 %v174
    %2673 = vmatprep.subr.mxu0 %v177
    %2674 = vmatpush1.msra.mxu0 %v176
    %2675 = vmatprep.subr.mxu0 %v179
    %2676 = vmatpush1.msra.mxu0 %v178
    %2677 = vmatprep.subr.mxu0 %v181
    %2678 = vmatpush1.msra.mxu0 %v180
    %2679 = vmatprep.subr.mxu0 %v183
    %2680 = vmatpush1.msra.mxu0 %v182
    %2681 = vmatprep.subr.mxu0 %v185
    %2682 = vmatpush1.msra.mxu0 %v184
    %2683 = vmatprep.subr.mxu0 %v187
    %2684 = vmatpush1.msra.mxu0 %v186
    %2685 = vmatprep.subr.mxu0 0.0
    %2686 = vmatpush1.msra.mxu0 0.0
    %2687 = vmatprep.subr.mxu0 0.0
    %2688 = vmatpush1.msra.mxu0 0.0
    %2689 = vmatprep.subr.mxu0 0.0
    %2690 = vmatpush1.msra.mxu0 0.0
    %2691 = vmatprep.subr.mxu0 0.0
    %2692 = vmatpush1.msra.mxu0 0.0
    %2693 = vmatprep.subr.mxu0 0.0
    %2694 = vmatpush1.msra.mxu0 0.0
    %2695 = vmatprep.subr.mxu0 0.0
    %2696 = vmatpush1.msra.mxu0 0.0
    %2697 = vmatprep.subr.mxu0 0.0
    %2698 = vmatpush1.msra.mxu0 0.0
    %2699 = vmatprep.subr.mxu0 0.0
    %2700 = vmatpush1.msra.mxu0 0.0
    %2701 = vmatprep.subr.mxu0 0.0
    %2702 = vmatpush1.msra.mxu0 0.0
    %2703 = vmatprep.subr.mxu0 0.0
    %2704 = vmatpush1.msra.mxu0 0.0
    %2705 = vmatprep.subr.mxu0 0.0
    %2706 = vmatpush1.msra.mxu0 0.0
    %2707 = vmatprep.subr.mxu0 0.0
    %2708 = vmatpush1.msra.mxu0 0.0
    %2709 = vmatprep.subr.mxu0 0.0
    %2710 = vmatpush1.msra.mxu0 0.0
    %2711 = vmatprep.subr.mxu0 0.0
    %2712 = vmatpush1.msra.mxu0 0.0
    %2713 = vmatprep.subr.mxu0 0.0
    %2714 = vmatpush1.msra.mxu0 0.0
    %2715 = vmatprep.subr.mxu0 0.0
    %2716 = vmatpush1.msra.mxu0 0.0
    %2717 = vmatprep.subr.mxu0 0.0
    %2718 = vmatpush1.msra.mxu0 0.0
    %2719 = vmatprep.subr.mxu0 0.0
    %2720 = vmatpush1.msra.mxu0 0.0
    %2721 = vmatprep.subr.mxu0 0.0
    %2722 = vmatpush1.msra.mxu0 0.0
    %2723 = vmatprep.subr.mxu0 0.0
    %2724 = vmatpush1.msra.mxu0 0.0
    %2725 = vmatprep.subr.mxu0 0.0
    %2726 = vmatpush1.msra.mxu0 0.0
    %2727 = vmatprep.subr.mxu0 0.0
    %2728 = vmatpush1.msra.mxu0 0.0
    %2729 = vmatprep.subr.mxu0 0.0
    %2730 = vmatpush1.msra.mxu0 0.0
    %2731 = vmatprep.subr.mxu0 0.0
    %2732 = vmatpush1.msra.mxu0 0.0
    %2733 = vmatprep.mubr.f32.mxu0 0.0
    %2734 = vmatmul.mubr.f32.gmra.mrb[0].mxu0 %v2667
    %v2735 = vpop.f32.mrb[0].mxu0
    %v2736 = vadd.f32 0.0, %v2735
    %v2737 = vpop.f32.mrb[0].mxu0
    %v2738 = vadd.f32 0.0, %v2737
    %2739 = vdwg.mxu0
    %2740 = vmatprep.subr.mxu0 %v141
    %2741 = vmatpush1.msra.mxu0 %v140
    %2742 = vmatprep.subr.mxu0 %v143
    %2743 = vmatpush1.msra.mxu0 %v142
    %2744 = vmatprep.subr.mxu0 %v145
    %2745 = vmatpush1.msra.mxu0 %v144
    %2746 = vmatprep.subr.mxu0 %v147
    %2747 = vmatpush1.msra.mxu0 %v146
    %2748 = vmatprep.subr.mxu0 %v149
    %2749 = vmatpush1.msra.mxu0 %v148
    %2750 = vmatprep.subr.mxu0 %v151
    %2751 = vmatpush1.msra.mxu0 %v150
    %2752 = vmatprep.subr.mxu0 %v153
    %2753 = vmatpush1.msra.mxu0 %v152
    %2754 = vmatprep.subr.mxu0 %v155
    %2755 = vmatpush1.msra.mxu0 %v154
    %2756 = vmatprep.subr.mxu0 %v157
    %2757 = vmatpush1.msra.mxu0 %v156
    %2758 = vmatprep.subr.mxu0 %v159
    %2759 = vmatpush1.msra.mxu0 %v158
    %2760 = vmatprep.subr.mxu0 %v161
    %2761 = vmatpush1.msra.mxu0 %v160
    %2762 = vmatprep.subr.mxu0 %v163
    %2763 = vmatpush1.msra.mxu0 %v162
    %2764 = vmatprep.subr.mxu0 %v165
    %2765 = vmatpush1.msra.mxu0 %v164
    %2766 = vmatprep.subr.mxu0 %v167
    %2767 = vmatpush1.msra.mxu0 %v166
    %2768 = vmatprep.subr.mxu0 %v169
    %2769 = vmatpush1.msra.mxu0 %v168
    %2770 = vmatprep.subr.mxu0 %v171
    %2771 = vmatpush1.msra.mxu0 %v170
    %2772 = vmatprep.subr.mxu0 0.0
    %2773 = vmatpush1.msra.mxu0 0.0
    %2774 = vmatprep.subr.mxu0 0.0
    %2775 = vmatpush1.msra.mxu0 0.0
    %2776 = vmatprep.subr.mxu0 0.0
    %2777 = vmatpush1.msra.mxu0 0.0
    %2778 = vmatprep.subr.mxu0 0.0
    %2779 = vmatpush1.msra.mxu0 0.0
    %2780 = vmatprep.subr.mxu0 0.0
    %2781 = vmatpush1.msra.mxu0 0.0
    %2782 = vmatprep.subr.mxu0 0.0
    %2783 = vmatpush1.msra.mxu0 0.0
    %2784 = vmatprep.subr.mxu0 0.0
    %2785 = vmatpush1.msra.mxu0 0.0
    %2786 = vmatprep.subr.mxu0 0.0
    %2787 = vmatpush1.msra.mxu0 0.0
    %2788 = vmatprep.subr.mxu0 0.0
    %2789 = vmatpush1.msra.mxu0 0.0
    %2790 = vmatprep.subr.mxu0 0.0
    %2791 = vmatpush1.msra.mxu0 0.0
    %2792 = vmatprep.subr.mxu0 0.0
    %2793 = vmatpush1.msra.mxu0 0.0
    %2794 = vmatprep.subr.mxu0 0.0
    %2795 = vmatpush1.msra.mxu0 0.0
    %2796 = vmatprep.subr.mxu0 0.0
    %2797 = vmatpush1.msra.mxu0 0.0
    %2798 = vmatprep.subr.mxu0 0.0
    %2799 = vmatpush1.msra.mxu0 0.0
    %2800 = vmatprep.subr.mxu0 0.0
    %2801 = vmatpush1.msra.mxu0 0.0
    %2802 = vmatprep.subr.mxu0 0.0
    %2803 = vmatpush1.msra.mxu0 0.0
    %2804 = vmatprep.mubr.f32.mxu0 0.0
    %2805 = vmatmul.mubr.f32.gmra.mrb[0].mxu0 %v2663
    %v2806 = vpop.f32.mrb[0].mxu0
    %v2807 = vadd.f32 %v2736, %v2806
    %v2808 = vpop.f32.mrb[0].mxu0
    %v2809 = vadd.f32 %v2738, %v2808
    %2810 = vdwg.mxu0
    %v2811 = vadd.f32 %v2807, %v536
    %v2812 = vadd.f32 %v2809, %v540
    %v2813 = vxor.u32 %v2811, 2147483648
    %v2814 = vmul.f32 %v2813, 1.442695
    %v2815 = vpow.pop %v2814
    %v2816 = vadd.f32 %v2815, 1.0
    %v2817 = vrcp.pop %v2816
    %v2818 = vmul.f32 1.0, %v2817
    %v2819 = vtanh.pop %v2812
    %v2820 = vxor.u32 %v2812, 2147483648
    %v2821 = vmul.f32 %v2820, 1.442695
    %v2822 = vpow.pop %v2821
    %v2823 = vadd.f32 %v2822, 1.0
    %v2824 = vrcp.pop %v2823
    %v2825 = vmul.f32 1.0, %v2824
    %v2826 = vmul.f32 %v2818, %v2454
    %v2827 = vmul.f32 %v2818, %v2819
    %2829 = vrot.lane.b32.xlu0 %v2827, 64
    %v2830 = vpop.permute.xlu0 %2829
    %v2832 = vadd.f32 %v2826, %v2830
    %v2833 = vtanh.pop %v2832
    %v2834 = vmul.f32 %v2825, %v2833
    %vm2835 = vcmp.gt.f32.partialorder %v2834, 0.0
    %v2836 = vmul.f32 %v2834, 0.1
    %v2837 = vsel %vm2835, %v2834, %v2836
    %2839 = vrot.lane.b32.xlu0 %v2837, 64
    %v2840 = vpop.permute.xlu0 %2839
    %s2842 = scalar_lea.vmem [#allocation10], 12
    %2843 = vst.msk [vmem:[%s2842] sm:$0x3] %vm574, %v2840
    %s2844 = scalar_lea.vmem [#allocation2], 56
    %v2845 = vld [vmem:[%s2844] sm:$0xff]
    %2846 = vmatprep.subr.mxu0 %v77
    %2847 = vmatpush1.msra.mxu0 %v76
    %2848 = vmatprep.subr.mxu0 %v81
    %2849 = vmatpush1.msra.mxu0 %v80
    %2850 = vmatprep.subr.mxu0 %v85
    %2851 = vmatpush1.msra.mxu0 %v84
    %2852 = vmatprep.subr.mxu0 %v89
    %2853 = vmatpush1.msra.mxu0 %v88
    %2854 = vmatprep.subr.mxu0 %v93
    %2855 = vmatpush1.msra.mxu0 %v92
    %2856 = vmatprep.subr.mxu0 %v97
    %2857 = vmatpush1.msra.mxu0 %v96
    %2858 = vmatprep.subr.mxu0 %v101
    %2859 = vmatpush1.msra.mxu0 %v100
    %2860 = vmatprep.subr.mxu0 %v105
    %2861 = vmatpush1.msra.mxu0 %v104
    %2862 = vmatprep.subr.mxu0 %v109
    %2863 = vmatpush1.msra.mxu0 %v108
    %2864 = vmatprep.subr.mxu0 %v113
    %2865 = vmatpush1.msra.mxu0 %v112
    %2866 = vmatprep.subr.mxu0 %v117
    %2867 = vmatpush1.msra.mxu0 %v116
    %2868 = vmatprep.subr.mxu0 %v121
    %2869 = vmatpush1.msra.mxu0 %v120
    %2870 = vmatprep.subr.mxu0 %v125
    %2871 = vmatpush1.msra.mxu0 %v124
    %2872 = vmatprep.subr.mxu0 %v129
    %2873 = vmatpush1.msra.mxu0 %v128
    %2874 = vmatprep.subr.mxu0 %v133
    %2875 = vmatpush1.msra.mxu0 %v132
    %2876 = vmatprep.subr.mxu0 %v137
    %2877 = vmatpush1.msra.mxu0 %v136
    %2878 = vmatprep.subr.mxu0 0.0
    %2879 = vmatpush1.msra.mxu0 0.0
    %2880 = vmatprep.subr.mxu0 0.0
    %2881 = vmatpush1.msra.mxu0 0.0
    %2882 = vmatprep.subr.mxu0 0.0
    %2883 = vmatpush1.msra.mxu0 0.0
    %2884 = vmatprep.subr.mxu0 0.0
    %2885 = vmatpush1.msra.mxu0 0.0
    %2886 = vmatprep.subr.mxu0 0.0
    %2887 = vmatpush1.msra.mxu0 0.0
    %2888 = vmatprep.subr.mxu0 0.0
    %2889 = vmatpush1.msra.mxu0 0.0
    %2890 = vmatprep.subr.mxu0 0.0
    %2891 = vmatpush1.msra.mxu0 0.0
    %2892 = vmatprep.subr.mxu0 0.0
    %2893 = vmatpush1.msra.mxu0 0.0
    %2894 = vmatprep.subr.mxu0 0.0
    %2895 = vmatpush1.msra.mxu0 0.0
    %2896 = vmatprep.subr.mxu0 0.0
    %2897 = vmatpush1.msra.mxu0 0.0
    %2898 = vmatprep.subr.mxu0 0.0
    %2899 = vmatpush1.msra.mxu0 0.0
    %2900 = vmatprep.subr.mxu0 0.0
    %2901 = vmatpush1.msra.mxu0 0.0
    %2902 = vmatprep.subr.mxu0 0.0
    %2903 = vmatpush1.msra.mxu0 0.0
    %2904 = vmatprep.subr.mxu0 0.0
    %2905 = vmatpush1.msra.mxu0 0.0
    %2906 = vmatprep.subr.mxu0 0.0
    %2907 = vmatpush1.msra.mxu0 0.0
    %2908 = vmatprep.subr.mxu0 0.0
    %2909 = vmatpush1.msra.mxu0 0.0
    %2910 = vmatprep.mubr.f32.mxu0 0.0
    %2911 = vmatmul.mubr.f32.gmra.mrb[0].mxu0 %v2663
    %v2912 = vpop.f32.mrb[0].mxu0
    %v2913 = vadd.f32 0.0, %v2912
    %v2914 = vpop.f32.mrb[0].mxu0
    %v2915 = vadd.f32 0.0, %v2914
    %2916 = vdwg.mxu0
    %2917 = vmatprep.subr.mxu0 %v79
    %2918 = vmatpush1.msra.mxu0 %v78
    %2919 = vmatprep.subr.mxu0 %v83
    %2920 = vmatpush1.msra.mxu0 %v82
    %2921 = vmatprep.subr.mxu0 %v87
    %2922 = vmatpush1.msra.mxu0 %v86
    %2923 = vmatprep.subr.mxu0 %v91
    %2924 = vmatpush1.msra.mxu0 %v90
    %2925 = vmatprep.subr.mxu0 %v95
    %2926 = vmatpush1.msra.mxu0 %v94
    %2927 = vmatprep.subr.mxu0 %v99
    %2928 = vmatpush1.msra.mxu0 %v98
    %2929 = vmatprep.subr.mxu0 %v103
    %2930 = vmatpush1.msra.mxu0 %v102
    %2931 = vmatprep.subr.mxu0 %v107
    %2932 = vmatpush1.msra.mxu0 %v106
    %2933 = vmatprep.subr.mxu0 %v111
    %2934 = vmatpush1.msra.mxu0 %v110
    %2935 = vmatprep.subr.mxu0 %v115
    %2936 = vmatpush1.msra.mxu0 %v114
    %2937 = vmatprep.subr.mxu0 %v119
    %2938 = vmatpush1.msra.mxu0 %v118
    %2939 = vmatprep.subr.mxu0 %v123
    %2940 = vmatpush1.msra.mxu0 %v122
    %2941 = vmatprep.subr.mxu0 %v127
    %2942 = vmatpush1.msra.mxu0 %v126
    %2943 = vmatprep.subr.mxu0 %v131
    %2944 = vmatpush1.msra.mxu0 %v130
    %2945 = vmatprep.subr.mxu0 %v135
    %2946 = vmatpush1.msra.mxu0 %v134
    %2947 = vmatprep.subr.mxu0 %v139
    %2948 = vmatpush1.msra.mxu0 %v138
    %2949 = vmatprep.subr.mxu0 0.0
    %2950 = vmatpush1.msra.mxu0 0.0
    %2951 = vmatprep.subr.mxu0 0.0
    %2952 = vmatpush1.msra.mxu0 0.0
    %2953 = vmatprep.subr.mxu0 0.0
    %2954 = vmatpush1.msra.mxu0 0.0
    %2955 = vmatprep.subr.mxu0 0.0
    %2956 = vmatpush1.msra.mxu0 0.0
    %2957 = vmatprep.subr.mxu0 0.0
    %2958 = vmatpush1.msra.mxu0 0.0
    %2959 = vmatprep.subr.mxu0 0.0
    %2960 = vmatpush1.msra.mxu0 0.0
    %2961 = vmatprep.subr.mxu0 0.0
    %2962 = vmatpush1.msra.mxu0 0.0
    %2963 = vmatprep.subr.mxu0 0.0
    %2964 = vmatpush1.msra.mxu0 0.0
    %2965 = vmatprep.subr.mxu0 0.0
    %2966 = vmatpush1.msra.mxu0 0.0
    %2967 = vmatprep.subr.mxu0 0.0
    %2968 = vmatpush1.msra.mxu0 0.0
    %2969 = vmatprep.subr.mxu0 0.0
    %2970 = vmatpush1.msra.mxu0 0.0
    %2971 = vmatprep.subr.mxu0 0.0
    %2972 = vmatpush1.msra.mxu0 0.0
    %2973 = vmatprep.subr.mxu0 0.0
    %2974 = vmatpush1.msra.mxu0 0.0
    %2975 = vmatprep.subr.mxu0 0.0
    %2976 = vmatpush1.msra.mxu0 0.0
    %2977 = vmatprep.subr.mxu0 0.0
    %2978 = vmatpush1.msra.mxu0 0.0
    %2979 = vmatprep.subr.mxu0 0.0
    %2980 = vmatpush1.msra.mxu0 0.0
    %2981 = vmatprep.mubr.f32.mxu0 0.0
    %2982 = vmatmul.mubr.f32.gmra.mrb[0].mxu0 %v2663
    %v2983 = vpop.f32.mrb[0].mxu0
    %v2984 = vadd.f32 0.0, %v2983
    %v2985 = vpop.f32.mrb[0].mxu0
    %v2986 = vadd.f32 0.0, %v2985
    %2987 = vdwg.mxu0
    %v2992 = vcombine.low %v2913, %v2915
    %v2993 = vcombine.low %v2984, %v2986
    %v2995 = vunpack.c.l.s4 1983009808
    %v2996 = vunpack.c.0.s8 %v2995
    %v2997 = vlaneseq
    %v2998 = vshrl.u32 %v2997, 7
    %v2999 = vsub.s32 %v2996, %v2998
    %v3000 = vrot.slane %v2992, %v2999
    %v3002 = vunpack.c.l.s4 1983009808
    %v3003 = vunpack.c.0.s8 %v3002
    %v3004 = vlaneseq
    %v3005 = vshrl.u32 %v3004, 7
    %v3006 = vsub.s32 %v3003, %v3005
    %v3007 = vrot.slane %v2993, %v3006
    %v3008 = vcombine.low %v3000, %v3007
    %v3010 = vadd.f32 %v2845, %v3008
    %v3011 = vxor.u32 %v3010, 2147483648
    %v3012 = vmul.f32 %v3011, 1.442695
    %v3013 = vpow.pop %v3012
    %v3014 = vadd.f32 %v3013, 1.0
    %v3015 = vrcp.pop %v3014
    %v3016 = vmul.f32 1.0, %v3015
    %v3018 = vrot.slane %v3010, 2
    %v3020 = vxor.u32 %v3018, 2147483648
    %v3021 = vmul.f32 %v3020, 1.442695
    %v3022 = vpow.pop %v3021
    %v3023 = vadd.f32 %v3022, 1.0
    %v3024 = vrcp.pop %v3023
    %v3025 = vmul.f32 1.0, %v3024
    %v3026 = vrot.slane %v3010, 4
    %v3028 = vtanh.pop %v3026
    %v3029 = vrot.slane %v3010, 6
    %v3031 = vxor.u32 %v3029, 2147483648
    %v3032 = vmul.f32 %v3031, 1.442695
    %v3033 = vpow.pop %v3032
    %v3034 = vadd.f32 %v3033, 1.0
    %v3035 = vrcp.pop %v3034
    %v3036 = vmul.f32 1.0, %v3035
    %v3037 = vmul.f32 %v3025, %v2661
    %v3038 = vmul.f32 %v3016, %v3028
    %v3039 = vadd.f32 %v3037, %v3038
    %v3040 = vtanh.pop %v3039
    %v3041 = vmul.f32 %v3036, %v3040
    %3043 = vrot.lane.b32.xlu0 %v2834, 64
    %v3044 = vpop.permute.xlu0 %3043
    %v3045 = vsel %vm386, %v3044, 0
    %3047 = vmatprep.subr.mxu0 %v173
    %3048 = vmatpush1.msra.mxu0 %v172
    %3049 = vmatprep.subr.mxu0 %v175
    %3050 = vmatpush1.msra.mxu0 %v174
    %3051 = vmatprep.subr.mxu0 %v177
    %3052 = vmatpush1.msra.mxu0 %v176
    %3053 = vmatprep.subr.mxu0 %v179
    %3054 = vmatpush1.msra.mxu0 %v178
    %3055 = vmatprep.subr.mxu0 %v181
    %3056 = vmatpush1.msra.mxu0 %v180
    %3057 = vmatprep.subr.mxu0 %v183
    %3058 = vmatpush1.msra.mxu0 %v182
    %3059 = vmatprep.subr.mxu0 %v185
    %3060 = vmatpush1.msra.mxu0 %v184
    %3061 = vmatprep.subr.mxu0 %v187
    %3062 = vmatpush1.msra.mxu0 %v186
    %3063 = vmatprep.subr.mxu0 0.0
    %3064 = vmatpush1.msra.mxu0 0.0
    %3065 = vmatprep.subr.mxu0 0.0
    %3066 = vmatpush1.msra.mxu0 0.0
    %3067 = vmatprep.subr.mxu0 0.0
    %3068 = vmatpush1.msra.mxu0 0.0
    %3069 = vmatprep.subr.mxu0 0.0
    %3070 = vmatpush1.msra.mxu0 0.0
    %3071 = vmatprep.subr.mxu0 0.0
    %3072 = vmatpush1.msra.mxu0 0.0
    %3073 = vmatprep.subr.mxu0 0.0
    %3074 = vmatpush1.msra.mxu0 0.0
    %3075 = vmatprep.subr.mxu0 0.0
    %3076 = vmatpush1.msra.mxu0 0.0
    %3077 = vmatprep.subr.mxu0 0.0
    %3078 = vmatpush1.msra.mxu0 0.0
    %3079 = vmatprep.subr.mxu0 0.0
    %3080 = vmatpush1.msra.mxu0 0.0
    %3081 = vmatprep.subr.mxu0 0.0
    %3082 = vmatpush1.msra.mxu0 0.0
    %3083 = vmatprep.subr.mxu0 0.0
    %3084 = vmatpush1.msra.mxu0 0.0
    %3085 = vmatprep.subr.mxu0 0.0
    %3086 = vmatpush1.msra.mxu0 0.0
    %3087 = vmatprep.subr.mxu0 0.0
    %3088 = vmatpush1.msra.mxu0 0.0
    %3089 = vmatprep.subr.mxu0 0.0
    %3090 = vmatpush1.msra.mxu0 0.0
    %3091 = vmatprep.subr.mxu0 0.0
    %3092 = vmatpush1.msra.mxu0 0.0
    %3093 = vmatprep.subr.mxu0 0.0
    %3094 = vmatpush1.msra.mxu0 0.0
    %3095 = vmatprep.subr.mxu0 0.0
    %3096 = vmatpush1.msra.mxu0 0.0
    %3097 = vmatprep.subr.mxu0 0.0
    %3098 = vmatpush1.msra.mxu0 0.0
    %3099 = vmatprep.subr.mxu0 0.0
    %3100 = vmatpush1.msra.mxu0 0.0
    %3101 = vmatprep.subr.mxu0 0.0
    %3102 = vmatpush1.msra.mxu0 0.0
    %3103 = vmatprep.subr.mxu0 0.0
    %3104 = vmatpush1.msra.mxu0 0.0
    %3105 = vmatprep.subr.mxu0 0.0
    %3106 = vmatpush1.msra.mxu0 0.0
    %3107 = vmatprep.subr.mxu0 0.0
    %3108 = vmatpush1.msra.mxu0 0.0
    %3109 = vmatprep.subr.mxu0 0.0
    %3110 = vmatpush1.msra.mxu0 0.0
    %3111 = vmatprep.mubr.f32.mxu0 0.0
    %3112 = vmatmul.mubr.f32.gmra.mrb[0].mxu0 %v3045
    %v3113 = vpop.f32.mrb[0].mxu0
    %v3114 = vadd.f32 0.0, %v3113
    %v3115 = vpop.f32.mrb[0].mxu0
    %v3116 = vadd.f32 0.0, %v3115
    %3117 = vdwg.mxu0
    %3118 = vmatprep.subr.mxu0 %v141
    %3119 = vmatpush1.msra.mxu0 %v140
    %3120 = vmatprep.subr.mxu0 %v143
    %3121 = vmatpush1.msra.mxu0 %v142
    %3122 = vmatprep.subr.mxu0 %v145
    %3123 = vmatpush1.msra.mxu0 %v144
    %3124 = vmatprep.subr.mxu0 %v147
    %3125 = vmatpush1.msra.mxu0 %v146
    %3126 = vmatprep.subr.mxu0 %v149
    %3127 = vmatpush1.msra.mxu0 %v148
    %3128 = vmatprep.subr.mxu0 %v151
    %3129 = vmatpush1.msra.mxu0 %v150
    %3130 = vmatprep.subr.mxu0 %v153
    %3131 = vmatpush1.msra.mxu0 %v152
    %3132 = vmatprep.subr.mxu0 %v155
    %3133 = vmatpush1.msra.mxu0 %v154
    %3134 = vmatprep.subr.mxu0 %v157
    %3135 = vmatpush1.msra.mxu0 %v156
    %3136 = vmatprep.subr.mxu0 %v159
    %3137 = vmatpush1.msra.mxu0 %v158
    %3138 = vmatprep.subr.mxu0 %v161
    %3139 = vmatpush1.msra.mxu0 %v160
    %3140 = vmatprep.subr.mxu0 %v163
    %3141 = vmatpush1.msra.mxu0 %v162
    %3142 = vmatprep.subr.mxu0 %v165
    %3143 = vmatpush1.msra.mxu0 %v164
    %3144 = vmatprep.subr.mxu0 %v167
    %3145 = vmatpush1.msra.mxu0 %v166
    %3146 = vmatprep.subr.mxu0 %v169
    %3147 = vmatpush1.msra.mxu0 %v168
    %3148 = vmatprep.subr.mxu0 %v171
    %3149 = vmatpush1.msra.mxu0 %v170
    %3150 = vmatprep.subr.mxu0 0.0
    %3151 = vmatpush1.msra.mxu0 0.0
    %3152 = vmatprep.subr.mxu0 0.0
    %3153 = vmatpush1.msra.mxu0 0.0
    %3154 = vmatprep.subr.mxu0 0.0
    %3155 = vmatpush1.msra.mxu0 0.0
    %3156 = vmatprep.subr.mxu0 0.0
    %3157 = vmatpush1.msra.mxu0 0.0
    %3158 = vmatprep.subr.mxu0 0.0
    %3159 = vmatpush1.msra.mxu0 0.0
    %3160 = vmatprep.subr.mxu0 0.0
    %3161 = vmatpush1.msra.mxu0 0.0
    %3162 = vmatprep.subr.mxu0 0.0
    %3163 = vmatpush1.msra.mxu0 0.0
    %3164 = vmatprep.subr.mxu0 0.0
    %3165 = vmatpush1.msra.mxu0 0.0
    %3166 = vmatprep.subr.mxu0 0.0
    %3167 = vmatpush1.msra.mxu0 0.0
    %3168 = vmatprep.subr.mxu0 0.0
    %3169 = vmatpush1.msra.mxu0 0.0
    %3170 = vmatprep.subr.mxu0 0.0
    %3171 = vmatpush1.msra.mxu0 0.0
    %3172 = vmatprep.subr.mxu0 0.0
    %3173 = vmatpush1.msra.mxu0 0.0
    %3174 = vmatprep.subr.mxu0 0.0
    %3175 = vmatpush1.msra.mxu0 0.0
    %3176 = vmatprep.subr.mxu0 0.0
    %3177 = vmatpush1.msra.mxu0 0.0
    %3178 = vmatprep.subr.mxu0 0.0
    %3179 = vmatpush1.msra.mxu0 0.0
    %3180 = vmatprep.subr.mxu0 0.0
    %3181 = vmatpush1.msra.mxu0 0.0
    %3182 = vmatprep.mubr.f32.mxu0 0.0
    %3183 = vmatmul.mubr.f32.gmra.mrb[0].mxu0 %v3041
    %v3184 = vpop.f32.mrb[0].mxu0
    %v3185 = vadd.f32 %v3114, %v3184
    %v3186 = vpop.f32.mrb[0].mxu0
    %v3187 = vadd.f32 %v3116, %v3186
    %3188 = vdwg.mxu0
    %v3189 = vadd.f32 %v3185, %v536
    %v3190 = vadd.f32 %v3187, %v540
    %v3191 = vxor.u32 %v3189, 2147483648
    %v3192 = vmul.f32 %v3191, 1.442695
    %v3193 = vpow.pop %v3192
    %v3194 = vadd.f32 %v3193, 1.0
    %v3195 = vrcp.pop %v3194
    %v3196 = vmul.f32 1.0, %v3195
    %v3197 = vtanh.pop %v3190
    %v3198 = vxor.u32 %v3190, 2147483648
    %v3199 = vmul.f32 %v3198, 1.442695
    %v3200 = vpow.pop %v3199
    %v3201 = vadd.f32 %v3200, 1.0
    %v3202 = vrcp.pop %v3201
    %v3203 = vmul.f32 1.0, %v3202
    %v3204 = vmul.f32 %v3196, %v2832
    %v3205 = vmul.f32 %v3196, %v3197
    %3207 = vrot.lane.b32.xlu0 %v3205, 64
    %v3208 = vpop.permute.xlu0 %3207
    %v3210 = vadd.f32 %v3204, %v3208
    %v3211 = vtanh.pop %v3210
    %v3212 = vmul.f32 %v3203, %v3211
    %vm3213 = vcmp.gt.f32.partialorder %v3212, 0.0
    %v3214 = vmul.f32 %v3212, 0.1
    %v3215 = vsel %vm3213, %v3212, %v3214
    %3217 = vrot.lane.b32.xlu0 %v3215, 64
    %v3218 = vpop.permute.xlu0 %3217
    %s3220 = scalar_lea.vmem [#allocation10], 14
    %3221 = vst.msk [vmem:[%s3220] sm:$0x3] %vm574, %v3218
    %s3222 = scalar_lea.vmem [#allocation2], 64
    %v3223 = vld [vmem:[%s3222] sm:$0xff]
    %3224 = vmatprep.subr.mxu0 %v77
    %3225 = vmatpush1.msra.mxu0 %v76
    %3226 = vmatprep.subr.mxu0 %v81
    %3227 = vmatpush1.msra.mxu0 %v80
    %3228 = vmatprep.subr.mxu0 %v85
    %3229 = vmatpush1.msra.mxu0 %v84
    %3230 = vmatprep.subr.mxu0 %v89
    %3231 = vmatpush1.msra.mxu0 %v88
    %3232 = vmatprep.subr.mxu0 %v93
    %3233 = vmatpush1.msra.mxu0 %v92
    %3234 = vmatprep.subr.mxu0 %v97
    %3235 = vmatpush1.msra.mxu0 %v96
    %3236 = vmatprep.subr.mxu0 %v101
    %3237 = vmatpush1.msra.mxu0 %v100
    %3238 = vmatprep.subr.mxu0 %v105
    %3239 = vmatpush1.msra.mxu0 %v104
    %3240 = vmatprep.subr.mxu0 %v109
    %3241 = vmatpush1.msra.mxu0 %v108
    %3242 = vmatprep.subr.mxu0 %v113
    %3243 = vmatpush1.msra.mxu0 %v112
    %3244 = vmatprep.subr.mxu0 %v117
    %3245 = vmatpush1.msra.mxu0 %v116
    %3246 = vmatprep.subr.mxu0 %v121
    %3247 = vmatpush1.msra.mxu0 %v120
    %3248 = vmatprep.subr.mxu0 %v125
    %3249 = vmatpush1.msra.mxu0 %v124
    %3250 = vmatprep.subr.mxu0 %v129
    %3251 = vmatpush1.msra.mxu0 %v128
    %3252 = vmatprep.subr.mxu0 %v133
    %3253 = vmatpush1.msra.mxu0 %v132
    %3254 = vmatprep.subr.mxu0 %v137
    %3255 = vmatpush1.msra.mxu0 %v136
    %3256 = vmatprep.subr.mxu0 0.0
    %3257 = vmatpush1.msra.mxu0 0.0
    %3258 = vmatprep.subr.mxu0 0.0
    %3259 = vmatpush1.msra.mxu0 0.0
    %3260 = vmatprep.subr.mxu0 0.0
    %3261 = vmatpush1.msra.mxu0 0.0
    %3262 = vmatprep.subr.mxu0 0.0
    %3263 = vmatpush1.msra.mxu0 0.0
    %3264 = vmatprep.subr.mxu0 0.0
    %3265 = vmatpush1.msra.mxu0 0.0
    %3266 = vmatprep.subr.mxu0 0.0
    %3267 = vmatpush1.msra.mxu0 0.0
    %3268 = vmatprep.subr.mxu0 0.0
    %3269 = vmatpush1.msra.mxu0 0.0
    %3270 = vmatprep.subr.mxu0 0.0
    %3271 = vmatpush1.msra.mxu0 0.0
    %3272 = vmatprep.subr.mxu0 0.0
    %3273 = vmatpush1.msra.mxu0 0.0
    %3274 = vmatprep.subr.mxu0 0.0
    %3275 = vmatpush1.msra.mxu0 0.0
    %3276 = vmatprep.subr.mxu0 0.0
    %3277 = vmatpush1.msra.mxu0 0.0
    %3278 = vmatprep.subr.mxu0 0.0
    %3279 = vmatpush1.msra.mxu0 0.0
    %3280 = vmatprep.subr.mxu0 0.0
    %3281 = vmatpush1.msra.mxu0 0.0
    %3282 = vmatprep.subr.mxu0 0.0
    %3283 = vmatpush1.msra.mxu0 0.0
    %3284 = vmatprep.subr.mxu0 0.0
    %3285 = vmatpush1.msra.mxu0 0.0
    %3286 = vmatprep.subr.mxu0 0.0
    %3287 = vmatpush1.msra.mxu0 0.0
    %3288 = vmatprep.mubr.f32.mxu0 0.0
    %3289 = vmatmul.mubr.f32.gmra.mrb[0].mxu0 %v3041
    %v3290 = vpop.f32.mrb[0].mxu0
    %v3291 = vadd.f32 0.0, %v3290
    %v3292 = vpop.f32.mrb[0].mxu0
    %v3293 = vadd.f32 0.0, %v3292
    %3294 = vdwg.mxu0
    %3295 = vmatprep.subr.mxu0 %v79
    %3296 = vmatpush1.msra.mxu0 %v78
    %3297 = vmatprep.subr.mxu0 %v83
    %3298 = vmatpush1.msra.mxu0 %v82
    %3299 = vmatprep.subr.mxu0 %v87
    %3300 = vmatpush1.msra.mxu0 %v86
    %3301 = vmatprep.subr.mxu0 %v91
    %3302 = vmatpush1.msra.mxu0 %v90
    %3303 = vmatprep.subr.mxu0 %v95
    %3304 = vmatpush1.msra.mxu0 %v94
    %3305 = vmatprep.subr.mxu0 %v99
    %3306 = vmatpush1.msra.mxu0 %v98
    %3307 = vmatprep.subr.mxu0 %v103
    %3308 = vmatpush1.msra.mxu0 %v102
    %3309 = vmatprep.subr.mxu0 %v107
    %3310 = vmatpush1.msra.mxu0 %v106
    %3311 = vmatprep.subr.mxu0 %v111
    %3312 = vmatpush1.msra.mxu0 %v110
    %3313 = vmatprep.subr.mxu0 %v115
    %3314 = vmatpush1.msra.mxu0 %v114
    %3315 = vmatprep.subr.mxu0 %v119
    %3316 = vmatpush1.msra.mxu0 %v118
    %3317 = vmatprep.subr.mxu0 %v123
    %3318 = vmatpush1.msra.mxu0 %v122
    %3319 = vmatprep.subr.mxu0 %v127
    %3320 = vmatpush1.msra.mxu0 %v126
    %3321 = vmatprep.subr.mxu0 %v131
    %3322 = vmatpush1.msra.mxu0 %v130
    %3323 = vmatprep.subr.mxu0 %v135
    %3324 = vmatpush1.msra.mxu0 %v134
    %3325 = vmatprep.subr.mxu0 %v139
    %3326 = vmatpush1.msra.mxu0 %v138
    %3327 = vmatprep.subr.mxu0 0.0
    %3328 = vmatpush1.msra.mxu0 0.0
    %3329 = vmatprep.subr.mxu0 0.0
    %3330 = vmatpush1.msra.mxu0 0.0
    %3331 = vmatprep.subr.mxu0 0.0
    %3332 = vmatpush1.msra.mxu0 0.0
    %3333 = vmatprep.subr.mxu0 0.0
    %3334 = vmatpush1.msra.mxu0 0.0
    %3335 = vmatprep.subr.mxu0 0.0
    %3336 = vmatpush1.msra.mxu0 0.0
    %3337 = vmatprep.subr.mxu0 0.0
    %3338 = vmatpush1.msra.mxu0 0.0
    %3339 = vmatprep.subr.mxu0 0.0
    %3340 = vmatpush1.msra.mxu0 0.0
    %3341 = vmatprep.subr.mxu0 0.0
    %3342 = vmatpush1.msra.mxu0 0.0
    %3343 = vmatprep.subr.mxu0 0.0
    %3344 = vmatpush1.msra.mxu0 0.0
    %3345 = vmatprep.subr.mxu0 0.0
    %3346 = vmatpush1.msra.mxu0 0.0
    %3347 = vmatprep.subr.mxu0 0.0
    %3348 = vmatpush1.msra.mxu0 0.0
    %3349 = vmatprep.subr.mxu0 0.0
    %3350 = vmatpush1.msra.mxu0 0.0
    %3351 = vmatprep.subr.mxu0 0.0
    %3352 = vmatpush1.msra.mxu0 0.0
    %3353 = vmatprep.subr.mxu0 0.0
    %3354 = vmatpush1.msra.mxu0 0.0
    %3355 = vmatprep.subr.mxu0 0.0
    %3356 = vmatpush1.msra.mxu0 0.0
    %3357 = vmatprep.subr.mxu0 0.0
    %3358 = vmatpush1.msra.mxu0 0.0
    %3359 = vmatprep.mubr.f32.mxu0 0.0
    %3360 = vmatmul.mubr.f32.gmra.mrb[0].mxu0 %v3041
    %v3361 = vpop.f32.mrb[0].mxu0
    %v3362 = vadd.f32 0.0, %v3361
    %v3363 = vpop.f32.mrb[0].mxu0
    %v3364 = vadd.f32 0.0, %v3363
    %3365 = vdwg.mxu0
    %v3370 = vcombine.low %v3291, %v3293
    %v3371 = vcombine.low %v3362, %v3364
    %v3373 = vunpack.c.l.s4 1983009808
    %v3374 = vunpack.c.0.s8 %v3373
    %v3375 = vlaneseq
    %v3376 = vshrl.u32 %v3375, 7
    %v3377 = vsub.s32 %v3374, %v3376
    %v3378 = vrot.slane %v3370, %v3377
    %v3380 = vunpack.c.l.s4 1983009808
    %v3381 = vunpack.c.0.s8 %v3380
    %v3382 = vlaneseq
    %v3383 = vshrl.u32 %v3382, 7
    %v3384 = vsub.s32 %v3381, %v3383
    %v3385 = vrot.slane %v3371, %v3384
    %v3386 = vcombine.low %v3378, %v3385
    %v3388 = vadd.f32 %v3223, %v3386
    %v3389 = vxor.u32 %v3388, 2147483648
    %v3390 = vmul.f32 %v3389, 1.442695
    %v3391 = vpow.pop %v3390
    %v3392 = vadd.f32 %v3391, 1.0
    %v3393 = vrcp.pop %v3392
    %v3394 = vmul.f32 1.0, %v3393
    %v3396 = vrot.slane %v3388, 2
    %v3398 = vxor.u32 %v3396, 2147483648
    %v3399 = vmul.f32 %v3398, 1.442695
    %v3400 = vpow.pop %v3399
    %v3401 = vadd.f32 %v3400, 1.0
    %v3402 = vrcp.pop %v3401
    %v3403 = vmul.f32 1.0, %v3402
    %v3404 = vrot.slane %v3388, 4
    %v3406 = vtanh.pop %v3404
    %v3407 = vrot.slane %v3388, 6
    %v3409 = vxor.u32 %v3407, 2147483648
    %v3410 = vmul.f32 %v3409, 1.442695
    %v3411 = vpow.pop %v3410
    %v3412 = vadd.f32 %v3411, 1.0
    %v3413 = vrcp.pop %v3412
    %v3414 = vmul.f32 1.0, %v3413
    %v3415 = vmul.f32 %v3403, %v3039
    %v3416 = vmul.f32 %v3394, %v3406
    %v3417 = vadd.f32 %v3415, %v3416
    %v3418 = vtanh.pop %v3417
    %v3419 = vmul.f32 %v3414, %v3418
    %3421 = vrot.lane.b32.xlu0 %v3212, 64
    %v3422 = vpop.permute.xlu0 %3421
    %v3423 = vsel %vm386, %v3422, 0
    %3425 = vmatprep.subr.mxu0 %v173
    %3426 = vmatpush1.msra.mxu0 %v172
    %3427 = vmatprep.subr.mxu0 %v175
    %3428 = vmatpush1.msra.mxu0 %v174
    %3429 = vmatprep.subr.mxu0 %v177
    %3430 = vmatpush1.msra.mxu0 %v176
    %3431 = vmatprep.subr.mxu0 %v179
    %3432 = vmatpush1.msra.mxu0 %v178
    %3433 = vmatprep.subr.mxu0 %v181
    %3434 = vmatpush1.msra.mxu0 %v180
    %3435 = vmatprep.subr.mxu0 %v183
    %3436 = vmatpush1.msra.mxu0 %v182
    %3437 = vmatprep.subr.mxu0 %v185
    %3438 = vmatpush1.msra.mxu0 %v184
    %3439 = vmatprep.subr.mxu0 %v187
    %3440 = vmatpush1.msra.mxu0 %v186
    %3441 = vmatprep.subr.mxu0 0.0
    %3442 = vmatpush1.msra.mxu0 0.0
    %3443 = vmatprep.subr.mxu0 0.0
    %3444 = vmatpush1.msra.mxu0 0.0
    %3445 = vmatprep.subr.mxu0 0.0
    %3446 = vmatpush1.msra.mxu0 0.0
    %3447 = vmatprep.subr.mxu0 0.0
    %3448 = vmatpush1.msra.mxu0 0.0
    %3449 = vmatprep.subr.mxu0 0.0
    %3450 = vmatpush1.msra.mxu0 0.0
    %3451 = vmatprep.subr.mxu0 0.0
    %3452 = vmatpush1.msra.mxu0 0.0
    %3453 = vmatprep.subr.mxu0 0.0
    %3454 = vmatpush1.msra.mxu0 0.0
    %3455 = vmatprep.subr.mxu0 0.0
    %3456 = vmatpush1.msra.mxu0 0.0
    %3457 = vmatprep.subr.mxu0 0.0
    %3458 = vmatpush1.msra.mxu0 0.0
    %3459 = vmatprep.subr.mxu0 0.0
    %3460 = vmatpush1.msra.mxu0 0.0
    %3461 = vmatprep.subr.mxu0 0.0
    %3462 = vmatpush1.msra.mxu0 0.0
    %3463 = vmatprep.subr.mxu0 0.0
    %3464 = vmatpush1.msra.mxu0 0.0
    %3465 = vmatprep.subr.mxu0 0.0
    %3466 = vmatpush1.msra.mxu0 0.0
    %3467 = vmatprep.subr.mxu0 0.0
    %3468 = vmatpush1.msra.mxu0 0.0
    %3469 = vmatprep.subr.mxu0 0.0
    %3470 = vmatpush1.msra.mxu0 0.0
    %3471 = vmatprep.subr.mxu0 0.0
    %3472 = vmatpush1.msra.mxu0 0.0
    %3473 = vmatprep.subr.mxu0 0.0
    %3474 = vmatpush1.msra.mxu0 0.0
    %3475 = vmatprep.subr.mxu0 0.0
    %3476 = vmatpush1.msra.mxu0 0.0
    %3477 = vmatprep.subr.mxu0 0.0
    %3478 = vmatpush1.msra.mxu0 0.0
    %3479 = vmatprep.subr.mxu0 0.0
    %3480 = vmatpush1.msra.mxu0 0.0
    %3481 = vmatprep.subr.mxu0 0.0
    %3482 = vmatpush1.msra.mxu0 0.0
    %3483 = vmatprep.subr.mxu0 0.0
    %3484 = vmatpush1.msra.mxu0 0.0
    %3485 = vmatprep.subr.mxu0 0.0
    %3486 = vmatpush1.msra.mxu0 0.0
    %3487 = vmatprep.subr.mxu0 0.0
    %3488 = vmatpush1.msra.mxu0 0.0
    %3489 = vmatprep.mubr.f32.mxu0 0.0
    %3490 = vmatmul.mubr.f32.gmra.mrb[0].mxu0 %v3423
    %v3491 = vpop.f32.mrb[0].mxu0
    %v3492 = vadd.f32 0.0, %v3491
    %v3493 = vpop.f32.mrb[0].mxu0
    %v3494 = vadd.f32 0.0, %v3493
    %3495 = vdwg.mxu0
    %3496 = vmatprep.subr.mxu0 %v141
    %3497 = vmatpush1.msra.mxu0 %v140
    %3498 = vmatprep.subr.mxu0 %v143
    %3499 = vmatpush1.msra.mxu0 %v142
    %3500 = vmatprep.subr.mxu0 %v145
    %3501 = vmatpush1.msra.mxu0 %v144
    %3502 = vmatprep.subr.mxu0 %v147
    %3503 = vmatpush1.msra.mxu0 %v146
    %3504 = vmatprep.subr.mxu0 %v149
    %3505 = vmatpush1.msra.mxu0 %v148
    %3506 = vmatprep.subr.mxu0 %v151
    %3507 = vmatpush1.msra.mxu0 %v150
    %3508 = vmatprep.subr.mxu0 %v153
    %3509 = vmatpush1.msra.mxu0 %v152
    %3510 = vmatprep.subr.mxu0 %v155
    %3511 = vmatpush1.msra.mxu0 %v154
    %3512 = vmatprep.subr.mxu0 %v157
    %3513 = vmatpush1.msra.mxu0 %v156
    %3514 = vmatprep.subr.mxu0 %v159
    %3515 = vmatpush1.msra.mxu0 %v158
    %3516 = vmatprep.subr.mxu0 %v161
    %3517 = vmatpush1.msra.mxu0 %v160
    %3518 = vmatprep.subr.mxu0 %v163
    %3519 = vmatpush1.msra.mxu0 %v162
    %3520 = vmatprep.subr.mxu0 %v165
    %3521 = vmatpush1.msra.mxu0 %v164
    %3522 = vmatprep.subr.mxu0 %v167
    %3523 = vmatpush1.msra.mxu0 %v166
    %3524 = vmatprep.subr.mxu0 %v169
    %3525 = vmatpush1.msra.mxu0 %v168
    %3526 = vmatprep.subr.mxu0 %v171
    %3527 = vmatpush1.msra.mxu0 %v170
    %3528 = vmatprep.subr.mxu0 0.0
    %3529 = vmatpush1.msra.mxu0 0.0
    %3530 = vmatprep.subr.mxu0 0.0
    %3531 = vmatpush1.msra.mxu0 0.0
    %3532 = vmatprep.subr.mxu0 0.0
    %3533 = vmatpush1.msra.mxu0 0.0
    %3534 = vmatprep.subr.mxu0 0.0
    %3535 = vmatpush1.msra.mxu0 0.0
    %3536 = vmatprep.subr.mxu0 0.0
    %3537 = vmatpush1.msra.mxu0 0.0
    %3538 = vmatprep.subr.mxu0 0.0
    %3539 = vmatpush1.msra.mxu0 0.0
    %3540 = vmatprep.subr.mxu0 0.0
    %3541 = vmatpush1.msra.mxu0 0.0
    %3542 = vmatprep.subr.mxu0 0.0
    %3543 = vmatpush1.msra.mxu0 0.0
    %3544 = vmatprep.subr.mxu0 0.0
    %3545 = vmatpush1.msra.mxu0 0.0
    %3546 = vmatprep.subr.mxu0 0.0
    %3547 = vmatpush1.msra.mxu0 0.0
    %3548 = vmatprep.subr.mxu0 0.0
    %3549 = vmatpush1.msra.mxu0 0.0
    %3550 = vmatprep.subr.mxu0 0.0
    %3551 = vmatpush1.msra.mxu0 0.0
    %3552 = vmatprep.subr.mxu0 0.0
    %3553 = vmatpush1.msra.mxu0 0.0
    %3554 = vmatprep.subr.mxu0 0.0
    %3555 = vmatpush1.msra.mxu0 0.0
    %3556 = vmatprep.subr.mxu0 0.0
    %3557 = vmatpush1.msra.mxu0 0.0
    %3558 = vmatprep.subr.mxu0 0.0
    %3559 = vmatpush1.msra.mxu0 0.0
    %3560 = vmatprep.mubr.f32.mxu0 0.0
    %3561 = vmatmul.mubr.f32.gmra.mrb[0].mxu0 %v3419
    %v3562 = vpop.f32.mrb[0].mxu0
    %v3563 = vadd.f32 %v3492, %v3562
    %v3564 = vpop.f32.mrb[0].mxu0
    %v3565 = vadd.f32 %v3494, %v3564
    %3566 = vdwg.mxu0
    %v3567 = vadd.f32 %v3563, %v536
    %v3568 = vadd.f32 %v3565, %v540
    %v3569 = vxor.u32 %v3567, 2147483648
    %v3570 = vmul.f32 %v3569, 1.442695
    %v3571 = vpow.pop %v3570
    %v3572 = vadd.f32 %v3571, 1.0
    %v3573 = vrcp.pop %v3572
    %v3574 = vmul.f32 1.0, %v3573
    %v3575 = vtanh.pop %v3568
    %v3576 = vxor.u32 %v3568, 2147483648
    %v3577 = vmul.f32 %v3576, 1.442695
    %v3578 = vpow.pop %v3577
    %v3579 = vadd.f32 %v3578, 1.0
    %v3580 = vrcp.pop %v3579
    %v3581 = vmul.f32 1.0, %v3580
    %v3582 = vmul.f32 %v3574, %v3210
    %v3583 = vmul.f32 %v3574, %v3575
    %3585 = vrot.lane.b32.xlu0 %v3583, 64
    %v3586 = vpop.permute.xlu0 %3585
    %v3588 = vadd.f32 %v3582, %v3586
    %v3589 = vtanh.pop %v3588
    %v3590 = vmul.f32 %v3581, %v3589
    %vm3591 = vcmp.gt.f32.partialorder %v3590, 0.0
    %v3592 = vmul.f32 %v3590, 0.1
    %v3593 = vsel %vm3591, %v3590, %v3592
    %3595 = vrot.lane.b32.xlu0 %v3593, 64
    %v3596 = vpop.permute.xlu0 %3595
    %s3598 = scalar_lea.vmem [#allocation10], 16
    %3599 = vst.msk [vmem:[%s3598] sm:$0x3] %vm574, %v3596
    %s3600 = scalar_lea.vmem [#allocation2], 72
    %v3601 = vld [vmem:[%s3600] sm:$0xff]
    %3602 = vmatprep.subr.mxu0 %v77
    %3603 = vmatpush1.msra.mxu0 %v76
    %3604 = vmatprep.subr.mxu0 %v81
    %3605 = vmatpush1.msra.mxu0 %v80
    %3606 = vmatprep.subr.mxu0 %v85
    %3607 = vmatpush1.msra.mxu0 %v84
    %3608 = vmatprep.subr.mxu0 %v89
    %3609 = vmatpush1.msra.mxu0 %v88
    %3610 = vmatprep.subr.mxu0 %v93
    %3611 = vmatpush1.msra.mxu0 %v92
    %3612 = vmatprep.subr.mxu0 %v97
    %3613 = vmatpush1.msra.mxu0 %v96
    %3614 = vmatprep.subr.mxu0 %v101
    %3615 = vmatpush1.msra.mxu0 %v100
    %3616 = vmatprep.subr.mxu0 %v105
    %3617 = vmatpush1.msra.mxu0 %v104
    %3618 = vmatprep.subr.mxu0 %v109
    %3619 = vmatpush1.msra.mxu0 %v108
    %3620 = vmatprep.subr.mxu0 %v113
    %3621 = vmatpush1.msra.mxu0 %v112
    %3622 = vmatprep.subr.mxu0 %v117
    %3623 = vmatpush1.msra.mxu0 %v116
    %3624 = vmatprep.subr.mxu0 %v121
    %3625 = vmatpush1.msra.mxu0 %v120
    %3626 = vmatprep.subr.mxu0 %v125
    %3627 = vmatpush1.msra.mxu0 %v124
    %3628 = vmatprep.subr.mxu0 %v129
    %3629 = vmatpush1.msra.mxu0 %v128
    %3630 = vmatprep.subr.mxu0 %v133
    %3631 = vmatpush1.msra.mxu0 %v132
    %3632 = vmatprep.subr.mxu0 %v137
    %3633 = vmatpush1.msra.mxu0 %v136
    %3634 = vmatprep.subr.mxu0 0.0
    %3635 = vmatpush1.msra.mxu0 0.0
    %3636 = vmatprep.subr.mxu0 0.0
    %3637 = vmatpush1.msra.mxu0 0.0
    %3638 = vmatprep.subr.mxu0 0.0
    %3639 = vmatpush1.msra.mxu0 0.0
    %3640 = vmatprep.subr.mxu0 0.0
    %3641 = vmatpush1.msra.mxu0 0.0
    %3642 = vmatprep.subr.mxu0 0.0
    %3643 = vmatpush1.msra.mxu0 0.0
    %3644 = vmatprep.subr.mxu0 0.0
    %3645 = vmatpush1.msra.mxu0 0.0
    %3646 = vmatprep.subr.mxu0 0.0
    %3647 = vmatpush1.msra.mxu0 0.0
    %3648 = vmatprep.subr.mxu0 0.0
    %3649 = vmatpush1.msra.mxu0 0.0
    %3650 = vmatprep.subr.mxu0 0.0
    %3651 = vmatpush1.msra.mxu0 0.0
    %3652 = vmatprep.subr.mxu0 0.0
    %3653 = vmatpush1.msra.mxu0 0.0
    %3654 = vmatprep.subr.mxu0 0.0
    %3655 = vmatpush1.msra.mxu0 0.0
    %3656 = vmatprep.subr.mxu0 0.0
    %3657 = vmatpush1.msra.mxu0 0.0
    %3658 = vmatprep.subr.mxu0 0.0
    %3659 = vmatpush1.msra.mxu0 0.0
    %3660 = vmatprep.subr.mxu0 0.0
    %3661 = vmatpush1.msra.mxu0 0.0
    %3662 = vmatprep.subr.mxu0 0.0
    %3663 = vmatpush1.msra.mxu0 0.0
    %3664 = vmatprep.subr.mxu0 0.0
    %3665 = vmatpush1.msra.mxu0 0.0
    %3666 = vmatprep.mubr.f32.mxu0 0.0
    %3667 = vmatmul.mubr.f32.gmra.mrb[0].mxu0 %v3419
    %v3668 = vpop.f32.mrb[0].mxu0
    %v3669 = vadd.f32 0.0, %v3668
    %v3670 = vpop.f32.mrb[0].mxu0
    %v3671 = vadd.f32 0.0, %v3670
    %3672 = vdwg.mxu0
    %3673 = vmatprep.subr.mxu0 %v79
    %3674 = vmatpush1.msra.mxu0 %v78
    %3675 = vmatprep.subr.mxu0 %v83
    %3676 = vmatpush1.msra.mxu0 %v82
    %3677 = vmatprep.subr.mxu0 %v87
    %3678 = vmatpush1.msra.mxu0 %v86
    %3679 = vmatprep.subr.mxu0 %v91
    %3680 = vmatpush1.msra.mxu0 %v90
    %3681 = vmatprep.subr.mxu0 %v95
    %3682 = vmatpush1.msra.mxu0 %v94
    %3683 = vmatprep.subr.mxu0 %v99
    %3684 = vmatpush1.msra.mxu0 %v98
    %3685 = vmatprep.subr.mxu0 %v103
    %3686 = vmatpush1.msra.mxu0 %v102
    %3687 = vmatprep.subr.mxu0 %v107
    %3688 = vmatpush1.msra.mxu0 %v106
    %3689 = vmatprep.subr.mxu0 %v111
    %3690 = vmatpush1.msra.mxu0 %v110
    %3691 = vmatprep.subr.mxu0 %v115
    %3692 = vmatpush1.msra.mxu0 %v114
    %3693 = vmatprep.subr.mxu0 %v119
    %3694 = vmatpush1.msra.mxu0 %v118
    %3695 = vmatprep.subr.mxu0 %v123
    %3696 = vmatpush1.msra.mxu0 %v122
    %3697 = vmatprep.subr.mxu0 %v127
    %3698 = vmatpush1.msra.mxu0 %v126
    %3699 = vmatprep.subr.mxu0 %v131
    %3700 = vmatpush1.msra.mxu0 %v130
    %3701 = vmatprep.subr.mxu0 %v135
    %3702 = vmatpush1.msra.mxu0 %v134
    %3703 = vmatprep.subr.mxu0 %v139
    %3704 = vmatpush1.msra.mxu0 %v138
    %3705 = vmatprep.subr.mxu0 0.0
    %3706 = vmatpush1.msra.mxu0 0.0
    %3707 = vmatprep.subr.mxu0 0.0
    %3708 = vmatpush1.msra.mxu0 0.0
    %3709 = vmatprep.subr.mxu0 0.0
    %3710 = vmatpush1.msra.mxu0 0.0
    %3711 = vmatprep.subr.mxu0 0.0
    %3712 = vmatpush1.msra.mxu0 0.0
    %3713 = vmatprep.subr.mxu0 0.0
    %3714 = vmatpush1.msra.mxu0 0.0
    %3715 = vmatprep.subr.mxu0 0.0
    %3716 = vmatpush1.msra.mxu0 0.0
    %3717 = vmatprep.subr.mxu0 0.0
    %3718 = vmatpush1.msra.mxu0 0.0
    %3719 = vmatprep.subr.mxu0 0.0
    %3720 = vmatpush1.msra.mxu0 0.0
    %3721 = vmatprep.subr.mxu0 0.0
    %3722 = vmatpush1.msra.mxu0 0.0
    %3723 = vmatprep.subr.mxu0 0.0
    %3724 = vmatpush1.msra.mxu0 0.0
    %3725 = vmatprep.subr.mxu0 0.0
    %3726 = vmatpush1.msra.mxu0 0.0
    %3727 = vmatprep.subr.mxu0 0.0
    %3728 = vmatpush1.msra.mxu0 0.0
    %3729 = vmatprep.subr.mxu0 0.0
    %3730 = vmatpush1.msra.mxu0 0.0
    %3731 = vmatprep.subr.mxu0 0.0
    %3732 = vmatpush1.msra.mxu0 0.0
    %3733 = vmatprep.subr.mxu0 0.0
    %3734 = vmatpush1.msra.mxu0 0.0
    %3735 = vmatprep.subr.mxu0 0.0
    %3736 = vmatpush1.msra.mxu0 0.0
    %3737 = vmatprep.mubr.f32.mxu0 0.0
    %3738 = vmatmul.mubr.f32.gmra.mrb[0].mxu0 %v3419
    %v3739 = vpop.f32.mrb[0].mxu0
    %v3740 = vadd.f32 0.0, %v3739
    %v3741 = vpop.f32.mrb[0].mxu0
    %v3742 = vadd.f32 0.0, %v3741
    %3743 = vdwg.mxu0
    %v3748 = vcombine.low %v3669, %v3671
    %v3749 = vcombine.low %v3740, %v3742
    %v3751 = vunpack.c.l.s4 1983009808
    %v3752 = vunpack.c.0.s8 %v3751
    %v3753 = vlaneseq
    %v3754 = vshrl.u32 %v3753, 7
    %v3755 = vsub.s32 %v3752, %v3754
    %v3756 = vrot.slane %v3748, %v3755
    %v3758 = vunpack.c.l.s4 1983009808
    %v3759 = vunpack.c.0.s8 %v3758
    %v3760 = vlaneseq
    %v3761 = vshrl.u32 %v3760, 7
    %v3762 = vsub.s32 %v3759, %v3761
    %v3763 = vrot.slane %v3749, %v3762
    %v3764 = vcombine.low %v3756, %v3763
    %v3766 = vadd.f32 %v3601, %v3764
    %v3767 = vxor.u32 %v3766, 2147483648
    %v3768 = vmul.f32 %v3767, 1.442695
    %v3769 = vpow.pop %v3768
    %v3770 = vadd.f32 %v3769, 1.0
    %v3771 = vrcp.pop %v3770
    %v3772 = vmul.f32 1.0, %v3771
    %v3774 = vrot.slane %v3766, 2
    %v3776 = vxor.u32 %v3774, 2147483648
    %v3777 = vmul.f32 %v3776, 1.442695
    %v3778 = vpow.pop %v3777
    %v3779 = vadd.f32 %v3778, 1.0
    %v3780 = vrcp.pop %v3779
    %v3781 = vmul.f32 1.0, %v3780
    %v3782 = vrot.slane %v3766, 4
    %v3784 = vtanh.pop %v3782
    %v3785 = vrot.slane %v3766, 6
    %v3787 = vxor.u32 %v3785, 2147483648
    %v3788 = vmul.f32 %v3787, 1.442695
    %v3789 = vpow.pop %v3788
    %v3790 = vadd.f32 %v3789, 1.0
    %v3791 = vrcp.pop %v3790
    %v3792 = vmul.f32 1.0, %v3791
    %v3793 = vmul.f32 %v3781, %v3417
    %v3794 = vmul.f32 %v3772, %v3784
    %v3795 = vadd.f32 %v3793, %v3794
    %v3796 = vtanh.pop %v3795
    %v3797 = vmul.f32 %v3792, %v3796
    %3799 = vrot.lane.b32.xlu0 %v3590, 64
    %v3800 = vpop.permute.xlu0 %3799
    %v3801 = vsel %vm386, %v3800, 0
    %3803 = vmatprep.subr.mxu0 %v173
    %3804 = vmatpush1.msra.mxu0 %v172
    %3805 = vmatprep.subr.mxu0 %v175
    %3806 = vmatpush1.msra.mxu0 %v174
    %3807 = vmatprep.subr.mxu0 %v177
    %3808 = vmatpush1.msra.mxu0 %v176
    %3809 = vmatprep.subr.mxu0 %v179
    %3810 = vmatpush1.msra.mxu0 %v178
    %3811 = vmatprep.subr.mxu0 %v181
    %3812 = vmatpush1.msra.mxu0 %v180
    %3813 = vmatprep.subr.mxu0 %v183
    %3814 = vmatpush1.msra.mxu0 %v182
    %3815 = vmatprep.subr.mxu0 %v185
    %3816 = vmatpush1.msra.mxu0 %v184
    %3817 = vmatprep.subr.mxu0 %v187
    %3818 = vmatpush1.msra.mxu0 %v186
    %3819 = vmatprep.subr.mxu0 0.0
    %3820 = vmatpush1.msra.mxu0 0.0
    %3821 = vmatprep.subr.mxu0 0.0
    %3822 = vmatpush1.msra.mxu0 0.0
    %3823 = vmatprep.subr.mxu0 0.0
    %3824 = vmatpush1.msra.mxu0 0.0
    %3825 = vmatprep.subr.mxu0 0.0
    %3826 = vmatpush1.msra.mxu0 0.0
    %3827 = vmatprep.subr.mxu0 0.0
    %3828 = vmatpush1.msra.mxu0 0.0
    %3829 = vmatprep.subr.mxu0 0.0
    %3830 = vmatpush1.msra.mxu0 0.0
    %3831 = vmatprep.subr.mxu0 0.0
    %3832 = vmatpush1.msra.mxu0 0.0
    %3833 = vmatprep.subr.mxu0 0.0
    %3834 = vmatpush1.msra.mxu0 0.0
    %3835 = vmatprep.subr.mxu0 0.0
    %3836 = vmatpush1.msra.mxu0 0.0
    %3837 = vmatprep.subr.mxu0 0.0
    %3838 = vmatpush1.msra.mxu0 0.0
    %3839 = vmatprep.subr.mxu0 0.0
    %3840 = vmatpush1.msra.mxu0 0.0
    %3841 = vmatprep.subr.mxu0 0.0
    %3842 = vmatpush1.msra.mxu0 0.0
    %3843 = vmatprep.subr.mxu0 0.0
    %3844 = vmatpush1.msra.mxu0 0.0
    %3845 = vmatprep.subr.mxu0 0.0
    %3846 = vmatpush1.msra.mxu0 0.0
    %3847 = vmatprep.subr.mxu0 0.0
    %3848 = vmatpush1.msra.mxu0 0.0
    %3849 = vmatprep.subr.mxu0 0.0
    %3850 = vmatpush1.msra.mxu0 0.0
    %3851 = vmatprep.subr.mxu0 0.0
    %3852 = vmatpush1.msra.mxu0 0.0
    %3853 = vmatprep.subr.mxu0 0.0
    %3854 = vmatpush1.msra.mxu0 0.0
    %3855 = vmatprep.subr.mxu0 0.0
    %3856 = vmatpush1.msra.mxu0 0.0
    %3857 = vmatprep.subr.mxu0 0.0
    %3858 = vmatpush1.msra.mxu0 0.0
    %3859 = vmatprep.subr.mxu0 0.0
    %3860 = vmatpush1.msra.mxu0 0.0
    %3861 = vmatprep.subr.mxu0 0.0
    %3862 = vmatpush1.msra.mxu0 0.0
    %3863 = vmatprep.subr.mxu0 0.0
    %3864 = vmatpush1.msra.mxu0 0.0
    %3865 = vmatprep.subr.mxu0 0.0
    %3866 = vmatpush1.msra.mxu0 0.0
    %3867 = vmatprep.mubr.f32.mxu0 0.0
    %3868 = vmatmul.mubr.f32.gmra.mrb[0].mxu0 %v3801
    %v3869 = vpop.f32.mrb[0].mxu0
    %v3870 = vadd.f32 0.0, %v3869
    %v3871 = vpop.f32.mrb[0].mxu0
    %v3872 = vadd.f32 0.0, %v3871
    %3873 = vdwg.mxu0
    %3874 = vmatprep.subr.mxu0 %v141
    %3875 = vmatpush1.msra.mxu0 %v140
    %3876 = vmatprep.subr.mxu0 %v143
    %3877 = vmatpush1.msra.mxu0 %v142
    %3878 = vmatprep.subr.mxu0 %v145
    %3879 = vmatpush1.msra.mxu0 %v144
    %3880 = vmatprep.subr.mxu0 %v147
    %3881 = vmatpush1.msra.mxu0 %v146
    %3882 = vmatprep.subr.mxu0 %v149
    %3883 = vmatpush1.msra.mxu0 %v148
    %3884 = vmatprep.subr.mxu0 %v151
    %3885 = vmatpush1.msra.mxu0 %v150
    %3886 = vmatprep.subr.mxu0 %v153
    %3887 = vmatpush1.msra.mxu0 %v152
    %3888 = vmatprep.subr.mxu0 %v155
    %3889 = vmatpush1.msra.mxu0 %v154
    %3890 = vmatprep.subr.mxu0 %v157
    %3891 = vmatpush1.msra.mxu0 %v156
    %3892 = vmatprep.subr.mxu0 %v159
    %3893 = vmatpush1.msra.mxu0 %v158
    %3894 = vmatprep.subr.mxu0 %v161
    %3895 = vmatpush1.msra.mxu0 %v160
    %3896 = vmatprep.subr.mxu0 %v163
    %3897 = vmatpush1.msra.mxu0 %v162
    %3898 = vmatprep.subr.mxu0 %v165
    %3899 = vmatpush1.msra.mxu0 %v164
    %3900 = vmatprep.subr.mxu0 %v167
    %3901 = vmatpush1.msra.mxu0 %v166
    %3902 = vmatprep.subr.mxu0 %v169
    %3903 = vmatpush1.msra.mxu0 %v168
    %3904 = vmatprep.subr.mxu0 %v171
    %3905 = vmatpush1.msra.mxu0 %v170
    %3906 = vmatprep.subr.mxu0 0.0
    %3907 = vmatpush1.msra.mxu0 0.0
    %3908 = vmatprep.subr.mxu0 0.0
    %3909 = vmatpush1.msra.mxu0 0.0
    %3910 = vmatprep.subr.mxu0 0.0
    %3911 = vmatpush1.msra.mxu0 0.0
    %3912 = vmatprep.subr.mxu0 0.0
    %3913 = vmatpush1.msra.mxu0 0.0
    %3914 = vmatprep.subr.mxu0 0.0
    %3915 = vmatpush1.msra.mxu0 0.0
    %3916 = vmatprep.subr.mxu0 0.0
    %3917 = vmatpush1.msra.mxu0 0.0
    %3918 = vmatprep.subr.mxu0 0.0
    %3919 = vmatpush1.msra.mxu0 0.0
    %3920 = vmatprep.subr.mxu0 0.0
    %3921 = vmatpush1.msra.mxu0 0.0
    %3922 = vmatprep.subr.mxu0 0.0
    %3923 = vmatpush1.msra.mxu0 0.0
    %3924 = vmatprep.subr.mxu0 0.0
    %3925 = vmatpush1.msra.mxu0 0.0
    %3926 = vmatprep.subr.mxu0 0.0
    %3927 = vmatpush1.msra.mxu0 0.0
    %3928 = vmatprep.subr.mxu0 0.0
    %3929 = vmatpush1.msra.mxu0 0.0
    %3930 = vmatprep.subr.mxu0 0.0
    %3931 = vmatpush1.msra.mxu0 0.0
    %3932 = vmatprep.subr.mxu0 0.0
    %3933 = vmatpush1.msra.mxu0 0.0
    %3934 = vmatprep.subr.mxu0 0.0
    %3935 = vmatpush1.msra.mxu0 0.0
    %3936 = vmatprep.subr.mxu0 0.0
    %3937 = vmatpush1.msra.mxu0 0.0
    %3938 = vmatprep.mubr.f32.mxu0 0.0
    %3939 = vmatmul.mubr.f32.gmra.mrb[0].mxu0 %v3797
    %v3940 = vpop.f32.mrb[0].mxu0
    %v3941 = vadd.f32 %v3870, %v3940
    %v3942 = vpop.f32.mrb[0].mxu0
    %v3943 = vadd.f32 %v3872, %v3942
    %3944 = vdwg.mxu0
    %v3945 = vadd.f32 %v3941, %v536
    %v3946 = vadd.f32 %v3943, %v540
    %v3947 = vxor.u32 %v3945, 2147483648
    %v3948 = vmul.f32 %v3947, 1.442695
    %v3949 = vpow.pop %v3948
    %v3950 = vadd.f32 %v3949, 1.0
    %v3951 = vrcp.pop %v3950
    %v3952 = vmul.f32 1.0, %v3951
    %v3953 = vtanh.pop %v3946
    %v3954 = vxor.u32 %v3946, 2147483648
    %v3955 = vmul.f32 %v3954, 1.442695
    %v3956 = vpow.pop %v3955
    %v3957 = vadd.f32 %v3956, 1.0
    %v3958 = vrcp.pop %v3957
    %v3959 = vmul.f32 1.0, %v3958
    %v3960 = vmul.f32 %v3952, %v3588
    %v3961 = vmul.f32 %v3952, %v3953
    %3963 = vrot.lane.b32.xlu0 %v3961, 64
    %v3964 = vpop.permute.xlu0 %3963
    %v3966 = vadd.f32 %v3960, %v3964
    %v3967 = vtanh.pop %v3966
    %v3968 = vmul.f32 %v3959, %v3967
    %vm3969 = vcmp.gt.f32.partialorder %v3968, 0.0
    %v3970 = vmul.f32 %v3968, 0.1
    %v3971 = vsel %vm3969, %v3968, %v3970
    %3973 = vrot.lane.b32.xlu0 %v3971, 64
    %v3974 = vpop.permute.xlu0 %3973
    %s3976 = scalar_lea.vmem [#allocation10], 18
    %3977 = vst.msk [vmem:[%s3976] sm:$0x3] %vm574, %v3974
    %s3978 = scalar_lea.vmem [#allocation2], 80
    %v3979 = vld [vmem:[%s3978] sm:$0xff]
    %3980 = vmatprep.subr.mxu0 %v77
    %3981 = vmatpush1.msra.mxu0 %v76
    %3982 = vmatprep.subr.mxu0 %v81
    %3983 = vmatpush1.msra.mxu0 %v80
    %3984 = vmatprep.subr.mxu0 %v85
    %3985 = vmatpush1.msra.mxu0 %v84
    %3986 = vmatprep.subr.mxu0 %v89
    %3987 = vmatpush1.msra.mxu0 %v88
    %3988 = vmatprep.subr.mxu0 %v93
    %3989 = vmatpush1.msra.mxu0 %v92
    %3990 = vmatprep.subr.mxu0 %v97
    %3991 = vmatpush1.msra.mxu0 %v96
    %3992 = vmatprep.subr.mxu0 %v101
    %3993 = vmatpush1.msra.mxu0 %v100
    %3994 = vmatprep.subr.mxu0 %v105
    %3995 = vmatpush1.msra.mxu0 %v104
    %3996 = vmatprep.subr.mxu0 %v109
    %3997 = vmatpush1.msra.mxu0 %v108
    %3998 = vmatprep.subr.mxu0 %v113
    %3999 = vmatpush1.msra.mxu0 %v112
    %4000 = vmatprep.subr.mxu0 %v117
    %4001 = vmatpush1.msra.mxu0 %v116
    %4002 = vmatprep.subr.mxu0 %v121
    %4003 = vmatpush1.msra.mxu0 %v120
    %4004 = vmatprep.subr.mxu0 %v125
    %4005 = vmatpush1.msra.mxu0 %v124
    %4006 = vmatprep.subr.mxu0 %v129
    %4007 = vmatpush1.msra.mxu0 %v128
    %4008 = vmatprep.subr.mxu0 %v133
    %4009 = vmatpush1.msra.mxu0 %v132
    %4010 = vmatprep.subr.mxu0 %v137
    %4011 = vmatpush1.msra.mxu0 %v136
    %4012 = vmatprep.subr.mxu0 0.0
    %4013 = vmatpush1.msra.mxu0 0.0
    %4014 = vmatprep.subr.mxu0 0.0
    %4015 = vmatpush1.msra.mxu0 0.0
    %4016 = vmatprep.subr.mxu0 0.0
    %4017 = vmatpush1.msra.mxu0 0.0
    %4018 = vmatprep.subr.mxu0 0.0
    %4019 = vmatpush1.msra.mxu0 0.0
    %4020 = vmatprep.subr.mxu0 0.0
    %4021 = vmatpush1.msra.mxu0 0.0
    %4022 = vmatprep.subr.mxu0 0.0
    %4023 = vmatpush1.msra.mxu0 0.0
    %4024 = vmatprep.subr.mxu0 0.0
    %4025 = vmatpush1.msra.mxu0 0.0
    %4026 = vmatprep.subr.mxu0 0.0
    %4027 = vmatpush1.msra.mxu0 0.0
    %4028 = vmatprep.subr.mxu0 0.0
    %4029 = vmatpush1.msra.mxu0 0.0
    %4030 = vmatprep.subr.mxu0 0.0
    %4031 = vmatpush1.msra.mxu0 0.0
    %4032 = vmatprep.subr.mxu0 0.0
    %4033 = vmatpush1.msra.mxu0 0.0
    %4034 = vmatprep.subr.mxu0 0.0
    %4035 = vmatpush1.msra.mxu0 0.0
    %4036 = vmatprep.subr.mxu0 0.0
    %4037 = vmatpush1.msra.mxu0 0.0
    %4038 = vmatprep.subr.mxu0 0.0
    %4039 = vmatpush1.msra.mxu0 0.0
    %4040 = vmatprep.subr.mxu0 0.0
    %4041 = vmatpush1.msra.mxu0 0.0
    %4042 = vmatprep.subr.mxu0 0.0
    %4043 = vmatpush1.msra.mxu0 0.0
    %4044 = vmatprep.mubr.f32.mxu0 0.0
    %4045 = vmatmul.mubr.f32.gmra.mrb[0].mxu0 %v3797
    %v4046 = vpop.f32.mrb[0].mxu0
    %v4047 = vadd.f32 0.0, %v4046
    %v4048 = vpop.f32.mrb[0].mxu0
    %v4049 = vadd.f32 0.0, %v4048
    %4050 = vdwg.mxu0
    %4051 = vmatprep.subr.mxu0 %v79
    %4052 = vmatpush1.msra.mxu0 %v78
    %4053 = vmatprep.subr.mxu0 %v83
    %4054 = vmatpush1.msra.mxu0 %v82
    %4055 = vmatprep.subr.mxu0 %v87
    %4056 = vmatpush1.msra.mxu0 %v86
    %4057 = vmatprep.subr.mxu0 %v91
    %4058 = vmatpush1.msra.mxu0 %v90
    %4059 = vmatprep.subr.mxu0 %v95
    %4060 = vmatpush1.msra.mxu0 %v94
    %4061 = vmatprep.subr.mxu0 %v99
    %4062 = vmatpush1.msra.mxu0 %v98
    %4063 = vmatprep.subr.mxu0 %v103
    %4064 = vmatpush1.msra.mxu0 %v102
    %4065 = vmatprep.subr.mxu0 %v107
    %4066 = vmatpush1.msra.mxu0 %v106
    %4067 = vmatprep.subr.mxu0 %v111
    %4068 = vmatpush1.msra.mxu0 %v110
    %4069 = vmatprep.subr.mxu0 %v115
    %4070 = vmatpush1.msra.mxu0 %v114
    %4071 = vmatprep.subr.mxu0 %v119
    %4072 = vmatpush1.msra.mxu0 %v118
    %4073 = vmatprep.subr.mxu0 %v123
    %4074 = vmatpush1.msra.mxu0 %v122
    %4075 = vmatprep.subr.mxu0 %v127
    %4076 = vmatpush1.msra.mxu0 %v126
    %4077 = vmatprep.subr.mxu0 %v131
    %4078 = vmatpush1.msra.mxu0 %v130
    %4079 = vmatprep.subr.mxu0 %v135
    %4080 = vmatpush1.msra.mxu0 %v134
    %4081 = vmatprep.subr.mxu0 %v139
    %4082 = vmatpush1.msra.mxu0 %v138
    %4083 = vmatprep.subr.mxu0 0.0
    %4084 = vmatpush1.msra.mxu0 0.0
    %4085 = vmatprep.subr.mxu0 0.0
    %4086 = vmatpush1.msra.mxu0 0.0
    %4087 = vmatprep.subr.mxu0 0.0
    %4088 = vmatpush1.msra.mxu0 0.0
    %4089 = vmatprep.subr.mxu0 0.0
    %4090 = vmatpush1.msra.mxu0 0.0
    %4091 = vmatprep.subr.mxu0 0.0
    %4092 = vmatpush1.msra.mxu0 0.0
    %4093 = vmatprep.subr.mxu0 0.0
    %4094 = vmatpush1.msra.mxu0 0.0
    %4095 = vmatprep.subr.mxu0 0.0
    %4096 = vmatpush1.msra.mxu0 0.0
    %4097 = vmatprep.subr.mxu0 0.0
    %4098 = vmatpush1.msra.mxu0 0.0
    %4099 = vmatprep.subr.mxu0 0.0
    %4100 = vmatpush1.msra.mxu0 0.0
    %4101 = vmatprep.subr.mxu0 0.0
    %4102 = vmatpush1.msra.mxu0 0.0
    %4103 = vmatprep.subr.mxu0 0.0
    %4104 = vmatpush1.msra.mxu0 0.0
    %4105 = vmatprep.subr.mxu0 0.0
    %4106 = vmatpush1.msra.mxu0 0.0
    %4107 = vmatprep.subr.mxu0 0.0
    %4108 = vmatpush1.msra.mxu0 0.0
    %4109 = vmatprep.subr.mxu0 0.0
    %4110 = vmatpush1.msra.mxu0 0.0
    %4111 = vmatprep.subr.mxu0 0.0
    %4112 = vmatpush1.msra.mxu0 0.0
    %4113 = vmatprep.subr.mxu0 0.0
    %4114 = vmatpush1.msra.mxu0 0.0
    %4115 = vmatprep.mubr.f32.mxu0 0.0
    %4116 = vmatmul.mubr.f32.gmra.mrb[0].mxu0 %v3797
    %v4117 = vpop.f32.mrb[0].mxu0
    %v4118 = vadd.f32 0.0, %v4117
    %v4119 = vpop.f32.mrb[0].mxu0
    %v4120 = vadd.f32 0.0, %v4119
    %4121 = vdwg.mxu0
    %v4126 = vcombine.low %v4047, %v4049
    %v4127 = vcombine.low %v4118, %v4120
    %v4129 = vunpack.c.l.s4 1983009808
    %v4130 = vunpack.c.0.s8 %v4129
    %v4131 = vlaneseq
    %v4132 = vshrl.u32 %v4131, 7
    %v4133 = vsub.s32 %v4130, %v4132
    %v4134 = vrot.slane %v4126, %v4133
    %v4136 = vunpack.c.l.s4 1983009808
    %v4137 = vunpack.c.0.s8 %v4136
    %v4138 = vlaneseq
    %v4139 = vshrl.u32 %v4138, 7
    %v4140 = vsub.s32 %v4137, %v4139
    %v4141 = vrot.slane %v4127, %v4140
    %v4142 = vcombine.low %v4134, %v4141
    %v4144 = vadd.f32 %v3979, %v4142
    %v4145 = vxor.u32 %v4144, 2147483648
    %v4146 = vmul.f32 %v4145, 1.442695
    %v4147 = vpow.pop %v4146
    %v4148 = vadd.f32 %v4147, 1.0
    %v4149 = vrcp.pop %v4148
    %v4150 = vmul.f32 1.0, %v4149
    %v4152 = vrot.slane %v4144, 2
    %v4154 = vxor.u32 %v4152, 2147483648
    %v4155 = vmul.f32 %v4154, 1.442695
    %v4156 = vpow.pop %v4155
    %v4157 = vadd.f32 %v4156, 1.0
    %v4158 = vrcp.pop %v4157
    %v4159 = vmul.f32 1.0, %v4158
    %v4160 = vrot.slane %v4144, 4
    %v4162 = vtanh.pop %v4160
    %v4163 = vrot.slane %v4144, 6
    %v4165 = vxor.u32 %v4163, 2147483648
    %v4166 = vmul.f32 %v4165, 1.442695
    %v4167 = vpow.pop %v4166
    %v4168 = vadd.f32 %v4167, 1.0
    %v4169 = vrcp.pop %v4168
    %v4170 = vmul.f32 1.0, %v4169
    %v4171 = vmul.f32 %v4159, %v3795
    %v4172 = vmul.f32 %v4150, %v4162
    %v4173 = vadd.f32 %v4171, %v4172
    %v4174 = vtanh.pop %v4173
    %v4175 = vmul.f32 %v4170, %v4174
    %4177 = vrot.lane.b32.xlu0 %v3968, 64
    %v4178 = vpop.permute.xlu0 %4177
    %v4179 = vsel %vm386, %v4178, 0
    %4181 = vmatprep.subr.mxu0 %v173
    %4182 = vmatpush1.msra.mxu0 %v172
    %4183 = vmatprep.subr.mxu0 %v175
    %4184 = vmatpush1.msra.mxu0 %v174
    %4185 = vmatprep.subr.mxu0 %v177
    %4186 = vmatpush1.msra.mxu0 %v176
    %4187 = vmatprep.subr.mxu0 %v179
    %4188 = vmatpush1.msra.mxu0 %v178
    %4189 = vmatprep.subr.mxu0 %v181
    %4190 = vmatpush1.msra.mxu0 %v180
    %4191 = vmatprep.subr.mxu0 %v183
    %4192 = vmatpush1.msra.mxu0 %v182
    %4193 = vmatprep.subr.mxu0 %v185
    %4194 = vmatpush1.msra.mxu0 %v184
    %4195 = vmatprep.subr.mxu0 %v187
    %4196 = vmatpush1.msra.mxu0 %v186
    %4197 = vmatprep.subr.mxu0 0.0
    %4198 = vmatpush1.msra.mxu0 0.0
    %4199 = vmatprep.subr.mxu0 0.0
    %4200 = vmatpush1.msra.mxu0 0.0
    %4201 = vmatprep.subr.mxu0 0.0
    %4202 = vmatpush1.msra.mxu0 0.0
    %4203 = vmatprep.subr.mxu0 0.0
    %4204 = vmatpush1.msra.mxu0 0.0
    %4205 = vmatprep.subr.mxu0 0.0
    %4206 = vmatpush1.msra.mxu0 0.0
    %4207 = vmatprep.subr.mxu0 0.0
    %4208 = vmatpush1.msra.mxu0 0.0
    %4209 = vmatprep.subr.mxu0 0.0
    %4210 = vmatpush1.msra.mxu0 0.0
    %4211 = vmatprep.subr.mxu0 0.0
    %4212 = vmatpush1.msra.mxu0 0.0
    %4213 = vmatprep.subr.mxu0 0.0
    %4214 = vmatpush1.msra.mxu0 0.0
    %4215 = vmatprep.subr.mxu0 0.0
    %4216 = vmatpush1.msra.mxu0 0.0
    %4217 = vmatprep.subr.mxu0 0.0
    %4218 = vmatpush1.msra.mxu0 0.0
    %4219 = vmatprep.subr.mxu0 0.0
    %4220 = vmatpush1.msra.mxu0 0.0
    %4221 = vmatprep.subr.mxu0 0.0
    %4222 = vmatpush1.msra.mxu0 0.0
    %4223 = vmatprep.subr.mxu0 0.0
    %4224 = vmatpush1.msra.mxu0 0.0
    %4225 = vmatprep.subr.mxu0 0.0
    %4226 = vmatpush1.msra.mxu0 0.0
    %4227 = vmatprep.subr.mxu0 0.0
    %4228 = vmatpush1.msra.mxu0 0.0
    %4229 = vmatprep.subr.mxu0 0.0
    %4230 = vmatpush1.msra.mxu0 0.0
    %4231 = vmatprep.subr.mxu0 0.0
    %4232 = vmatpush1.msra.mxu0 0.0
    %4233 = vmatprep.subr.mxu0 0.0
    %4234 = vmatpush1.msra.mxu0 0.0
    %4235 = vmatprep.subr.mxu0 0.0
    %4236 = vmatpush1.msra.mxu0 0.0
    %4237 = vmatprep.subr.mxu0 0.0
    %4238 = vmatpush1.msra.mxu0 0.0
    %4239 = vmatprep.subr.mxu0 0.0
    %4240 = vmatpush1.msra.mxu0 0.0
    %4241 = vmatprep.subr.mxu0 0.0
    %4242 = vmatpush1.msra.mxu0 0.0
    %4243 = vmatprep.subr.mxu0 0.0
    %4244 = vmatpush1.msra.mxu0 0.0
    %4245 = vmatprep.mubr.f32.mxu0 0.0
    %4246 = vmatmul.mubr.f32.gmra.mrb[0].mxu0 %v4179
    %v4247 = vpop.f32.mrb[0].mxu0
    %v4248 = vadd.f32 0.0, %v4247
    %v4249 = vpop.f32.mrb[0].mxu0
    %v4250 = vadd.f32 0.0, %v4249
    %4251 = vdwg.mxu0
    %4252 = vmatprep.subr.mxu0 %v141
    %4253 = vmatpush1.msra.mxu0 %v140
    %4254 = vmatprep.subr.mxu0 %v143
    %4255 = vmatpush1.msra.mxu0 %v142
    %4256 = vmatprep.subr.mxu0 %v145
    %4257 = vmatpush1.msra.mxu0 %v144
    %4258 = vmatprep.subr.mxu0 %v147
    %4259 = vmatpush1.msra.mxu0 %v146
    %4260 = vmatprep.subr.mxu0 %v149
    %4261 = vmatpush1.msra.mxu0 %v148
    %4262 = vmatprep.subr.mxu0 %v151
    %4263 = vmatpush1.msra.mxu0 %v150
    %4264 = vmatprep.subr.mxu0 %v153
    %4265 = vmatpush1.msra.mxu0 %v152
    %4266 = vmatprep.subr.mxu0 %v155
    %4267 = vmatpush1.msra.mxu0 %v154
    %4268 = vmatprep.subr.mxu0 %v157
    %4269 = vmatpush1.msra.mxu0 %v156
    %4270 = vmatprep.subr.mxu0 %v159
    %4271 = vmatpush1.msra.mxu0 %v158
    %4272 = vmatprep.subr.mxu0 %v161
    %4273 = vmatpush1.msra.mxu0 %v160
    %4274 = vmatprep.subr.mxu0 %v163
    %4275 = vmatpush1.msra.mxu0 %v162
    %4276 = vmatprep.subr.mxu0 %v165
    %4277 = vmatpush1.msra.mxu0 %v164
    %4278 = vmatprep.subr.mxu0 %v167
    %4279 = vmatpush1.msra.mxu0 %v166
    %4280 = vmatprep.subr.mxu0 %v169
    %4281 = vmatpush1.msra.mxu0 %v168
    %4282 = vmatprep.subr.mxu0 %v171
    %4283 = vmatpush1.msra.mxu0 %v170
    %4284 = vmatprep.subr.mxu0 0.0
    %4285 = vmatpush1.msra.mxu0 0.0
    %4286 = vmatprep.subr.mxu0 0.0
    %4287 = vmatpush1.msra.mxu0 0.0
    %4288 = vmatprep.subr.mxu0 0.0
    %4289 = vmatpush1.msra.mxu0 0.0
    %4290 = vmatprep.subr.mxu0 0.0
    %4291 = vmatpush1.msra.mxu0 0.0
    %4292 = vmatprep.subr.mxu0 0.0
    %4293 = vmatpush1.msra.mxu0 0.0
    %4294 = vmatprep.subr.mxu0 0.0
    %4295 = vmatpush1.msra.mxu0 0.0
    %4296 = vmatprep.subr.mxu0 0.0
    %4297 = vmatpush1.msra.mxu0 0.0
    %4298 = vmatprep.subr.mxu0 0.0
    %4299 = vmatpush1.msra.mxu0 0.0
    %4300 = vmatprep.subr.mxu0 0.0
    %4301 = vmatpush1.msra.mxu0 0.0
    %4302 = vmatprep.subr.mxu0 0.0
    %4303 = vmatpush1.msra.mxu0 0.0
    %4304 = vmatprep.subr.mxu0 0.0
    %4305 = vmatpush1.msra.mxu0 0.0
    %4306 = vmatprep.subr.mxu0 0.0
    %4307 = vmatpush1.msra.mxu0 0.0
    %4308 = vmatprep.subr.mxu0 0.0
    %4309 = vmatpush1.msra.mxu0 0.0
    %4310 = vmatprep.subr.mxu0 0.0
    %4311 = vmatpush1.msra.mxu0 0.0
    %4312 = vmatprep.subr.mxu0 0.0
    %4313 = vmatpush1.msra.mxu0 0.0
    %4314 = vmatprep.subr.mxu0 0.0
    %4315 = vmatpush1.msra.mxu0 0.0
    %4316 = vmatprep.mubr.f32.mxu0 0.0
    %4317 = vmatmul.mubr.f32.gmra.mrb[0].mxu0 %v4175
    %v4318 = vpop.f32.mrb[0].mxu0
    %v4319 = vadd.f32 %v4248, %v4318
    %v4320 = vpop.f32.mrb[0].mxu0
    %v4321 = vadd.f32 %v4250, %v4320
    %4322 = vdwg.mxu0
    %v4323 = vadd.f32 %v4319, %v536
    %v4324 = vadd.f32 %v4321, %v540
    %v4325 = vxor.u32 %v4323, 2147483648
    %v4326 = vmul.f32 %v4325, 1.442695
    %v4327 = vpow.pop %v4326
    %v4328 = vadd.f32 %v4327, 1.0
    %v4329 = vrcp.pop %v4328
    %v4330 = vmul.f32 1.0, %v4329
    %v4331 = vtanh.pop %v4324
    %v4332 = vxor.u32 %v4324, 2147483648
    %v4333 = vmul.f32 %v4332, 1.442695
    %v4334 = vpow.pop %v4333
    %v4335 = vadd.f32 %v4334, 1.0
    %v4336 = vrcp.pop %v4335
    %v4337 = vmul.f32 1.0, %v4336
    %v4338 = vmul.f32 %v4330, %v3966
    %v4339 = vmul.f32 %v4330, %v4331
    %4341 = vrot.lane.b32.xlu0 %v4339, 64
    %v4342 = vpop.permute.xlu0 %4341
    %v4344 = vadd.f32 %v4338, %v4342
    %v4345 = vtanh.pop %v4344
    %v4346 = vmul.f32 %v4337, %v4345
    %vm4347 = vcmp.gt.f32.partialorder %v4346, 0.0
    %v4348 = vmul.f32 %v4346, 0.1
    %v4349 = vsel %vm4347, %v4346, %v4348
    %4351 = vrot.lane.b32.xlu0 %v4349, 64
    %v4352 = vpop.permute.xlu0 %4351
    %s4354 = scalar_lea.vmem [#allocation10], 20
    %4355 = vst.msk [vmem:[%s4354] sm:$0x3] %vm574, %v4352
    %s4356 = scalar_lea.vmem [#allocation2], 88
    %v4357 = vld [vmem:[%s4356] sm:$0xff]
    %4358 = vmatprep.subr.mxu0 %v77
    %4359 = vmatpush1.msra.mxu0 %v76
    %4360 = vmatprep.subr.mxu0 %v81
    %4361 = vmatpush1.msra.mxu0 %v80
    %4362 = vmatprep.subr.mxu0 %v85
    %4363 = vmatpush1.msra.mxu0 %v84
    %4364 = vmatprep.subr.mxu0 %v89
    %4365 = vmatpush1.msra.mxu0 %v88
    %4366 = vmatprep.subr.mxu0 %v93
    %4367 = vmatpush1.msra.mxu0 %v92
    %4368 = vmatprep.subr.mxu0 %v97
    %4369 = vmatpush1.msra.mxu0 %v96
    %4370 = vmatprep.subr.mxu0 %v101
    %4371 = vmatpush1.msra.mxu0 %v100
    %4372 = vmatprep.subr.mxu0 %v105
    %4373 = vmatpush1.msra.mxu0 %v104
    %4374 = vmatprep.subr.mxu0 %v109
    %4375 = vmatpush1.msra.mxu0 %v108
    %4376 = vmatprep.subr.mxu0 %v113
    %4377 = vmatpush1.msra.mxu0 %v112
    %4378 = vmatprep.subr.mxu0 %v117
    %4379 = vmatpush1.msra.mxu0 %v116
    %4380 = vmatprep.subr.mxu0 %v121
    %4381 = vmatpush1.msra.mxu0 %v120
    %4382 = vmatprep.subr.mxu0 %v125
    %4383 = vmatpush1.msra.mxu0 %v124
    %4384 = vmatprep.subr.mxu0 %v129
    %4385 = vmatpush1.msra.mxu0 %v128
    %4386 = vmatprep.subr.mxu0 %v133
    %4387 = vmatpush1.msra.mxu0 %v132
    %4388 = vmatprep.subr.mxu0 %v137
    %4389 = vmatpush1.msra.mxu0 %v136
    %4390 = vmatprep.subr.mxu0 0.0
    %4391 = vmatpush1.msra.mxu0 0.0
    %4392 = vmatprep.subr.mxu0 0.0
    %4393 = vmatpush1.msra.mxu0 0.0
    %4394 = vmatprep.subr.mxu0 0.0
    %4395 = vmatpush1.msra.mxu0 0.0
    %4396 = vmatprep.subr.mxu0 0.0
    %4397 = vmatpush1.msra.mxu0 0.0
    %4398 = vmatprep.subr.mxu0 0.0
    %4399 = vmatpush1.msra.mxu0 0.0
    %4400 = vmatprep.subr.mxu0 0.0
    %4401 = vmatpush1.msra.mxu0 0.0
    %4402 = vmatprep.subr.mxu0 0.0
    %4403 = vmatpush1.msra.mxu0 0.0
    %4404 = vmatprep.subr.mxu0 0.0
    %4405 = vmatpush1.msra.mxu0 0.0
    %4406 = vmatprep.subr.mxu0 0.0
    %4407 = vmatpush1.msra.mxu0 0.0
    %4408 = vmatprep.subr.mxu0 0.0
    %4409 = vmatpush1.msra.mxu0 0.0
    %4410 = vmatprep.subr.mxu0 0.0
    %4411 = vmatpush1.msra.mxu0 0.0
    %4412 = vmatprep.subr.mxu0 0.0
    %4413 = vmatpush1.msra.mxu0 0.0
    %4414 = vmatprep.subr.mxu0 0.0
    %4415 = vmatpush1.msra.mxu0 0.0
    %4416 = vmatprep.subr.mxu0 0.0
    %4417 = vmatpush1.msra.mxu0 0.0
    %4418 = vmatprep.subr.mxu0 0.0
    %4419 = vmatpush1.msra.mxu0 0.0
    %4420 = vmatprep.subr.mxu0 0.0
    %4421 = vmatpush1.msra.mxu0 0.0
    %4422 = vmatprep.mubr.f32.mxu0 0.0
    %4423 = vmatmul.mubr.f32.gmra.mrb[0].mxu0 %v4175
    %v4424 = vpop.f32.mrb[0].mxu0
    %v4425 = vadd.f32 0.0, %v4424
    %v4426 = vpop.f32.mrb[0].mxu0
    %v4427 = vadd.f32 0.0, %v4426
    %4428 = vdwg.mxu0
    %4429 = vmatprep.subr.mxu0 %v79
    %4430 = vmatpush1.msra.mxu0 %v78
    %4431 = vmatprep.subr.mxu0 %v83
    %4432 = vmatpush1.msra.mxu0 %v82
    %4433 = vmatprep.subr.mxu0 %v87
    %4434 = vmatpush1.msra.mxu0 %v86
    %4435 = vmatprep.subr.mxu0 %v91
    %4436 = vmatpush1.msra.mxu0 %v90
    %4437 = vmatprep.subr.mxu0 %v95
    %4438 = vmatpush1.msra.mxu0 %v94
    %4439 = vmatprep.subr.mxu0 %v99
    %4440 = vmatpush1.msra.mxu0 %v98
    %4441 = vmatprep.subr.mxu0 %v103
    %4442 = vmatpush1.msra.mxu0 %v102
    %4443 = vmatprep.subr.mxu0 %v107
    %4444 = vmatpush1.msra.mxu0 %v106
    %4445 = vmatprep.subr.mxu0 %v111
    %4446 = vmatpush1.msra.mxu0 %v110
    %4447 = vmatprep.subr.mxu0 %v115
    %4448 = vmatpush1.msra.mxu0 %v114
    %4449 = vmatprep.subr.mxu0 %v119
    %4450 = vmatpush1.msra.mxu0 %v118
    %4451 = vmatprep.subr.mxu0 %v123
    %4452 = vmatpush1.msra.mxu0 %v122
    %4453 = vmatprep.subr.mxu0 %v127
    %4454 = vmatpush1.msra.mxu0 %v126
    %4455 = vmatprep.subr.mxu0 %v131
    %4456 = vmatpush1.msra.mxu0 %v130
    %4457 = vmatprep.subr.mxu0 %v135
    %4458 = vmatpush1.msra.mxu0 %v134
    %4459 = vmatprep.subr.mxu0 %v139
    %4460 = vmatpush1.msra.mxu0 %v138
    %4461 = vmatprep.subr.mxu0 0.0
    %4462 = vmatpush1.msra.mxu0 0.0
    %4463 = vmatprep.subr.mxu0 0.0
    %4464 = vmatpush1.msra.mxu0 0.0
    %4465 = vmatprep.subr.mxu0 0.0
    %4466 = vmatpush1.msra.mxu0 0.0
    %4467 = vmatprep.subr.mxu0 0.0
    %4468 = vmatpush1.msra.mxu0 0.0
    %4469 = vmatprep.subr.mxu0 0.0
    %4470 = vmatpush1.msra.mxu0 0.0
    %4471 = vmatprep.subr.mxu0 0.0
    %4472 = vmatpush1.msra.mxu0 0.0
    %4473 = vmatprep.subr.mxu0 0.0
    %4474 = vmatpush1.msra.mxu0 0.0
    %4475 = vmatprep.subr.mxu0 0.0
    %4476 = vmatpush1.msra.mxu0 0.0
    %4477 = vmatprep.subr.mxu0 0.0
    %4478 = vmatpush1.msra.mxu0 0.0
    %4479 = vmatprep.subr.mxu0 0.0
    %4480 = vmatpush1.msra.mxu0 0.0
    %4481 = vmatprep.subr.mxu0 0.0
    %4482 = vmatpush1.msra.mxu0 0.0
    %4483 = vmatprep.subr.mxu0 0.0
    %4484 = vmatpush1.msra.mxu0 0.0
    %4485 = vmatprep.subr.mxu0 0.0
    %4486 = vmatpush1.msra.mxu0 0.0
    %4487 = vmatprep.subr.mxu0 0.0
    %4488 = vmatpush1.msra.mxu0 0.0
    %4489 = vmatprep.subr.mxu0 0.0
    %4490 = vmatpush1.msra.mxu0 0.0
    %4491 = vmatprep.subr.mxu0 0.0
    %4492 = vmatpush1.msra.mxu0 0.0
    %4493 = vmatprep.mubr.f32.mxu0 0.0
    %4494 = vmatmul.mubr.f32.gmra.mrb[0].mxu0 %v4175
    %v4495 = vpop.f32.mrb[0].mxu0
    %v4496 = vadd.f32 0.0, %v4495
    %v4497 = vpop.f32.mrb[0].mxu0
    %v4498 = vadd.f32 0.0, %v4497
    %4499 = vdwg.mxu0
    %v4504 = vcombine.low %v4425, %v4427
    %v4505 = vcombine.low %v4496, %v4498
    %v4507 = vunpack.c.l.s4 1983009808
    %v4508 = vunpack.c.0.s8 %v4507
    %v4509 = vlaneseq
    %v4510 = vshrl.u32 %v4509, 7
    %v4511 = vsub.s32 %v4508, %v4510
    %v4512 = vrot.slane %v4504, %v4511
    %v4514 = vunpack.c.l.s4 1983009808
    %v4515 = vunpack.c.0.s8 %v4514
    %v4516 = vlaneseq
    %v4517 = vshrl.u32 %v4516, 7
    %v4518 = vsub.s32 %v4515, %v4517
    %v4519 = vrot.slane %v4505, %v4518
    %v4520 = vcombine.low %v4512, %v4519
    %v4522 = vadd.f32 %v4357, %v4520
    %v4523 = vxor.u32 %v4522, 2147483648
    %v4524 = vmul.f32 %v4523, 1.442695
    %v4525 = vpow.pop %v4524
    %v4526 = vadd.f32 %v4525, 1.0
    %v4527 = vrcp.pop %v4526
    %v4528 = vmul.f32 1.0, %v4527
    %v4530 = vrot.slane %v4522, 2
    %v4532 = vxor.u32 %v4530, 2147483648
    %v4533 = vmul.f32 %v4532, 1.442695
    %v4534 = vpow.pop %v4533
    %v4535 = vadd.f32 %v4534, 1.0
    %v4536 = vrcp.pop %v4535
    %v4537 = vmul.f32 1.0, %v4536
    %v4538 = vrot.slane %v4522, 4
    %v4540 = vtanh.pop %v4538
    %v4541 = vrot.slane %v4522, 6
    %v4543 = vxor.u32 %v4541, 2147483648
    %v4544 = vmul.f32 %v4543, 1.442695
    %v4545 = vpow.pop %v4544
    %v4546 = vadd.f32 %v4545, 1.0
    %v4547 = vrcp.pop %v4546
    %v4548 = vmul.f32 1.0, %v4547
    %v4549 = vmul.f32 %v4537, %v4173
    %v4550 = vmul.f32 %v4528, %v4540
    %v4551 = vadd.f32 %v4549, %v4550
    %v4552 = vtanh.pop %v4551
    %v4553 = vmul.f32 %v4548, %v4552
    %4555 = vrot.lane.b32.xlu0 %v4346, 64
    %v4556 = vpop.permute.xlu0 %4555
    %v4557 = vsel %vm386, %v4556, 0
    %4559 = vmatprep.subr.mxu0 %v173
    %4560 = vmatpush1.msra.mxu0 %v172
    %4561 = vmatprep.subr.mxu0 %v175
    %4562 = vmatpush1.msra.mxu0 %v174
    %4563 = vmatprep.subr.mxu0 %v177
    %4564 = vmatpush1.msra.mxu0 %v176
    %4565 = vmatprep.subr.mxu0 %v179
    %4566 = vmatpush1.msra.mxu0 %v178
    %4567 = vmatprep.subr.mxu0 %v181
    %4568 = vmatpush1.msra.mxu0 %v180
    %4569 = vmatprep.subr.mxu0 %v183
    %4570 = vmatpush1.msra.mxu0 %v182
    %4571 = vmatprep.subr.mxu0 %v185
    %4572 = vmatpush1.msra.mxu0 %v184
    %4573 = vmatprep.subr.mxu0 %v187
    %4574 = vmatpush1.msra.mxu0 %v186
    %4575 = vmatprep.subr.mxu0 0.0
    %4576 = vmatpush1.msra.mxu0 0.0
    %4577 = vmatprep.subr.mxu0 0.0
    %4578 = vmatpush1.msra.mxu0 0.0
    %4579 = vmatprep.subr.mxu0 0.0
    %4580 = vmatpush1.msra.mxu0 0.0
    %4581 = vmatprep.subr.mxu0 0.0
    %4582 = vmatpush1.msra.mxu0 0.0
    %4583 = vmatprep.subr.mxu0 0.0
    %4584 = vmatpush1.msra.mxu0 0.0
    %4585 = vmatprep.subr.mxu0 0.0
    %4586 = vmatpush1.msra.mxu0 0.0
    %4587 = vmatprep.subr.mxu0 0.0
    %4588 = vmatpush1.msra.mxu0 0.0
    %4589 = vmatprep.subr.mxu0 0.0
    %4590 = vmatpush1.msra.mxu0 0.0
    %4591 = vmatprep.subr.mxu0 0.0
    %4592 = vmatpush1.msra.mxu0 0.0
    %4593 = vmatprep.subr.mxu0 0.0
    %4594 = vmatpush1.msra.mxu0 0.0
    %4595 = vmatprep.subr.mxu0 0.0
    %4596 = vmatpush1.msra.mxu0 0.0
    %4597 = vmatprep.subr.mxu0 0.0
    %4598 = vmatpush1.msra.mxu0 0.0
    %4599 = vmatprep.subr.mxu0 0.0
    %4600 = vmatpush1.msra.mxu0 0.0
    %4601 = vmatprep.subr.mxu0 0.0
    %4602 = vmatpush1.msra.mxu0 0.0
    %4603 = vmatprep.subr.mxu0 0.0
    %4604 = vmatpush1.msra.mxu0 0.0
    %4605 = vmatprep.subr.mxu0 0.0
    %4606 = vmatpush1.msra.mxu0 0.0
    %4607 = vmatprep.subr.mxu0 0.0
    %4608 = vmatpush1.msra.mxu0 0.0
    %4609 = vmatprep.subr.mxu0 0.0
    %4610 = vmatpush1.msra.mxu0 0.0
    %4611 = vmatprep.subr.mxu0 0.0
    %4612 = vmatpush1.msra.mxu0 0.0
    %4613 = vmatprep.subr.mxu0 0.0
    %4614 = vmatpush1.msra.mxu0 0.0
    %4615 = vmatprep.subr.mxu0 0.0
    %4616 = vmatpush1.msra.mxu0 0.0
    %4617 = vmatprep.subr.mxu0 0.0
    %4618 = vmatpush1.msra.mxu0 0.0
    %4619 = vmatprep.subr.mxu0 0.0
    %4620 = vmatpush1.msra.mxu0 0.0
    %4621 = vmatprep.subr.mxu0 0.0
    %4622 = vmatpush1.msra.mxu0 0.0
    %4623 = vmatprep.mubr.f32.mxu0 0.0
    %4624 = vmatmul.mubr.f32.gmra.mrb[0].mxu0 %v4557
    %v4625 = vpop.f32.mrb[0].mxu0
    %v4626 = vadd.f32 0.0, %v4625
    %v4627 = vpop.f32.mrb[0].mxu0
    %v4628 = vadd.f32 0.0, %v4627
    %4629 = vdwg.mxu0
    %4630 = vmatprep.subr.mxu0 %v141
    %4631 = vmatpush1.msra.mxu0 %v140
    %4632 = vmatprep.subr.mxu0 %v143
    %4633 = vmatpush1.msra.mxu0 %v142
    %4634 = vmatprep.subr.mxu0 %v145
    %4635 = vmatpush1.msra.mxu0 %v144
    %4636 = vmatprep.subr.mxu0 %v147
    %4637 = vmatpush1.msra.mxu0 %v146
    %4638 = vmatprep.subr.mxu0 %v149
    %4639 = vmatpush1.msra.mxu0 %v148
    %4640 = vmatprep.subr.mxu0 %v151
    %4641 = vmatpush1.msra.mxu0 %v150
    %4642 = vmatprep.subr.mxu0 %v153
    %4643 = vmatpush1.msra.mxu0 %v152
    %4644 = vmatprep.subr.mxu0 %v155
    %4645 = vmatpush1.msra.mxu0 %v154
    %4646 = vmatprep.subr.mxu0 %v157
    %4647 = vmatpush1.msra.mxu0 %v156
    %4648 = vmatprep.subr.mxu0 %v159
    %4649 = vmatpush1.msra.mxu0 %v158
    %4650 = vmatprep.subr.mxu0 %v161
    %4651 = vmatpush1.msra.mxu0 %v160
    %4652 = vmatprep.subr.mxu0 %v163
    %4653 = vmatpush1.msra.mxu0 %v162
    %4654 = vmatprep.subr.mxu0 %v165
    %4655 = vmatpush1.msra.mxu0 %v164
    %4656 = vmatprep.subr.mxu0 %v167
    %4657 = vmatpush1.msra.mxu0 %v166
    %4658 = vmatprep.subr.mxu0 %v169
    %4659 = vmatpush1.msra.mxu0 %v168
    %4660 = vmatprep.subr.mxu0 %v171
    %4661 = vmatpush1.msra.mxu0 %v170
    %4662 = vmatprep.subr.mxu0 0.0
    %4663 = vmatpush1.msra.mxu0 0.0
    %4664 = vmatprep.subr.mxu0 0.0
    %4665 = vmatpush1.msra.mxu0 0.0
    %4666 = vmatprep.subr.mxu0 0.0
    %4667 = vmatpush1.msra.mxu0 0.0
    %4668 = vmatprep.subr.mxu0 0.0
    %4669 = vmatpush1.msra.mxu0 0.0
    %4670 = vmatprep.subr.mxu0 0.0
    %4671 = vmatpush1.msra.mxu0 0.0
    %4672 = vmatprep.subr.mxu0 0.0
    %4673 = vmatpush1.msra.mxu0 0.0
    %4674 = vmatprep.subr.mxu0 0.0
    %4675 = vmatpush1.msra.mxu0 0.0
    %4676 = vmatprep.subr.mxu0 0.0
    %4677 = vmatpush1.msra.mxu0 0.0
    %4678 = vmatprep.subr.mxu0 0.0
    %4679 = vmatpush1.msra.mxu0 0.0
    %4680 = vmatprep.subr.mxu0 0.0
    %4681 = vmatpush1.msra.mxu0 0.0
    %4682 = vmatprep.subr.mxu0 0.0
    %4683 = vmatpush1.msra.mxu0 0.0
    %4684 = vmatprep.subr.mxu0 0.0
    %4685 = vmatpush1.msra.mxu0 0.0
    %4686 = vmatprep.subr.mxu0 0.0
    %4687 = vmatpush1.msra.mxu0 0.0
    %4688 = vmatprep.subr.mxu0 0.0
    %4689 = vmatpush1.msra.mxu0 0.0
    %4690 = vmatprep.subr.mxu0 0.0
    %4691 = vmatpush1.msra.mxu0 0.0
    %4692 = vmatprep.subr.mxu0 0.0
    %4693 = vmatpush1.msra.mxu0 0.0
    %4694 = vmatprep.mubr.f32.mxu0 0.0
    %4695 = vmatmul.mubr.f32.gmra.mrb[0].mxu0 %v4553
    %v4696 = vpop.f32.mrb[0].mxu0
    %v4697 = vadd.f32 %v4626, %v4696
    %v4698 = vpop.f32.mrb[0].mxu0
    %v4699 = vadd.f32 %v4628, %v4698
    %4700 = vdwg.mxu0
    %v4701 = vadd.f32 %v4697, %v536
    %v4702 = vadd.f32 %v4699, %v540
    %v4703 = vxor.u32 %v4701, 2147483648
    %v4704 = vmul.f32 %v4703, 1.442695
    %v4705 = vpow.pop %v4704
    %v4706 = vadd.f32 %v4705, 1.0
    %v4707 = vrcp.pop %v4706
    %v4708 = vmul.f32 1.0, %v4707
    %v4709 = vtanh.pop %v4702
    %v4710 = vxor.u32 %v4702, 2147483648
    %v4711 = vmul.f32 %v4710, 1.442695
    %v4712 = vpow.pop %v4711
    %v4713 = vadd.f32 %v4712, 1.0
    %v4714 = vrcp.pop %v4713
    %v4715 = vmul.f32 1.0, %v4714
    %v4716 = vmul.f32 %v4708, %v4344
    %v4717 = vmul.f32 %v4708, %v4709
    %4719 = vrot.lane.b32.xlu0 %v4717, 64
    %v4720 = vpop.permute.xlu0 %4719
    %v4722 = vadd.f32 %v4716, %v4720
    %v4723 = vtanh.pop %v4722
    %v4724 = vmul.f32 %v4715, %v4723
    %vm4725 = vcmp.gt.f32.partialorder %v4724, 0.0
    %v4726 = vmul.f32 %v4724, 0.1
    %v4727 = vsel %vm4725, %v4724, %v4726
    %4729 = vrot.lane.b32.xlu0 %v4727, 64
    %v4730 = vpop.permute.xlu0 %4729
    %s4732 = scalar_lea.vmem [#allocation10], 22
    %4733 = vst.msk [vmem:[%s4732] sm:$0x3] %vm574, %v4730
    %s4734 = scalar_lea.vmem [#allocation2], 96
    %v4735 = vld [vmem:[%s4734] sm:$0xff]
    %4736 = vmatprep.subr.mxu0 %v77
    %4737 = vmatpush1.msra.mxu0 %v76
    %4738 = vmatprep.subr.mxu0 %v81
    %4739 = vmatpush1.msra.mxu0 %v80
    %4740 = vmatprep.subr.mxu0 %v85
    %4741 = vmatpush1.msra.mxu0 %v84
    %4742 = vmatprep.subr.mxu0 %v89
    %4743 = vmatpush1.msra.mxu0 %v88
    %4744 = vmatprep.subr.mxu0 %v93
    %4745 = vmatpush1.msra.mxu0 %v92
    %4746 = vmatprep.subr.mxu0 %v97
    %4747 = vmatpush1.msra.mxu0 %v96
    %4748 = vmatprep.subr.mxu0 %v101
    %4749 = vmatpush1.msra.mxu0 %v100
    %4750 = vmatprep.subr.mxu0 %v105
    %4751 = vmatpush1.msra.mxu0 %v104
    %4752 = vmatprep.subr.mxu0 %v109
    %4753 = vmatpush1.msra.mxu0 %v108
    %4754 = vmatprep.subr.mxu0 %v113
    %4755 = vmatpush1.msra.mxu0 %v112
    %4756 = vmatprep.subr.mxu0 %v117
    %4757 = vmatpush1.msra.mxu0 %v116
    %4758 = vmatprep.subr.mxu0 %v121
    %4759 = vmatpush1.msra.mxu0 %v120
    %4760 = vmatprep.subr.mxu0 %v125
    %4761 = vmatpush1.msra.mxu0 %v124
    %4762 = vmatprep.subr.mxu0 %v129
    %4763 = vmatpush1.msra.mxu0 %v128
    %4764 = vmatprep.subr.mxu0 %v133
    %4765 = vmatpush1.msra.mxu0 %v132
    %4766 = vmatprep.subr.mxu0 %v137
    %4767 = vmatpush1.msra.mxu0 %v136
    %4768 = vmatprep.subr.mxu0 0.0
    %4769 = vmatpush1.msra.mxu0 0.0
    %4770 = vmatprep.subr.mxu0 0.0
    %4771 = vmatpush1.msra.mxu0 0.0
    %4772 = vmatprep.subr.mxu0 0.0
    %4773 = vmatpush1.msra.mxu0 0.0
    %4774 = vmatprep.subr.mxu0 0.0
    %4775 = vmatpush1.msra.mxu0 0.0
    %4776 = vmatprep.subr.mxu0 0.0
    %4777 = vmatpush1.msra.mxu0 0.0
    %4778 = vmatprep.subr.mxu0 0.0
    %4779 = vmatpush1.msra.mxu0 0.0
    %4780 = vmatprep.subr.mxu0 0.0
    %4781 = vmatpush1.msra.mxu0 0.0
    %4782 = vmatprep.subr.mxu0 0.0
    %4783 = vmatpush1.msra.mxu0 0.0
    %4784 = vmatprep.subr.mxu0 0.0
    %4785 = vmatpush1.msra.mxu0 0.0
    %4786 = vmatprep.subr.mxu0 0.0
    %4787 = vmatpush1.msra.mxu0 0.0
    %4788 = vmatprep.subr.mxu0 0.0
    %4789 = vmatpush1.msra.mxu0 0.0
    %4790 = vmatprep.subr.mxu0 0.0
    %4791 = vmatpush1.msra.mxu0 0.0
    %4792 = vmatprep.subr.mxu0 0.0
    %4793 = vmatpush1.msra.mxu0 0.0
    %4794 = vmatprep.subr.mxu0 0.0
    %4795 = vmatpush1.msra.mxu0 0.0
    %4796 = vmatprep.subr.mxu0 0.0
    %4797 = vmatpush1.msra.mxu0 0.0
    %4798 = vmatprep.subr.mxu0 0.0
    %4799 = vmatpush1.msra.mxu0 0.0
    %4800 = vmatprep.mubr.f32.mxu0 0.0
    %4801 = vmatmul.mubr.f32.gmra.mrb[0].mxu0 %v4553
    %v4802 = vpop.f32.mrb[0].mxu0
    %v4803 = vadd.f32 0.0, %v4802
    %v4804 = vpop.f32.mrb[0].mxu0
    %v4805 = vadd.f32 0.0, %v4804
    %4806 = vdwg.mxu0
    %4807 = vmatprep.subr.mxu0 %v79
    %4808 = vmatpush1.msra.mxu0 %v78
    %4809 = vmatprep.subr.mxu0 %v83
    %4810 = vmatpush1.msra.mxu0 %v82
    %4811 = vmatprep.subr.mxu0 %v87
    %4812 = vmatpush1.msra.mxu0 %v86
    %4813 = vmatprep.subr.mxu0 %v91
    %4814 = vmatpush1.msra.mxu0 %v90
    %4815 = vmatprep.subr.mxu0 %v95
    %4816 = vmatpush1.msra.mxu0 %v94
    %4817 = vmatprep.subr.mxu0 %v99
    %4818 = vmatpush1.msra.mxu0 %v98
    %4819 = vmatprep.subr.mxu0 %v103
    %4820 = vmatpush1.msra.mxu0 %v102
    %4821 = vmatprep.subr.mxu0 %v107
    %4822 = vmatpush1.msra.mxu0 %v106
    %4823 = vmatprep.subr.mxu0 %v111
    %4824 = vmatpush1.msra.mxu0 %v110
    %4825 = vmatprep.subr.mxu0 %v115
    %4826 = vmatpush1.msra.mxu0 %v114
    %4827 = vmatprep.subr.mxu0 %v119
    %4828 = vmatpush1.msra.mxu0 %v118
    %4829 = vmatprep.subr.mxu0 %v123
    %4830 = vmatpush1.msra.mxu0 %v122
    %4831 = vmatprep.subr.mxu0 %v127
    %4832 = vmatpush1.msra.mxu0 %v126
    %4833 = vmatprep.subr.mxu0 %v131
    %4834 = vmatpush1.msra.mxu0 %v130
    %4835 = vmatprep.subr.mxu0 %v135
    %4836 = vmatpush1.msra.mxu0 %v134
    %4837 = vmatprep.subr.mxu0 %v139
    %4838 = vmatpush1.msra.mxu0 %v138
    %4839 = vmatprep.subr.mxu0 0.0
    %4840 = vmatpush1.msra.mxu0 0.0
    %4841 = vmatprep.subr.mxu0 0.0
    %4842 = vmatpush1.msra.mxu0 0.0
    %4843 = vmatprep.subr.mxu0 0.0
    %4844 = vmatpush1.msra.mxu0 0.0
    %4845 = vmatprep.subr.mxu0 0.0
    %4846 = vmatpush1.msra.mxu0 0.0
    %4847 = vmatprep.subr.mxu0 0.0
    %4848 = vmatpush1.msra.mxu0 0.0
    %4849 = vmatprep.subr.mxu0 0.0
    %4850 = vmatpush1.msra.mxu0 0.0
    %4851 = vmatprep.subr.mxu0 0.0
    %4852 = vmatpush1.msra.mxu0 0.0
    %4853 = vmatprep.subr.mxu0 0.0
    %4854 = vmatpush1.msra.mxu0 0.0
    %4855 = vmatprep.subr.mxu0 0.0
    %4856 = vmatpush1.msra.mxu0 0.0
    %4857 = vmatprep.subr.mxu0 0.0
    %4858 = vmatpush1.msra.mxu0 0.0
    %4859 = vmatprep.subr.mxu0 0.0
    %4860 = vmatpush1.msra.mxu0 0.0
    %4861 = vmatprep.subr.mxu0 0.0
    %4862 = vmatpush1.msra.mxu0 0.0
    %4863 = vmatprep.subr.mxu0 0.0
    %4864 = vmatpush1.msra.mxu0 0.0
    %4865 = vmatprep.subr.mxu0 0.0
    %4866 = vmatpush1.msra.mxu0 0.0
    %4867 = vmatprep.subr.mxu0 0.0
    %4868 = vmatpush1.msra.mxu0 0.0
    %4869 = vmatprep.subr.mxu0 0.0
    %4870 = vmatpush1.msra.mxu0 0.0
    %4871 = vmatprep.mubr.f32.mxu0 0.0
    %4872 = vmatmul.mubr.f32.gmra.mrb[0].mxu0 %v4553
    %v4873 = vpop.f32.mrb[0].mxu0
    %v4874 = vadd.f32 0.0, %v4873
    %v4875 = vpop.f32.mrb[0].mxu0
    %v4876 = vadd.f32 0.0, %v4875
    %4877 = vdwg.mxu0
    %v4882 = vcombine.low %v4803, %v4805
    %v4883 = vcombine.low %v4874, %v4876
    %v4885 = vunpack.c.l.s4 1983009808
    %v4886 = vunpack.c.0.s8 %v4885
    %v4887 = vlaneseq
    %v4888 = vshrl.u32 %v4887, 7
    %v4889 = vsub.s32 %v4886, %v4888
    %v4890 = vrot.slane %v4882, %v4889
    %v4892 = vunpack.c.l.s4 1983009808
    %v4893 = vunpack.c.0.s8 %v4892
    %v4894 = vlaneseq
    %v4895 = vshrl.u32 %v4894, 7
    %v4896 = vsub.s32 %v4893, %v4895
    %v4897 = vrot.slane %v4883, %v4896
    %v4898 = vcombine.low %v4890, %v4897
    %v4900 = vadd.f32 %v4735, %v4898
    %v4901 = vxor.u32 %v4900, 2147483648
    %v4902 = vmul.f32 %v4901, 1.442695
    %v4903 = vpow.pop %v4902
    %v4904 = vadd.f32 %v4903, 1.0
    %v4905 = vrcp.pop %v4904
    %v4906 = vmul.f32 1.0, %v4905
    %v4908 = vrot.slane %v4900, 2
    %v4910 = vxor.u32 %v4908, 2147483648
    %v4911 = vmul.f32 %v4910, 1.442695
    %v4912 = vpow.pop %v4911
    %v4913 = vadd.f32 %v4912, 1.0
    %v4914 = vrcp.pop %v4913
    %v4915 = vmul.f32 1.0, %v4914
    %v4916 = vrot.slane %v4900, 4
    %v4918 = vtanh.pop %v4916
    %v4919 = vrot.slane %v4900, 6
    %v4921 = vxor.u32 %v4919, 2147483648
    %v4922 = vmul.f32 %v4921, 1.442695
    %v4923 = vpow.pop %v4922
    %v4924 = vadd.f32 %v4923, 1.0
    %v4925 = vrcp.pop %v4924
    %v4926 = vmul.f32 1.0, %v4925
    %v4927 = vmul.f32 %v4915, %v4551
    %v4928 = vmul.f32 %v4906, %v4918
    %v4929 = vadd.f32 %v4927, %v4928
    %v4930 = vtanh.pop %v4929
    %v4931 = vmul.f32 %v4926, %v4930
    %4933 = vrot.lane.b32.xlu0 %v4724, 64
    %v4934 = vpop.permute.xlu0 %4933
    %v4935 = vsel %vm386, %v4934, 0
    %4937 = vmatprep.subr.mxu0 %v173
    %4938 = vmatpush1.msra.mxu0 %v172
    %4939 = vmatprep.subr.mxu0 %v175
    %4940 = vmatpush1.msra.mxu0 %v174
    %4941 = vmatprep.subr.mxu0 %v177
    %4942 = vmatpush1.msra.mxu0 %v176
    %4943 = vmatprep.subr.mxu0 %v179
    %4944 = vmatpush1.msra.mxu0 %v178
    %4945 = vmatprep.subr.mxu0 %v181
    %4946 = vmatpush1.msra.mxu0 %v180
    %4947 = vmatprep.subr.mxu0 %v183
    %4948 = vmatpush1.msra.mxu0 %v182
    %4949 = vmatprep.subr.mxu0 %v185
    %4950 = vmatpush1.msra.mxu0 %v184
    %4951 = vmatprep.subr.mxu0 %v187
    %4952 = vmatpush1.msra.mxu0 %v186
    %4953 = vmatprep.subr.mxu0 0.0
    %4954 = vmatpush1.msra.mxu0 0.0
    %4955 = vmatprep.subr.mxu0 0.0
    %4956 = vmatpush1.msra.mxu0 0.0
    %4957 = vmatprep.subr.mxu0 0.0
    %4958 = vmatpush1.msra.mxu0 0.0
    %4959 = vmatprep.subr.mxu0 0.0
    %4960 = vmatpush1.msra.mxu0 0.0
    %4961 = vmatprep.subr.mxu0 0.0
    %4962 = vmatpush1.msra.mxu0 0.0
    %4963 = vmatprep.subr.mxu0 0.0
    %4964 = vmatpush1.msra.mxu0 0.0
    %4965 = vmatprep.subr.mxu0 0.0
    %4966 = vmatpush1.msra.mxu0 0.0
    %4967 = vmatprep.subr.mxu0 0.0
    %4968 = vmatpush1.msra.mxu0 0.0
    %4969 = vmatprep.subr.mxu0 0.0
    %4970 = vmatpush1.msra.mxu0 0.0
    %4971 = vmatprep.subr.mxu0 0.0
    %4972 = vmatpush1.msra.mxu0 0.0
    %4973 = vmatprep.subr.mxu0 0.0
    %4974 = vmatpush1.msra.mxu0 0.0
    %4975 = vmatprep.subr.mxu0 0.0
    %4976 = vmatpush1.msra.mxu0 0.0
    %4977 = vmatprep.subr.mxu0 0.0
    %4978 = vmatpush1.msra.mxu0 0.0
    %4979 = vmatprep.subr.mxu0 0.0
    %4980 = vmatpush1.msra.mxu0 0.0
    %4981 = vmatprep.subr.mxu0 0.0
    %4982 = vmatpush1.msra.mxu0 0.0
    %4983 = vmatprep.subr.mxu0 0.0
    %4984 = vmatpush1.msra.mxu0 0.0
    %4985 = vmatprep.subr.mxu0 0.0
    %4986 = vmatpush1.msra.mxu0 0.0
    %4987 = vmatprep.subr.mxu0 0.0
    %4988 = vmatpush1.msra.mxu0 0.0
    %4989 = vmatprep.subr.mxu0 0.0
    %4990 = vmatpush1.msra.mxu0 0.0
    %4991 = vmatprep.subr.mxu0 0.0
    %4992 = vmatpush1.msra.mxu0 0.0
    %4993 = vmatprep.subr.mxu0 0.0
    %4994 = vmatpush1.msra.mxu0 0.0
    %4995 = vmatprep.subr.mxu0 0.0
    %4996 = vmatpush1.msra.mxu0 0.0
    %4997 = vmatprep.subr.mxu0 0.0
    %4998 = vmatpush1.msra.mxu0 0.0
    %4999 = vmatprep.subr.mxu0 0.0
    %5000 = vmatpush1.msra.mxu0 0.0
    %5001 = vmatprep.mubr.f32.mxu0 0.0
    %5002 = vmatmul.mubr.f32.gmra.mrb[0].mxu0 %v4935
    %v5003 = vpop.f32.mrb[0].mxu0
    %v5004 = vadd.f32 0.0, %v5003
    %v5005 = vpop.f32.mrb[0].mxu0
    %v5006 = vadd.f32 0.0, %v5005
    %5007 = vdwg.mxu0
    %5008 = vmatprep.subr.mxu0 %v141
    %5009 = vmatpush1.msra.mxu0 %v140
    %5010 = vmatprep.subr.mxu0 %v143
    %5011 = vmatpush1.msra.mxu0 %v142
    %5012 = vmatprep.subr.mxu0 %v145
    %5013 = vmatpush1.msra.mxu0 %v144
    %5014 = vmatprep.subr.mxu0 %v147
    %5015 = vmatpush1.msra.mxu0 %v146
    %5016 = vmatprep.subr.mxu0 %v149
    %5017 = vmatpush1.msra.mxu0 %v148
    %5018 = vmatprep.subr.mxu0 %v151
    %5019 = vmatpush1.msra.mxu0 %v150
    %5020 = vmatprep.subr.mxu0 %v153
    %5021 = vmatpush1.msra.mxu0 %v152
    %5022 = vmatprep.subr.mxu0 %v155
    %5023 = vmatpush1.msra.mxu0 %v154
    %5024 = vmatprep.subr.mxu0 %v157
    %5025 = vmatpush1.msra.mxu0 %v156
    %5026 = vmatprep.subr.mxu0 %v159
    %5027 = vmatpush1.msra.mxu0 %v158
    %5028 = vmatprep.subr.mxu0 %v161
    %5029 = vmatpush1.msra.mxu0 %v160
    %5030 = vmatprep.subr.mxu0 %v163
    %5031 = vmatpush1.msra.mxu0 %v162
    %5032 = vmatprep.subr.mxu0 %v165
    %5033 = vmatpush1.msra.mxu0 %v164
    %5034 = vmatprep.subr.mxu0 %v167
    %5035 = vmatpush1.msra.mxu0 %v166
    %5036 = vmatprep.subr.mxu0 %v169
    %5037 = vmatpush1.msra.mxu0 %v168
    %5038 = vmatprep.subr.mxu0 %v171
    %5039 = vmatpush1.msra.mxu0 %v170
    %5040 = vmatprep.subr.mxu0 0.0
    %5041 = vmatpush1.msra.mxu0 0.0
    %5042 = vmatprep.subr.mxu0 0.0
    %5043 = vmatpush1.msra.mxu0 0.0
    %5044 = vmatprep.subr.mxu0 0.0
    %5045 = vmatpush1.msra.mxu0 0.0
    %5046 = vmatprep.subr.mxu0 0.0
    %5047 = vmatpush1.msra.mxu0 0.0
    %5048 = vmatprep.subr.mxu0 0.0
    %5049 = vmatpush1.msra.mxu0 0.0
    %5050 = vmatprep.subr.mxu0 0.0
    %5051 = vmatpush1.msra.mxu0 0.0
    %5052 = vmatprep.subr.mxu0 0.0
    %5053 = vmatpush1.msra.mxu0 0.0
    %5054 = vmatprep.subr.mxu0 0.0
    %5055 = vmatpush1.msra.mxu0 0.0
    %5056 = vmatprep.subr.mxu0 0.0
    %5057 = vmatpush1.msra.mxu0 0.0
    %5058 = vmatprep.subr.mxu0 0.0
    %5059 = vmatpush1.msra.mxu0 0.0
    %5060 = vmatprep.subr.mxu0 0.0
    %5061 = vmatpush1.msra.mxu0 0.0
    %5062 = vmatprep.subr.mxu0 0.0
    %5063 = vmatpush1.msra.mxu0 0.0
    %5064 = vmatprep.subr.mxu0 0.0
    %5065 = vmatpush1.msra.mxu0 0.0
    %5066 = vmatprep.subr.mxu0 0.0
    %5067 = vmatpush1.msra.mxu0 0.0
    %5068 = vmatprep.subr.mxu0 0.0
    %5069 = vmatpush1.msra.mxu0 0.0
    %5070 = vmatprep.subr.mxu0 0.0
    %5071 = vmatpush1.msra.mxu0 0.0
    %5072 = vmatprep.mubr.f32.mxu0 0.0
    %5073 = vmatmul.mubr.f32.gmra.mrb[0].mxu0 %v4931
    %v5074 = vpop.f32.mrb[0].mxu0
    %v5075 = vadd.f32 %v5004, %v5074
    %v5076 = vpop.f32.mrb[0].mxu0
    %v5077 = vadd.f32 %v5006, %v5076
    %5078 = vdwg.mxu0
    %v5079 = vadd.f32 %v5075, %v536
    %v5080 = vadd.f32 %v5077, %v540
    %v5081 = vxor.u32 %v5079, 2147483648
    %v5082 = vmul.f32 %v5081, 1.442695
    %v5083 = vpow.pop %v5082
    %v5084 = vadd.f32 %v5083, 1.0
    %v5085 = vrcp.pop %v5084
    %v5086 = vmul.f32 1.0, %v5085
    %v5087 = vtanh.pop %v5080
    %v5088 = vxor.u32 %v5080, 2147483648
    %v5089 = vmul.f32 %v5088, 1.442695
    %v5090 = vpow.pop %v5089
    %v5091 = vadd.f32 %v5090, 1.0
    %v5092 = vrcp.pop %v5091
    %v5093 = vmul.f32 1.0, %v5092
    %v5094 = vmul.f32 %v5086, %v4722
    %v5095 = vmul.f32 %v5086, %v5087
    %5097 = vrot.lane.b32.xlu0 %v5095, 64
    %v5098 = vpop.permute.xlu0 %5097
    %v5100 = vadd.f32 %v5094, %v5098
    %v5101 = vtanh.pop %v5100
    %v5102 = vmul.f32 %v5093, %v5101
    %vm5103 = vcmp.gt.f32.partialorder %v5102, 0.0
    %v5104 = vmul.f32 %v5102, 0.1
    %v5105 = vsel %vm5103, %v5102, %v5104
    %5107 = vrot.lane.b32.xlu0 %v5105, 64
    %v5108 = vpop.permute.xlu0 %5107
    %s5110 = scalar_lea.vmem [#allocation10], 24
    %5111 = vst.msk [vmem:[%s5110] sm:$0x3] %vm574, %v5108
    %s5112 = scalar_lea.vmem [#allocation2], 104
    %v5113 = vld [vmem:[%s5112] sm:$0xff]
    %5114 = vmatprep.subr.mxu0 %v77
    %5115 = vmatpush1.msra.mxu0 %v76
    %5116 = vmatprep.subr.mxu0 %v81
    %5117 = vmatpush1.msra.mxu0 %v80
    %5118 = vmatprep.subr.mxu0 %v85
    %5119 = vmatpush1.msra.mxu0 %v84
    %5120 = vmatprep.subr.mxu0 %v89
    %5121 = vmatpush1.msra.mxu0 %v88
    %5122 = vmatprep.subr.mxu0 %v93
    %5123 = vmatpush1.msra.mxu0 %v92
    %5124 = vmatprep.subr.mxu0 %v97
    %5125 = vmatpush1.msra.mxu0 %v96
    %5126 = vmatprep.subr.mxu0 %v101
    %5127 = vmatpush1.msra.mxu0 %v100
    %5128 = vmatprep.subr.mxu0 %v105
    %5129 = vmatpush1.msra.mxu0 %v104
    %5130 = vmatprep.subr.mxu0 %v109
    %5131 = vmatpush1.msra.mxu0 %v108
    %5132 = vmatprep.subr.mxu0 %v113
    %5133 = vmatpush1.msra.mxu0 %v112
    %5134 = vmatprep.subr.mxu0 %v117
    %5135 = vmatpush1.msra.mxu0 %v116
    %5136 = vmatprep.subr.mxu0 %v121
    %5137 = vmatpush1.msra.mxu0 %v120
    %5138 = vmatprep.subr.mxu0 %v125
    %5139 = vmatpush1.msra.mxu0 %v124
    %5140 = vmatprep.subr.mxu0 %v129
    %5141 = vmatpush1.msra.mxu0 %v128
    %5142 = vmatprep.subr.mxu0 %v133
    %5143 = vmatpush1.msra.mxu0 %v132
    %5144 = vmatprep.subr.mxu0 %v137
    %5145 = vmatpush1.msra.mxu0 %v136
    %5146 = vmatprep.subr.mxu0 0.0
    %5147 = vmatpush1.msra.mxu0 0.0
    %5148 = vmatprep.subr.mxu0 0.0
    %5149 = vmatpush1.msra.mxu0 0.0
    %5150 = vmatprep.subr.mxu0 0.0
    %5151 = vmatpush1.msra.mxu0 0.0
    %5152 = vmatprep.subr.mxu0 0.0
    %5153 = vmatpush1.msra.mxu0 0.0
    %5154 = vmatprep.subr.mxu0 0.0
    %5155 = vmatpush1.msra.mxu0 0.0
    %5156 = vmatprep.subr.mxu0 0.0
    %5157 = vmatpush1.msra.mxu0 0.0
    %5158 = vmatprep.subr.mxu0 0.0
    %5159 = vmatpush1.msra.mxu0 0.0
    %5160 = vmatprep.subr.mxu0 0.0
    %5161 = vmatpush1.msra.mxu0 0.0
    %5162 = vmatprep.subr.mxu0 0.0
    %5163 = vmatpush1.msra.mxu0 0.0
    %5164 = vmatprep.subr.mxu0 0.0
    %5165 = vmatpush1.msra.mxu0 0.0
    %5166 = vmatprep.subr.mxu0 0.0
    %5167 = vmatpush1.msra.mxu0 0.0
    %5168 = vmatprep.subr.mxu0 0.0
    %5169 = vmatpush1.msra.mxu0 0.0
    %5170 = vmatprep.subr.mxu0 0.0
    %5171 = vmatpush1.msra.mxu0 0.0
    %5172 = vmatprep.subr.mxu0 0.0
    %5173 = vmatpush1.msra.mxu0 0.0
    %5174 = vmatprep.subr.mxu0 0.0
    %5175 = vmatpush1.msra.mxu0 0.0
    %5176 = vmatprep.subr.mxu0 0.0
    %5177 = vmatpush1.msra.mxu0 0.0
    %5178 = vmatprep.mubr.f32.mxu0 0.0
    %5179 = vmatmul.mubr.f32.gmra.mrb[0].mxu0 %v4931
    %v5180 = vpop.f32.mrb[0].mxu0
    %v5181 = vadd.f32 0.0, %v5180
    %v5182 = vpop.f32.mrb[0].mxu0
    %v5183 = vadd.f32 0.0, %v5182
    %5184 = vdwg.mxu0
    %5185 = vmatprep.subr.mxu0 %v79
    %5186 = vmatpush1.msra.mxu0 %v78
    %5187 = vmatprep.subr.mxu0 %v83
    %5188 = vmatpush1.msra.mxu0 %v82
    %5189 = vmatprep.subr.mxu0 %v87
    %5190 = vmatpush1.msra.mxu0 %v86
    %5191 = vmatprep.subr.mxu0 %v91
    %5192 = vmatpush1.msra.mxu0 %v90
    %5193 = vmatprep.subr.mxu0 %v95
    %5194 = vmatpush1.msra.mxu0 %v94
    %5195 = vmatprep.subr.mxu0 %v99
    %5196 = vmatpush1.msra.mxu0 %v98
    %5197 = vmatprep.subr.mxu0 %v103
    %5198 = vmatpush1.msra.mxu0 %v102
    %5199 = vmatprep.subr.mxu0 %v107
    %5200 = vmatpush1.msra.mxu0 %v106
    %5201 = vmatprep.subr.mxu0 %v111
    %5202 = vmatpush1.msra.mxu0 %v110
    %5203 = vmatprep.subr.mxu0 %v115
    %5204 = vmatpush1.msra.mxu0 %v114
    %5205 = vmatprep.subr.mxu0 %v119
    %5206 = vmatpush1.msra.mxu0 %v118
    %5207 = vmatprep.subr.mxu0 %v123
    %5208 = vmatpush1.msra.mxu0 %v122
    %5209 = vmatprep.subr.mxu0 %v127
    %5210 = vmatpush1.msra.mxu0 %v126
    %5211 = vmatprep.subr.mxu0 %v131
    %5212 = vmatpush1.msra.mxu0 %v130
    %5213 = vmatprep.subr.mxu0 %v135
    %5214 = vmatpush1.msra.mxu0 %v134
    %5215 = vmatprep.subr.mxu0 %v139
    %5216 = vmatpush1.msra.mxu0 %v138
    %5217 = vmatprep.subr.mxu0 0.0
    %5218 = vmatpush1.msra.mxu0 0.0
    %5219 = vmatprep.subr.mxu0 0.0
    %5220 = vmatpush1.msra.mxu0 0.0
    %5221 = vmatprep.subr.mxu0 0.0
    %5222 = vmatpush1.msra.mxu0 0.0
    %5223 = vmatprep.subr.mxu0 0.0
    %5224 = vmatpush1.msra.mxu0 0.0
    %5225 = vmatprep.subr.mxu0 0.0
    %5226 = vmatpush1.msra.mxu0 0.0
    %5227 = vmatprep.subr.mxu0 0.0
    %5228 = vmatpush1.msra.mxu0 0.0
    %5229 = vmatprep.subr.mxu0 0.0
    %5230 = vmatpush1.msra.mxu0 0.0
    %5231 = vmatprep.subr.mxu0 0.0
    %5232 = vmatpush1.msra.mxu0 0.0
    %5233 = vmatprep.subr.mxu0 0.0
    %5234 = vmatpush1.msra.mxu0 0.0
    %5235 = vmatprep.subr.mxu0 0.0
    %5236 = vmatpush1.msra.mxu0 0.0
    %5237 = vmatprep.subr.mxu0 0.0
    %5238 = vmatpush1.msra.mxu0 0.0
    %5239 = vmatprep.subr.mxu0 0.0
    %5240 = vmatpush1.msra.mxu0 0.0
    %5241 = vmatprep.subr.mxu0 0.0
    %5242 = vmatpush1.msra.mxu0 0.0
    %5243 = vmatprep.subr.mxu0 0.0
    %5244 = vmatpush1.msra.mxu0 0.0
    %5245 = vmatprep.subr.mxu0 0.0
    %5246 = vmatpush1.msra.mxu0 0.0
    %5247 = vmatprep.subr.mxu0 0.0
    %5248 = vmatpush1.msra.mxu0 0.0
    %5249 = vmatprep.mubr.f32.mxu0 0.0
    %5250 = vmatmul.mubr.f32.gmra.mrb[0].mxu0 %v4931
    %v5251 = vpop.f32.mrb[0].mxu0
    %v5252 = vadd.f32 0.0, %v5251
    %v5253 = vpop.f32.mrb[0].mxu0
    %v5254 = vadd.f32 0.0, %v5253
    %5255 = vdwg.mxu0
    %v5260 = vcombine.low %v5181, %v5183
    %v5261 = vcombine.low %v5252, %v5254
    %v5263 = vunpack.c.l.s4 1983009808
    %v5264 = vunpack.c.0.s8 %v5263
    %v5265 = vlaneseq
    %v5266 = vshrl.u32 %v5265, 7
    %v5267 = vsub.s32 %v5264, %v5266
    %v5268 = vrot.slane %v5260, %v5267
    %v5270 = vunpack.c.l.s4 1983009808
    %v5271 = vunpack.c.0.s8 %v5270
    %v5272 = vlaneseq
    %v5273 = vshrl.u32 %v5272, 7
    %v5274 = vsub.s32 %v5271, %v5273
    %v5275 = vrot.slane %v5261, %v5274
    %v5276 = vcombine.low %v5268, %v5275
    %v5278 = vadd.f32 %v5113, %v5276
    %v5279 = vxor.u32 %v5278, 2147483648
    %v5280 = vmul.f32 %v5279, 1.442695
    %v5281 = vpow.pop %v5280
    %v5282 = vadd.f32 %v5281, 1.0
    %v5283 = vrcp.pop %v5282
    %v5284 = vmul.f32 1.0, %v5283
    %v5286 = vrot.slane %v5278, 2
    %v5288 = vxor.u32 %v5286, 2147483648
    %v5289 = vmul.f32 %v5288, 1.442695
    %v5290 = vpow.pop %v5289
    %v5291 = vadd.f32 %v5290, 1.0
    %v5292 = vrcp.pop %v5291
    %v5293 = vmul.f32 1.0, %v5292
    %v5294 = vrot.slane %v5278, 4
    %v5296 = vtanh.pop %v5294
    %v5297 = vrot.slane %v5278, 6
    %v5299 = vxor.u32 %v5297, 2147483648
    %v5300 = vmul.f32 %v5299, 1.442695
    %v5301 = vpow.pop %v5300
    %v5302 = vadd.f32 %v5301, 1.0
    %v5303 = vrcp.pop %v5302
    %v5304 = vmul.f32 1.0, %v5303
    %v5305 = vmul.f32 %v5293, %v4929
    %v5306 = vmul.f32 %v5284, %v5296
    %v5307 = vadd.f32 %v5305, %v5306
    %v5308 = vtanh.pop %v5307
    %v5309 = vmul.f32 %v5304, %v5308
    %5311 = vrot.lane.b32.xlu0 %v5102, 64
    %v5312 = vpop.permute.xlu0 %5311
    %v5313 = vsel %vm386, %v5312, 0
    %5315 = vmatprep.subr.mxu0 %v173
    %5316 = vmatpush1.msra.mxu0 %v172
    %5317 = vmatprep.subr.mxu0 %v175
    %5318 = vmatpush1.msra.mxu0 %v174
    %5319 = vmatprep.subr.mxu0 %v177
    %5320 = vmatpush1.msra.mxu0 %v176
    %5321 = vmatprep.subr.mxu0 %v179
    %5322 = vmatpush1.msra.mxu0 %v178
    %5323 = vmatprep.subr.mxu0 %v181
    %5324 = vmatpush1.msra.mxu0 %v180
    %5325 = vmatprep.subr.mxu0 %v183
    %5326 = vmatpush1.msra.mxu0 %v182
    %5327 = vmatprep.subr.mxu0 %v185
    %5328 = vmatpush1.msra.mxu0 %v184
    %5329 = vmatprep.subr.mxu0 %v187
    %5330 = vmatpush1.msra.mxu0 %v186
    %5331 = vmatprep.subr.mxu0 0.0
    %5332 = vmatpush1.msra.mxu0 0.0
    %5333 = vmatprep.subr.mxu0 0.0
    %5334 = vmatpush1.msra.mxu0 0.0
    %5335 = vmatprep.subr.mxu0 0.0
    %5336 = vmatpush1.msra.mxu0 0.0
    %5337 = vmatprep.subr.mxu0 0.0
    %5338 = vmatpush1.msra.mxu0 0.0
    %5339 = vmatprep.subr.mxu0 0.0
    %5340 = vmatpush1.msra.mxu0 0.0
    %5341 = vmatprep.subr.mxu0 0.0
    %5342 = vmatpush1.msra.mxu0 0.0
    %5343 = vmatprep.subr.mxu0 0.0
    %5344 = vmatpush1.msra.mxu0 0.0
    %5345 = vmatprep.subr.mxu0 0.0
    %5346 = vmatpush1.msra.mxu0 0.0
    %5347 = vmatprep.subr.mxu0 0.0
    %5348 = vmatpush1.msra.mxu0 0.0
    %5349 = vmatprep.subr.mxu0 0.0
    %5350 = vmatpush1.msra.mxu0 0.0
    %5351 = vmatprep.subr.mxu0 0.0
    %5352 = vmatpush1.msra.mxu0 0.0
    %5353 = vmatprep.subr.mxu0 0.0
    %5354 = vmatpush1.msra.mxu0 0.0
    %5355 = vmatprep.subr.mxu0 0.0
    %5356 = vmatpush1.msra.mxu0 0.0
    %5357 = vmatprep.subr.mxu0 0.0
    %5358 = vmatpush1.msra.mxu0 0.0
    %5359 = vmatprep.subr.mxu0 0.0
    %5360 = vmatpush1.msra.mxu0 0.0
    %5361 = vmatprep.subr.mxu0 0.0
    %5362 = vmatpush1.msra.mxu0 0.0
    %5363 = vmatprep.subr.mxu0 0.0
    %5364 = vmatpush1.msra.mxu0 0.0
    %5365 = vmatprep.subr.mxu0 0.0
    %5366 = vmatpush1.msra.mxu0 0.0
    %5367 = vmatprep.subr.mxu0 0.0
    %5368 = vmatpush1.msra.mxu0 0.0
    %5369 = vmatprep.subr.mxu0 0.0
    %5370 = vmatpush1.msra.mxu0 0.0
    %5371 = vmatprep.subr.mxu0 0.0
    %5372 = vmatpush1.msra.mxu0 0.0
    %5373 = vmatprep.subr.mxu0 0.0
    %5374 = vmatpush1.msra.mxu0 0.0
    %5375 = vmatprep.subr.mxu0 0.0
    %5376 = vmatpush1.msra.mxu0 0.0
    %5377 = vmatprep.subr.mxu0 0.0
    %5378 = vmatpush1.msra.mxu0 0.0
    %5379 = vmatprep.mubr.f32.mxu0 0.0
    %5380 = vmatmul.mubr.f32.gmra.mrb[0].mxu0 %v5313
    %v5381 = vpop.f32.mrb[0].mxu0
    %v5382 = vadd.f32 0.0, %v5381
    %v5383 = vpop.f32.mrb[0].mxu0
    %v5384 = vadd.f32 0.0, %v5383
    %5385 = vdwg.mxu0
    %5386 = vmatprep.subr.mxu0 %v141
    %5387 = vmatpush1.msra.mxu0 %v140
    %5388 = vmatprep.subr.mxu0 %v143
    %5389 = vmatpush1.msra.mxu0 %v142
    %5390 = vmatprep.subr.mxu0 %v145
    %5391 = vmatpush1.msra.mxu0 %v144
    %5392 = vmatprep.subr.mxu0 %v147
    %5393 = vmatpush1.msra.mxu0 %v146
    %5394 = vmatprep.subr.mxu0 %v149
    %5395 = vmatpush1.msra.mxu0 %v148
    %5396 = vmatprep.subr.mxu0 %v151
    %5397 = vmatpush1.msra.mxu0 %v150
    %5398 = vmatprep.subr.mxu0 %v153
    %5399 = vmatpush1.msra.mxu0 %v152
    %5400 = vmatprep.subr.mxu0 %v155
    %5401 = vmatpush1.msra.mxu0 %v154
    %5402 = vmatprep.subr.mxu0 %v157
    %5403 = vmatpush1.msra.mxu0 %v156
    %5404 = vmatprep.subr.mxu0 %v159
    %5405 = vmatpush1.msra.mxu0 %v158
    %5406 = vmatprep.subr.mxu0 %v161
    %5407 = vmatpush1.msra.mxu0 %v160
    %5408 = vmatprep.subr.mxu0 %v163
    %5409 = vmatpush1.msra.mxu0 %v162
    %5410 = vmatprep.subr.mxu0 %v165
    %5411 = vmatpush1.msra.mxu0 %v164
    %5412 = vmatprep.subr.mxu0 %v167
    %5413 = vmatpush1.msra.mxu0 %v166
    %5414 = vmatprep.subr.mxu0 %v169
    %5415 = vmatpush1.msra.mxu0 %v168
    %5416 = vmatprep.subr.mxu0 %v171
    %5417 = vmatpush1.msra.mxu0 %v170
    %5418 = vmatprep.subr.mxu0 0.0
    %5419 = vmatpush1.msra.mxu0 0.0
    %5420 = vmatprep.subr.mxu0 0.0
    %5421 = vmatpush1.msra.mxu0 0.0
    %5422 = vmatprep.subr.mxu0 0.0
    %5423 = vmatpush1.msra.mxu0 0.0
    %5424 = vmatprep.subr.mxu0 0.0
    %5425 = vmatpush1.msra.mxu0 0.0
    %5426 = vmatprep.subr.mxu0 0.0
    %5427 = vmatpush1.msra.mxu0 0.0
    %5428 = vmatprep.subr.mxu0 0.0
    %5429 = vmatpush1.msra.mxu0 0.0
    %5430 = vmatprep.subr.mxu0 0.0
    %5431 = vmatpush1.msra.mxu0 0.0
    %5432 = vmatprep.subr.mxu0 0.0
    %5433 = vmatpush1.msra.mxu0 0.0
    %5434 = vmatprep.subr.mxu0 0.0
    %5435 = vmatpush1.msra.mxu0 0.0
    %5436 = vmatprep.subr.mxu0 0.0
    %5437 = vmatpush1.msra.mxu0 0.0
    %5438 = vmatprep.subr.mxu0 0.0
    %5439 = vmatpush1.msra.mxu0 0.0
    %5440 = vmatprep.subr.mxu0 0.0
    %5441 = vmatpush1.msra.mxu0 0.0
    %5442 = vmatprep.subr.mxu0 0.0
    %5443 = vmatpush1.msra.mxu0 0.0
    %5444 = vmatprep.subr.mxu0 0.0
    %5445 = vmatpush1.msra.mxu0 0.0
    %5446 = vmatprep.subr.mxu0 0.0
    %5447 = vmatpush1.msra.mxu0 0.0
    %5448 = vmatprep.subr.mxu0 0.0
    %5449 = vmatpush1.msra.mxu0 0.0
    %5450 = vmatprep.mubr.f32.mxu0 0.0
    %5451 = vmatmul.mubr.f32.gmra.mrb[0].mxu0 %v5309
    %v5452 = vpop.f32.mrb[0].mxu0
    %v5453 = vadd.f32 %v5382, %v5452
    %v5454 = vpop.f32.mrb[0].mxu0
    %v5455 = vadd.f32 %v5384, %v5454
    %5456 = vdwg.mxu0
    %v5457 = vadd.f32 %v5453, %v536
    %v5458 = vadd.f32 %v5455, %v540
    %v5459 = vxor.u32 %v5457, 2147483648
    %v5460 = vmul.f32 %v5459, 1.442695
    %v5461 = vpow.pop %v5460
    %v5462 = vadd.f32 %v5461, 1.0
    %v5463 = vrcp.pop %v5462
    %v5464 = vmul.f32 1.0, %v5463
    %v5465 = vtanh.pop %v5458
    %v5466 = vxor.u32 %v5458, 2147483648
    %v5467 = vmul.f32 %v5466, 1.442695
    %v5468 = vpow.pop %v5467
    %v5469 = vadd.f32 %v5468, 1.0
    %v5470 = vrcp.pop %v5469
    %v5471 = vmul.f32 1.0, %v5470
    %v5472 = vmul.f32 %v5464, %v5100
    %v5473 = vmul.f32 %v5464, %v5465
    %5475 = vrot.lane.b32.xlu0 %v5473, 64
    %v5476 = vpop.permute.xlu0 %5475
    %v5478 = vadd.f32 %v5472, %v5476
    %v5479 = vtanh.pop %v5478
    %v5480 = vmul.f32 %v5471, %v5479
    %vm5481 = vcmp.gt.f32.partialorder %v5480, 0.0
    %v5482 = vmul.f32 %v5480, 0.1
    %v5483 = vsel %vm5481, %v5480, %v5482
    %5485 = vrot.lane.b32.xlu0 %v5483, 64
    %v5486 = vpop.permute.xlu0 %5485
    %s5488 = scalar_lea.vmem [#allocation10], 26
    %5489 = vst.msk [vmem:[%s5488] sm:$0x3] %vm574, %v5486
    %s5490 = scalar_lea.vmem [#allocation2], 112
    %v5491 = vld [vmem:[%s5490] sm:$0xff]
    %5492 = vmatprep.subr.mxu0 %v77
    %5493 = vmatpush1.msra.mxu0 %v76
    %5494 = vmatprep.subr.mxu0 %v81
    %5495 = vmatpush1.msra.mxu0 %v80
    %5496 = vmatprep.subr.mxu0 %v85
    %5497 = vmatpush1.msra.mxu0 %v84
    %5498 = vmatprep.subr.mxu0 %v89
    %5499 = vmatpush1.msra.mxu0 %v88
    %5500 = vmatprep.subr.mxu0 %v93
    %5501 = vmatpush1.msra.mxu0 %v92
    %5502 = vmatprep.subr.mxu0 %v97
    %5503 = vmatpush1.msra.mxu0 %v96
    %5504 = vmatprep.subr.mxu0 %v101
    %5505 = vmatpush1.msra.mxu0 %v100
    %5506 = vmatprep.subr.mxu0 %v105
    %5507 = vmatpush1.msra.mxu0 %v104
    %5508 = vmatprep.subr.mxu0 %v109
    %5509 = vmatpush1.msra.mxu0 %v108
    %5510 = vmatprep.subr.mxu0 %v113
    %5511 = vmatpush1.msra.mxu0 %v112
    %5512 = vmatprep.subr.mxu0 %v117
    %5513 = vmatpush1.msra.mxu0 %v116
    %5514 = vmatprep.subr.mxu0 %v121
    %5515 = vmatpush1.msra.mxu0 %v120
    %5516 = vmatprep.subr.mxu0 %v125
    %5517 = vmatpush1.msra.mxu0 %v124
    %5518 = vmatprep.subr.mxu0 %v129
    %5519 = vmatpush1.msra.mxu0 %v128
    %5520 = vmatprep.subr.mxu0 %v133
    %5521 = vmatpush1.msra.mxu0 %v132
    %5522 = vmatprep.subr.mxu0 %v137
    %5523 = vmatpush1.msra.mxu0 %v136
    %5524 = vmatprep.subr.mxu0 0.0
    %5525 = vmatpush1.msra.mxu0 0.0
    %5526 = vmatprep.subr.mxu0 0.0
    %5527 = vmatpush1.msra.mxu0 0.0
    %5528 = vmatprep.subr.mxu0 0.0
    %5529 = vmatpush1.msra.mxu0 0.0
    %5530 = vmatprep.subr.mxu0 0.0
    %5531 = vmatpush1.msra.mxu0 0.0
    %5532 = vmatprep.subr.mxu0 0.0
    %5533 = vmatpush1.msra.mxu0 0.0
    %5534 = vmatprep.subr.mxu0 0.0
    %5535 = vmatpush1.msra.mxu0 0.0
    %5536 = vmatprep.subr.mxu0 0.0
    %5537 = vmatpush1.msra.mxu0 0.0
    %5538 = vmatprep.subr.mxu0 0.0
    %5539 = vmatpush1.msra.mxu0 0.0
    %5540 = vmatprep.subr.mxu0 0.0
    %5541 = vmatpush1.msra.mxu0 0.0
    %5542 = vmatprep.subr.mxu0 0.0
    %5543 = vmatpush1.msra.mxu0 0.0
    %5544 = vmatprep.subr.mxu0 0.0
    %5545 = vmatpush1.msra.mxu0 0.0
    %5546 = vmatprep.subr.mxu0 0.0
    %5547 = vmatpush1.msra.mxu0 0.0
    %5548 = vmatprep.subr.mxu0 0.0
    %5549 = vmatpush1.msra.mxu0 0.0
    %5550 = vmatprep.subr.mxu0 0.0
    %5551 = vmatpush1.msra.mxu0 0.0
    %5552 = vmatprep.subr.mxu0 0.0
    %5553 = vmatpush1.msra.mxu0 0.0
    %5554 = vmatprep.subr.mxu0 0.0
    %5555 = vmatpush1.msra.mxu0 0.0
    %5556 = vmatprep.mubr.f32.mxu0 0.0
    %5557 = vmatmul.mubr.f32.gmra.mrb[0].mxu0 %v5309
    %v5558 = vpop.f32.mrb[0].mxu0
    %v5559 = vadd.f32 0.0, %v5558
    %v5560 = vpop.f32.mrb[0].mxu0
    %v5561 = vadd.f32 0.0, %v5560
    %5562 = vdwg.mxu0
    %5563 = vmatprep.subr.mxu0 %v79
    %5564 = vmatpush1.msra.mxu0 %v78
    %5565 = vmatprep.subr.mxu0 %v83
    %5566 = vmatpush1.msra.mxu0 %v82
    %5567 = vmatprep.subr.mxu0 %v87
    %5568 = vmatpush1.msra.mxu0 %v86
    %5569 = vmatprep.subr.mxu0 %v91
    %5570 = vmatpush1.msra.mxu0 %v90
    %5571 = vmatprep.subr.mxu0 %v95
    %5572 = vmatpush1.msra.mxu0 %v94
    %5573 = vmatprep.subr.mxu0 %v99
    %5574 = vmatpush1.msra.mxu0 %v98
    %5575 = vmatprep.subr.mxu0 %v103
    %5576 = vmatpush1.msra.mxu0 %v102
    %5577 = vmatprep.subr.mxu0 %v107
    %5578 = vmatpush1.msra.mxu0 %v106
    %5579 = vmatprep.subr.mxu0 %v111
    %5580 = vmatpush1.msra.mxu0 %v110
    %5581 = vmatprep.subr.mxu0 %v115
    %5582 = vmatpush1.msra.mxu0 %v114
    %5583 = vmatprep.subr.mxu0 %v119
    %5584 = vmatpush1.msra.mxu0 %v118
    %5585 = vmatprep.subr.mxu0 %v123
    %5586 = vmatpush1.msra.mxu0 %v122
    %5587 = vmatprep.subr.mxu0 %v127
    %5588 = vmatpush1.msra.mxu0 %v126
    %5589 = vmatprep.subr.mxu0 %v131
    %5590 = vmatpush1.msra.mxu0 %v130
    %5591 = vmatprep.subr.mxu0 %v135
    %5592 = vmatpush1.msra.mxu0 %v134
    %5593 = vmatprep.subr.mxu0 %v139
    %5594 = vmatpush1.msra.mxu0 %v138
    %5595 = vmatprep.subr.mxu0 0.0
    %5596 = vmatpush1.msra.mxu0 0.0
    %5597 = vmatprep.subr.mxu0 0.0
    %5598 = vmatpush1.msra.mxu0 0.0
    %5599 = vmatprep.subr.mxu0 0.0
    %5600 = vmatpush1.msra.mxu0 0.0
    %5601 = vmatprep.subr.mxu0 0.0
    %5602 = vmatpush1.msra.mxu0 0.0
    %5603 = vmatprep.subr.mxu0 0.0
    %5604 = vmatpush1.msra.mxu0 0.0
    %5605 = vmatprep.subr.mxu0 0.0
    %5606 = vmatpush1.msra.mxu0 0.0
    %5607 = vmatprep.subr.mxu0 0.0
    %5608 = vmatpush1.msra.mxu0 0.0
    %5609 = vmatprep.subr.mxu0 0.0
    %5610 = vmatpush1.msra.mxu0 0.0
    %5611 = vmatprep.subr.mxu0 0.0
    %5612 = vmatpush1.msra.mxu0 0.0
    %5613 = vmatprep.subr.mxu0 0.0
    %5614 = vmatpush1.msra.mxu0 0.0
    %5615 = vmatprep.subr.mxu0 0.0
    %5616 = vmatpush1.msra.mxu0 0.0
    %5617 = vmatprep.subr.mxu0 0.0
    %5618 = vmatpush1.msra.mxu0 0.0
    %5619 = vmatprep.subr.mxu0 0.0
    %5620 = vmatpush1.msra.mxu0 0.0
    %5621 = vmatprep.subr.mxu0 0.0
    %5622 = vmatpush1.msra.mxu0 0.0
    %5623 = vmatprep.subr.mxu0 0.0
    %5624 = vmatpush1.msra.mxu0 0.0
    %5625 = vmatprep.subr.mxu0 0.0
    %5626 = vmatpush1.msra.mxu0 0.0
    %5627 = vmatprep.mubr.f32.mxu0 0.0
    %5628 = vmatmul.mubr.f32.gmra.mrb[0].mxu0 %v5309
    %v5629 = vpop.f32.mrb[0].mxu0
    %v5630 = vadd.f32 0.0, %v5629
    %v5631 = vpop.f32.mrb[0].mxu0
    %v5632 = vadd.f32 0.0, %v5631
    %5633 = vdwg.mxu0
    %v5638 = vcombine.low %v5559, %v5561
    %v5639 = vcombine.low %v5630, %v5632
    %v5641 = vunpack.c.l.s4 1983009808
    %v5642 = vunpack.c.0.s8 %v5641
    %v5643 = vlaneseq
    %v5644 = vshrl.u32 %v5643, 7
    %v5645 = vsub.s32 %v5642, %v5644
    %v5646 = vrot.slane %v5638, %v5645
    %v5648 = vunpack.c.l.s4 1983009808
    %v5649 = vunpack.c.0.s8 %v5648
    %v5650 = vlaneseq
    %v5651 = vshrl.u32 %v5650, 7
    %v5652 = vsub.s32 %v5649, %v5651
    %v5653 = vrot.slane %v5639, %v5652
    %v5654 = vcombine.low %v5646, %v5653
    %v5656 = vadd.f32 %v5491, %v5654
    %v5657 = vxor.u32 %v5656, 2147483648
    %v5658 = vmul.f32 %v5657, 1.442695
    %v5659 = vpow.pop %v5658
    %v5660 = vadd.f32 %v5659, 1.0
    %v5661 = vrcp.pop %v5660
    %v5662 = vmul.f32 1.0, %v5661
    %v5664 = vrot.slane %v5656, 2
    %v5666 = vxor.u32 %v5664, 2147483648
    %v5667 = vmul.f32 %v5666, 1.442695
    %v5668 = vpow.pop %v5667
    %v5669 = vadd.f32 %v5668, 1.0
    %v5670 = vrcp.pop %v5669
    %v5671 = vmul.f32 1.0, %v5670
    %v5672 = vrot.slane %v5656, 4
    %v5674 = vtanh.pop %v5672
    %v5675 = vrot.slane %v5656, 6
    %v5677 = vxor.u32 %v5675, 2147483648
    %v5678 = vmul.f32 %v5677, 1.442695
    %v5679 = vpow.pop %v5678
    %v5680 = vadd.f32 %v5679, 1.0
    %v5681 = vrcp.pop %v5680
    %v5682 = vmul.f32 1.0, %v5681
    %v5683 = vmul.f32 %v5671, %v5307
    %v5684 = vmul.f32 %v5662, %v5674
    %v5685 = vadd.f32 %v5683, %v5684
    %v5686 = vtanh.pop %v5685
    %v5687 = vmul.f32 %v5682, %v5686
    %5689 = vrot.lane.b32.xlu0 %v5480, 64
    %v5690 = vpop.permute.xlu0 %5689
    %v5691 = vsel %vm386, %v5690, 0
    %5693 = vmatprep.subr.mxu0 %v173
    %5694 = vmatpush1.msra.mxu0 %v172
    %5695 = vmatprep.subr.mxu0 %v175
    %5696 = vmatpush1.msra.mxu0 %v174
    %5697 = vmatprep.subr.mxu0 %v177
    %5698 = vmatpush1.msra.mxu0 %v176
    %5699 = vmatprep.subr.mxu0 %v179
    %5700 = vmatpush1.msra.mxu0 %v178
    %5701 = vmatprep.subr.mxu0 %v181
    %5702 = vmatpush1.msra.mxu0 %v180
    %5703 = vmatprep.subr.mxu0 %v183
    %5704 = vmatpush1.msra.mxu0 %v182
    %5705 = vmatprep.subr.mxu0 %v185
    %5706 = vmatpush1.msra.mxu0 %v184
    %5707 = vmatprep.subr.mxu0 %v187
    %5708 = vmatpush1.msra.mxu0 %v186
    %5709 = vmatprep.subr.mxu0 0.0
    %5710 = vmatpush1.msra.mxu0 0.0
    %5711 = vmatprep.subr.mxu0 0.0
    %5712 = vmatpush1.msra.mxu0 0.0
    %5713 = vmatprep.subr.mxu0 0.0
    %5714 = vmatpush1.msra.mxu0 0.0
    %5715 = vmatprep.subr.mxu0 0.0
    %5716 = vmatpush1.msra.mxu0 0.0
    %5717 = vmatprep.subr.mxu0 0.0
    %5718 = vmatpush1.msra.mxu0 0.0
    %5719 = vmatprep.subr.mxu0 0.0
    %5720 = vmatpush1.msra.mxu0 0.0
    %5721 = vmatprep.subr.mxu0 0.0
    %5722 = vmatpush1.msra.mxu0 0.0
    %5723 = vmatprep.subr.mxu0 0.0
    %5724 = vmatpush1.msra.mxu0 0.0
    %5725 = vmatprep.subr.mxu0 0.0
    %5726 = vmatpush1.msra.mxu0 0.0
    %5727 = vmatprep.subr.mxu0 0.0
    %5728 = vmatpush1.msra.mxu0 0.0
    %5729 = vmatprep.subr.mxu0 0.0
    %5730 = vmatpush1.msra.mxu0 0.0
    %5731 = vmatprep.subr.mxu0 0.0
    %5732 = vmatpush1.msra.mxu0 0.0
    %5733 = vmatprep.subr.mxu0 0.0
    %5734 = vmatpush1.msra.mxu0 0.0
    %5735 = vmatprep.subr.mxu0 0.0
    %5736 = vmatpush1.msra.mxu0 0.0
    %5737 = vmatprep.subr.mxu0 0.0
    %5738 = vmatpush1.msra.mxu0 0.0
    %5739 = vmatprep.subr.mxu0 0.0
    %5740 = vmatpush1.msra.mxu0 0.0
    %5741 = vmatprep.subr.mxu0 0.0
    %5742 = vmatpush1.msra.mxu0 0.0
    %5743 = vmatprep.subr.mxu0 0.0
    %5744 = vmatpush1.msra.mxu0 0.0
    %5745 = vmatprep.subr.mxu0 0.0
    %5746 = vmatpush1.msra.mxu0 0.0
    %5747 = vmatprep.subr.mxu0 0.0
    %5748 = vmatpush1.msra.mxu0 0.0
    %5749 = vmatprep.subr.mxu0 0.0
    %5750 = vmatpush1.msra.mxu0 0.0
    %5751 = vmatprep.subr.mxu0 0.0
    %5752 = vmatpush1.msra.mxu0 0.0
    %5753 = vmatprep.subr.mxu0 0.0
    %5754 = vmatpush1.msra.mxu0 0.0
    %5755 = vmatprep.subr.mxu0 0.0
    %5756 = vmatpush1.msra.mxu0 0.0
    %5757 = vmatprep.mubr.f32.mxu0 0.0
    %5758 = vmatmul.mubr.f32.gmra.mrb[0].mxu0 %v5691
    %v5759 = vpop.f32.mrb[0].mxu0
    %v5760 = vadd.f32 0.0, %v5759
    %v5761 = vpop.f32.mrb[0].mxu0
    %v5762 = vadd.f32 0.0, %v5761
    %5763 = vdwg.mxu0
    %5764 = vmatprep.subr.mxu0 %v141
    %5765 = vmatpush1.msra.mxu0 %v140
    %5766 = vmatprep.subr.mxu0 %v143
    %5767 = vmatpush1.msra.mxu0 %v142
    %5768 = vmatprep.subr.mxu0 %v145
    %5769 = vmatpush1.msra.mxu0 %v144
    %5770 = vmatprep.subr.mxu0 %v147
    %5771 = vmatpush1.msra.mxu0 %v146
    %5772 = vmatprep.subr.mxu0 %v149
    %5773 = vmatpush1.msra.mxu0 %v148
    %5774 = vmatprep.subr.mxu0 %v151
    %5775 = vmatpush1.msra.mxu0 %v150
    %5776 = vmatprep.subr.mxu0 %v153
    %5777 = vmatpush1.msra.mxu0 %v152
    %5778 = vmatprep.subr.mxu0 %v155
    %5779 = vmatpush1.msra.mxu0 %v154
    %5780 = vmatprep.subr.mxu0 %v157
    %5781 = vmatpush1.msra.mxu0 %v156
    %5782 = vmatprep.subr.mxu0 %v159
    %5783 = vmatpush1.msra.mxu0 %v158
    %5784 = vmatprep.subr.mxu0 %v161
    %5785 = vmatpush1.msra.mxu0 %v160
    %5786 = vmatprep.subr.mxu0 %v163
    %5787 = vmatpush1.msra.mxu0 %v162
    %5788 = vmatprep.subr.mxu0 %v165
    %5789 = vmatpush1.msra.mxu0 %v164
    %5790 = vmatprep.subr.mxu0 %v167
    %5791 = vmatpush1.msra.mxu0 %v166
    %5792 = vmatprep.subr.mxu0 %v169
    %5793 = vmatpush1.msra.mxu0 %v168
    %5794 = vmatprep.subr.mxu0 %v171
    %5795 = vmatpush1.msra.mxu0 %v170
    %5796 = vmatprep.subr.mxu0 0.0
    %5797 = vmatpush1.msra.mxu0 0.0
    %5798 = vmatprep.subr.mxu0 0.0
    %5799 = vmatpush1.msra.mxu0 0.0
    %5800 = vmatprep.subr.mxu0 0.0
    %5801 = vmatpush1.msra.mxu0 0.0
    %5802 = vmatprep.subr.mxu0 0.0
    %5803 = vmatpush1.msra.mxu0 0.0
    %5804 = vmatprep.subr.mxu0 0.0
    %5805 = vmatpush1.msra.mxu0 0.0
    %5806 = vmatprep.subr.mxu0 0.0
    %5807 = vmatpush1.msra.mxu0 0.0
    %5808 = vmatprep.subr.mxu0 0.0
    %5809 = vmatpush1.msra.mxu0 0.0
    %5810 = vmatprep.subr.mxu0 0.0
    %5811 = vmatpush1.msra.mxu0 0.0
    %5812 = vmatprep.subr.mxu0 0.0
    %5813 = vmatpush1.msra.mxu0 0.0
    %5814 = vmatprep.subr.mxu0 0.0
    %5815 = vmatpush1.msra.mxu0 0.0
    %5816 = vmatprep.subr.mxu0 0.0
    %5817 = vmatpush1.msra.mxu0 0.0
    %5818 = vmatprep.subr.mxu0 0.0
    %5819 = vmatpush1.msra.mxu0 0.0
    %5820 = vmatprep.subr.mxu0 0.0
    %5821 = vmatpush1.msra.mxu0 0.0
    %5822 = vmatprep.subr.mxu0 0.0
    %5823 = vmatpush1.msra.mxu0 0.0
    %5824 = vmatprep.subr.mxu0 0.0
    %5825 = vmatpush1.msra.mxu0 0.0
    %5826 = vmatprep.subr.mxu0 0.0
    %5827 = vmatpush1.msra.mxu0 0.0
    %5828 = vmatprep.mubr.f32.mxu0 0.0
    %5829 = vmatmul.mubr.f32.gmra.mrb[0].mxu0 %v5687
    %v5830 = vpop.f32.mrb[0].mxu0
    %v5831 = vadd.f32 %v5760, %v5830
    %v5832 = vpop.f32.mrb[0].mxu0
    %v5833 = vadd.f32 %v5762, %v5832
    %5834 = vdwg.mxu0
    %v5835 = vadd.f32 %v5831, %v536
    %v5836 = vadd.f32 %v5833, %v540
    %v5837 = vxor.u32 %v5835, 2147483648
    %v5838 = vmul.f32 %v5837, 1.442695
    %v5839 = vpow.pop %v5838
    %v5840 = vadd.f32 %v5839, 1.0
    %v5841 = vrcp.pop %v5840
    %v5842 = vmul.f32 1.0, %v5841
    %v5843 = vtanh.pop %v5836
    %v5844 = vxor.u32 %v5836, 2147483648
    %v5845 = vmul.f32 %v5844, 1.442695
    %v5846 = vpow.pop %v5845
    %v5847 = vadd.f32 %v5846, 1.0
    %v5848 = vrcp.pop %v5847
    %v5849 = vmul.f32 1.0, %v5848
    %v5850 = vmul.f32 %v5842, %v5478
    %v5851 = vmul.f32 %v5842, %v5843
    %5853 = vrot.lane.b32.xlu0 %v5851, 64
    %v5854 = vpop.permute.xlu0 %5853
    %v5856 = vadd.f32 %v5850, %v5854
    %v5857 = vtanh.pop %v5856
    %v5858 = vmul.f32 %v5849, %v5857
    %vm5859 = vcmp.gt.f32.partialorder %v5858, 0.0
    %v5860 = vmul.f32 %v5858, 0.1
    %v5861 = vsel %vm5859, %v5858, %v5860
    %5863 = vrot.lane.b32.xlu0 %v5861, 64
    %v5864 = vpop.permute.xlu0 %5863
    %s5866 = scalar_lea.vmem [#allocation10], 28
    %5867 = vst.msk [vmem:[%s5866] sm:$0x3] %vm574, %v5864
    %s5868 = scalar_lea.vmem [#allocation2], 120
    %v5869 = vld [vmem:[%s5868] sm:$0xff]
    %5870 = vmatprep.subr.mxu0 %v77
    %5871 = vmatpush1.msra.mxu0 %v76
    %5872 = vmatprep.subr.mxu0 %v81
    %5873 = vmatpush1.msra.mxu0 %v80
    %5874 = vmatprep.subr.mxu0 %v85
    %5875 = vmatpush1.msra.mxu0 %v84
    %5876 = vmatprep.subr.mxu0 %v89
    %5877 = vmatpush1.msra.mxu0 %v88
    %5878 = vmatprep.subr.mxu0 %v93
    %5879 = vmatpush1.msra.mxu0 %v92
    %5880 = vmatprep.subr.mxu0 %v97
    %5881 = vmatpush1.msra.mxu0 %v96
    %5882 = vmatprep.subr.mxu0 %v101
    %5883 = vmatpush1.msra.mxu0 %v100
    %5884 = vmatprep.subr.mxu0 %v105
    %5885 = vmatpush1.msra.mxu0 %v104
    %5886 = vmatprep.subr.mxu0 %v109
    %5887 = vmatpush1.msra.mxu0 %v108
    %5888 = vmatprep.subr.mxu0 %v113
    %5889 = vmatpush1.msra.mxu0 %v112
    %5890 = vmatprep.subr.mxu0 %v117
    %5891 = vmatpush1.msra.mxu0 %v116
    %5892 = vmatprep.subr.mxu0 %v121
    %5893 = vmatpush1.msra.mxu0 %v120
    %5894 = vmatprep.subr.mxu0 %v125
    %5895 = vmatpush1.msra.mxu0 %v124
    %5896 = vmatprep.subr.mxu0 %v129
    %5897 = vmatpush1.msra.mxu0 %v128
    %5898 = vmatprep.subr.mxu0 %v133
    %5899 = vmatpush1.msra.mxu0 %v132
    %5900 = vmatprep.subr.mxu0 %v137
    %5901 = vmatpush1.msra.mxu0 %v136
    %5902 = vmatprep.subr.mxu0 0.0
    %5903 = vmatpush1.msra.mxu0 0.0
    %5904 = vmatprep.subr.mxu0 0.0
    %5905 = vmatpush1.msra.mxu0 0.0
    %5906 = vmatprep.subr.mxu0 0.0
    %5907 = vmatpush1.msra.mxu0 0.0
    %5908 = vmatprep.subr.mxu0 0.0
    %5909 = vmatpush1.msra.mxu0 0.0
    %5910 = vmatprep.subr.mxu0 0.0
    %5911 = vmatpush1.msra.mxu0 0.0
    %5912 = vmatprep.subr.mxu0 0.0
    %5913 = vmatpush1.msra.mxu0 0.0
    %5914 = vmatprep.subr.mxu0 0.0
    %5915 = vmatpush1.msra.mxu0 0.0
    %5916 = vmatprep.subr.mxu0 0.0
    %5917 = vmatpush1.msra.mxu0 0.0
    %5918 = vmatprep.subr.mxu0 0.0
    %5919 = vmatpush1.msra.mxu0 0.0
    %5920 = vmatprep.subr.mxu0 0.0
    %5921 = vmatpush1.msra.mxu0 0.0
    %5922 = vmatprep.subr.mxu0 0.0
    %5923 = vmatpush1.msra.mxu0 0.0
    %5924 = vmatprep.subr.mxu0 0.0
    %5925 = vmatpush1.msra.mxu0 0.0
    %5926 = vmatprep.subr.mxu0 0.0
    %5927 = vmatpush1.msra.mxu0 0.0
    %5928 = vmatprep.subr.mxu0 0.0
    %5929 = vmatpush1.msra.mxu0 0.0
    %5930 = vmatprep.subr.mxu0 0.0
    %5931 = vmatpush1.msra.mxu0 0.0
    %5932 = vmatprep.subr.mxu0 0.0
    %5933 = vmatpush1.msra.mxu0 0.0
    %5934 = vmatprep.mubr.f32.mxu0 0.0
    %5935 = vmatmul.mubr.f32.gmra.mrb[0].mxu0 %v5687
    %v5936 = vpop.f32.mrb[0].mxu0
    %v5937 = vadd.f32 0.0, %v5936
    %v5938 = vpop.f32.mrb[0].mxu0
    %v5939 = vadd.f32 0.0, %v5938
    %5940 = vdwg.mxu0
    %5941 = vmatprep.subr.mxu0 %v79
    %5942 = vmatpush1.msra.mxu0 %v78
    %5943 = vmatprep.subr.mxu0 %v83
    %5944 = vmatpush1.msra.mxu0 %v82
    %5945 = vmatprep.subr.mxu0 %v87
    %5946 = vmatpush1.msra.mxu0 %v86
    %5947 = vmatprep.subr.mxu0 %v91
    %5948 = vmatpush1.msra.mxu0 %v90
    %5949 = vmatprep.subr.mxu0 %v95
    %5950 = vmatpush1.msra.mxu0 %v94
    %5951 = vmatprep.subr.mxu0 %v99
    %5952 = vmatpush1.msra.mxu0 %v98
    %5953 = vmatprep.subr.mxu0 %v103
    %5954 = vmatpush1.msra.mxu0 %v102
    %5955 = vmatprep.subr.mxu0 %v107
    %5956 = vmatpush1.msra.mxu0 %v106
    %5957 = vmatprep.subr.mxu0 %v111
    %5958 = vmatpush1.msra.mxu0 %v110
    %5959 = vmatprep.subr.mxu0 %v115
    %5960 = vmatpush1.msra.mxu0 %v114
    %5961 = vmatprep.subr.mxu0 %v119
    %5962 = vmatpush1.msra.mxu0 %v118
    %5963 = vmatprep.subr.mxu0 %v123
    %5964 = vmatpush1.msra.mxu0 %v122
    %5965 = vmatprep.subr.mxu0 %v127
    %5966 = vmatpush1.msra.mxu0 %v126
    %5967 = vmatprep.subr.mxu0 %v131
    %5968 = vmatpush1.msra.mxu0 %v130
    %5969 = vmatprep.subr.mxu0 %v135
    %5970 = vmatpush1.msra.mxu0 %v134
    %5971 = vmatprep.subr.mxu0 %v139
    %5972 = vmatpush1.msra.mxu0 %v138
    %5973 = vmatprep.subr.mxu0 0.0
    %5974 = vmatpush1.msra.mxu0 0.0
    %5975 = vmatprep.subr.mxu0 0.0
    %5976 = vmatpush1.msra.mxu0 0.0
    %5977 = vmatprep.subr.mxu0 0.0
    %5978 = vmatpush1.msra.mxu0 0.0
    %5979 = vmatprep.subr.mxu0 0.0
    %5980 = vmatpush1.msra.mxu0 0.0
    %5981 = vmatprep.subr.mxu0 0.0
    %5982 = vmatpush1.msra.mxu0 0.0
    %5983 = vmatprep.subr.mxu0 0.0
    %5984 = vmatpush1.msra.mxu0 0.0
    %5985 = vmatprep.subr.mxu0 0.0
    %5986 = vmatpush1.msra.mxu0 0.0
    %5987 = vmatprep.subr.mxu0 0.0
    %5988 = vmatpush1.msra.mxu0 0.0
    %5989 = vmatprep.subr.mxu0 0.0
    %5990 = vmatpush1.msra.mxu0 0.0
    %5991 = vmatprep.subr.mxu0 0.0
    %5992 = vmatpush1.msra.mxu0 0.0
    %5993 = vmatprep.subr.mxu0 0.0
    %5994 = vmatpush1.msra.mxu0 0.0
    %5995 = vmatprep.subr.mxu0 0.0
    %5996 = vmatpush1.msra.mxu0 0.0
    %5997 = vmatprep.subr.mxu0 0.0
    %5998 = vmatpush1.msra.mxu0 0.0
    %5999 = vmatprep.subr.mxu0 0.0
    %6000 = vmatpush1.msra.mxu0 0.0
    %6001 = vmatprep.subr.mxu0 0.0
    %6002 = vmatpush1.msra.mxu0 0.0
    %6003 = vmatprep.subr.mxu0 0.0
    %6004 = vmatpush1.msra.mxu0 0.0
    %6005 = vmatprep.mubr.f32.mxu0 0.0
    %6006 = vmatmul.mubr.f32.gmra.mrb[0].mxu0 %v5687
    %v6007 = vpop.f32.mrb[0].mxu0
    %v6008 = vadd.f32 0.0, %v6007
    %v6009 = vpop.f32.mrb[0].mxu0
    %v6010 = vadd.f32 0.0, %v6009
    %6011 = vdwg.mxu0
    %v6016 = vcombine.low %v5937, %v5939
    %v6017 = vcombine.low %v6008, %v6010
    %v6019 = vunpack.c.l.s4 1983009808
    %v6020 = vunpack.c.0.s8 %v6019
    %v6021 = vlaneseq
    %v6022 = vshrl.u32 %v6021, 7
    %v6023 = vsub.s32 %v6020, %v6022
    %v6024 = vrot.slane %v6016, %v6023
    %v6026 = vunpack.c.l.s4 1983009808
    %v6027 = vunpack.c.0.s8 %v6026
    %v6028 = vlaneseq
    %v6029 = vshrl.u32 %v6028, 7
    %v6030 = vsub.s32 %v6027, %v6029
    %v6031 = vrot.slane %v6017, %v6030
    %v6032 = vcombine.low %v6024, %v6031
    %v6034 = vadd.f32 %v5869, %v6032
    %v6035 = vxor.u32 %v6034, 2147483648
    %v6036 = vmul.f32 %v6035, 1.442695
    %v6037 = vpow.pop %v6036
    %v6038 = vadd.f32 %v6037, 1.0
    %v6039 = vrcp.pop %v6038
    %v6040 = vmul.f32 1.0, %v6039
    %v6042 = vrot.slane %v6034, 2
    %v6044 = vxor.u32 %v6042, 2147483648
    %v6045 = vmul.f32 %v6044, 1.442695
    %v6046 = vpow.pop %v6045
    %v6047 = vadd.f32 %v6046, 1.0
    %v6048 = vrcp.pop %v6047
    %v6049 = vmul.f32 1.0, %v6048
    %v6050 = vrot.slane %v6034, 4
    %v6052 = vtanh.pop %v6050
    %v6053 = vrot.slane %v6034, 6
    %v6055 = vxor.u32 %v6053, 2147483648
    %v6056 = vmul.f32 %v6055, 1.442695
    %v6057 = vpow.pop %v6056
    %v6058 = vadd.f32 %v6057, 1.0
    %v6059 = vrcp.pop %v6058
    %v6060 = vmul.f32 1.0, %v6059
    %v6061 = vmul.f32 %v6049, %v5685
    %v6062 = vmul.f32 %v6040, %v6052
    %v6063 = vadd.f32 %v6061, %v6062
    %v6064 = vtanh.pop %v6063
    %v6065 = vmul.f32 %v6060, %v6064
    %6067 = vrot.lane.b32.xlu0 %v5858, 64
    %v6068 = vpop.permute.xlu0 %6067
    %v6069 = vsel %vm386, %v6068, 0
    %6071 = vmatprep.subr.mxu0 %v173
    %6072 = vmatpush1.msra.mxu0 %v172
    %6073 = vmatprep.subr.mxu0 %v175
    %6074 = vmatpush1.msra.mxu0 %v174
    %6075 = vmatprep.subr.mxu0 %v177
    %6076 = vmatpush1.msra.mxu0 %v176
    %6077 = vmatprep.subr.mxu0 %v179
    %6078 = vmatpush1.msra.mxu0 %v178
    %6079 = vmatprep.subr.mxu0 %v181
    %6080 = vmatpush1.msra.mxu0 %v180
    %6081 = vmatprep.subr.mxu0 %v183
    %6082 = vmatpush1.msra.mxu0 %v182
    %6083 = vmatprep.subr.mxu0 %v185
    %6084 = vmatpush1.msra.mxu0 %v184
    %6085 = vmatprep.subr.mxu0 %v187
    %6086 = vmatpush1.msra.mxu0 %v186
    %6087 = vmatprep.subr.mxu0 0.0
    %6088 = vmatpush1.msra.mxu0 0.0
    %6089 = vmatprep.subr.mxu0 0.0
    %6090 = vmatpush1.msra.mxu0 0.0
    %6091 = vmatprep.subr.mxu0 0.0
    %6092 = vmatpush1.msra.mxu0 0.0
    %6093 = vmatprep.subr.mxu0 0.0
    %6094 = vmatpush1.msra.mxu0 0.0
    %6095 = vmatprep.subr.mxu0 0.0
    %6096 = vmatpush1.msra.mxu0 0.0
    %6097 = vmatprep.subr.mxu0 0.0
    %6098 = vmatpush1.msra.mxu0 0.0
    %6099 = vmatprep.subr.mxu0 0.0
    %6100 = vmatpush1.msra.mxu0 0.0
    %6101 = vmatprep.subr.mxu0 0.0
    %6102 = vmatpush1.msra.mxu0 0.0
    %6103 = vmatprep.subr.mxu0 0.0
    %6104 = vmatpush1.msra.mxu0 0.0
    %6105 = vmatprep.subr.mxu0 0.0
    %6106 = vmatpush1.msra.mxu0 0.0
    %6107 = vmatprep.subr.mxu0 0.0
    %6108 = vmatpush1.msra.mxu0 0.0
    %6109 = vmatprep.subr.mxu0 0.0
    %6110 = vmatpush1.msra.mxu0 0.0
    %6111 = vmatprep.subr.mxu0 0.0
    %6112 = vmatpush1.msra.mxu0 0.0
    %6113 = vmatprep.subr.mxu0 0.0
    %6114 = vmatpush1.msra.mxu0 0.0
    %6115 = vmatprep.subr.mxu0 0.0
    %6116 = vmatpush1.msra.mxu0 0.0
    %6117 = vmatprep.subr.mxu0 0.0
    %6118 = vmatpush1.msra.mxu0 0.0
    %6119 = vmatprep.subr.mxu0 0.0
    %6120 = vmatpush1.msra.mxu0 0.0
    %6121 = vmatprep.subr.mxu0 0.0
    %6122 = vmatpush1.msra.mxu0 0.0
    %6123 = vmatprep.subr.mxu0 0.0
    %6124 = vmatpush1.msra.mxu0 0.0
    %6125 = vmatprep.subr.mxu0 0.0
    %6126 = vmatpush1.msra.mxu0 0.0
    %6127 = vmatprep.subr.mxu0 0.0
    %6128 = vmatpush1.msra.mxu0 0.0
    %6129 = vmatprep.subr.mxu0 0.0
    %6130 = vmatpush1.msra.mxu0 0.0
    %6131 = vmatprep.subr.mxu0 0.0
    %6132 = vmatpush1.msra.mxu0 0.0
    %6133 = vmatprep.subr.mxu0 0.0
    %6134 = vmatpush1.msra.mxu0 0.0
    %6135 = vmatprep.mubr.f32.mxu0 0.0
    %6136 = vmatmul.mubr.f32.gmra.mrb[0].mxu0 %v6069
    %v6137 = vpop.f32.mrb[0].mxu0
    %v6138 = vadd.f32 0.0, %v6137
    %v6139 = vpop.f32.mrb[0].mxu0
    %v6140 = vadd.f32 0.0, %v6139
    %6141 = vdwg.mxu0
    %6142 = vmatprep.subr.mxu0 %v141
    %6143 = vmatpush1.msra.mxu0 %v140
    %6144 = vmatprep.subr.mxu0 %v143
    %6145 = vmatpush1.msra.mxu0 %v142
    %6146 = vmatprep.subr.mxu0 %v145
    %6147 = vmatpush1.msra.mxu0 %v144
    %6148 = vmatprep.subr.mxu0 %v147
    %6149 = vmatpush1.msra.mxu0 %v146
    %6150 = vmatprep.subr.mxu0 %v149
    %6151 = vmatpush1.msra.mxu0 %v148
    %6152 = vmatprep.subr.mxu0 %v151
    %6153 = vmatpush1.msra.mxu0 %v150
    %6154 = vmatprep.subr.mxu0 %v153
    %6155 = vmatpush1.msra.mxu0 %v152
    %6156 = vmatprep.subr.mxu0 %v155
    %6157 = vmatpush1.msra.mxu0 %v154
    %6158 = vmatprep.subr.mxu0 %v157
    %6159 = vmatpush1.msra.mxu0 %v156
    %6160 = vmatprep.subr.mxu0 %v159
    %6161 = vmatpush1.msra.mxu0 %v158
    %6162 = vmatprep.subr.mxu0 %v161
    %6163 = vmatpush1.msra.mxu0 %v160
    %6164 = vmatprep.subr.mxu0 %v163
    %6165 = vmatpush1.msra.mxu0 %v162
    %6166 = vmatprep.subr.mxu0 %v165
    %6167 = vmatpush1.msra.mxu0 %v164
    %6168 = vmatprep.subr.mxu0 %v167
    %6169 = vmatpush1.msra.mxu0 %v166
    %6170 = vmatprep.subr.mxu0 %v169
    %6171 = vmatpush1.msra.mxu0 %v168
    %6172 = vmatprep.subr.mxu0 %v171
    %6173 = vmatpush1.msra.mxu0 %v170
    %6174 = vmatprep.subr.mxu0 0.0
    %6175 = vmatpush1.msra.mxu0 0.0
    %6176 = vmatprep.subr.mxu0 0.0
    %6177 = vmatpush1.msra.mxu0 0.0
    %6178 = vmatprep.subr.mxu0 0.0
    %6179 = vmatpush1.msra.mxu0 0.0
    %6180 = vmatprep.subr.mxu0 0.0
    %6181 = vmatpush1.msra.mxu0 0.0
    %6182 = vmatprep.subr.mxu0 0.0
    %6183 = vmatpush1.msra.mxu0 0.0
    %6184 = vmatprep.subr.mxu0 0.0
    %6185 = vmatpush1.msra.mxu0 0.0
    %6186 = vmatprep.subr.mxu0 0.0
    %6187 = vmatpush1.msra.mxu0 0.0
    %6188 = vmatprep.subr.mxu0 0.0
    %6189 = vmatpush1.msra.mxu0 0.0
    %6190 = vmatprep.subr.mxu0 0.0
    %6191 = vmatpush1.msra.mxu0 0.0
    %6192 = vmatprep.subr.mxu0 0.0
    %6193 = vmatpush1.msra.mxu0 0.0
    %6194 = vmatprep.subr.mxu0 0.0
    %6195 = vmatpush1.msra.mxu0 0.0
    %6196 = vmatprep.subr.mxu0 0.0
    %6197 = vmatpush1.msra.mxu0 0.0
    %6198 = vmatprep.subr.mxu0 0.0
    %6199 = vmatpush1.msra.mxu0 0.0
    %6200 = vmatprep.subr.mxu0 0.0
    %6201 = vmatpush1.msra.mxu0 0.0
    %6202 = vmatprep.subr.mxu0 0.0
    %6203 = vmatpush1.msra.mxu0 0.0
    %6204 = vmatprep.subr.mxu0 0.0
    %6205 = vmatpush1.msra.mxu0 0.0
    %6206 = vmatprep.mubr.f32.mxu0 0.0
    %6207 = vmatmul.mubr.f32.gmra.mrb[0].mxu0 %v6065
    %v6208 = vpop.f32.mrb[0].mxu0
    %v6209 = vadd.f32 %v6138, %v6208
    %v6210 = vpop.f32.mrb[0].mxu0
    %v6211 = vadd.f32 %v6140, %v6210
    %6212 = vdwg.mxu0
    %v6213 = vadd.f32 %v6209, %v536
    %v6214 = vadd.f32 %v6211, %v540
    %v6215 = vxor.u32 %v6213, 2147483648
    %v6216 = vmul.f32 %v6215, 1.442695
    %v6217 = vpow.pop %v6216
    %v6218 = vadd.f32 %v6217, 1.0
    %v6219 = vrcp.pop %v6218
    %v6220 = vmul.f32 1.0, %v6219
    %v6221 = vtanh.pop %v6214
    %v6222 = vxor.u32 %v6214, 2147483648
    %v6223 = vmul.f32 %v6222, 1.442695
    %v6224 = vpow.pop %v6223
    %v6225 = vadd.f32 %v6224, 1.0
    %v6226 = vrcp.pop %v6225
    %v6227 = vmul.f32 1.0, %v6226
    %v6228 = vmul.f32 %v6220, %v5856
    %v6229 = vmul.f32 %v6220, %v6221
    %6231 = vrot.lane.b32.xlu0 %v6229, 64
    %v6232 = vpop.permute.xlu0 %6231
    %v6234 = vadd.f32 %v6228, %v6232
    %v6235 = vtanh.pop %v6234
    %v6236 = vmul.f32 %v6227, %v6235
    %vm6237 = vcmp.gt.f32.partialorder %v6236, 0.0
    %v6238 = vmul.f32 %v6236, 0.1
    %v6239 = vsel %vm6237, %v6236, %v6238
    %6241 = vrot.lane.b32.xlu0 %v6239, 64
    %v6242 = vpop.permute.xlu0 %6241
    %s6244 = scalar_lea.vmem [#allocation10], 30
    %6245 = vst.msk [vmem:[%s6244] sm:$0x3] %vm574, %v6242
    %s6246 = scalar_lea.vmem [#allocation2], 128
    %v6247 = vld [vmem:[%s6246] sm:$0xff]
    %6248 = vmatprep.subr.mxu0 %v77
    %6249 = vmatpush1.msra.mxu0 %v76
    %6250 = vmatprep.subr.mxu0 %v81
    %6251 = vmatpush1.msra.mxu0 %v80
    %6252 = vmatprep.subr.mxu0 %v85
    %6253 = vmatpush1.msra.mxu0 %v84
    %6254 = vmatprep.subr.mxu0 %v89
    %6255 = vmatpush1.msra.mxu0 %v88
    %6256 = vmatprep.subr.mxu0 %v93
    %6257 = vmatpush1.msra.mxu0 %v92
    %6258 = vmatprep.subr.mxu0 %v97
    %6259 = vmatpush1.msra.mxu0 %v96
    %6260 = vmatprep.subr.mxu0 %v101
    %6261 = vmatpush1.msra.mxu0 %v100
    %6262 = vmatprep.subr.mxu0 %v105
    %6263 = vmatpush1.msra.mxu0 %v104
    %6264 = vmatprep.subr.mxu0 %v109
    %6265 = vmatpush1.msra.mxu0 %v108
    %6266 = vmatprep.subr.mxu0 %v113
    %6267 = vmatpush1.msra.mxu0 %v112
    %6268 = vmatprep.subr.mxu0 %v117
    %6269 = vmatpush1.msra.mxu0 %v116
    %6270 = vmatprep.subr.mxu0 %v121
    %6271 = vmatpush1.msra.mxu0 %v120
    %6272 = vmatprep.subr.mxu0 %v125
    %6273 = vmatpush1.msra.mxu0 %v124
    %6274 = vmatprep.subr.mxu0 %v129
    %6275 = vmatpush1.msra.mxu0 %v128
    %6276 = vmatprep.subr.mxu0 %v133
    %6277 = vmatpush1.msra.mxu0 %v132
    %6278 = vmatprep.subr.mxu0 %v137
    %6279 = vmatpush1.msra.mxu0 %v136
    %6280 = vmatprep.subr.mxu0 0.0
    %6281 = vmatpush1.msra.mxu0 0.0
    %6282 = vmatprep.subr.mxu0 0.0
    %6283 = vmatpush1.msra.mxu0 0.0
    %6284 = vmatprep.subr.mxu0 0.0
    %6285 = vmatpush1.msra.mxu0 0.0
    %6286 = vmatprep.subr.mxu0 0.0
    %6287 = vmatpush1.msra.mxu0 0.0
    %6288 = vmatprep.subr.mxu0 0.0
    %6289 = vmatpush1.msra.mxu0 0.0
    %6290 = vmatprep.subr.mxu0 0.0
    %6291 = vmatpush1.msra.mxu0 0.0
    %6292 = vmatprep.subr.mxu0 0.0
    %6293 = vmatpush1.msra.mxu0 0.0
    %6294 = vmatprep.subr.mxu0 0.0
    %6295 = vmatpush1.msra.mxu0 0.0
    %6296 = vmatprep.subr.mxu0 0.0
    %6297 = vmatpush1.msra.mxu0 0.0
    %6298 = vmatprep.subr.mxu0 0.0
    %6299 = vmatpush1.msra.mxu0 0.0
    %6300 = vmatprep.subr.mxu0 0.0
    %6301 = vmatpush1.msra.mxu0 0.0
    %6302 = vmatprep.subr.mxu0 0.0
    %6303 = vmatpush1.msra.mxu0 0.0
    %6304 = vmatprep.subr.mxu0 0.0
    %6305 = vmatpush1.msra.mxu0 0.0
    %6306 = vmatprep.subr.mxu0 0.0
    %6307 = vmatpush1.msra.mxu0 0.0
    %6308 = vmatprep.subr.mxu0 0.0
    %6309 = vmatpush1.msra.mxu0 0.0
    %6310 = vmatprep.subr.mxu0 0.0
    %6311 = vmatpush1.msra.mxu0 0.0
    %6312 = vmatprep.mubr.f32.mxu0 0.0
    %6313 = vmatmul.mubr.f32.gmra.mrb[0].mxu0 %v6065
    %v6314 = vpop.f32.mrb[0].mxu0
    %v6315 = vadd.f32 0.0, %v6314
    %v6316 = vpop.f32.mrb[0].mxu0
    %v6317 = vadd.f32 0.0, %v6316
    %6318 = vdwg.mxu0
    %6319 = vmatprep.subr.mxu0 %v79
    %6320 = vmatpush1.msra.mxu0 %v78
    %6321 = vmatprep.subr.mxu0 %v83
    %6322 = vmatpush1.msra.mxu0 %v82
    %6323 = vmatprep.subr.mxu0 %v87
    %6324 = vmatpush1.msra.mxu0 %v86
    %6325 = vmatprep.subr.mxu0 %v91
    %6326 = vmatpush1.msra.mxu0 %v90
    %6327 = vmatprep.subr.mxu0 %v95
    %6328 = vmatpush1.msra.mxu0 %v94
    %6329 = vmatprep.subr.mxu0 %v99
    %6330 = vmatpush1.msra.mxu0 %v98
    %6331 = vmatprep.subr.mxu0 %v103
    %6332 = vmatpush1.msra.mxu0 %v102
    %6333 = vmatprep.subr.mxu0 %v107
    %6334 = vmatpush1.msra.mxu0 %v106
    %6335 = vmatprep.subr.mxu0 %v111
    %6336 = vmatpush1.msra.mxu0 %v110
    %6337 = vmatprep.subr.mxu0 %v115
    %6338 = vmatpush1.msra.mxu0 %v114
    %6339 = vmatprep.subr.mxu0 %v119
    %6340 = vmatpush1.msra.mxu0 %v118
    %6341 = vmatprep.subr.mxu0 %v123
    %6342 = vmatpush1.msra.mxu0 %v122
    %6343 = vmatprep.subr.mxu0 %v127
    %6344 = vmatpush1.msra.mxu0 %v126
    %6345 = vmatprep.subr.mxu0 %v131
    %6346 = vmatpush1.msra.mxu0 %v130
    %6347 = vmatprep.subr.mxu0 %v135
    %6348 = vmatpush1.msra.mxu0 %v134
    %6349 = vmatprep.subr.mxu0 %v139
    %6350 = vmatpush1.msra.mxu0 %v138
    %6351 = vmatprep.subr.mxu0 0.0
    %6352 = vmatpush1.msra.mxu0 0.0
    %6353 = vmatprep.subr.mxu0 0.0
    %6354 = vmatpush1.msra.mxu0 0.0
    %6355 = vmatprep.subr.mxu0 0.0
    %6356 = vmatpush1.msra.mxu0 0.0
    %6357 = vmatprep.subr.mxu0 0.0
    %6358 = vmatpush1.msra.mxu0 0.0
    %6359 = vmatprep.subr.mxu0 0.0
    %6360 = vmatpush1.msra.mxu0 0.0
    %6361 = vmatprep.subr.mxu0 0.0
    %6362 = vmatpush1.msra.mxu0 0.0
    %6363 = vmatprep.subr.mxu0 0.0
    %6364 = vmatpush1.msra.mxu0 0.0
    %6365 = vmatprep.subr.mxu0 0.0
    %6366 = vmatpush1.msra.mxu0 0.0
    %6367 = vmatprep.subr.mxu0 0.0
    %6368 = vmatpush1.msra.mxu0 0.0
    %6369 = vmatprep.subr.mxu0 0.0
    %6370 = vmatpush1.msra.mxu0 0.0
    %6371 = vmatprep.subr.mxu0 0.0
    %6372 = vmatpush1.msra.mxu0 0.0
    %6373 = vmatprep.subr.mxu0 0.0
    %6374 = vmatpush1.msra.mxu0 0.0
    %6375 = vmatprep.subr.mxu0 0.0
    %6376 = vmatpush1.msra.mxu0 0.0
    %6377 = vmatprep.subr.mxu0 0.0
    %6378 = vmatpush1.msra.mxu0 0.0
    %6379 = vmatprep.subr.mxu0 0.0
    %6380 = vmatpush1.msra.mxu0 0.0
    %6381 = vmatprep.subr.mxu0 0.0
    %6382 = vmatpush1.msra.mxu0 0.0
    %6383 = vmatprep.mubr.f32.mxu0 0.0
    %6384 = vmatmul.mubr.f32.gmra.mrb[0].mxu0 %v6065
    %v6385 = vpop.f32.mrb[0].mxu0
    %v6386 = vadd.f32 0.0, %v6385
    %v6387 = vpop.f32.mrb[0].mxu0
    %v6388 = vadd.f32 0.0, %v6387
    %6389 = vdwg.mxu0
    %v6394 = vcombine.low %v6315, %v6317
    %v6395 = vcombine.low %v6386, %v6388
    %v6397 = vunpack.c.l.s4 1983009808
    %v6398 = vunpack.c.0.s8 %v6397
    %v6399 = vlaneseq
    %v6400 = vshrl.u32 %v6399, 7
    %v6401 = vsub.s32 %v6398, %v6400
    %v6402 = vrot.slane %v6394, %v6401
    %v6404 = vunpack.c.l.s4 1983009808
    %v6405 = vunpack.c.0.s8 %v6404
    %v6406 = vlaneseq
    %v6407 = vshrl.u32 %v6406, 7
    %v6408 = vsub.s32 %v6405, %v6407
    %v6409 = vrot.slane %v6395, %v6408
    %v6410 = vcombine.low %v6402, %v6409
    %v6412 = vadd.f32 %v6247, %v6410
    %v6413 = vxor.u32 %v6412, 2147483648
    %v6414 = vmul.f32 %v6413, 1.442695
    %v6415 = vpow.pop %v6414
    %v6416 = vadd.f32 %v6415, 1.0
    %v6417 = vrcp.pop %v6416
    %v6418 = vmul.f32 1.0, %v6417
    %v6420 = vrot.slane %v6412, 2
    %v6422 = vxor.u32 %v6420, 2147483648
    %v6423 = vmul.f32 %v6422, 1.442695
    %v6424 = vpow.pop %v6423
    %v6425 = vadd.f32 %v6424, 1.0
    %v6426 = vrcp.pop %v6425
    %v6427 = vmul.f32 1.0, %v6426
    %v6428 = vrot.slane %v6412, 4
    %v6430 = vtanh.pop %v6428
    %v6431 = vrot.slane %v6412, 6
    %v6433 = vxor.u32 %v6431, 2147483648
    %v6434 = vmul.f32 %v6433, 1.442695
    %v6435 = vpow.pop %v6434
    %v6436 = vadd.f32 %v6435, 1.0
    %v6437 = vrcp.pop %v6436
    %v6438 = vmul.f32 1.0, %v6437
    %v6439 = vmul.f32 %v6427, %v6063
    %v6440 = vmul.f32 %v6418, %v6430
    %v6441 = vadd.f32 %v6439, %v6440
    %v6442 = vtanh.pop %v6441
    %v6443 = vmul.f32 %v6438, %v6442
    %6445 = vrot.lane.b32.xlu0 %v6236, 64
    %v6446 = vpop.permute.xlu0 %6445
    %v6447 = vsel %vm386, %v6446, 0
    %6449 = vmatprep.subr.mxu0 %v173
    %6450 = vmatpush1.msra.mxu0 %v172
    %6451 = vmatprep.subr.mxu0 %v175
    %6452 = vmatpush1.msra.mxu0 %v174
    %6453 = vmatprep.subr.mxu0 %v177
    %6454 = vmatpush1.msra.mxu0 %v176
    %6455 = vmatprep.subr.mxu0 %v179
    %6456 = vmatpush1.msra.mxu0 %v178
    %6457 = vmatprep.subr.mxu0 %v181
    %6458 = vmatpush1.msra.mxu0 %v180
    %6459 = vmatprep.subr.mxu0 %v183
    %6460 = vmatpush1.msra.mxu0 %v182
    %6461 = vmatprep.subr.mxu0 %v185
    %6462 = vmatpush1.msra.mxu0 %v184
    %6463 = vmatprep.subr.mxu0 %v187
    %6464 = vmatpush1.msra.mxu0 %v186
    %6465 = vmatprep.subr.mxu0 0.0
    %6466 = vmatpush1.msra.mxu0 0.0
    %6467 = vmatprep.subr.mxu0 0.0
    %6468 = vmatpush1.msra.mxu0 0.0
    %6469 = vmatprep.subr.mxu0 0.0
    %6470 = vmatpush1.msra.mxu0 0.0
    %6471 = vmatprep.subr.mxu0 0.0
    %6472 = vmatpush1.msra.mxu0 0.0
    %6473 = vmatprep.subr.mxu0 0.0
    %6474 = vmatpush1.msra.mxu0 0.0
    %6475 = vmatprep.subr.mxu0 0.0
    %6476 = vmatpush1.msra.mxu0 0.0
    %6477 = vmatprep.subr.mxu0 0.0
    %6478 = vmatpush1.msra.mxu0 0.0
    %6479 = vmatprep.subr.mxu0 0.0
    %6480 = vmatpush1.msra.mxu0 0.0
    %6481 = vmatprep.subr.mxu0 0.0
    %6482 = vmatpush1.msra.mxu0 0.0
    %6483 = vmatprep.subr.mxu0 0.0
    %6484 = vmatpush1.msra.mxu0 0.0
    %6485 = vmatprep.subr.mxu0 0.0
    %6486 = vmatpush1.msra.mxu0 0.0
    %6487 = vmatprep.subr.mxu0 0.0
    %6488 = vmatpush1.msra.mxu0 0.0
    %6489 = vmatprep.subr.mxu0 0.0
    %6490 = vmatpush1.msra.mxu0 0.0
    %6491 = vmatprep.subr.mxu0 0.0
    %6492 = vmatpush1.msra.mxu0 0.0
    %6493 = vmatprep.subr.mxu0 0.0
    %6494 = vmatpush1.msra.mxu0 0.0
    %6495 = vmatprep.subr.mxu0 0.0
    %6496 = vmatpush1.msra.mxu0 0.0
    %6497 = vmatprep.subr.mxu0 0.0
    %6498 = vmatpush1.msra.mxu0 0.0
    %6499 = vmatprep.subr.mxu0 0.0
    %6500 = vmatpush1.msra.mxu0 0.0
    %6501 = vmatprep.subr.mxu0 0.0
    %6502 = vmatpush1.msra.mxu0 0.0
    %6503 = vmatprep.subr.mxu0 0.0
    %6504 = vmatpush1.msra.mxu0 0.0
    %6505 = vmatprep.subr.mxu0 0.0
    %6506 = vmatpush1.msra.mxu0 0.0
    %6507 = vmatprep.subr.mxu0 0.0
    %6508 = vmatpush1.msra.mxu0 0.0
    %6509 = vmatprep.subr.mxu0 0.0
    %6510 = vmatpush1.msra.mxu0 0.0
    %6511 = vmatprep.subr.mxu0 0.0
    %6512 = vmatpush1.msra.mxu0 0.0
    %6513 = vmatprep.mubr.f32.mxu0 0.0
    %6514 = vmatmul.mubr.f32.gmra.mrb[0].mxu0 %v6447
    %v6515 = vpop.f32.mrb[0].mxu0
    %v6516 = vadd.f32 0.0, %v6515
    %v6517 = vpop.f32.mrb[0].mxu0
    %v6518 = vadd.f32 0.0, %v6517
    %6519 = vdwg.mxu0
    %6520 = vmatprep.subr.mxu0 %v141
    %6521 = vmatpush1.msra.mxu0 %v140
    %6522 = vmatprep.subr.mxu0 %v143
    %6523 = vmatpush1.msra.mxu0 %v142
    %6524 = vmatprep.subr.mxu0 %v145
    %6525 = vmatpush1.msra.mxu0 %v144
    %6526 = vmatprep.subr.mxu0 %v147
    %6527 = vmatpush1.msra.mxu0 %v146
    %6528 = vmatprep.subr.mxu0 %v149
    %6529 = vmatpush1.msra.mxu0 %v148
    %6530 = vmatprep.subr.mxu0 %v151
    %6531 = vmatpush1.msra.mxu0 %v150
    %6532 = vmatprep.subr.mxu0 %v153
    %6533 = vmatpush1.msra.mxu0 %v152
    %6534 = vmatprep.subr.mxu0 %v155
    %6535 = vmatpush1.msra.mxu0 %v154
    %6536 = vmatprep.subr.mxu0 %v157
    %6537 = vmatpush1.msra.mxu0 %v156
    %6538 = vmatprep.subr.mxu0 %v159
    %6539 = vmatpush1.msra.mxu0 %v158
    %6540 = vmatprep.subr.mxu0 %v161
    %6541 = vmatpush1.msra.mxu0 %v160
    %6542 = vmatprep.subr.mxu0 %v163
    %6543 = vmatpush1.msra.mxu0 %v162
    %6544 = vmatprep.subr.mxu0 %v165
    %6545 = vmatpush1.msra.mxu0 %v164
    %6546 = vmatprep.subr.mxu0 %v167
    %6547 = vmatpush1.msra.mxu0 %v166
    %6548 = vmatprep.subr.mxu0 %v169
    %6549 = vmatpush1.msra.mxu0 %v168
    %6550 = vmatprep.subr.mxu0 %v171
    %6551 = vmatpush1.msra.mxu0 %v170
    %6552 = vmatprep.subr.mxu0 0.0
    %6553 = vmatpush1.msra.mxu0 0.0
    %6554 = vmatprep.subr.mxu0 0.0
    %6555 = vmatpush1.msra.mxu0 0.0
    %6556 = vmatprep.subr.mxu0 0.0
    %6557 = vmatpush1.msra.mxu0 0.0
    %6558 = vmatprep.subr.mxu0 0.0
    %6559 = vmatpush1.msra.mxu0 0.0
    %6560 = vmatprep.subr.mxu0 0.0
    %6561 = vmatpush1.msra.mxu0 0.0
    %6562 = vmatprep.subr.mxu0 0.0
    %6563 = vmatpush1.msra.mxu0 0.0
    %6564 = vmatprep.subr.mxu0 0.0
    %6565 = vmatpush1.msra.mxu0 0.0
    %6566 = vmatprep.subr.mxu0 0.0
    %6567 = vmatpush1.msra.mxu0 0.0
    %6568 = vmatprep.subr.mxu0 0.0
    %6569 = vmatpush1.msra.mxu0 0.0
    %6570 = vmatprep.subr.mxu0 0.0
    %6571 = vmatpush1.msra.mxu0 0.0
    %6572 = vmatprep.subr.mxu0 0.0
    %6573 = vmatpush1.msra.mxu0 0.0
    %6574 = vmatprep.subr.mxu0 0.0
    %6575 = vmatpush1.msra.mxu0 0.0
    %6576 = vmatprep.subr.mxu0 0.0
    %6577 = vmatpush1.msra.mxu0 0.0
    %6578 = vmatprep.subr.mxu0 0.0
    %6579 = vmatpush1.msra.mxu0 0.0
    %6580 = vmatprep.subr.mxu0 0.0
    %6581 = vmatpush1.msra.mxu0 0.0
    %6582 = vmatprep.subr.mxu0 0.0
    %6583 = vmatpush1.msra.mxu0 0.0
    %6584 = vmatprep.mubr.f32.mxu0 0.0
    %6585 = vmatmul.mubr.f32.gmra.mrb[0].mxu0 %v6443
    %v6586 = vpop.f32.mrb[0].mxu0
    %v6587 = vadd.f32 %v6516, %v6586
    %v6588 = vpop.f32.mrb[0].mxu0
    %v6589 = vadd.f32 %v6518, %v6588
    %6590 = vdwg.mxu0
    %v6591 = vadd.f32 %v6587, %v536
    %v6592 = vadd.f32 %v6589, %v540
    %v6593 = vxor.u32 %v6591, 2147483648
    %v6594 = vmul.f32 %v6593, 1.442695
    %v6595 = vpow.pop %v6594
    %v6596 = vadd.f32 %v6595, 1.0
    %v6597 = vrcp.pop %v6596
    %v6598 = vmul.f32 1.0, %v6597
    %v6599 = vtanh.pop %v6592
    %v6600 = vxor.u32 %v6592, 2147483648
    %v6601 = vmul.f32 %v6600, 1.442695
    %v6602 = vpow.pop %v6601
    %v6603 = vadd.f32 %v6602, 1.0
    %v6604 = vrcp.pop %v6603
    %v6605 = vmul.f32 1.0, %v6604
    %v6606 = vmul.f32 %v6598, %v6234
    %v6607 = vmul.f32 %v6598, %v6599
    %6609 = vrot.lane.b32.xlu0 %v6607, 64
    %v6610 = vpop.permute.xlu0 %6609
    %v6612 = vadd.f32 %v6606, %v6610
    %v6613 = vtanh.pop %v6612
    %v6614 = vmul.f32 %v6605, %v6613
    %vm6615 = vcmp.gt.f32.partialorder %v6614, 0.0
    %v6616 = vmul.f32 %v6614, 0.1
    %v6617 = vsel %vm6615, %v6614, %v6616
    %6619 = vrot.lane.b32.xlu0 %v6617, 64
    %v6620 = vpop.permute.xlu0 %6619
    %s6622 = scalar_lea.vmem [#allocation10], 32
    %6623 = vst.msk [vmem:[%s6622] sm:$0x3] %vm574, %v6620
    %s6624 = scalar_lea.vmem [#allocation2], 136
    %v6625 = vld [vmem:[%s6624] sm:$0xff]
    %6626 = vmatprep.subr.mxu0 %v77
    %6627 = vmatpush1.msra.mxu0 %v76
    %6628 = vmatprep.subr.mxu0 %v81
    %6629 = vmatpush1.msra.mxu0 %v80
    %6630 = vmatprep.subr.mxu0 %v85
    %6631 = vmatpush1.msra.mxu0 %v84
    %6632 = vmatprep.subr.mxu0 %v89
    %6633 = vmatpush1.msra.mxu0 %v88
    %6634 = vmatprep.subr.mxu0 %v93
    %6635 = vmatpush1.msra.mxu0 %v92
    %6636 = vmatprep.subr.mxu0 %v97
    %6637 = vmatpush1.msra.mxu0 %v96
    %6638 = vmatprep.subr.mxu0 %v101
    %6639 = vmatpush1.msra.mxu0 %v100
    %6640 = vmatprep.subr.mxu0 %v105
    %6641 = vmatpush1.msra.mxu0 %v104
    %6642 = vmatprep.subr.mxu0 %v109
    %6643 = vmatpush1.msra.mxu0 %v108
    %6644 = vmatprep.subr.mxu0 %v113
    %6645 = vmatpush1.msra.mxu0 %v112
    %6646 = vmatprep.subr.mxu0 %v117
    %6647 = vmatpush1.msra.mxu0 %v116
    %6648 = vmatprep.subr.mxu0 %v121
    %6649 = vmatpush1.msra.mxu0 %v120
    %6650 = vmatprep.subr.mxu0 %v125
    %6651 = vmatpush1.msra.mxu0 %v124
    %6652 = vmatprep.subr.mxu0 %v129
    %6653 = vmatpush1.msra.mxu0 %v128
    %6654 = vmatprep.subr.mxu0 %v133
    %6655 = vmatpush1.msra.mxu0 %v132
    %6656 = vmatprep.subr.mxu0 %v137
    %6657 = vmatpush1.msra.mxu0 %v136
    %6658 = vmatprep.subr.mxu0 0.0
    %6659 = vmatpush1.msra.mxu0 0.0
    %6660 = vmatprep.subr.mxu0 0.0
    %6661 = vmatpush1.msra.mxu0 0.0
    %6662 = vmatprep.subr.mxu0 0.0
    %6663 = vmatpush1.msra.mxu0 0.0
    %6664 = vmatprep.subr.mxu0 0.0
    %6665 = vmatpush1.msra.mxu0 0.0
    %6666 = vmatprep.subr.mxu0 0.0
    %6667 = vmatpush1.msra.mxu0 0.0
    %6668 = vmatprep.subr.mxu0 0.0
    %6669 = vmatpush1.msra.mxu0 0.0
    %6670 = vmatprep.subr.mxu0 0.0
    %6671 = vmatpush1.msra.mxu0 0.0
    %6672 = vmatprep.subr.mxu0 0.0
    %6673 = vmatpush1.msra.mxu0 0.0
    %6674 = vmatprep.subr.mxu0 0.0
    %6675 = vmatpush1.msra.mxu0 0.0
    %6676 = vmatprep.subr.mxu0 0.0
    %6677 = vmatpush1.msra.mxu0 0.0
    %6678 = vmatprep.subr.mxu0 0.0
    %6679 = vmatpush1.msra.mxu0 0.0
    %6680 = vmatprep.subr.mxu0 0.0
    %6681 = vmatpush1.msra.mxu0 0.0
    %6682 = vmatprep.subr.mxu0 0.0
    %6683 = vmatpush1.msra.mxu0 0.0
    %6684 = vmatprep.subr.mxu0 0.0
    %6685 = vmatpush1.msra.mxu0 0.0
    %6686 = vmatprep.subr.mxu0 0.0
    %6687 = vmatpush1.msra.mxu0 0.0
    %6688 = vmatprep.subr.mxu0 0.0
    %6689 = vmatpush1.msra.mxu0 0.0
    %6690 = vmatprep.mubr.f32.mxu0 0.0
    %6691 = vmatmul.mubr.f32.gmra.mrb[0].mxu0 %v6443
    %v6692 = vpop.f32.mrb[0].mxu0
    %v6693 = vadd.f32 0.0, %v6692
    %v6694 = vpop.f32.mrb[0].mxu0
    %v6695 = vadd.f32 0.0, %v6694
    %6696 = vdwg.mxu0
    %6697 = vmatprep.subr.mxu0 %v79
    %6698 = vmatpush1.msra.mxu0 %v78
    %6699 = vmatprep.subr.mxu0 %v83
    %6700 = vmatpush1.msra.mxu0 %v82
    %6701 = vmatprep.subr.mxu0 %v87
    %6702 = vmatpush1.msra.mxu0 %v86
    %6703 = vmatprep.subr.mxu0 %v91
    %6704 = vmatpush1.msra.mxu0 %v90
    %6705 = vmatprep.subr.mxu0 %v95
    %6706 = vmatpush1.msra.mxu0 %v94
    %6707 = vmatprep.subr.mxu0 %v99
    %6708 = vmatpush1.msra.mxu0 %v98
    %6709 = vmatprep.subr.mxu0 %v103
    %6710 = vmatpush1.msra.mxu0 %v102
    %6711 = vmatprep.subr.mxu0 %v107
    %6712 = vmatpush1.msra.mxu0 %v106
    %6713 = vmatprep.subr.mxu0 %v111
    %6714 = vmatpush1.msra.mxu0 %v110
    %6715 = vmatprep.subr.mxu0 %v115
    %6716 = vmatpush1.msra.mxu0 %v114
    %6717 = vmatprep.subr.mxu0 %v119
    %6718 = vmatpush1.msra.mxu0 %v118
    %6719 = vmatprep.subr.mxu0 %v123
    %6720 = vmatpush1.msra.mxu0 %v122
    %6721 = vmatprep.subr.mxu0 %v127
    %6722 = vmatpush1.msra.mxu0 %v126
    %6723 = vmatprep.subr.mxu0 %v131
    %6724 = vmatpush1.msra.mxu0 %v130
    %6725 = vmatprep.subr.mxu0 %v135
    %6726 = vmatpush1.msra.mxu0 %v134
    %6727 = vmatprep.subr.mxu0 %v139
    %6728 = vmatpush1.msra.mxu0 %v138
    %6729 = vmatprep.subr.mxu0 0.0
    %6730 = vmatpush1.msra.mxu0 0.0
    %6731 = vmatprep.subr.mxu0 0.0
    %6732 = vmatpush1.msra.mxu0 0.0
    %6733 = vmatprep.subr.mxu0 0.0
    %6734 = vmatpush1.msra.mxu0 0.0
    %6735 = vmatprep.subr.mxu0 0.0
    %6736 = vmatpush1.msra.mxu0 0.0
    %6737 = vmatprep.subr.mxu0 0.0
    %6738 = vmatpush1.msra.mxu0 0.0
    %6739 = vmatprep.subr.mxu0 0.0
    %6740 = vmatpush1.msra.mxu0 0.0
    %6741 = vmatprep.subr.mxu0 0.0
    %6742 = vmatpush1.msra.mxu0 0.0
    %6743 = vmatprep.subr.mxu0 0.0
    %6744 = vmatpush1.msra.mxu0 0.0
    %6745 = vmatprep.subr.mxu0 0.0
    %6746 = vmatpush1.msra.mxu0 0.0
    %6747 = vmatprep.subr.mxu0 0.0
    %6748 = vmatpush1.msra.mxu0 0.0
    %6749 = vmatprep.subr.mxu0 0.0
    %6750 = vmatpush1.msra.mxu0 0.0
    %6751 = vmatprep.subr.mxu0 0.0
    %6752 = vmatpush1.msra.mxu0 0.0
    %6753 = vmatprep.subr.mxu0 0.0
    %6754 = vmatpush1.msra.mxu0 0.0
    %6755 = vmatprep.subr.mxu0 0.0
    %6756 = vmatpush1.msra.mxu0 0.0
    %6757 = vmatprep.subr.mxu0 0.0
    %6758 = vmatpush1.msra.mxu0 0.0
    %6759 = vmatprep.subr.mxu0 0.0
    %6760 = vmatpush1.msra.mxu0 0.0
    %6761 = vmatprep.mubr.f32.mxu0 0.0
    %6762 = vmatmul.mubr.f32.gmra.mrb[0].mxu0 %v6443
    %v6763 = vpop.f32.mrb[0].mxu0
    %v6764 = vadd.f32 0.0, %v6763
    %v6765 = vpop.f32.mrb[0].mxu0
    %v6766 = vadd.f32 0.0, %v6765
    %6767 = vdwg.mxu0
    %v6772 = vcombine.low %v6693, %v6695
    %v6773 = vcombine.low %v6764, %v6766
    %v6775 = vunpack.c.l.s4 1983009808
    %v6776 = vunpack.c.0.s8 %v6775
    %v6777 = vlaneseq
    %v6778 = vshrl.u32 %v6777, 7
    %v6779 = vsub.s32 %v6776, %v6778
    %v6780 = vrot.slane %v6772, %v6779
    %v6782 = vunpack.c.l.s4 1983009808
    %v6783 = vunpack.c.0.s8 %v6782
    %v6784 = vlaneseq
    %v6785 = vshrl.u32 %v6784, 7
    %v6786 = vsub.s32 %v6783, %v6785
    %v6787 = vrot.slane %v6773, %v6786
    %v6788 = vcombine.low %v6780, %v6787
    %v6790 = vadd.f32 %v6625, %v6788
    %v6791 = vxor.u32 %v6790, 2147483648
    %v6792 = vmul.f32 %v6791, 1.442695
    %v6793 = vpow.pop %v6792
    %v6794 = vadd.f32 %v6793, 1.0
    %v6795 = vrcp.pop %v6794
    %v6796 = vmul.f32 1.0, %v6795
    %v6798 = vrot.slane %v6790, 2
    %v6800 = vxor.u32 %v6798, 2147483648
    %v6801 = vmul.f32 %v6800, 1.442695
    %v6802 = vpow.pop %v6801
    %v6803 = vadd.f32 %v6802, 1.0
    %v6804 = vrcp.pop %v6803
    %v6805 = vmul.f32 1.0, %v6804
    %v6806 = vrot.slane %v6790, 4
    %v6808 = vtanh.pop %v6806
    %v6809 = vrot.slane %v6790, 6
    %v6811 = vxor.u32 %v6809, 2147483648
    %v6812 = vmul.f32 %v6811, 1.442695
    %v6813 = vpow.pop %v6812
    %v6814 = vadd.f32 %v6813, 1.0
    %v6815 = vrcp.pop %v6814
    %v6816 = vmul.f32 1.0, %v6815
    %v6817 = vmul.f32 %v6805, %v6441
    %v6818 = vmul.f32 %v6796, %v6808
    %v6819 = vadd.f32 %v6817, %v6818
    %v6820 = vtanh.pop %v6819
    %v6821 = vmul.f32 %v6816, %v6820
    %6823 = vrot.lane.b32.xlu0 %v6614, 64
    %v6824 = vpop.permute.xlu0 %6823
    %v6825 = vsel %vm386, %v6824, 0
    %6827 = vmatprep.subr.mxu0 %v173
    %6828 = vmatpush1.msra.mxu0 %v172
    %6829 = vmatprep.subr.mxu0 %v175
    %6830 = vmatpush1.msra.mxu0 %v174
    %6831 = vmatprep.subr.mxu0 %v177
    %6832 = vmatpush1.msra.mxu0 %v176
    %6833 = vmatprep.subr.mxu0 %v179
    %6834 = vmatpush1.msra.mxu0 %v178
    %6835 = vmatprep.subr.mxu0 %v181
    %6836 = vmatpush1.msra.mxu0 %v180
    %6837 = vmatprep.subr.mxu0 %v183
    %6838 = vmatpush1.msra.mxu0 %v182
    %6839 = vmatprep.subr.mxu0 %v185
    %6840 = vmatpush1.msra.mxu0 %v184
    %6841 = vmatprep.subr.mxu0 %v187
    %6842 = vmatpush1.msra.mxu0 %v186
    %6843 = vmatprep.subr.mxu0 0.0
    %6844 = vmatpush1.msra.mxu0 0.0
    %6845 = vmatprep.subr.mxu0 0.0
    %6846 = vmatpush1.msra.mxu0 0.0
    %6847 = vmatprep.subr.mxu0 0.0
    %6848 = vmatpush1.msra.mxu0 0.0
    %6849 = vmatprep.subr.mxu0 0.0
    %6850 = vmatpush1.msra.mxu0 0.0
    %6851 = vmatprep.subr.mxu0 0.0
    %6852 = vmatpush1.msra.mxu0 0.0
    %6853 = vmatprep.subr.mxu0 0.0
    %6854 = vmatpush1.msra.mxu0 0.0
    %6855 = vmatprep.subr.mxu0 0.0
    %6856 = vmatpush1.msra.mxu0 0.0
    %6857 = vmatprep.subr.mxu0 0.0
    %6858 = vmatpush1.msra.mxu0 0.0
    %6859 = vmatprep.subr.mxu0 0.0
    %6860 = vmatpush1.msra.mxu0 0.0
    %6861 = vmatprep.subr.mxu0 0.0
    %6862 = vmatpush1.msra.mxu0 0.0
    %6863 = vmatprep.subr.mxu0 0.0
    %6864 = vmatpush1.msra.mxu0 0.0
    %6865 = vmatprep.subr.mxu0 0.0
    %6866 = vmatpush1.msra.mxu0 0.0
    %6867 = vmatprep.subr.mxu0 0.0
    %6868 = vmatpush1.msra.mxu0 0.0
    %6869 = vmatprep.subr.mxu0 0.0
    %6870 = vmatpush1.msra.mxu0 0.0
    %6871 = vmatprep.subr.mxu0 0.0
    %6872 = vmatpush1.msra.mxu0 0.0
    %6873 = vmatprep.subr.mxu0 0.0
    %6874 = vmatpush1.msra.mxu0 0.0
    %6875 = vmatprep.subr.mxu0 0.0
    %6876 = vmatpush1.msra.mxu0 0.0
    %6877 = vmatprep.subr.mxu0 0.0
    %6878 = vmatpush1.msra.mxu0 0.0
    %6879 = vmatprep.subr.mxu0 0.0
    %6880 = vmatpush1.msra.mxu0 0.0
    %6881 = vmatprep.subr.mxu0 0.0
    %6882 = vmatpush1.msra.mxu0 0.0
    %6883 = vmatprep.subr.mxu0 0.0
    %6884 = vmatpush1.msra.mxu0 0.0
    %6885 = vmatprep.subr.mxu0 0.0
    %6886 = vmatpush1.msra.mxu0 0.0
    %6887 = vmatprep.subr.mxu0 0.0
    %6888 = vmatpush1.msra.mxu0 0.0
    %6889 = vmatprep.subr.mxu0 0.0
    %6890 = vmatpush1.msra.mxu0 0.0
    %6891 = vmatprep.mubr.f32.mxu0 0.0
    %6892 = vmatmul.mubr.f32.gmra.mrb[0].mxu0 %v6825
    %v6893 = vpop.f32.mrb[0].mxu0
    %v6894 = vadd.f32 0.0, %v6893
    %v6895 = vpop.f32.mrb[0].mxu0
    %v6896 = vadd.f32 0.0, %v6895
    %6897 = vdwg.mxu0
    %6898 = vmatprep.subr.mxu0 %v141
    %6899 = vmatpush1.msra.mxu0 %v140
    %6900 = vmatprep.subr.mxu0 %v143
    %6901 = vmatpush1.msra.mxu0 %v142
    %6902 = vmatprep.subr.mxu0 %v145
    %6903 = vmatpush1.msra.mxu0 %v144
    %6904 = vmatprep.subr.mxu0 %v147
    %6905 = vmatpush1.msra.mxu0 %v146
    %6906 = vmatprep.subr.mxu0 %v149
    %6907 = vmatpush1.msra.mxu0 %v148
    %6908 = vmatprep.subr.mxu0 %v151
    %6909 = vmatpush1.msra.mxu0 %v150
    %6910 = vmatprep.subr.mxu0 %v153
    %6911 = vmatpush1.msra.mxu0 %v152
    %6912 = vmatprep.subr.mxu0 %v155
    %6913 = vmatpush1.msra.mxu0 %v154
    %6914 = vmatprep.subr.mxu0 %v157
    %6915 = vmatpush1.msra.mxu0 %v156
    %6916 = vmatprep.subr.mxu0 %v159
    %6917 = vmatpush1.msra.mxu0 %v158
    %6918 = vmatprep.subr.mxu0 %v161
    %6919 = vmatpush1.msra.mxu0 %v160
    %6920 = vmatprep.subr.mxu0 %v163
    %6921 = vmatpush1.msra.mxu0 %v162
    %6922 = vmatprep.subr.mxu0 %v165
    %6923 = vmatpush1.msra.mxu0 %v164
    %6924 = vmatprep.subr.mxu0 %v167
    %6925 = vmatpush1.msra.mxu0 %v166
    %6926 = vmatprep.subr.mxu0 %v169
    %6927 = vmatpush1.msra.mxu0 %v168
    %6928 = vmatprep.subr.mxu0 %v171
    %6929 = vmatpush1.msra.mxu0 %v170
    %6930 = vmatprep.subr.mxu0 0.0
    %6931 = vmatpush1.msra.mxu0 0.0
    %6932 = vmatprep.subr.mxu0 0.0
    %6933 = vmatpush1.msra.mxu0 0.0
    %6934 = vmatprep.subr.mxu0 0.0
    %6935 = vmatpush1.msra.mxu0 0.0
    %6936 = vmatprep.subr.mxu0 0.0
    %6937 = vmatpush1.msra.mxu0 0.0
    %6938 = vmatprep.subr.mxu0 0.0
    %6939 = vmatpush1.msra.mxu0 0.0
    %6940 = vmatprep.subr.mxu0 0.0
    %6941 = vmatpush1.msra.mxu0 0.0
    %6942 = vmatprep.subr.mxu0 0.0
    %6943 = vmatpush1.msra.mxu0 0.0
    %6944 = vmatprep.subr.mxu0 0.0
    %6945 = vmatpush1.msra.mxu0 0.0
    %6946 = vmatprep.subr.mxu0 0.0
    %6947 = vmatpush1.msra.mxu0 0.0
    %6948 = vmatprep.subr.mxu0 0.0
    %6949 = vmatpush1.msra.mxu0 0.0
    %6950 = vmatprep.subr.mxu0 0.0
    %6951 = vmatpush1.msra.mxu0 0.0
    %6952 = vmatprep.subr.mxu0 0.0
    %6953 = vmatpush1.msra.mxu0 0.0
    %6954 = vmatprep.subr.mxu0 0.0
    %6955 = vmatpush1.msra.mxu0 0.0
    %6956 = vmatprep.subr.mxu0 0.0
    %6957 = vmatpush1.msra.mxu0 0.0
    %6958 = vmatprep.subr.mxu0 0.0
    %6959 = vmatpush1.msra.mxu0 0.0
    %6960 = vmatprep.subr.mxu0 0.0
    %6961 = vmatpush1.msra.mxu0 0.0
    %6962 = vmatprep.mubr.f32.mxu0 0.0
    %6963 = vmatmul.mubr.f32.gmra.mrb[0].mxu0 %v6821
    %v6964 = vpop.f32.mrb[0].mxu0
    %v6965 = vadd.f32 %v6894, %v6964
    %v6966 = vpop.f32.mrb[0].mxu0
    %v6967 = vadd.f32 %v6896, %v6966
    %6968 = vdwg.mxu0
    %v6969 = vadd.f32 %v6965, %v536
    %v6970 = vadd.f32 %v6967, %v540
    %v6971 = vxor.u32 %v6969, 2147483648
    %v6972 = vmul.f32 %v6971, 1.442695
    %v6973 = vpow.pop %v6972
    %v6974 = vadd.f32 %v6973, 1.0
    %v6975 = vrcp.pop %v6974
    %v6976 = vmul.f32 1.0, %v6975
    %v6977 = vtanh.pop %v6970
    %v6978 = vxor.u32 %v6970, 2147483648
    %v6979 = vmul.f32 %v6978, 1.442695
    %v6980 = vpow.pop %v6979
    %v6981 = vadd.f32 %v6980, 1.0
    %v6982 = vrcp.pop %v6981
    %v6983 = vmul.f32 1.0, %v6982
    %v6984 = vmul.f32 %v6976, %v6612
    %v6985 = vmul.f32 %v6976, %v6977
    %6987 = vrot.lane.b32.xlu0 %v6985, 64
    %v6988 = vpop.permute.xlu0 %6987
    %v6990 = vadd.f32 %v6984, %v6988
    %v6991 = vtanh.pop %v6990
    %v6992 = vmul.f32 %v6983, %v6991
    %vm6993 = vcmp.gt.f32.partialorder %v6992, 0.0
    %v6994 = vmul.f32 %v6992, 0.1
    %v6995 = vsel %vm6993, %v6992, %v6994
    %6997 = vrot.lane.b32.xlu0 %v6995, 64
    %v6998 = vpop.permute.xlu0 %6997
    %s7000 = scalar_lea.vmem [#allocation10], 34
    %7001 = vst.msk [vmem:[%s7000] sm:$0x3] %vm574, %v6998
    %s7002 = scalar_lea.vmem [#allocation2], 144
    %v7003 = vld [vmem:[%s7002] sm:$0xff]
    %7004 = vmatprep.subr.mxu0 %v77
    %7005 = vmatpush1.msra.mxu0 %v76
    %7006 = vmatprep.subr.mxu0 %v81
    %7007 = vmatpush1.msra.mxu0 %v80
    %7008 = vmatprep.subr.mxu0 %v85
    %7009 = vmatpush1.msra.mxu0 %v84
    %7010 = vmatprep.subr.mxu0 %v89
    %7011 = vmatpush1.msra.mxu0 %v88
    %7012 = vmatprep.subr.mxu0 %v93
    %7013 = vmatpush1.msra.mxu0 %v92
    %7014 = vmatprep.subr.mxu0 %v97
    %7015 = vmatpush1.msra.mxu0 %v96
    %7016 = vmatprep.subr.mxu0 %v101
    %7017 = vmatpush1.msra.mxu0 %v100
    %7018 = vmatprep.subr.mxu0 %v105
    %7019 = vmatpush1.msra.mxu0 %v104
    %7020 = vmatprep.subr.mxu0 %v109
    %7021 = vmatpush1.msra.mxu0 %v108
    %7022 = vmatprep.subr.mxu0 %v113
    %7023 = vmatpush1.msra.mxu0 %v112
    %7024 = vmatprep.subr.mxu0 %v117
    %7025 = vmatpush1.msra.mxu0 %v116
    %7026 = vmatprep.subr.mxu0 %v121
    %7027 = vmatpush1.msra.mxu0 %v120
    %7028 = vmatprep.subr.mxu0 %v125
    %7029 = vmatpush1.msra.mxu0 %v124
    %7030 = vmatprep.subr.mxu0 %v129
    %7031 = vmatpush1.msra.mxu0 %v128
    %7032 = vmatprep.subr.mxu0 %v133
    %7033 = vmatpush1.msra.mxu0 %v132
    %7034 = vmatprep.subr.mxu0 %v137
    %7035 = vmatpush1.msra.mxu0 %v136
    %7036 = vmatprep.subr.mxu0 0.0
    %7037 = vmatpush1.msra.mxu0 0.0
    %7038 = vmatprep.subr.mxu0 0.0
    %7039 = vmatpush1.msra.mxu0 0.0
    %7040 = vmatprep.subr.mxu0 0.0
    %7041 = vmatpush1.msra.mxu0 0.0
    %7042 = vmatprep.subr.mxu0 0.0
    %7043 = vmatpush1.msra.mxu0 0.0
    %7044 = vmatprep.subr.mxu0 0.0
    %7045 = vmatpush1.msra.mxu0 0.0
    %7046 = vmatprep.subr.mxu0 0.0
    %7047 = vmatpush1.msra.mxu0 0.0
    %7048 = vmatprep.subr.mxu0 0.0
    %7049 = vmatpush1.msra.mxu0 0.0
    %7050 = vmatprep.subr.mxu0 0.0
    %7051 = vmatpush1.msra.mxu0 0.0
    %7052 = vmatprep.subr.mxu0 0.0
    %7053 = vmatpush1.msra.mxu0 0.0
    %7054 = vmatprep.subr.mxu0 0.0
    %7055 = vmatpush1.msra.mxu0 0.0
    %7056 = vmatprep.subr.mxu0 0.0
    %7057 = vmatpush1.msra.mxu0 0.0
    %7058 = vmatprep.subr.mxu0 0.0
    %7059 = vmatpush1.msra.mxu0 0.0
    %7060 = vmatprep.subr.mxu0 0.0
    %7061 = vmatpush1.msra.mxu0 0.0
    %7062 = vmatprep.subr.mxu0 0.0
    %7063 = vmatpush1.msra.mxu0 0.0
    %7064 = vmatprep.subr.mxu0 0.0
    %7065 = vmatpush1.msra.mxu0 0.0
    %7066 = vmatprep.subr.mxu0 0.0
    %7067 = vmatpush1.msra.mxu0 0.0
    %7068 = vmatprep.mubr.f32.mxu0 0.0
    %7069 = vmatmul.mubr.f32.gmra.mrb[0].mxu0 %v6821
    %v7070 = vpop.f32.mrb[0].mxu0
    %v7071 = vadd.f32 0.0, %v7070
    %v7072 = vpop.f32.mrb[0].mxu0
    %v7073 = vadd.f32 0.0, %v7072
    %7074 = vdwg.mxu0
    %7075 = vmatprep.subr.mxu0 %v79
    %7076 = vmatpush1.msra.mxu0 %v78
    %7077 = vmatprep.subr.mxu0 %v83
    %7078 = vmatpush1.msra.mxu0 %v82
    %7079 = vmatprep.subr.mxu0 %v87
    %7080 = vmatpush1.msra.mxu0 %v86
    %7081 = vmatprep.subr.mxu0 %v91
    %7082 = vmatpush1.msra.mxu0 %v90
    %7083 = vmatprep.subr.mxu0 %v95
    %7084 = vmatpush1.msra.mxu0 %v94
    %7085 = vmatprep.subr.mxu0 %v99
    %7086 = vmatpush1.msra.mxu0 %v98
    %7087 = vmatprep.subr.mxu0 %v103
    %7088 = vmatpush1.msra.mxu0 %v102
    %7089 = vmatprep.subr.mxu0 %v107
    %7090 = vmatpush1.msra.mxu0 %v106
    %7091 = vmatprep.subr.mxu0 %v111
    %7092 = vmatpush1.msra.mxu0 %v110
    %7093 = vmatprep.subr.mxu0 %v115
    %7094 = vmatpush1.msra.mxu0 %v114
    %7095 = vmatprep.subr.mxu0 %v119
    %7096 = vmatpush1.msra.mxu0 %v118
    %7097 = vmatprep.subr.mxu0 %v123
    %7098 = vmatpush1.msra.mxu0 %v122
    %7099 = vmatprep.subr.mxu0 %v127
    %7100 = vmatpush1.msra.mxu0 %v126
    %7101 = vmatprep.subr.mxu0 %v131
    %7102 = vmatpush1.msra.mxu0 %v130
    %7103 = vmatprep.subr.mxu0 %v135
    %7104 = vmatpush1.msra.mxu0 %v134
    %7105 = vmatprep.subr.mxu0 %v139
    %7106 = vmatpush1.msra.mxu0 %v138
    %7107 = vmatprep.subr.mxu0 0.0
    %7108 = vmatpush1.msra.mxu0 0.0
    %7109 = vmatprep.subr.mxu0 0.0
    %7110 = vmatpush1.msra.mxu0 0.0
    %7111 = vmatprep.subr.mxu0 0.0
    %7112 = vmatpush1.msra.mxu0 0.0
    %7113 = vmatprep.subr.mxu0 0.0
    %7114 = vmatpush1.msra.mxu0 0.0
    %7115 = vmatprep.subr.mxu0 0.0
    %7116 = vmatpush1.msra.mxu0 0.0
    %7117 = vmatprep.subr.mxu0 0.0
    %7118 = vmatpush1.msra.mxu0 0.0
    %7119 = vmatprep.subr.mxu0 0.0
    %7120 = vmatpush1.msra.mxu0 0.0
    %7121 = vmatprep.subr.mxu0 0.0
    %7122 = vmatpush1.msra.mxu0 0.0
    %7123 = vmatprep.subr.mxu0 0.0
    %7124 = vmatpush1.msra.mxu0 0.0
    %7125 = vmatprep.subr.mxu0 0.0
    %7126 = vmatpush1.msra.mxu0 0.0
    %7127 = vmatprep.subr.mxu0 0.0
    %7128 = vmatpush1.msra.mxu0 0.0
    %7129 = vmatprep.subr.mxu0 0.0
    %7130 = vmatpush1.msra.mxu0 0.0
    %7131 = vmatprep.subr.mxu0 0.0
    %7132 = vmatpush1.msra.mxu0 0.0
    %7133 = vmatprep.subr.mxu0 0.0
    %7134 = vmatpush1.msra.mxu0 0.0
    %7135 = vmatprep.subr.mxu0 0.0
    %7136 = vmatpush1.msra.mxu0 0.0
    %7137 = vmatprep.subr.mxu0 0.0
    %7138 = vmatpush1.msra.mxu0 0.0
    %7139 = vmatprep.mubr.f32.mxu0 0.0
    %7140 = vmatmul.mubr.f32.gmra.mrb[0].mxu0 %v6821
    %v7141 = vpop.f32.mrb[0].mxu0
    %v7142 = vadd.f32 0.0, %v7141
    %v7143 = vpop.f32.mrb[0].mxu0
    %v7144 = vadd.f32 0.0, %v7143
    %7145 = vdwg.mxu0
    %v7150 = vcombine.low %v7071, %v7073
    %v7151 = vcombine.low %v7142, %v7144
    %v7153 = vunpack.c.l.s4 1983009808
    %v7154 = vunpack.c.0.s8 %v7153
    %v7155 = vlaneseq
    %v7156 = vshrl.u32 %v7155, 7
    %v7157 = vsub.s32 %v7154, %v7156
    %v7158 = vrot.slane %v7150, %v7157
    %v7160 = vunpack.c.l.s4 1983009808
    %v7161 = vunpack.c.0.s8 %v7160
    %v7162 = vlaneseq
    %v7163 = vshrl.u32 %v7162, 7
    %v7164 = vsub.s32 %v7161, %v7163
    %v7165 = vrot.slane %v7151, %v7164
    %v7166 = vcombine.low %v7158, %v7165
    %v7168 = vadd.f32 %v7003, %v7166
    %v7169 = vxor.u32 %v7168, 2147483648
    %v7170 = vmul.f32 %v7169, 1.442695
    %v7171 = vpow.pop %v7170
    %v7172 = vadd.f32 %v7171, 1.0
    %v7173 = vrcp.pop %v7172
    %v7174 = vmul.f32 1.0, %v7173
    %v7176 = vrot.slane %v7168, 2
    %v7178 = vxor.u32 %v7176, 2147483648
    %v7179 = vmul.f32 %v7178, 1.442695
    %v7180 = vpow.pop %v7179
    %v7181 = vadd.f32 %v7180, 1.0
    %v7182 = vrcp.pop %v7181
    %v7183 = vmul.f32 1.0, %v7182
    %v7184 = vrot.slane %v7168, 4
    %v7186 = vtanh.pop %v7184
    %v7187 = vrot.slane %v7168, 6
    %v7189 = vxor.u32 %v7187, 2147483648
    %v7190 = vmul.f32 %v7189, 1.442695
    %v7191 = vpow.pop %v7190
    %v7192 = vadd.f32 %v7191, 1.0
    %v7193 = vrcp.pop %v7192
    %v7194 = vmul.f32 1.0, %v7193
    %v7195 = vmul.f32 %v7183, %v6819
    %v7196 = vmul.f32 %v7174, %v7186
    %v7197 = vadd.f32 %v7195, %v7196
    %v7198 = vtanh.pop %v7197
    %v7199 = vmul.f32 %v7194, %v7198
    %7201 = vrot.lane.b32.xlu0 %v6992, 64
    %v7202 = vpop.permute.xlu0 %7201
    %v7203 = vsel %vm386, %v7202, 0
    %7205 = vmatprep.subr.mxu0 %v173
    %7206 = vmatpush1.msra.mxu0 %v172
    %7207 = vmatprep.subr.mxu0 %v175
    %7208 = vmatpush1.msra.mxu0 %v174
    %7209 = vmatprep.subr.mxu0 %v177
    %7210 = vmatpush1.msra.mxu0 %v176
    %7211 = vmatprep.subr.mxu0 %v179
    %7212 = vmatpush1.msra.mxu0 %v178
    %7213 = vmatprep.subr.mxu0 %v181
    %7214 = vmatpush1.msra.mxu0 %v180
    %7215 = vmatprep.subr.mxu0 %v183
    %7216 = vmatpush1.msra.mxu0 %v182
    %7217 = vmatprep.subr.mxu0 %v185
    %7218 = vmatpush1.msra.mxu0 %v184
    %7219 = vmatprep.subr.mxu0 %v187
    %7220 = vmatpush1.msra.mxu0 %v186
    %7221 = vmatprep.subr.mxu0 0.0
    %7222 = vmatpush1.msra.mxu0 0.0
    %7223 = vmatprep.subr.mxu0 0.0
    %7224 = vmatpush1.msra.mxu0 0.0
    %7225 = vmatprep.subr.mxu0 0.0
    %7226 = vmatpush1.msra.mxu0 0.0
    %7227 = vmatprep.subr.mxu0 0.0
    %7228 = vmatpush1.msra.mxu0 0.0
    %7229 = vmatprep.subr.mxu0 0.0
    %7230 = vmatpush1.msra.mxu0 0.0
    %7231 = vmatprep.subr.mxu0 0.0
    %7232 = vmatpush1.msra.mxu0 0.0
    %7233 = vmatprep.subr.mxu0 0.0
    %7234 = vmatpush1.msra.mxu0 0.0
    %7235 = vmatprep.subr.mxu0 0.0
    %7236 = vmatpush1.msra.mxu0 0.0
    %7237 = vmatprep.subr.mxu0 0.0
    %7238 = vmatpush1.msra.mxu0 0.0
    %7239 = vmatprep.subr.mxu0 0.0
    %7240 = vmatpush1.msra.mxu0 0.0
    %7241 = vmatprep.subr.mxu0 0.0
    %7242 = vmatpush1.msra.mxu0 0.0
    %7243 = vmatprep.subr.mxu0 0.0
    %7244 = vmatpush1.msra.mxu0 0.0
    %7245 = vmatprep.subr.mxu0 0.0
    %7246 = vmatpush1.msra.mxu0 0.0
    %7247 = vmatprep.subr.mxu0 0.0
    %7248 = vmatpush1.msra.mxu0 0.0
    %7249 = vmatprep.subr.mxu0 0.0
    %7250 = vmatpush1.msra.mxu0 0.0
    %7251 = vmatprep.subr.mxu0 0.0
    %7252 = vmatpush1.msra.mxu0 0.0
    %7253 = vmatprep.subr.mxu0 0.0
    %7254 = vmatpush1.msra.mxu0 0.0
    %7255 = vmatprep.subr.mxu0 0.0
    %7256 = vmatpush1.msra.mxu0 0.0
    %7257 = vmatprep.subr.mxu0 0.0
    %7258 = vmatpush1.msra.mxu0 0.0
    %7259 = vmatprep.subr.mxu0 0.0
    %7260 = vmatpush1.msra.mxu0 0.0
    %7261 = vmatprep.subr.mxu0 0.0
    %7262 = vmatpush1.msra.mxu0 0.0
    %7263 = vmatprep.subr.mxu0 0.0
    %7264 = vmatpush1.msra.mxu0 0.0
    %7265 = vmatprep.subr.mxu0 0.0
    %7266 = vmatpush1.msra.mxu0 0.0
    %7267 = vmatprep.subr.mxu0 0.0
    %7268 = vmatpush1.msra.mxu0 0.0
    %7269 = vmatprep.mubr.f32.mxu0 0.0
    %7270 = vmatmul.mubr.f32.gmra.mrb[0].mxu0 %v7203
    %v7271 = vpop.f32.mrb[0].mxu0
    %v7272 = vadd.f32 0.0, %v7271
    %v7273 = vpop.f32.mrb[0].mxu0
    %v7274 = vadd.f32 0.0, %v7273
    %7275 = vdwg.mxu0
    %7276 = vmatprep.subr.mxu0 %v141
    %7277 = vmatpush1.msra.mxu0 %v140
    %7278 = vmatprep.subr.mxu0 %v143
    %7279 = vmatpush1.msra.mxu0 %v142
    %7280 = vmatprep.subr.mxu0 %v145
    %7281 = vmatpush1.msra.mxu0 %v144
    %7282 = vmatprep.subr.mxu0 %v147
    %7283 = vmatpush1.msra.mxu0 %v146
    %7284 = vmatprep.subr.mxu0 %v149
    %7285 = vmatpush1.msra.mxu0 %v148
    %7286 = vmatprep.subr.mxu0 %v151
    %7287 = vmatpush1.msra.mxu0 %v150
    %7288 = vmatprep.subr.mxu0 %v153
    %7289 = vmatpush1.msra.mxu0 %v152
    %7290 = vmatprep.subr.mxu0 %v155
    %7291 = vmatpush1.msra.mxu0 %v154
    %7292 = vmatprep.subr.mxu0 %v157
    %7293 = vmatpush1.msra.mxu0 %v156
    %7294 = vmatprep.subr.mxu0 %v159
    %7295 = vmatpush1.msra.mxu0 %v158
    %7296 = vmatprep.subr.mxu0 %v161
    %7297 = vmatpush1.msra.mxu0 %v160
    %7298 = vmatprep.subr.mxu0 %v163
    %7299 = vmatpush1.msra.mxu0 %v162
    %7300 = vmatprep.subr.mxu0 %v165
    %7301 = vmatpush1.msra.mxu0 %v164
    %7302 = vmatprep.subr.mxu0 %v167
    %7303 = vmatpush1.msra.mxu0 %v166
    %7304 = vmatprep.subr.mxu0 %v169
    %7305 = vmatpush1.msra.mxu0 %v168
    %7306 = vmatprep.subr.mxu0 %v171
    %7307 = vmatpush1.msra.mxu0 %v170
    %7308 = vmatprep.subr.mxu0 0.0
    %7309 = vmatpush1.msra.mxu0 0.0
    %7310 = vmatprep.subr.mxu0 0.0
    %7311 = vmatpush1.msra.mxu0 0.0
    %7312 = vmatprep.subr.mxu0 0.0
    %7313 = vmatpush1.msra.mxu0 0.0
    %7314 = vmatprep.subr.mxu0 0.0
    %7315 = vmatpush1.msra.mxu0 0.0
    %7316 = vmatprep.subr.mxu0 0.0
    %7317 = vmatpush1.msra.mxu0 0.0
    %7318 = vmatprep.subr.mxu0 0.0
    %7319 = vmatpush1.msra.mxu0 0.0
    %7320 = vmatprep.subr.mxu0 0.0
    %7321 = vmatpush1.msra.mxu0 0.0
    %7322 = vmatprep.subr.mxu0 0.0
    %7323 = vmatpush1.msra.mxu0 0.0
    %7324 = vmatprep.subr.mxu0 0.0
    %7325 = vmatpush1.msra.mxu0 0.0
    %7326 = vmatprep.subr.mxu0 0.0
    %7327 = vmatpush1.msra.mxu0 0.0
    %7328 = vmatprep.subr.mxu0 0.0
    %7329 = vmatpush1.msra.mxu0 0.0
    %7330 = vmatprep.subr.mxu0 0.0
    %7331 = vmatpush1.msra.mxu0 0.0
    %7332 = vmatprep.subr.mxu0 0.0
    %7333 = vmatpush1.msra.mxu0 0.0
    %7334 = vmatprep.subr.mxu0 0.0
    %7335 = vmatpush1.msra.mxu0 0.0
    %7336 = vmatprep.subr.mxu0 0.0
    %7337 = vmatpush1.msra.mxu0 0.0
    %7338 = vmatprep.subr.mxu0 0.0
    %7339 = vmatpush1.msra.mxu0 0.0
    %7340 = vmatprep.mubr.f32.mxu0 0.0
    %7341 = vmatmul.mubr.f32.gmra.mrb[0].mxu0 %v7199
    %v7342 = vpop.f32.mrb[0].mxu0
    %v7343 = vadd.f32 %v7272, %v7342
    %v7344 = vpop.f32.mrb[0].mxu0
    %v7345 = vadd.f32 %v7274, %v7344
    %7346 = vdwg.mxu0
    %v7347 = vadd.f32 %v7343, %v536
    %v7348 = vadd.f32 %v7345, %v540
    %v7349 = vxor.u32 %v7347, 2147483648
    %v7350 = vmul.f32 %v7349, 1.442695
    %v7351 = vpow.pop %v7350
    %v7352 = vadd.f32 %v7351, 1.0
    %v7353 = vrcp.pop %v7352
    %v7354 = vmul.f32 1.0, %v7353
    %v7355 = vtanh.pop %v7348
    %v7356 = vxor.u32 %v7348, 2147483648
    %v7357 = vmul.f32 %v7356, 1.442695
    %v7358 = vpow.pop %v7357
    %v7359 = vadd.f32 %v7358, 1.0
    %v7360 = vrcp.pop %v7359
    %v7361 = vmul.f32 1.0, %v7360
    %v7362 = vmul.f32 %v7354, %v6990
    %v7363 = vmul.f32 %v7354, %v7355
    %7365 = vrot.lane.b32.xlu0 %v7363, 64
    %v7366 = vpop.permute.xlu0 %7365
    %v7368 = vadd.f32 %v7362, %v7366
    %v7369 = vtanh.pop %v7368
    %v7370 = vmul.f32 %v7361, %v7369
    %vm7371 = vcmp.gt.f32.partialorder %v7370, 0.0
    %v7372 = vmul.f32 %v7370, 0.1
    %v7373 = vsel %vm7371, %v7370, %v7372
    %7375 = vrot.lane.b32.xlu0 %v7373, 64
    %v7376 = vpop.permute.xlu0 %7375
    %s7378 = scalar_lea.vmem [#allocation10], 36
    %7379 = vst.msk [vmem:[%s7378] sm:$0x3] %vm574, %v7376
    %s7380 = scalar_lea.vmem [#allocation2], 152
    %v7381 = vld [vmem:[%s7380] sm:$0xff]
    %7382 = vmatprep.subr.mxu0 %v77
    %7383 = vmatpush1.msra.mxu0 %v76
    %7384 = vmatprep.subr.mxu0 %v81
    %7385 = vmatpush1.msra.mxu0 %v80
    %7386 = vmatprep.subr.mxu0 %v85
    %7387 = vmatpush1.msra.mxu0 %v84
    %7388 = vmatprep.subr.mxu0 %v89
    %7389 = vmatpush1.msra.mxu0 %v88
    %7390 = vmatprep.subr.mxu0 %v93
    %7391 = vmatpush1.msra.mxu0 %v92
    %7392 = vmatprep.subr.mxu0 %v97
    %7393 = vmatpush1.msra.mxu0 %v96
    %7394 = vmatprep.subr.mxu0 %v101
    %7395 = vmatpush1.msra.mxu0 %v100
    %7396 = vmatprep.subr.mxu0 %v105
    %7397 = vmatpush1.msra.mxu0 %v104
    %7398 = vmatprep.subr.mxu0 %v109
    %7399 = vmatpush1.msra.mxu0 %v108
    %7400 = vmatprep.subr.mxu0 %v113
    %7401 = vmatpush1.msra.mxu0 %v112
    %7402 = vmatprep.subr.mxu0 %v117
    %7403 = vmatpush1.msra.mxu0 %v116
    %7404 = vmatprep.subr.mxu0 %v121
    %7405 = vmatpush1.msra.mxu0 %v120
    %7406 = vmatprep.subr.mxu0 %v125
    %7407 = vmatpush1.msra.mxu0 %v124
    %7408 = vmatprep.subr.mxu0 %v129
    %7409 = vmatpush1.msra.mxu0 %v128
    %7410 = vmatprep.subr.mxu0 %v133
    %7411 = vmatpush1.msra.mxu0 %v132
    %7412 = vmatprep.subr.mxu0 %v137
    %7413 = vmatpush1.msra.mxu0 %v136
    %7414 = vmatprep.subr.mxu0 0.0
    %7415 = vmatpush1.msra.mxu0 0.0
    %7416 = vmatprep.subr.mxu0 0.0
    %7417 = vmatpush1.msra.mxu0 0.0
    %7418 = vmatprep.subr.mxu0 0.0
    %7419 = vmatpush1.msra.mxu0 0.0
    %7420 = vmatprep.subr.mxu0 0.0
    %7421 = vmatpush1.msra.mxu0 0.0
    %7422 = vmatprep.subr.mxu0 0.0
    %7423 = vmatpush1.msra.mxu0 0.0
    %7424 = vmatprep.subr.mxu0 0.0
    %7425 = vmatpush1.msra.mxu0 0.0
    %7426 = vmatprep.subr.mxu0 0.0
    %7427 = vmatpush1.msra.mxu0 0.0
    %7428 = vmatprep.subr.mxu0 0.0
    %7429 = vmatpush1.msra.mxu0 0.0
    %7430 = vmatprep.subr.mxu0 0.0
    %7431 = vmatpush1.msra.mxu0 0.0
    %7432 = vmatprep.subr.mxu0 0.0
    %7433 = vmatpush1.msra.mxu0 0.0
    %7434 = vmatprep.subr.mxu0 0.0
    %7435 = vmatpush1.msra.mxu0 0.0
    %7436 = vmatprep.subr.mxu0 0.0
    %7437 = vmatpush1.msra.mxu0 0.0
    %7438 = vmatprep.subr.mxu0 0.0
    %7439 = vmatpush1.msra.mxu0 0.0
    %7440 = vmatprep.subr.mxu0 0.0
    %7441 = vmatpush1.msra.mxu0 0.0
    %7442 = vmatprep.subr.mxu0 0.0
    %7443 = vmatpush1.msra.mxu0 0.0
    %7444 = vmatprep.subr.mxu0 0.0
    %7445 = vmatpush1.msra.mxu0 0.0
    %7446 = vmatprep.mubr.f32.mxu0 0.0
    %7447 = vmatmul.mubr.f32.gmra.mrb[0].mxu0 %v7199
    %v7448 = vpop.f32.mrb[0].mxu0
    %v7449 = vadd.f32 0.0, %v7448
    %v7450 = vpop.f32.mrb[0].mxu0
    %v7451 = vadd.f32 0.0, %v7450
    %7452 = vdwg.mxu0
    %7453 = vmatprep.subr.mxu0 %v79
    %7454 = vmatpush1.msra.mxu0 %v78
    %7455 = vmatprep.subr.mxu0 %v83
    %7456 = vmatpush1.msra.mxu0 %v82
    %7457 = vmatprep.subr.mxu0 %v87
    %7458 = vmatpush1.msra.mxu0 %v86
    %7459 = vmatprep.subr.mxu0 %v91
    %7460 = vmatpush1.msra.mxu0 %v90
    %7461 = vmatprep.subr.mxu0 %v95
    %7462 = vmatpush1.msra.mxu0 %v94
    %7463 = vmatprep.subr.mxu0 %v99
    %7464 = vmatpush1.msra.mxu0 %v98
    %7465 = vmatprep.subr.mxu0 %v103
    %7466 = vmatpush1.msra.mxu0 %v102
    %7467 = vmatprep.subr.mxu0 %v107
    %7468 = vmatpush1.msra.mxu0 %v106
    %7469 = vmatprep.subr.mxu0 %v111
    %7470 = vmatpush1.msra.mxu0 %v110
    %7471 = vmatprep.subr.mxu0 %v115
    %7472 = vmatpush1.msra.mxu0 %v114
    %7473 = vmatprep.subr.mxu0 %v119
    %7474 = vmatpush1.msra.mxu0 %v118
    %7475 = vmatprep.subr.mxu0 %v123
    %7476 = vmatpush1.msra.mxu0 %v122
    %7477 = vmatprep.subr.mxu0 %v127
    %7478 = vmatpush1.msra.mxu0 %v126
    %7479 = vmatprep.subr.mxu0 %v131
    %7480 = vmatpush1.msra.mxu0 %v130
    %7481 = vmatprep.subr.mxu0 %v135
    %7482 = vmatpush1.msra.mxu0 %v134
    %7483 = vmatprep.subr.mxu0 %v139
    %7484 = vmatpush1.msra.mxu0 %v138
    %7485 = vmatprep.subr.mxu0 0.0
    %7486 = vmatpush1.msra.mxu0 0.0
    %7487 = vmatprep.subr.mxu0 0.0
    %7488 = vmatpush1.msra.mxu0 0.0
    %7489 = vmatprep.subr.mxu0 0.0
    %7490 = vmatpush1.msra.mxu0 0.0
    %7491 = vmatprep.subr.mxu0 0.0
    %7492 = vmatpush1.msra.mxu0 0.0
    %7493 = vmatprep.subr.mxu0 0.0
    %7494 = vmatpush1.msra.mxu0 0.0
    %7495 = vmatprep.subr.mxu0 0.0
    %7496 = vmatpush1.msra.mxu0 0.0
    %7497 = vmatprep.subr.mxu0 0.0
    %7498 = vmatpush1.msra.mxu0 0.0
    %7499 = vmatprep.subr.mxu0 0.0
    %7500 = vmatpush1.msra.mxu0 0.0
    %7501 = vmatprep.subr.mxu0 0.0
    %7502 = vmatpush1.msra.mxu0 0.0
    %7503 = vmatprep.subr.mxu0 0.0
    %7504 = vmatpush1.msra.mxu0 0.0
    %7505 = vmatprep.subr.mxu0 0.0
    %7506 = vmatpush1.msra.mxu0 0.0
    %7507 = vmatprep.subr.mxu0 0.0
    %7508 = vmatpush1.msra.mxu0 0.0
    %7509 = vmatprep.subr.mxu0 0.0
    %7510 = vmatpush1.msra.mxu0 0.0
    %7511 = vmatprep.subr.mxu0 0.0
    %7512 = vmatpush1.msra.mxu0 0.0
    %7513 = vmatprep.subr.mxu0 0.0
    %7514 = vmatpush1.msra.mxu0 0.0
    %7515 = vmatprep.subr.mxu0 0.0
    %7516 = vmatpush1.msra.mxu0 0.0
    %7517 = vmatprep.mubr.f32.mxu0 0.0
    %7518 = vmatmul.mubr.f32.gmra.mrb[0].mxu0 %v7199
    %v7519 = vpop.f32.mrb[0].mxu0
    %v7520 = vadd.f32 0.0, %v7519
    %v7521 = vpop.f32.mrb[0].mxu0
    %v7522 = vadd.f32 0.0, %v7521
    %7523 = vdwg.mxu0
    %v7528 = vcombine.low %v7449, %v7451
    %v7529 = vcombine.low %v7520, %v7522
    %v7531 = vunpack.c.l.s4 1983009808
    %v7532 = vunpack.c.0.s8 %v7531
    %v7533 = vlaneseq
    %v7534 = vshrl.u32 %v7533, 7
    %v7535 = vsub.s32 %v7532, %v7534
    %v7536 = vrot.slane %v7528, %v7535
    %v7538 = vunpack.c.l.s4 1983009808
    %v7539 = vunpack.c.0.s8 %v7538
    %v7540 = vlaneseq
    %v7541 = vshrl.u32 %v7540, 7
    %v7542 = vsub.s32 %v7539, %v7541
    %v7543 = vrot.slane %v7529, %v7542
    %v7544 = vcombine.low %v7536, %v7543
    %v7546 = vadd.f32 %v7381, %v7544
    %v7547 = vxor.u32 %v7546, 2147483648
    %v7548 = vmul.f32 %v7547, 1.442695
    %v7549 = vpow.pop %v7548
    %v7550 = vadd.f32 %v7549, 1.0
    %v7551 = vrcp.pop %v7550
    %v7552 = vmul.f32 1.0, %v7551
    %v7554 = vrot.slane %v7546, 2
    %v7556 = vxor.u32 %v7554, 2147483648
    %v7557 = vmul.f32 %v7556, 1.442695
    %v7558 = vpow.pop %v7557
    %v7559 = vadd.f32 %v7558, 1.0
    %v7560 = vrcp.pop %v7559
    %v7561 = vmul.f32 1.0, %v7560
    %v7562 = vrot.slane %v7546, 4
    %v7564 = vtanh.pop %v7562
    %v7565 = vrot.slane %v7546, 6
    %v7567 = vxor.u32 %v7565, 2147483648
    %v7568 = vmul.f32 %v7567, 1.442695
    %v7569 = vpow.pop %v7568
    %v7570 = vadd.f32 %v7569, 1.0
    %v7571 = vrcp.pop %v7570
    %v7572 = vmul.f32 1.0, %v7571
    %v7573 = vmul.f32 %v7561, %v7197
    %v7574 = vmul.f32 %v7552, %v7564
    %v7575 = vadd.f32 %v7573, %v7574
    %v7576 = vtanh.pop %v7575
    %v7577 = vmul.f32 %v7572, %v7576
    %7579 = vrot.lane.b32.xlu0 %v7370, 64
    %v7580 = vpop.permute.xlu0 %7579
    %v7581 = vsel %vm386, %v7580, 0
    %7583 = vmatprep.subr.mxu0 %v173
    %7584 = vmatpush1.msra.mxu0 %v172
    %7585 = vmatprep.subr.mxu0 %v175
    %7586 = vmatpush1.msra.mxu0 %v174
    %7587 = vmatprep.subr.mxu0 %v177
    %7588 = vmatpush1.msra.mxu0 %v176
    %7589 = vmatprep.subr.mxu0 %v179
    %7590 = vmatpush1.msra.mxu0 %v178
    %7591 = vmatprep.subr.mxu0 %v181
    %7592 = vmatpush1.msra.mxu0 %v180
    %7593 = vmatprep.subr.mxu0 %v183
    %7594 = vmatpush1.msra.mxu0 %v182
    %7595 = vmatprep.subr.mxu0 %v185
    %7596 = vmatpush1.msra.mxu0 %v184
    %7597 = vmatprep.subr.mxu0 %v187
    %7598 = vmatpush1.msra.mxu0 %v186
    %7599 = vmatprep.subr.mxu0 0.0
    %7600 = vmatpush1.msra.mxu0 0.0
    %7601 = vmatprep.subr.mxu0 0.0
    %7602 = vmatpush1.msra.mxu0 0.0
    %7603 = vmatprep.subr.mxu0 0.0
    %7604 = vmatpush1.msra.mxu0 0.0
    %7605 = vmatprep.subr.mxu0 0.0
    %7606 = vmatpush1.msra.mxu0 0.0
    %7607 = vmatprep.subr.mxu0 0.0
    %7608 = vmatpush1.msra.mxu0 0.0
    %7609 = vmatprep.subr.mxu0 0.0
    %7610 = vmatpush1.msra.mxu0 0.0
    %7611 = vmatprep.subr.mxu0 0.0
    %7612 = vmatpush1.msra.mxu0 0.0
    %7613 = vmatprep.subr.mxu0 0.0
    %7614 = vmatpush1.msra.mxu0 0.0
    %7615 = vmatprep.subr.mxu0 0.0
    %7616 = vmatpush1.msra.mxu0 0.0
    %7617 = vmatprep.subr.mxu0 0.0
    %7618 = vmatpush1.msra.mxu0 0.0
    %7619 = vmatprep.subr.mxu0 0.0
    %7620 = vmatpush1.msra.mxu0 0.0
    %7621 = vmatprep.subr.mxu0 0.0
    %7622 = vmatpush1.msra.mxu0 0.0
    %7623 = vmatprep.subr.mxu0 0.0
    %7624 = vmatpush1.msra.mxu0 0.0
    %7625 = vmatprep.subr.mxu0 0.0
    %7626 = vmatpush1.msra.mxu0 0.0
    %7627 = vmatprep.subr.mxu0 0.0
    %7628 = vmatpush1.msra.mxu0 0.0
    %7629 = vmatprep.subr.mxu0 0.0
    %7630 = vmatpush1.msra.mxu0 0.0
    %7631 = vmatprep.subr.mxu0 0.0
    %7632 = vmatpush1.msra.mxu0 0.0
    %7633 = vmatprep.subr.mxu0 0.0
    %7634 = vmatpush1.msra.mxu0 0.0
    %7635 = vmatprep.subr.mxu0 0.0
    %7636 = vmatpush1.msra.mxu0 0.0
    %7637 = vmatprep.subr.mxu0 0.0
    %7638 = vmatpush1.msra.mxu0 0.0
    %7639 = vmatprep.subr.mxu0 0.0
    %7640 = vmatpush1.msra.mxu0 0.0
    %7641 = vmatprep.subr.mxu0 0.0
    %7642 = vmatpush1.msra.mxu0 0.0
    %7643 = vmatprep.subr.mxu0 0.0
    %7644 = vmatpush1.msra.mxu0 0.0
    %7645 = vmatprep.subr.mxu0 0.0
    %7646 = vmatpush1.msra.mxu0 0.0
    %7647 = vmatprep.mubr.f32.mxu0 0.0
    %7648 = vmatmul.mubr.f32.gmra.mrb[0].mxu0 %v7581
    %v7649 = vpop.f32.mrb[0].mxu0
    %v7650 = vadd.f32 0.0, %v7649
    %v7651 = vpop.f32.mrb[0].mxu0
    %v7652 = vadd.f32 0.0, %v7651
    %7653 = vdwg.mxu0
    %7654 = vmatprep.subr.mxu0 %v141
    %7655 = vmatpush1.msra.mxu0 %v140
    %7656 = vmatprep.subr.mxu0 %v143
    %7657 = vmatpush1.msra.mxu0 %v142
    %7658 = vmatprep.subr.mxu0 %v145
    %7659 = vmatpush1.msra.mxu0 %v144
    %7660 = vmatprep.subr.mxu0 %v147
    %7661 = vmatpush1.msra.mxu0 %v146
    %7662 = vmatprep.subr.mxu0 %v149
    %7663 = vmatpush1.msra.mxu0 %v148
    %7664 = vmatprep.subr.mxu0 %v151
    %7665 = vmatpush1.msra.mxu0 %v150
    %7666 = vmatprep.subr.mxu0 %v153
    %7667 = vmatpush1.msra.mxu0 %v152
    %7668 = vmatprep.subr.mxu0 %v155
    %7669 = vmatpush1.msra.mxu0 %v154
    %7670 = vmatprep.subr.mxu0 %v157
    %7671 = vmatpush1.msra.mxu0 %v156
    %7672 = vmatprep.subr.mxu0 %v159
    %7673 = vmatpush1.msra.mxu0 %v158
    %7674 = vmatprep.subr.mxu0 %v161
    %7675 = vmatpush1.msra.mxu0 %v160
    %7676 = vmatprep.subr.mxu0 %v163
    %7677 = vmatpush1.msra.mxu0 %v162
    %7678 = vmatprep.subr.mxu0 %v165
    %7679 = vmatpush1.msra.mxu0 %v164
    %7680 = vmatprep.subr.mxu0 %v167
    %7681 = vmatpush1.msra.mxu0 %v166
    %7682 = vmatprep.subr.mxu0 %v169
    %7683 = vmatpush1.msra.mxu0 %v168
    %7684 = vmatprep.subr.mxu0 %v171
    %7685 = vmatpush1.msra.mxu0 %v170
    %7686 = vmatprep.subr.mxu0 0.0
    %7687 = vmatpush1.msra.mxu0 0.0
    %7688 = vmatprep.subr.mxu0 0.0
    %7689 = vmatpush1.msra.mxu0 0.0
    %7690 = vmatprep.subr.mxu0 0.0
    %7691 = vmatpush1.msra.mxu0 0.0
    %7692 = vmatprep.subr.mxu0 0.0
    %7693 = vmatpush1.msra.mxu0 0.0
    %7694 = vmatprep.subr.mxu0 0.0
    %7695 = vmatpush1.msra.mxu0 0.0
    %7696 = vmatprep.subr.mxu0 0.0
    %7697 = vmatpush1.msra.mxu0 0.0
    %7698 = vmatprep.subr.mxu0 0.0
    %7699 = vmatpush1.msra.mxu0 0.0
    %7700 = vmatprep.subr.mxu0 0.0
    %7701 = vmatpush1.msra.mxu0 0.0
    %7702 = vmatprep.subr.mxu0 0.0
    %7703 = vmatpush1.msra.mxu0 0.0
    %7704 = vmatprep.subr.mxu0 0.0
    %7705 = vmatpush1.msra.mxu0 0.0
    %7706 = vmatprep.subr.mxu0 0.0
    %7707 = vmatpush1.msra.mxu0 0.0
    %7708 = vmatprep.subr.mxu0 0.0
    %7709 = vmatpush1.msra.mxu0 0.0
    %7710 = vmatprep.subr.mxu0 0.0
    %7711 = vmatpush1.msra.mxu0 0.0
    %7712 = vmatprep.subr.mxu0 0.0
    %7713 = vmatpush1.msra.mxu0 0.0
    %7714 = vmatprep.subr.mxu0 0.0
    %7715 = vmatpush1.msra.mxu0 0.0
    %7716 = vmatprep.subr.mxu0 0.0
    %7717 = vmatpush1.msra.mxu0 0.0
    %7718 = vmatprep.mubr.f32.mxu0 0.0
    %7719 = vmatmul.mubr.f32.gmra.mrb[0].mxu0 %v7577
    %v7720 = vpop.f32.mrb[0].mxu0
    %v7721 = vadd.f32 %v7650, %v7720
    %v7722 = vpop.f32.mrb[0].mxu0
    %v7723 = vadd.f32 %v7652, %v7722
    %7724 = vdwg.mxu0
    %v7725 = vadd.f32 %v7721, %v536
    %v7726 = vadd.f32 %v7723, %v540
    %v7727 = vxor.u32 %v7725, 2147483648
    %v7728 = vmul.f32 %v7727, 1.442695
    %v7729 = vpow.pop %v7728
    %v7730 = vadd.f32 %v7729, 1.0
    %v7731 = vrcp.pop %v7730
    %v7732 = vmul.f32 1.0, %v7731
    %v7733 = vtanh.pop %v7726
    %v7734 = vxor.u32 %v7726, 2147483648
    %v7735 = vmul.f32 %v7734, 1.442695
    %v7736 = vpow.pop %v7735
    %v7737 = vadd.f32 %v7736, 1.0
    %v7738 = vrcp.pop %v7737
    %v7739 = vmul.f32 1.0, %v7738
    %v7740 = vmul.f32 %v7732, %v7368
    %v7741 = vmul.f32 %v7732, %v7733
    %7743 = vrot.lane.b32.xlu0 %v7741, 64
    %v7744 = vpop.permute.xlu0 %7743
    %v7746 = vadd.f32 %v7740, %v7744
    %v7747 = vtanh.pop %v7746
    %v7748 = vmul.f32 %v7739, %v7747
    %vm7749 = vcmp.gt.f32.partialorder %v7748, 0.0
    %v7750 = vmul.f32 %v7748, 0.1
    %v7751 = vsel %vm7749, %v7748, %v7750
    %7753 = vrot.lane.b32.xlu0 %v7751, 64
    %v7754 = vpop.permute.xlu0 %7753
    %s7756 = scalar_lea.vmem [#allocation10], 38
    %7757 = vst.msk [vmem:[%s7756] sm:$0x3] %vm574, %v7754
    // Predicated region
    $region38: #{tpu_custom_call.1} parent=1 // pred_check
      _
    $region39: #{tpu_custom_call.1} parent=1 // pred_check_branch
      %7759 = sbr.rel (0) target = $region41
    $region40: #{tpu_custom_call.1} parent=1 // pred_region
      %s7761 = ssub.s32 640, 640
      %7762 = vsyncadd [#allocation4], %s7761
      %s7763 = sshll.u32 [#allocation10], 4
      %s7764 = int_to_ptr.vmem [resolvable:$true] %s7763
      %7769 = dma.vmem_to_hbm [thread:$0]  %s7764, 640, %s5, [#allocation4], 32, 32, 2
    $region41: #{tpu_custom_call.1} parent=1 // pred_fallthru
      _
    // Predicated region
    $region42: #{tpu_custom_call.1} parent=1 // pred_check
      _
    $region43: #{tpu_custom_call.1} parent=1 // pred_check_branch
      %7771 = sbr.rel (0) target = $region45
    $region44: #{tpu_custom_call.1} parent=1 // pred_region
      %7772 = dma.done [#allocation4], 640
    $region45: #{tpu_custom_call.1} parent=1 // pred_fallthru
      _
    %7773 = vsyncpa [#allocation3], 1
    %7774 = vsyncpa [#allocation6], 1
    %7775 = vsyncpa [#allocation9], 1
    %7776 = vsyncpa [#allocation4], 1

</llo_original>
